<compile_context>
chip_gen: v6e
topology: v6e:2x2x1
jax: 0.10.0
libtpu: 0.0.40
codegen_flags: <defaults>
</compile_context>

<pallas_src>
import numpy as np

import jax
import jax.numpy as jnp
from jax import lax
from jax.experimental import pallas as pl
from jax.experimental.pallas import tpu as pltpu


def _round_up(x, m):
    return ((x + m - 1) // m) * m


def _make_final_state_kernel(total_steps, h_const, bs_block, hidden_p, dim_p,
                             unroll):
    """Single fused loop over all (time_len-1)*n Euler substeps; writes z[-1]."""

    def kernel(z0_ref, w1_ref, b1_ref, w2_ref, b2_ref, out_ref):
        # Hoist weights and bias broadcasts once (JAX does not CSE broadcasts).
        w1 = w1_ref[...]
        w2 = w2_ref[...]
        b1 = jnp.broadcast_to(b1_ref[...], (bs_block, hidden_p))
        b2 = jnp.broadcast_to(b2_ref[...], (bs_block, dim_p))
        h = jnp.float32(h_const)  # compile-time constant step size

        def euler_step(_, zc):
            hid = jnp.tanh(jnp.dot(zc, w1, preferred_element_type=jnp.float32) + b1)
            f = jnp.dot(hid, w2, preferred_element_type=jnp.float32) + b2
            return zc + h * f

        z = z0_ref[...]
        if total_steps > 0:
            z = lax.fori_loop(0, total_steps, euler_step, z, unroll=unroll)
        out_ref[...] = z

    return kernel


def _make_trajectory_kernel(n_euler_steps, h_const, bs_block, hidden_p, dim_p,
                            unroll):
    """Time is a grid axis; state carried in VMEM scratch, one (1,bs,dim) block
    written (and pipelined out) per time step."""

    def kernel(z0_ref, w1_ref, b1_ref, w2_ref, b2_ref, out_ref, z_state):
        it = pl.program_id(1)

        @pl.when(it == 0)
        def _():
            z0 = z0_ref[...]
            z_state[...] = z0
            out_ref[0, :, :] = z0

        @pl.when(it > 0)
        def _():
            w1 = w1_ref[...]
            w2 = w2_ref[...]
            b1 = jnp.broadcast_to(b1_ref[...], (bs_block, hidden_p))
            b2 = jnp.broadcast_to(b2_ref[...], (bs_block, dim_p))
            h = jnp.float32(h_const)

            def euler_step(_, zc):
                hid = jnp.tanh(
                    jnp.dot(zc, w1, preferred_element_type=jnp.float32) + b1)
                f = jnp.dot(hid, w2, preferred_element_type=jnp.float32) + b2
                return zc + h * f

            z = lax.fori_loop(0, n_euler_steps, euler_step, z_state[...],
                              unroll=unroll)
            z_state[...] = z
            out_ref[0, :, :] = z

    return kernel


def neural_ode_forward(z0, t, params, step_size, return_whole_sequence=False):
    """JAX/Pallas equivalent of NeuralODE.forward with an Euler ode_solve."""
    w1, b1, w2, b2 = params
    bs, dim = z0.shape
    hidden = w1.shape[1]

    # t must be concrete at trace time (the substep count is a static quantity).
    try:
        t_np = np.asarray(jax.device_get(t), dtype=np.float64)
    except Exception as e:  # pragma: no cover
        raise ValueError(
            "NeuralODE Pallas kernel requires a concrete (non-traced) time grid t.") from e
    time_len = int(t_np.shape[0])

    if time_len > 1:
        dts = np.abs(np.diff(t_np))
        # TODO(synk): non-uniform time grids (per-interval substep counts) are
        # not supported by the fused kernel; the original driver uses arange.
        assert np.allclose(dts, dts[0], rtol=1e-6, atol=1e-12), (
            "uniform time grid required (t must be evenly spaced)")
        dt0 = float(dts[0])
        n_euler_steps = max(1, int(round(dt0 / step_size)))
        h_const = dt0 / n_euler_steps
    else:
        n_euler_steps = 1
        h_const = 0.0
    total_steps = (time_len - 1) * n_euler_steps

    # ---- pad to native f32 tiles: batch -> 8 sublanes, dim/hidden -> 128 lanes
    bs_p = _round_up(bs, 8)
    if bs_p > 256:
        bs_block = 256
        bs_p = _round_up(bs_p, bs_block)
    else:
        bs_block = bs_p
    nb = bs_p // bs_block
    dim_p = _round_up(dim, 128)
    hidden_p = _round_up(hidden, 128)

    def pad2(x, rows, cols):
        x = jnp.asarray(x, jnp.float32)
        return jnp.pad(x, ((0, rows - x.shape[0]), (0, cols - x.shape[1])))

    z0_p = pad2(z0, bs_p, dim_p)
    w1_p = pad2(w1, dim_p, hidden_p)
    b1_p = pad2(b1, 1, hidden_p)
    w2_p = pad2(w2, hidden_p, dim_p)
    b2_p = pad2(b2, 1, dim_p)

    # Advisory cost estimate so XLA schedules around the long-latency call.
    substep_flops = 2 * bs_p * dim_p * hidden_p * 2 + 4 * bs_p * dim_p
    cost = pl.CostEstimate(
        flops=int(max(1, total_steps) * nb * substep_flops),
        transcendentals=int(max(1, total_steps) * nb * bs_p * hidden_p),
        bytes_accessed=int(4 * (z0_p.size + w1_p.size + b1_p.size + w2_p.size
                                + b2_p.size
                                + (time_len * bs_p * dim_p
                                   if return_whole_sequence else bs_p * dim_p))),
    )

    if not return_whole_sequence:
        # Default path: only z[-1] is computed; no trajectory materialization.
        unroll = total_steps if 0 < total_steps <= 128 else max(
            1, min(n_euler_steps, 64))
        kernel = _make_final_state_kernel(total_steps, h_const, bs_block,
                                          hidden_p, dim_p, unroll)
        out = pl.pallas_call(
            kernel,
            out_shape=jax.ShapeDtypeStruct((bs_p, dim_p), jnp.float32),
            grid=(nb,),
            in_specs=[
                pl.BlockSpec((bs_block, dim_p), lambda b: (b, 0)),   # z0
                pl.BlockSpec((dim_p, hidden_p), lambda b: (0, 0)),   # W1
                pl.BlockSpec((1, hidden_p), lambda b: (0, 0)),       # b1
                pl.BlockSpec((hidden_p, dim_p), lambda b: (0, 0)),   # W2
                pl.BlockSpec((1, dim_p), lambda b: (0, 0)),          # b2
            ],
            out_specs=pl.BlockSpec((bs_block, dim_p), lambda b: (b, 0)),
            compiler_params=pltpu.CompilerParams(
                dimension_semantics=("parallel",)),
            cost_estimate=cost,
        )(z0_p, w1_p, b1_p, w2_p, b2_p)
        return out[:bs, :dim]

    # Whole-trajectory path: stream one (1, bs_block, dim_p) block per step.
    unroll = min(n_euler_steps, 64)
    kernel = _make_trajectory_kernel(n_euler_steps, h_const, bs_block, hidden_p,
                                     dim_p, unroll)
    out = pl.pallas_call(
        kernel,
        out_shape=jax.ShapeDtypeStruct((time_len, bs_p, dim_p), jnp.float32),
        grid=(nb, time_len),
        in_specs=[
            pl.BlockSpec((bs_block, dim_p), lambda b, it: (b, 0)),   # z0
            pl.BlockSpec((dim_p, hidden_p), lambda b, it: (0, 0)),   # W1
            pl.BlockSpec((1, hidden_p), lambda b, it: (0, 0)),       # b1
            pl.BlockSpec((hidden_p, dim_p), lambda b, it: (0, 0)),   # W2
            pl.BlockSpec((1, dim_p), lambda b, it: (0, 0)),          # b2
        ],
        out_specs=pl.BlockSpec((1, bs_block, dim_p), lambda b, it: (it, b, 0)),
        scratch_shapes=[pltpu.VMEM((bs_block, dim_p), jnp.float32)],
        compiler_params=pltpu.CompilerParams(
            dimension_semantics=("parallel", "arbitrary")),
        cost_estimate=cost,
    )(z0_p, w1_p, b1_p, w2_p, b2_p)
    return out[:, :bs, :dim]


def _reference_forward(z0, t, params, step_size):
    """Pure-JAX reference (same math, no Pallas): full trajectory."""
    w1, b1, w2, b2 = params

    def f(z):
        return jnp.tanh(z @ w1 + b1) @ w2 + b2

    t_np = np.asarray(t, dtype=np.float64)
    dt0 = float(np.abs(t_np[1] - t_np[0]))
    n_steps = max(1, int(round(dt0 / step_size)))
    z = z0
    zs = [z]
    for i in range(1, t.shape[0]):
        h = jnp.abs(t[i] - t[i - 1]) / n_steps
        for _ in range(n_steps):
            z = z + h * f(z)
        zs.append(z)
    return jnp.stack(zs, axis=0)


if __name__ == "__main__":
    # small shapes consistent with a (batch, dim) ODE state
    bs, dim, hidden = 4, 32, 64
    time_len = 5
    step_size = 0.1

    key = jax.random.PRNGKey(0)
    k0, k1, k2, k3, k4 = jax.random.split(key, 5)

    z0 = jax.random.normal(k0, (bs, dim), jnp.float32)
    # MLP ODEF parameters: Linear(dim, hidden), Linear(hidden, dim)
    w1 = jax.random.normal(k1, (dim, hidden), jnp.float32) / jnp.sqrt(dim)
    b1 = jax.random.normal(k2, (1, hidden), jnp.float32) * 0.1
    w2 = jax.random.normal(k3, (hidden, dim), jnp.float32) / jnp.sqrt(hidden)
    b2 = jax.random.normal(k4, (1, dim), jnp.float32) * 0.1
    params = (w1, b1, w2, b2)

    t = jnp.arange(time_len, dtype=jnp.float32)  # NeuralODE's uniform time grid

    # default path: only z[-1] is computed and written
    z_final = jax.block_until_ready(
        neural_ode_forward(z0, t, params, step_size))
    # return_whole_sequence=True path: trajectory streamed out per time step
    z_seq = jax.block_until_ready(
        neural_ode_forward(z0, t, params, step_size, return_whole_sequence=True))

    z_ref_seq = _reference_forward(z0, t, params, step_size)
    assert z_final.shape == (bs, dim)
    assert z_seq.shape == (time_len, bs, dim)
    assert jnp.allclose(z_final, z_ref_seq[-1], rtol=1e-4, atol=1e-4), (
        float(jnp.max(jnp.abs(z_final - z_ref_seq[-1]))))
    assert jnp.allclose(z_seq, z_ref_seq, rtol=1e-4, atol=1e-4), (
        float(jnp.max(jnp.abs(z_seq - z_ref_seq))))

    # TODO(synk): the adjoint/backward pass (ODEAdjoint.backward) is autograd
    # machinery, not part of the forward compute path, and is not implemented.
    print("KERNEL_OK")
</pallas_src>

<mosaic_0001>
module attributes {stable_mosaic.version = 11 : i64} {
  func.func @kernel(%arg0: i32, %arg1: memref<8x128xf32, #tpu.memory_space<vmem>>, %arg2: memref<128x128xf32, #tpu.memory_space<vmem>>, %arg3: memref<1x128xf32, #tpu.memory_space<vmem>>, %arg4: memref<128x128xf32, #tpu.memory_space<vmem>>, %arg5: memref<1x128xf32, #tpu.memory_space<vmem>>, %arg6: memref<8x128xf32, #tpu.memory_space<vmem>>) attributes {dimension_semantics = [#tpu.dimension_semantics<parallel>], iteration_bounds = array<i64: 1>, scalar_prefetch = 0 : i64, scratch_operands = 0 : i64, tpu.core_type = #tpu.core_type<tc>, window_params = [{transform_indices = @transform_0, window_bounds = array<i64: 8, 128>}, {pipeline_mode = #tpu.pipeline_mode<synchronous>, transform_indices = @transform_1, window_bounds = array<i64: 128, 128>}, {pipeline_mode = #tpu.pipeline_mode<synchronous>, transform_indices = @transform_2, window_bounds = array<i64: 1, 128>}, {pipeline_mode = #tpu.pipeline_mode<synchronous>, transform_indices = @transform_3, window_bounds = array<i64: 128, 128>}, {pipeline_mode = #tpu.pipeline_mode<synchronous>, transform_indices = @transform_4, window_bounds = array<i64: 1, 128>}, {transform_indices = @transform_5, window_bounds = array<i64: 8, 128>}]} {
    %c0 = arith.constant 0 : index
    %c0_0 = arith.constant 0 : index
    %0 = vector.load %arg2[%c0, %c0_0] : memref<128x128xf32, #tpu.memory_space<vmem>>, vector<128x128xf32>
    %c0_1 = arith.constant 0 : index
    %c0_2 = arith.constant 0 : index
    %1 = vector.load %arg4[%c0_1, %c0_2] : memref<128x128xf32, #tpu.memory_space<vmem>>, vector<128x128xf32>
    %c0_3 = arith.constant 0 : index
    %c0_4 = arith.constant 0 : index
    %2 = vector.load %arg3[%c0_3, %c0_4] : memref<1x128xf32, #tpu.memory_space<vmem>>, vector<1x128xf32>
    %3 = vector.shape_cast %2 : vector<1x128xf32> to vector<1x128xf32>
    %4 = vector.broadcast %3 : vector<1x128xf32> to vector<8x128xf32>
    %c0_5 = arith.constant 0 : index
    %c0_6 = arith.constant 0 : index
    %5 = vector.load %arg5[%c0_5, %c0_6] : memref<1x128xf32, #tpu.memory_space<vmem>>, vector<1x128xf32>
    %6 = vector.shape_cast %5 : vector<1x128xf32> to vector<1x128xf32>
    %7 = vector.broadcast %6 : vector<1x128xf32> to vector<8x128xf32>
    %c0_7 = arith.constant 0 : index
    %c0_8 = arith.constant 0 : index
    %8 = vector.load %arg1[%c0_7, %c0_8] : memref<8x128xf32, #tpu.memory_space<vmem>>, vector<8x128xf32>
    %cst = arith.constant 1.000000e-01 : f32
    %c0_i32 = arith.constant 0 : i32
    %cst_9 = arith.constant dense<0.000000e+00> : vector<8x128xf32>
    %9 = tpu.matmul %8, %0, %cst_9 {dimension_numbers = #tpu.dot_dimension_numbers<[1], [0], [0], [1], [0, 0, 1, 1], [], []>} : vector<8x128xf32>, vector<128x128xf32>, vector<8x128xf32> -> vector<8x128xf32>
    %10 = arith.addf %9, %4 : vector<8x128xf32>
    %11 = math.tanh %10 : vector<8x128xf32>
    %cst_10 = arith.constant dense<0.000000e+00> : vector<8x128xf32>
    %12 = tpu.matmul %11, %1, %cst_10 {dimension_numbers = #tpu.dot_dimension_numbers<[1], [0], [0], [1], [0, 0, 1, 1], [], []>} : vector<8x128xf32>, vector<128x128xf32>, vector<8x128xf32> -> vector<8x128xf32>
    %13 = arith.addf %12, %7 : vector<8x128xf32>
    %14 = vector.broadcast %cst : f32 to vector<8x128xf32>
    %15 = arith.mulf %14, %13 : vector<8x128xf32>
    %16 = arith.addf %8, %15 : vector<8x128xf32>
    %c1_i32 = arith.constant 1 : i32
    %cst_11 = arith.constant dense<0.000000e+00> : vector<8x128xf32>
    %17 = tpu.matmul %16, %0, %cst_11 {dimension_numbers = #tpu.dot_dimension_numbers<[1], [0], [0], [1], [0, 0, 1, 1], [], []>} : vector<8x128xf32>, vector<128x128xf32>, vector<8x128xf32> -> vector<8x128xf32>
    %18 = arith.addf %17, %4 : vector<8x128xf32>
    %19 = math.tanh %18 : vector<8x128xf32>
    %cst_12 = arith.constant dense<0.000000e+00> : vector<8x128xf32>
    %20 = tpu.matmul %19, %1, %cst_12 {dimension_numbers = #tpu.dot_dimension_numbers<[1], [0], [0], [1], [0, 0, 1, 1], [], []>} : vector<8x128xf32>, vector<128x128xf32>, vector<8x128xf32> -> vector<8x128xf32>
    %21 = arith.addf %20, %7 : vector<8x128xf32>
    %22 = vector.broadcast %cst : f32 to vector<8x128xf32>
    %23 = arith.mulf %22, %21 : vector<8x128xf32>
    %24 = arith.addf %16, %23 : vector<8x128xf32>
    %c2_i32 = arith.constant 2 : i32
    %cst_13 = arith.constant dense<0.000000e+00> : vector<8x128xf32>
    %25 = tpu.matmul %24, %0, %cst_13 {dimension_numbers = #tpu.dot_dimension_numbers<[1], [0], [0], [1], [0, 0, 1, 1], [], []>} : vector<8x128xf32>, vector<128x128xf32>, vector<8x128xf32> -> vector<8x128xf32>
    %26 = arith.addf %25, %4 : vector<8x128xf32>
    %27 = math.tanh %26 : vector<8x128xf32>
    %cst_14 = arith.constant dense<0.000000e+00> : vector<8x128xf32>
    %28 = tpu.matmul %27, %1, %cst_14 {dimension_numbers = #tpu.dot_dimension_numbers<[1], [0], [0], [1], [0, 0, 1, 1], [], []>} : vector<8x128xf32>, vector<128x128xf32>, vector<8x128xf32> -> vector<8x128xf32>
    %29 = arith.addf %28, %7 : vector<8x128xf32>
    %30 = vector.broadcast %cst : f32 to vector<8x128xf32>
    %31 = arith.mulf %30, %29 : vector<8x128xf32>
    %32 = arith.addf %24, %31 : vector<8x128xf32>
    %c3_i32 = arith.constant 3 : i32
    %cst_15 = arith.constant dense<0.000000e+00> : vector<8x128xf32>
    %33 = tpu.matmul %32, %0, %cst_15 {dimension_numbers = #tpu.dot_dimension_numbers<[1], [0], [0], [1], [0, 0, 1, 1], [], []>} : vector<8x128xf32>, vector<128x128xf32>, vector<8x128xf32> -> vector<8x128xf32>
    %34 = arith.addf %33, %4 : vector<8x128xf32>
    %35 = math.tanh %34 : vector<8x128xf32>
    %cst_16 = arith.constant dense<0.000000e+00> : vector<8x128xf32>
    %36 = tpu.matmul %35, %1, %cst_16 {dimension_numbers = #tpu.dot_dimension_numbers<[1], [0], [0], [1], [0, 0, 1, 1], [], []>} : vector<8x128xf32>, vector<128x128xf32>, vector<8x128xf32> -> vector<8x128xf32>
    %37 = arith.addf %36, %7 : vector<8x128xf32>
    %38 = vector.broadcast %cst : f32 to vector<8x128xf32>
    %39 = arith.mulf %38, %37 : vector<8x128xf32>
    %40 = arith.addf %32, %39 : vector<8x128xf32>
    %c4_i32 = arith.constant 4 : i32
    %cst_17 = arith.constant dense<0.000000e+00> : vector<8x128xf32>
    %41 = tpu.matmul %40, %0, %cst_17 {dimension_numbers = #tpu.dot_dimension_numbers<[1], [0], [0], [1], [0, 0, 1, 1], [], []>} : vector<8x128xf32>, vector<128x128xf32>, vector<8x128xf32> -> vector<8x128xf32>
    %42 = arith.addf %41, %4 : vector<8x128xf32>
    %43 = math.tanh %42 : vector<8x128xf32>
    %cst_18 = arith.constant dense<0.000000e+00> : vector<8x128xf32>
    %44 = tpu.matmul %43, %1, %cst_18 {dimension_numbers = #tpu.dot_dimension_numbers<[1], [0], [0], [1], [0, 0, 1, 1], [], []>} : vector<8x128xf32>, vector<128x128xf32>, vector<8x128xf32> -> vector<8x128xf32>
    %45 = arith.addf %44, %7 : vector<8x128xf32>
    %46 = vector.broadcast %cst : f32 to vector<8x128xf32>
    %47 = arith.mulf %46, %45 : vector<8x128xf32>
    %48 = arith.addf %40, %47 : vector<8x128xf32>
    %c5_i32 = arith.constant 5 : i32
    %cst_19 = arith.constant dense<0.000000e+00> : vector<8x128xf32>
    %49 = tpu.matmul %48, %0, %cst_19 {dimension_numbers = #tpu.dot_dimension_numbers<[1], [0], [0], [1], [0, 0, 1, 1], [], []>} : vector<8x128xf32>, vector<128x128xf32>, vector<8x128xf32> -> vector<8x128xf32>
    %50 = arith.addf %49, %4 : vector<8x128xf32>
    %51 = math.tanh %50 : vector<8x128xf32>
    %cst_20 = arith.constant dense<0.000000e+00> : vector<8x128xf32>
    %52 = tpu.matmul %51, %1, %cst_20 {dimension_numbers = #tpu.dot_dimension_numbers<[1], [0], [0], [1], [0, 0, 1, 1], [], []>} : vector<8x128xf32>, vector<128x128xf32>, vector<8x128xf32> -> vector<8x128xf32>
    %53 = arith.addf %52, %7 : vector<8x128xf32>
    %54 = vector.broadcast %cst : f32 to vector<8x128xf32>
    %55 = arith.mulf %54, %53 : vector<8x128xf32>
    %56 = arith.addf %48, %55 : vector<8x128xf32>
    %c6_i32 = arith.constant 6 : i32
    %cst_21 = arith.constant dense<0.000000e+00> : vector<8x128xf32>
    %57 = tpu.matmul %56, %0, %cst_21 {dimension_numbers = #tpu.dot_dimension_numbers<[1], [0], [0], [1], [0, 0, 1, 1], [], []>} : vector<8x128xf32>, vector<128x128xf32>, vector<8x128xf32> -> vector<8x128xf32>
    %58 = arith.addf %57, %4 : vector<8x128xf32>
    %59 = math.tanh %58 : vector<8x128xf32>
    %cst_22 = arith.constant dense<0.000000e+00> : vector<8x128xf32>
    %60 = tpu.matmul %59, %1, %cst_22 {dimension_numbers = #tpu.dot_dimension_numbers<[1], [0], [0], [1], [0, 0, 1, 1], [], []>} : vector<8x128xf32>, vector<128x128xf32>, vector<8x128xf32> -> vector<8x128xf32>
    %61 = arith.addf %60, %7 : vector<8x128xf32>
    %62 = vector.broadcast %cst : f32 to vector<8x128xf32>
    %63 = arith.mulf %62, %61 : vector<8x128xf32>
    %64 = arith.addf %56, %63 : vector<8x128xf32>
    %c7_i32 = arith.constant 7 : i32
    %cst_23 = arith.constant dense<0.000000e+00> : vector<8x128xf32>
    %65 = tpu.matmul %64, %0, %cst_23 {dimension_numbers = #tpu.dot_dimension_numbers<[1], [0], [0], [1], [0, 0, 1, 1], [], []>} : vector<8x128xf32>, vector<128x128xf32>, vector<8x128xf32> -> vector<8x128xf32>
    %66 = arith.addf %65, %4 : vector<8x128xf32>
    %67 = math.tanh %66 : vector<8x128xf32>
    %cst_24 = arith.constant dense<0.000000e+00> : vector<8x128xf32>
    %68 = tpu.matmul %67, %1, %cst_24 {dimension_numbers = #tpu.dot_dimension_numbers<[1], [0], [0], [1], [0, 0, 1, 1], [], []>} : vector<8x128xf32>, vector<128x128xf32>, vector<8x128xf32> -> vector<8x128xf32>
    %69 = arith.addf %68, %7 : vector<8x128xf32>
    %70 = vector.broadcast %cst : f32 to vector<8x128xf32>
    %71 = arith.mulf %70, %69 : vector<8x128xf32>
    %72 = arith.addf %64, %71 : vector<8x128xf32>
    %c8_i32 = arith.constant 8 : i32
    %cst_25 = arith.constant dense<0.000000e+00> : vector<8x128xf32>
    %73 = tpu.matmul %72, %0, %cst_25 {dimension_numbers = #tpu.dot_dimension_numbers<[1], [0], [0], [1], [0, 0, 1, 1], [], []>} : vector<8x128xf32>, vector<128x128xf32>, vector<8x128xf32> -> vector<8x128xf32>
    %74 = arith.addf %73, %4 : vector<8x128xf32>
    %75 = math.tanh %74 : vector<8x128xf32>
    %cst_26 = arith.constant dense<0.000000e+00> : vector<8x128xf32>
    %76 = tpu.matmul %75, %1, %cst_26 {dimension_numbers = #tpu.dot_dimension_numbers<[1], [0], [0], [1], [0, 0, 1, 1], [], []>} : vector<8x128xf32>, vector<128x128xf32>, vector<8x128xf32> -> vector<8x128xf32>
    %77 = arith.addf %76, %7 : vector<8x128xf32>
    %78 = vector.broadcast %cst : f32 to vector<8x128xf32>
    %79 = arith.mulf %78, %77 : vector<8x128xf32>
    %80 = arith.addf %72, %79 : vector<8x128xf32>
    %c9_i32 = arith.constant 9 : i32
    %cst_27 = arith.constant dense<0.000000e+00> : vector<8x128xf32>
    %81 = tpu.matmul %80, %0, %cst_27 {dimension_numbers = #tpu.dot_dimension_numbers<[1], [0], [0], [1], [0, 0, 1, 1], [], []>} : vector<8x128xf32>, vector<128x128xf32>, vector<8x128xf32> -> vector<8x128xf32>
    %82 = arith.addf %81, %4 : vector<8x128xf32>
    %83 = math.tanh %82 : vector<8x128xf32>
    %cst_28 = arith.constant dense<0.000000e+00> : vector<8x128xf32>
    %84 = tpu.matmul %83, %1, %cst_28 {dimension_numbers = #tpu.dot_dimension_numbers<[1], [0], [0], [1], [0, 0, 1, 1], [], []>} : vector<8x128xf32>, vector<128x128xf32>, vector<8x128xf32> -> vector<8x128xf32>
    %85 = arith.addf %84, %7 : vector<8x128xf32>
    %86 = vector.broadcast %cst : f32 to vector<8x128xf32>
    %87 = arith.mulf %86, %85 : vector<8x128xf32>
    %88 = arith.addf %80, %87 : vector<8x128xf32>
    %c10_i32 = arith.constant 10 : i32
    %cst_29 = arith.constant dense<0.000000e+00> : vector<8x128xf32>
    %89 = tpu.matmul %88, %0, %cst_29 {dimension_numbers = #tpu.dot_dimension_numbers<[1], [0], [0], [1], [0, 0, 1, 1], [], []>} : vector<8x128xf32>, vector<128x128xf32>, vector<8x128xf32> -> vector<8x128xf32>
    %90 = arith.addf %89, %4 : vector<8x128xf32>
    %91 = math.tanh %90 : vector<8x128xf32>
    %cst_30 = arith.constant dense<0.000000e+00> : vector<8x128xf32>
    %92 = tpu.matmul %91, %1, %cst_30 {dimension_numbers = #tpu.dot_dimension_numbers<[1], [0], [0], [1], [0, 0, 1, 1], [], []>} : vector<8x128xf32>, vector<128x128xf32>, vector<8x128xf32> -> vector<8x128xf32>
    %93 = arith.addf %92, %7 : vector<8x128xf32>
    %94 = vector.broadcast %cst : f32 to vector<8x128xf32>
    %95 = arith.mulf %94, %93 : vector<8x128xf32>
    %96 = arith.addf %88, %95 : vector<8x128xf32>
    %c11_i32 = arith.constant 11 : i32
    %cst_31 = arith.constant dense<0.000000e+00> : vector<8x128xf32>
    %97 = tpu.matmul %96, %0, %cst_31 {dimension_numbers = #tpu.dot_dimension_numbers<[1], [0], [0], [1], [0, 0, 1, 1], [], []>} : vector<8x128xf32>, vector<128x128xf32>, vector<8x128xf32> -> vector<8x128xf32>
    %98 = arith.addf %97, %4 : vector<8x128xf32>
    %99 = math.tanh %98 : vector<8x128xf32>
    %cst_32 = arith.constant dense<0.000000e+00> : vector<8x128xf32>
    %100 = tpu.matmul %99, %1, %cst_32 {dimension_numbers = #tpu.dot_dimension_numbers<[1], [0], [0], [1], [0, 0, 1, 1], [], []>} : vector<8x128xf32>, vector<128x128xf32>, vector<8x128xf32> -> vector<8x128xf32>
    %101 = arith.addf %100, %7 : vector<8x128xf32>
    %102 = vector.broadcast %cst : f32 to vector<8x128xf32>
    %103 = arith.mulf %102, %101 : vector<8x128xf32>
    %104 = arith.addf %96, %103 : vector<8x128xf32>
    %c12_i32 = arith.constant 12 : i32
    %cst_33 = arith.constant dense<0.000000e+00> : vector<8x128xf32>
    %105 = tpu.matmul %104, %0, %cst_33 {dimension_numbers = #tpu.dot_dimension_numbers<[1], [0], [0], [1], [0, 0, 1, 1], [], []>} : vector<8x128xf32>, vector<128x128xf32>, vector<8x128xf32> -> vector<8x128xf32>
    %106 = arith.addf %105, %4 : vector<8x128xf32>
    %107 = math.tanh %106 : vector<8x128xf32>
    %cst_34 = arith.constant dense<0.000000e+00> : vector<8x128xf32>
    %108 = tpu.matmul %107, %1, %cst_34 {dimension_numbers = #tpu.dot_dimension_numbers<[1], [0], [0], [1], [0, 0, 1, 1], [], []>} : vector<8x128xf32>, vector<128x128xf32>, vector<8x128xf32> -> vector<8x128xf32>
    %109 = arith.addf %108, %7 : vector<8x128xf32>
    %110 = vector.broadcast %cst : f32 to vector<8x128xf32>
    %111 = arith.mulf %110, %109 : vector<8x128xf32>
    %112 = arith.addf %104, %111 : vector<8x128xf32>
    %c13_i32 = arith.constant 13 : i32
    %cst_35 = arith.constant dense<0.000000e+00> : vector<8x128xf32>
    %113 = tpu.matmul %112, %0, %cst_35 {dimension_numbers = #tpu.dot_dimension_numbers<[1], [0], [0], [1], [0, 0, 1, 1], [], []>} : vector<8x128xf32>, vector<128x128xf32>, vector<8x128xf32> -> vector<8x128xf32>
    %114 = arith.addf %113, %4 : vector<8x128xf32>
    %115 = math.tanh %114 : vector<8x128xf32>
    %cst_36 = arith.constant dense<0.000000e+00> : vector<8x128xf32>
    %116 = tpu.matmul %115, %1, %cst_36 {dimension_numbers = #tpu.dot_dimension_numbers<[1], [0], [0], [1], [0, 0, 1, 1], [], []>} : vector<8x128xf32>, vector<128x128xf32>, vector<8x128xf32> -> vector<8x128xf32>
    %117 = arith.addf %116, %7 : vector<8x128xf32>
    %118 = vector.broadcast %cst : f32 to vector<8x128xf32>
    %119 = arith.mulf %118, %117 : vector<8x128xf32>
    %120 = arith.addf %112, %119 : vector<8x128xf32>
    %c14_i32 = arith.constant 14 : i32
    %cst_37 = arith.constant dense<0.000000e+00> : vector<8x128xf32>
    %121 = tpu.matmul %120, %0, %cst_37 {dimension_numbers = #tpu.dot_dimension_numbers<[1], [0], [0], [1], [0, 0, 1, 1], [], []>} : vector<8x128xf32>, vector<128x128xf32>, vector<8x128xf32> -> vector<8x128xf32>
    %122 = arith.addf %121, %4 : vector<8x128xf32>
    %123 = math.tanh %122 : vector<8x128xf32>
    %cst_38 = arith.constant dense<0.000000e+00> : vector<8x128xf32>
    %124 = tpu.matmul %123, %1, %cst_38 {dimension_numbers = #tpu.dot_dimension_numbers<[1], [0], [0], [1], [0, 0, 1, 1], [], []>} : vector<8x128xf32>, vector<128x128xf32>, vector<8x128xf32> -> vector<8x128xf32>
    %125 = arith.addf %124, %7 : vector<8x128xf32>
    %126 = vector.broadcast %cst : f32 to vector<8x128xf32>
    %127 = arith.mulf %126, %125 : vector<8x128xf32>
    %128 = arith.addf %120, %127 : vector<8x128xf32>
    %c15_i32 = arith.constant 15 : i32
    %cst_39 = arith.constant dense<0.000000e+00> : vector<8x128xf32>
    %129 = tpu.matmul %128, %0, %cst_39 {dimension_numbers = #tpu.dot_dimension_numbers<[1], [0], [0], [1], [0, 0, 1, 1], [], []>} : vector<8x128xf32>, vector<128x128xf32>, vector<8x128xf32> -> vector<8x128xf32>
    %130 = arith.addf %129, %4 : vector<8x128xf32>
    %131 = math.tanh %130 : vector<8x128xf32>
    %cst_40 = arith.constant dense<0.000000e+00> : vector<8x128xf32>
    %132 = tpu.matmul %131, %1, %cst_40 {dimension_numbers = #tpu.dot_dimension_numbers<[1], [0], [0], [1], [0, 0, 1, 1], [], []>} : vector<8x128xf32>, vector<128x128xf32>, vector<8x128xf32> -> vector<8x128xf32>
    %133 = arith.addf %132, %7 : vector<8x128xf32>
    %134 = vector.broadcast %cst : f32 to vector<8x128xf32>
    %135 = arith.mulf %134, %133 : vector<8x128xf32>
    %136 = arith.addf %128, %135 : vector<8x128xf32>
    %c16_i32 = arith.constant 16 : i32
    %cst_41 = arith.constant dense<0.000000e+00> : vector<8x128xf32>
    %137 = tpu.matmul %136, %0, %cst_41 {dimension_numbers = #tpu.dot_dimension_numbers<[1], [0], [0], [1], [0, 0, 1, 1], [], []>} : vector<8x128xf32>, vector<128x128xf32>, vector<8x128xf32> -> vector<8x128xf32>
    %138 = arith.addf %137, %4 : vector<8x128xf32>
    %139 = math.tanh %138 : vector<8x128xf32>
    %cst_42 = arith.constant dense<0.000000e+00> : vector<8x128xf32>
    %140 = tpu.matmul %139, %1, %cst_42 {dimension_numbers = #tpu.dot_dimension_numbers<[1], [0], [0], [1], [0, 0, 1, 1], [], []>} : vector<8x128xf32>, vector<128x128xf32>, vector<8x128xf32> -> vector<8x128xf32>
    %141 = arith.addf %140, %7 : vector<8x128xf32>
    %142 = vector.broadcast %cst : f32 to vector<8x128xf32>
    %143 = arith.mulf %142, %141 : vector<8x128xf32>
    %144 = arith.addf %136, %143 : vector<8x128xf32>
    %c17_i32 = arith.constant 17 : i32
    %cst_43 = arith.constant dense<0.000000e+00> : vector<8x128xf32>
    %145 = tpu.matmul %144, %0, %cst_43 {dimension_numbers = #tpu.dot_dimension_numbers<[1], [0], [0], [1], [0, 0, 1, 1], [], []>} : vector<8x128xf32>, vector<128x128xf32>, vector<8x128xf32> -> vector<8x128xf32>
    %146 = arith.addf %145, %4 : vector<8x128xf32>
    %147 = math.tanh %146 : vector<8x128xf32>
    %cst_44 = arith.constant dense<0.000000e+00> : vector<8x128xf32>
    %148 = tpu.matmul %147, %1, %cst_44 {dimension_numbers = #tpu.dot_dimension_numbers<[1], [0], [0], [1], [0, 0, 1, 1], [], []>} : vector<8x128xf32>, vector<128x128xf32>, vector<8x128xf32> -> vector<8x128xf32>
    %149 = arith.addf %148, %7 : vector<8x128xf32>
    %150 = vector.broadcast %cst : f32 to vector<8x128xf32>
    %151 = arith.mulf %150, %149 : vector<8x128xf32>
    %152 = arith.addf %144, %151 : vector<8x128xf32>
    %c18_i32 = arith.constant 18 : i32
    %cst_45 = arith.constant dense<0.000000e+00> : vector<8x128xf32>
    %153 = tpu.matmul %152, %0, %cst_45 {dimension_numbers = #tpu.dot_dimension_numbers<[1], [0], [0], [1], [0, 0, 1, 1], [], []>} : vector<8x128xf32>, vector<128x128xf32>, vector<8x128xf32> -> vector<8x128xf32>
    %154 = arith.addf %153, %4 : vector<8x128xf32>
    %155 = math.tanh %154 : vector<8x128xf32>
    %cst_46 = arith.constant dense<0.000000e+00> : vector<8x128xf32>
    %156 = tpu.matmul %155, %1, %cst_46 {dimension_numbers = #tpu.dot_dimension_numbers<[1], [0], [0], [1], [0, 0, 1, 1], [], []>} : vector<8x128xf32>, vector<128x128xf32>, vector<8x128xf32> -> vector<8x128xf32>
    %157 = arith.addf %156, %7 : vector<8x128xf32>
    %158 = vector.broadcast %cst : f32 to vector<8x128xf32>
    %159 = arith.mulf %158, %157 : vector<8x128xf32>
    %160 = arith.addf %152, %159 : vector<8x128xf32>
    %c19_i32 = arith.constant 19 : i32
    %cst_47 = arith.constant dense<0.000000e+00> : vector<8x128xf32>
    %161 = tpu.matmul %160, %0, %cst_47 {dimension_numbers = #tpu.dot_dimension_numbers<[1], [0], [0], [1], [0, 0, 1, 1], [], []>} : vector<8x128xf32>, vector<128x128xf32>, vector<8x128xf32> -> vector<8x128xf32>
    %162 = arith.addf %161, %4 : vector<8x128xf32>
    %163 = math.tanh %162 : vector<8x128xf32>
    %cst_48 = arith.constant dense<0.000000e+00> : vector<8x128xf32>
    %164 = tpu.matmul %163, %1, %cst_48 {dimension_numbers = #tpu.dot_dimension_numbers<[1], [0], [0], [1], [0, 0, 1, 1], [], []>} : vector<8x128xf32>, vector<128x128xf32>, vector<8x128xf32> -> vector<8x128xf32>
    %165 = arith.addf %164, %7 : vector<8x128xf32>
    %166 = vector.broadcast %cst : f32 to vector<8x128xf32>
    %167 = arith.mulf %166, %165 : vector<8x128xf32>
    %168 = arith.addf %160, %167 : vector<8x128xf32>
    %c20_i32 = arith.constant 20 : i32
    %cst_49 = arith.constant dense<0.000000e+00> : vector<8x128xf32>
    %169 = tpu.matmul %168, %0, %cst_49 {dimension_numbers = #tpu.dot_dimension_numbers<[1], [0], [0], [1], [0, 0, 1, 1], [], []>} : vector<8x128xf32>, vector<128x128xf32>, vector<8x128xf32> -> vector<8x128xf32>
    %170 = arith.addf %169, %4 : vector<8x128xf32>
    %171 = math.tanh %170 : vector<8x128xf32>
    %cst_50 = arith.constant dense<0.000000e+00> : vector<8x128xf32>
    %172 = tpu.matmul %171, %1, %cst_50 {dimension_numbers = #tpu.dot_dimension_numbers<[1], [0], [0], [1], [0, 0, 1, 1], [], []>} : vector<8x128xf32>, vector<128x128xf32>, vector<8x128xf32> -> vector<8x128xf32>
    %173 = arith.addf %172, %7 : vector<8x128xf32>
    %174 = vector.broadcast %cst : f32 to vector<8x128xf32>
    %175 = arith.mulf %174, %173 : vector<8x128xf32>
    %176 = arith.addf %168, %175 : vector<8x128xf32>
    %c21_i32 = arith.constant 21 : i32
    %cst_51 = arith.constant dense<0.000000e+00> : vector<8x128xf32>
    %177 = tpu.matmul %176, %0, %cst_51 {dimension_numbers = #tpu.dot_dimension_numbers<[1], [0], [0], [1], [0, 0, 1, 1], [], []>} : vector<8x128xf32>, vector<128x128xf32>, vector<8x128xf32> -> vector<8x128xf32>
    %178 = arith.addf %177, %4 : vector<8x128xf32>
    %179 = math.tanh %178 : vector<8x128xf32>
    %cst_52 = arith.constant dense<0.000000e+00> : vector<8x128xf32>
    %180 = tpu.matmul %179, %1, %cst_52 {dimension_numbers = #tpu.dot_dimension_numbers<[1], [0], [0], [1], [0, 0, 1, 1], [], []>} : vector<8x128xf32>, vector<128x128xf32>, vector<8x128xf32> -> vector<8x128xf32>
    %181 = arith.addf %180, %7 : vector<8x128xf32>
    %182 = vector.broadcast %cst : f32 to vector<8x128xf32>
    %183 = arith.mulf %182, %181 : vector<8x128xf32>
    %184 = arith.addf %176, %183 : vector<8x128xf32>
    %c22_i32 = arith.constant 22 : i32
    %cst_53 = arith.constant dense<0.000000e+00> : vector<8x128xf32>
    %185 = tpu.matmul %184, %0, %cst_53 {dimension_numbers = #tpu.dot_dimension_numbers<[1], [0], [0], [1], [0, 0, 1, 1], [], []>} : vector<8x128xf32>, vector<128x128xf32>, vector<8x128xf32> -> vector<8x128xf32>
    %186 = arith.addf %185, %4 : vector<8x128xf32>
    %187 = math.tanh %186 : vector<8x128xf32>
    %cst_54 = arith.constant dense<0.000000e+00> : vector<8x128xf32>
    %188 = tpu.matmul %187, %1, %cst_54 {dimension_numbers = #tpu.dot_dimension_numbers<[1], [0], [0], [1], [0, 0, 1, 1], [], []>} : vector<8x128xf32>, vector<128x128xf32>, vector<8x128xf32> -> vector<8x128xf32>
    %189 = arith.addf %188, %7 : vector<8x128xf32>
    %190 = vector.broadcast %cst : f32 to vector<8x128xf32>
    %191 = arith.mulf %190, %189 : vector<8x128xf32>
    %192 = arith.addf %184, %191 : vector<8x128xf32>
    %c23_i32 = arith.constant 23 : i32
    %cst_55 = arith.constant dense<0.000000e+00> : vector<8x128xf32>
    %193 = tpu.matmul %192, %0, %cst_55 {dimension_numbers = #tpu.dot_dimension_numbers<[1], [0], [0], [1], [0, 0, 1, 1], [], []>} : vector<8x128xf32>, vector<128x128xf32>, vector<8x128xf32> -> vector<8x128xf32>
    %194 = arith.addf %193, %4 : vector<8x128xf32>
    %195 = math.tanh %194 : vector<8x128xf32>
    %cst_56 = arith.constant dense<0.000000e+00> : vector<8x128xf32>
    %196 = tpu.matmul %195, %1, %cst_56 {dimension_numbers = #tpu.dot_dimension_numbers<[1], [0], [0], [1], [0, 0, 1, 1], [], []>} : vector<8x128xf32>, vector<128x128xf32>, vector<8x128xf32> -> vector<8x128xf32>
    %197 = arith.addf %196, %7 : vector<8x128xf32>
    %198 = vector.broadcast %cst : f32 to vector<8x128xf32>
    %199 = arith.mulf %198, %197 : vector<8x128xf32>
    %200 = arith.addf %192, %199 : vector<8x128xf32>
    %c24_i32 = arith.constant 24 : i32
    %cst_57 = arith.constant dense<0.000000e+00> : vector<8x128xf32>
    %201 = tpu.matmul %200, %0, %cst_57 {dimension_numbers = #tpu.dot_dimension_numbers<[1], [0], [0], [1], [0, 0, 1, 1], [], []>} : vector<8x128xf32>, vector<128x128xf32>, vector<8x128xf32> -> vector<8x128xf32>
    %202 = arith.addf %201, %4 : vector<8x128xf32>
    %203 = math.tanh %202 : vector<8x128xf32>
    %cst_58 = arith.constant dense<0.000000e+00> : vector<8x128xf32>
    %204 = tpu.matmul %203, %1, %cst_58 {dimension_numbers = #tpu.dot_dimension_numbers<[1], [0], [0], [1], [0, 0, 1, 1], [], []>} : vector<8x128xf32>, vector<128x128xf32>, vector<8x128xf32> -> vector<8x128xf32>
    %205 = arith.addf %204, %7 : vector<8x128xf32>
    %206 = vector.broadcast %cst : f32 to vector<8x128xf32>
    %207 = arith.mulf %206, %205 : vector<8x128xf32>
    %208 = arith.addf %200, %207 : vector<8x128xf32>
    %c25_i32 = arith.constant 25 : i32
    %cst_59 = arith.constant dense<0.000000e+00> : vector<8x128xf32>
    %209 = tpu.matmul %208, %0, %cst_59 {dimension_numbers = #tpu.dot_dimension_numbers<[1], [0], [0], [1], [0, 0, 1, 1], [], []>} : vector<8x128xf32>, vector<128x128xf32>, vector<8x128xf32> -> vector<8x128xf32>
    %210 = arith.addf %209, %4 : vector<8x128xf32>
    %211 = math.tanh %210 : vector<8x128xf32>
    %cst_60 = arith.constant dense<0.000000e+00> : vector<8x128xf32>
    %212 = tpu.matmul %211, %1, %cst_60 {dimension_numbers = #tpu.dot_dimension_numbers<[1], [0], [0], [1], [0, 0, 1, 1], [], []>} : vector<8x128xf32>, vector<128x128xf32>, vector<8x128xf32> -> vector<8x128xf32>
    %213 = arith.addf %212, %7 : vector<8x128xf32>
    %214 = vector.broadcast %cst : f32 to vector<8x128xf32>
    %215 = arith.mulf %214, %213 : vector<8x128xf32>
    %216 = arith.addf %208, %215 : vector<8x128xf32>
    %c26_i32 = arith.constant 26 : i32
    %cst_61 = arith.constant dense<0.000000e+00> : vector<8x128xf32>
    %217 = tpu.matmul %216, %0, %cst_61 {dimension_numbers = #tpu.dot_dimension_numbers<[1], [0], [0], [1], [0, 0, 1, 1], [], []>} : vector<8x128xf32>, vector<128x128xf32>, vector<8x128xf32> -> vector<8x128xf32>
    %218 = arith.addf %217, %4 : vector<8x128xf32>
    %219 = math.tanh %218 : vector<8x128xf32>
    %cst_62 = arith.constant dense<0.000000e+00> : vector<8x128xf32>
    %220 = tpu.matmul %219, %1, %cst_62 {dimension_numbers = #tpu.dot_dimension_numbers<[1], [0], [0], [1], [0, 0, 1, 1], [], []>} : vector<8x128xf32>, vector<128x128xf32>, vector<8x128xf32> -> vector<8x128xf32>
    %221 = arith.addf %220, %7 : vector<8x128xf32>
    %222 = vector.broadcast %cst : f32 to vector<8x128xf32>
    %223 = arith.mulf %222, %221 : vector<8x128xf32>
    %224 = arith.addf %216, %223 : vector<8x128xf32>
    %c27_i32 = arith.constant 27 : i32
    %cst_63 = arith.constant dense<0.000000e+00> : vector<8x128xf32>
    %225 = tpu.matmul %224, %0, %cst_63 {dimension_numbers = #tpu.dot_dimension_numbers<[1], [0], [0], [1], [0, 0, 1, 1], [], []>} : vector<8x128xf32>, vector<128x128xf32>, vector<8x128xf32> -> vector<8x128xf32>
    %226 = arith.addf %225, %4 : vector<8x128xf32>
    %227 = math.tanh %226 : vector<8x128xf32>
    %cst_64 = arith.constant dense<0.000000e+00> : vector<8x128xf32>
    %228 = tpu.matmul %227, %1, %cst_64 {dimension_numbers = #tpu.dot_dimension_numbers<[1], [0], [0], [1], [0, 0, 1, 1], [], []>} : vector<8x128xf32>, vector<128x128xf32>, vector<8x128xf32> -> vector<8x128xf32>
    %229 = arith.addf %228, %7 : vector<8x128xf32>
    %230 = vector.broadcast %cst : f32 to vector<8x128xf32>
    %231 = arith.mulf %230, %229 : vector<8x128xf32>
    %232 = arith.addf %224, %231 : vector<8x128xf32>
    %c28_i32 = arith.constant 28 : i32
    %cst_65 = arith.constant dense<0.000000e+00> : vector<8x128xf32>
    %233 = tpu.matmul %232, %0, %cst_65 {dimension_numbers = #tpu.dot_dimension_numbers<[1], [0], [0], [1], [0, 0, 1, 1], [], []>} : vector<8x128xf32>, vector<128x128xf32>, vector<8x128xf32> -> vector<8x128xf32>
    %234 = arith.addf %233, %4 : vector<8x128xf32>
    %235 = math.tanh %234 : vector<8x128xf32>
    %cst_66 = arith.constant dense<0.000000e+00> : vector<8x128xf32>
    %236 = tpu.matmul %235, %1, %cst_66 {dimension_numbers = #tpu.dot_dimension_numbers<[1], [0], [0], [1], [0, 0, 1, 1], [], []>} : vector<8x128xf32>, vector<128x128xf32>, vector<8x128xf32> -> vector<8x128xf32>
    %237 = arith.addf %236, %7 : vector<8x128xf32>
    %238 = vector.broadcast %cst : f32 to vector<8x128xf32>
    %239 = arith.mulf %238, %237 : vector<8x128xf32>
    %240 = arith.addf %232, %239 : vector<8x128xf32>
    %c29_i32 = arith.constant 29 : i32
    %cst_67 = arith.constant dense<0.000000e+00> : vector<8x128xf32>
    %241 = tpu.matmul %240, %0, %cst_67 {dimension_numbers = #tpu.dot_dimension_numbers<[1], [0], [0], [1], [0, 0, 1, 1], [], []>} : vector<8x128xf32>, vector<128x128xf32>, vector<8x128xf32> -> vector<8x128xf32>
    %242 = arith.addf %241, %4 : vector<8x128xf32>
    %243 = math.tanh %242 : vector<8x128xf32>
    %cst_68 = arith.constant dense<0.000000e+00> : vector<8x128xf32>
    %244 = tpu.matmul %243, %1, %cst_68 {dimension_numbers = #tpu.dot_dimension_numbers<[1], [0], [0], [1], [0, 0, 1, 1], [], []>} : vector<8x128xf32>, vector<128x128xf32>, vector<8x128xf32> -> vector<8x128xf32>
    %245 = arith.addf %244, %7 : vector<8x128xf32>
    %246 = vector.broadcast %cst : f32 to vector<8x128xf32>
    %247 = arith.mulf %246, %245 : vector<8x128xf32>
    %248 = arith.addf %240, %247 : vector<8x128xf32>
    %c30_i32 = arith.constant 30 : i32
    %cst_69 = arith.constant dense<0.000000e+00> : vector<8x128xf32>
    %249 = tpu.matmul %248, %0, %cst_69 {dimension_numbers = #tpu.dot_dimension_numbers<[1], [0], [0], [1], [0, 0, 1, 1], [], []>} : vector<8x128xf32>, vector<128x128xf32>, vector<8x128xf32> -> vector<8x128xf32>
    %250 = arith.addf %249, %4 : vector<8x128xf32>
    %251 = math.tanh %250 : vector<8x128xf32>
    %cst_70 = arith.constant dense<0.000000e+00> : vector<8x128xf32>
    %252 = tpu.matmul %251, %1, %cst_70 {dimension_numbers = #tpu.dot_dimension_numbers<[1], [0], [0], [1], [0, 0, 1, 1], [], []>} : vector<8x128xf32>, vector<128x128xf32>, vector<8x128xf32> -> vector<8x128xf32>
    %253 = arith.addf %252, %7 : vector<8x128xf32>
    %254 = vector.broadcast %cst : f32 to vector<8x128xf32>
    %255 = arith.mulf %254, %253 : vector<8x128xf32>
    %256 = arith.addf %248, %255 : vector<8x128xf32>
    %c31_i32 = arith.constant 31 : i32
    %cst_71 = arith.constant dense<0.000000e+00> : vector<8x128xf32>
    %257 = tpu.matmul %256, %0, %cst_71 {dimension_numbers = #tpu.dot_dimension_numbers<[1], [0], [0], [1], [0, 0, 1, 1], [], []>} : vector<8x128xf32>, vector<128x128xf32>, vector<8x128xf32> -> vector<8x128xf32>
    %258 = arith.addf %257, %4 : vector<8x128xf32>
    %259 = math.tanh %258 : vector<8x128xf32>
    %cst_72 = arith.constant dense<0.000000e+00> : vector<8x128xf32>
    %260 = tpu.matmul %259, %1, %cst_72 {dimension_numbers = #tpu.dot_dimension_numbers<[1], [0], [0], [1], [0, 0, 1, 1], [], []>} : vector<8x128xf32>, vector<128x128xf32>, vector<8x128xf32> -> vector<8x128xf32>
    %261 = arith.addf %260, %7 : vector<8x128xf32>
    %262 = vector.broadcast %cst : f32 to vector<8x128xf32>
    %263 = arith.mulf %262, %261 : vector<8x128xf32>
    %264 = arith.addf %256, %263 : vector<8x128xf32>
    %c32_i32 = arith.constant 32 : i32
    %cst_73 = arith.constant dense<0.000000e+00> : vector<8x128xf32>
    %265 = tpu.matmul %264, %0, %cst_73 {dimension_numbers = #tpu.dot_dimension_numbers<[1], [0], [0], [1], [0, 0, 1, 1], [], []>} : vector<8x128xf32>, vector<128x128xf32>, vector<8x128xf32> -> vector<8x128xf32>
    %266 = arith.addf %265, %4 : vector<8x128xf32>
    %267 = math.tanh %266 : vector<8x128xf32>
    %cst_74 = arith.constant dense<0.000000e+00> : vector<8x128xf32>
    %268 = tpu.matmul %267, %1, %cst_74 {dimension_numbers = #tpu.dot_dimension_numbers<[1], [0], [0], [1], [0, 0, 1, 1], [], []>} : vector<8x128xf32>, vector<128x128xf32>, vector<8x128xf32> -> vector<8x128xf32>
    %269 = arith.addf %268, %7 : vector<8x128xf32>
    %270 = vector.broadcast %cst : f32 to vector<8x128xf32>
    %271 = arith.mulf %270, %269 : vector<8x128xf32>
    %272 = arith.addf %264, %271 : vector<8x128xf32>
    %c33_i32 = arith.constant 33 : i32
    %cst_75 = arith.constant dense<0.000000e+00> : vector<8x128xf32>
    %273 = tpu.matmul %272, %0, %cst_75 {dimension_numbers = #tpu.dot_dimension_numbers<[1], [0], [0], [1], [0, 0, 1, 1], [], []>} : vector<8x128xf32>, vector<128x128xf32>, vector<8x128xf32> -> vector<8x128xf32>
    %274 = arith.addf %273, %4 : vector<8x128xf32>
    %275 = math.tanh %274 : vector<8x128xf32>
    %cst_76 = arith.constant dense<0.000000e+00> : vector<8x128xf32>
    %276 = tpu.matmul %275, %1, %cst_76 {dimension_numbers = #tpu.dot_dimension_numbers<[1], [0], [0], [1], [0, 0, 1, 1], [], []>} : vector<8x128xf32>, vector<128x128xf32>, vector<8x128xf32> -> vector<8x128xf32>
    %277 = arith.addf %276, %7 : vector<8x128xf32>
    %278 = vector.broadcast %cst : f32 to vector<8x128xf32>
    %279 = arith.mulf %278, %277 : vector<8x128xf32>
    %280 = arith.addf %272, %279 : vector<8x128xf32>
    %c34_i32 = arith.constant 34 : i32
    %cst_77 = arith.constant dense<0.000000e+00> : vector<8x128xf32>
    %281 = tpu.matmul %280, %0, %cst_77 {dimension_numbers = #tpu.dot_dimension_numbers<[1], [0], [0], [1], [0, 0, 1, 1], [], []>} : vector<8x128xf32>, vector<128x128xf32>, vector<8x128xf32> -> vector<8x128xf32>
    %282 = arith.addf %281, %4 : vector<8x128xf32>
    %283 = math.tanh %282 : vector<8x128xf32>
    %cst_78 = arith.constant dense<0.000000e+00> : vector<8x128xf32>
    %284 = tpu.matmul %283, %1, %cst_78 {dimension_numbers = #tpu.dot_dimension_numbers<[1], [0], [0], [1], [0, 0, 1, 1], [], []>} : vector<8x128xf32>, vector<128x128xf32>, vector<8x128xf32> -> vector<8x128xf32>
    %285 = arith.addf %284, %7 : vector<8x128xf32>
    %286 = vector.broadcast %cst : f32 to vector<8x128xf32>
    %287 = arith.mulf %286, %285 : vector<8x128xf32>
    %288 = arith.addf %280, %287 : vector<8x128xf32>
    %c35_i32 = arith.constant 35 : i32
    %cst_79 = arith.constant dense<0.000000e+00> : vector<8x128xf32>
    %289 = tpu.matmul %288, %0, %cst_79 {dimension_numbers = #tpu.dot_dimension_numbers<[1], [0], [0], [1], [0, 0, 1, 1], [], []>} : vector<8x128xf32>, vector<128x128xf32>, vector<8x128xf32> -> vector<8x128xf32>
    %290 = arith.addf %289, %4 : vector<8x128xf32>
    %291 = math.tanh %290 : vector<8x128xf32>
    %cst_80 = arith.constant dense<0.000000e+00> : vector<8x128xf32>
    %292 = tpu.matmul %291, %1, %cst_80 {dimension_numbers = #tpu.dot_dimension_numbers<[1], [0], [0], [1], [0, 0, 1, 1], [], []>} : vector<8x128xf32>, vector<128x128xf32>, vector<8x128xf32> -> vector<8x128xf32>
    %293 = arith.addf %292, %7 : vector<8x128xf32>
    %294 = vector.broadcast %cst : f32 to vector<8x128xf32>
    %295 = arith.mulf %294, %293 : vector<8x128xf32>
    %296 = arith.addf %288, %295 : vector<8x128xf32>
    %c36_i32 = arith.constant 36 : i32
    %cst_81 = arith.constant dense<0.000000e+00> : vector<8x128xf32>
    %297 = tpu.matmul %296, %0, %cst_81 {dimension_numbers = #tpu.dot_dimension_numbers<[1], [0], [0], [1], [0, 0, 1, 1], [], []>} : vector<8x128xf32>, vector<128x128xf32>, vector<8x128xf32> -> vector<8x128xf32>
    %298 = arith.addf %297, %4 : vector<8x128xf32>
    %299 = math.tanh %298 : vector<8x128xf32>
    %cst_82 = arith.constant dense<0.000000e+00> : vector<8x128xf32>
    %300 = tpu.matmul %299, %1, %cst_82 {dimension_numbers = #tpu.dot_dimension_numbers<[1], [0], [0], [1], [0, 0, 1, 1], [], []>} : vector<8x128xf32>, vector<128x128xf32>, vector<8x128xf32> -> vector<8x128xf32>
    %301 = arith.addf %300, %7 : vector<8x128xf32>
    %302 = vector.broadcast %cst : f32 to vector<8x128xf32>
    %303 = arith.mulf %302, %301 : vector<8x128xf32>
    %304 = arith.addf %296, %303 : vector<8x128xf32>
    %c37_i32 = arith.constant 37 : i32
    %cst_83 = arith.constant dense<0.000000e+00> : vector<8x128xf32>
    %305 = tpu.matmul %304, %0, %cst_83 {dimension_numbers = #tpu.dot_dimension_numbers<[1], [0], [0], [1], [0, 0, 1, 1], [], []>} : vector<8x128xf32>, vector<128x128xf32>, vector<8x128xf32> -> vector<8x128xf32>
    %306 = arith.addf %305, %4 : vector<8x128xf32>
    %307 = math.tanh %306 : vector<8x128xf32>
    %cst_84 = arith.constant dense<0.000000e+00> : vector<8x128xf32>
    %308 = tpu.matmul %307, %1, %cst_84 {dimension_numbers = #tpu.dot_dimension_numbers<[1], [0], [0], [1], [0, 0, 1, 1], [], []>} : vector<8x128xf32>, vector<128x128xf32>, vector<8x128xf32> -> vector<8x128xf32>
    %309 = arith.addf %308, %7 : vector<8x128xf32>
    %310 = vector.broadcast %cst : f32 to vector<8x128xf32>
    %311 = arith.mulf %310, %309 : vector<8x128xf32>
    %312 = arith.addf %304, %311 : vector<8x128xf32>
    %c38_i32 = arith.constant 38 : i32
    %cst_85 = arith.constant dense<0.000000e+00> : vector<8x128xf32>
    %313 = tpu.matmul %312, %0, %cst_85 {dimension_numbers = #tpu.dot_dimension_numbers<[1], [0], [0], [1], [0, 0, 1, 1], [], []>} : vector<8x128xf32>, vector<128x128xf32>, vector<8x128xf32> -> vector<8x128xf32>
    %314 = arith.addf %313, %4 : vector<8x128xf32>
    %315 = math.tanh %314 : vector<8x128xf32>
    %cst_86 = arith.constant dense<0.000000e+00> : vector<8x128xf32>
    %316 = tpu.matmul %315, %1, %cst_86 {dimension_numbers = #tpu.dot_dimension_numbers<[1], [0], [0], [1], [0, 0, 1, 1], [], []>} : vector<8x128xf32>, vector<128x128xf32>, vector<8x128xf32> -> vector<8x128xf32>
    %317 = arith.addf %316, %7 : vector<8x128xf32>
    %318 = vector.broadcast %cst : f32 to vector<8x128xf32>
    %319 = arith.mulf %318, %317 : vector<8x128xf32>
    %320 = arith.addf %312, %319 : vector<8x128xf32>
    %c39_i32 = arith.constant 39 : i32
    %cst_87 = arith.constant dense<0.000000e+00> : vector<8x128xf32>
    %321 = tpu.matmul %320, %0, %cst_87 {dimension_numbers = #tpu.dot_dimension_numbers<[1], [0], [0], [1], [0, 0, 1, 1], [], []>} : vector<8x128xf32>, vector<128x128xf32>, vector<8x128xf32> -> vector<8x128xf32>
    %322 = arith.addf %321, %4 : vector<8x128xf32>
    %323 = math.tanh %322 : vector<8x128xf32>
    %cst_88 = arith.constant dense<0.000000e+00> : vector<8x128xf32>
    %324 = tpu.matmul %323, %1, %cst_88 {dimension_numbers = #tpu.dot_dimension_numbers<[1], [0], [0], [1], [0, 0, 1, 1], [], []>} : vector<8x128xf32>, vector<128x128xf32>, vector<8x128xf32> -> vector<8x128xf32>
    %325 = arith.addf %324, %7 : vector<8x128xf32>
    %326 = vector.broadcast %cst : f32 to vector<8x128xf32>
    %327 = arith.mulf %326, %325 : vector<8x128xf32>
    %328 = arith.addf %320, %327 : vector<8x128xf32>
    %c0_89 = arith.constant 0 : index
    %c0_90 = arith.constant 0 : index
    %329 = vector.load %arg6[%c0_89, %c0_90] : memref<8x128xf32, #tpu.memory_space<vmem>>, vector<8x128xf32>
    tpu.vector_store %arg6[%c0_89, %c0_90], %328 {strides = array<i32>} : memref<8x128xf32, #tpu.memory_space<vmem>>, vector<8x128xf32>,
    return
  }
  func.func @transform_0(%arg0: i32) -> (i32, i32) {
    %c0_i32 = arith.constant 0 : i32
    %c0_i32_0 = arith.constant 0 : i32
    return %arg0, %c0_i32 : i32, i32
  }
  func.func @transform_1(%arg0: i32) -> (i32, i32) {
    %c0_i32 = arith.constant 0 : i32
    %c0_i32_0 = arith.constant 0 : i32
    %c0_i32_1 = arith.constant 0 : i32
    return %c0_i32, %c0_i32_0 : i32, i32
  }
  func.func @transform_2(%arg0: i32) -> (i32, i32) {
    %c0_i32 = arith.constant 0 : i32
    %c0_i32_0 = arith.constant 0 : i32
    %c0_i32_1 = arith.constant 0 : i32
    return %c0_i32, %c0_i32_0 : i32, i32
  }
  func.func @transform_3(%arg0: i32) -> (i32, i32) {
    %c0_i32 = arith.constant 0 : i32
    %c0_i32_0 = arith.constant 0 : i32
    %c0_i32_1 = arith.constant 0 : i32
    return %c0_i32, %c0_i32_0 : i32, i32
  }
  func.func @transform_4(%arg0: i32) -> (i32, i32) {
    %c0_i32 = arith.constant 0 : i32
    %c0_i32_0 = arith.constant 0 : i32
    %c0_i32_1 = arith.constant 0 : i32
    return %c0_i32, %c0_i32_0 : i32, i32
  }
  func.func @transform_5(%arg0: i32) -> (i32, i32) {
    %c0_i32 = arith.constant 0 : i32
    %c0_i32_0 = arith.constant 0 : i32
    return %arg0, %c0_i32 : i32, i32
  }
}

</mosaic_0001>

<llo_original>
// kernel: tpu_custom_call.1
$region0: #{tpu_custom_call.1}
  #allocation0 [shape = 'u32[]', space=smem, size = 0x4, offset = 0x4, fixed_abs, tag = 'smem constant byte address 0x4 - core index']
  #allocation1 [shape = 'u32[144,128]{1,0:T(1,128)}', space=vmem, size = 0x12000, scoped, tag = 'internal scratch']
  %s0 = inlined_call_operand.hbm [shape: f32[8,128], index: 0, kind: input, shape index: {}]
  %s1 = inlined_call_operand.hbm [shape: f32[128,128], index: 1, kind: input, shape index: {}]
  %s2 = inlined_call_operand.vmem [shape: f32[1,128], index: 2, kind: input, shape index: {}]
  %s3 = inlined_call_operand.hbm [shape: f32[128,128], index: 3, kind: input, shape index: {}]
  %s4 = inlined_call_operand.vmem [shape: f32[1,128], index: 4, kind: input, shape index: {}]
  %s5 = inlined_call_operand.hbm [shape: f32[8,128], index: 5, kind: output, shape index: {}]
  %s6 = sld [smem:[#allocation0]]
  $region42: #{tpu_custom_call.1} parent=0
    _
  %s8 = ssub.s32 1, %s6
  %s9 = scalar_select 0, %s8, %s6
  $region1: #{tpu_custom_call.1} parent=0
    #allocation2 [shape = 'u8[4096]{0}', space=vmem, size = 0x1000, scoped, tag = 'input window, operand 0, single buffered']
    #allocation3 [shape = 's32[1]{0}', space=sflag, size = 0x4, scoped, tag = 'scoped memory for tpu_custom_call.1']
    #allocation4 [shape = 's32[1]{0}', space=sflag, size = 0x4, scoped, tag = 'scoped memory for tpu_custom_call.1']
    #allocation5 [shape = 'u8[65536]{0}', space=vmem, size = 0x10000, scoped, tag = 'input window, operand 1, single buffered']
    #allocation6 [shape = 's32[1]{0}', space=sflag, size = 0x4, scoped, tag = 'scoped memory for tpu_custom_call.1']
    #allocation7 [shape = 'u8[65536]{0}', space=vmem, size = 0x10000, scoped, tag = 'input window, operand 3, single buffered']
    #allocation8 [shape = 'u8[4096]{0}', space=vmem, size = 0x1000, scoped, tag = 'output window, operand 0, single buffered']
    %10 = vsyncpa [#allocation3], 0
    %11 = vsyncpa [#allocation6], 0
    %12 = vsyncpa [#allocation4], 0
    // Predicated region
    $region2: #{tpu_custom_call.1} parent=1 // pred_check
      _
    $region3: #{tpu_custom_call.1} parent=1 // pred_check_branch
      %14 = sbr.rel (0) target = $region5
    $region4: #{tpu_custom_call.1} parent=1 // pred_region
      %s16 = ssub.s32 128, 128
      %17 = vsyncadd [#allocation3], %s16
      %s19 = sshll.u32 [#allocation2], 4
      %s20 = int_to_ptr.vmem [resolvable:$true] %s19
      %22 = dma.hbm_to_vmem [thread:$0]  %s0, 128, %s20, [#allocation3]
    $region5: #{tpu_custom_call.1} parent=1 // pred_fallthru
      _
    // Predicated region
    $region6: #{tpu_custom_call.1} parent=1 // pred_check
      _
    $region7: #{tpu_custom_call.1} parent=1 // pred_check_branch
      %24 = sbr.rel (0) target = $region9
    $region8: #{tpu_custom_call.1} parent=1 // pred_region
      %s26 = ssub.s32 2048, 2048
      %27 = vsyncadd [#allocation6], %s26
      %s28 = sshll.u32 [#allocation5], 4
      %s29 = int_to_ptr.vmem [resolvable:$true] %s28
      %34 = dma.hbm_to_vmem [thread:$0]  %s1, 2048, %s29, [#allocation6], 128, 128, 8
    $region9: #{tpu_custom_call.1} parent=1 // pred_fallthru
      _
    // Predicated region
    $region10: #{tpu_custom_call.1} parent=1 // pred_check
      _
    $region11: #{tpu_custom_call.1} parent=1 // pred_check_branch
      %36 = sbr.rel (0) target = $region13
    $region12: #{tpu_custom_call.1} parent=1 // pred_region
      _
    $region13: #{tpu_custom_call.1} parent=1 // pred_fallthru
      _
    // Predicated region
    $region14: #{tpu_custom_call.1} parent=1 // pred_check
      _
    $region15: #{tpu_custom_call.1} parent=1 // pred_check_branch
      %38 = sbr.rel (0) target = $region17
    $region16: #{tpu_custom_call.1} parent=1 // pred_region
      %s40 = ssub.s32 2048, 2048
      %41 = vsyncadd [#allocation6], %s40
      %s42 = sshll.u32 [#allocation7], 4
      %s43 = int_to_ptr.vmem [resolvable:$true] %s42
      %48 = dma.hbm_to_vmem [thread:$0]  %s3, 2048, %s43, [#allocation6], 128, 128, 8
    $region17: #{tpu_custom_call.1} parent=1 // pred_fallthru
      _
    // Predicated region
    $region18: #{tpu_custom_call.1} parent=1 // pred_check
      _
    $region19: #{tpu_custom_call.1} parent=1 // pred_check_branch
      %50 = sbr.rel (0) target = $region21
    $region20: #{tpu_custom_call.1} parent=1 // pred_region
      _
    $region21: #{tpu_custom_call.1} parent=1 // pred_fallthru
      _
    // Predicated region
    $region22: #{tpu_custom_call.1} parent=1 // pred_check
      _
    $region23: #{tpu_custom_call.1} parent=1 // pred_check_branch
      %52 = sbr.rel (0) target = $region25
    $region24: #{tpu_custom_call.1} parent=1 // pred_region
      %53 = dma.done [#allocation3], 128
    $region25: #{tpu_custom_call.1} parent=1 // pred_fallthru
      _
    // Predicated region
    $region26: #{tpu_custom_call.1} parent=1 // pred_check
      _
    $region27: #{tpu_custom_call.1} parent=1 // pred_check_branch
      %55 = sbr.rel (0) target = $region29
    $region28: #{tpu_custom_call.1} parent=1 // pred_region
      %56 = dma.done [#allocation6], 2048
    $region29: #{tpu_custom_call.1} parent=1 // pred_fallthru
      _
    // Predicated region
    $region30: #{tpu_custom_call.1} parent=1 // pred_check
      _
    $region31: #{tpu_custom_call.1} parent=1 // pred_check_branch
      %58 = sbr.rel (0) target = $region33
    $region32: #{tpu_custom_call.1} parent=1 // pred_region
      %59 = dma.done [#allocation6], 2048
    $region33: #{tpu_custom_call.1} parent=1 // pred_fallthru
      _
    %v60 = vld [vmem:[#allocation5] sm:$0xff]
    %v61 = vld [vmem:[#allocation5 + $0x8] sm:$0xff]
    %v62 = vld [vmem:[#allocation5 + $0x10] sm:$0xff]
    %v63 = vld [vmem:[#allocation5 + $0x18] sm:$0xff]
    %v64 = vld [vmem:[#allocation5 + $0x20] sm:$0xff]
    %v65 = vld [vmem:[#allocation5 + $0x28] sm:$0xff]
    %v66 = vld [vmem:[#allocation5 + $0x30] sm:$0xff]
    %v67 = vld [vmem:[#allocation5 + $0x38] sm:$0xff]
    %v68 = vld [vmem:[#allocation5 + $0x40] sm:$0xff]
    %v69 = vld [vmem:[#allocation5 + $0x48] sm:$0xff]
    %v70 = vld [vmem:[#allocation5 + $0x50] sm:$0xff]
    %v71 = vld [vmem:[#allocation5 + $0x58] sm:$0xff]
    %v72 = vld [vmem:[#allocation5 + $0x60] sm:$0xff]
    %v73 = vld [vmem:[#allocation5 + $0x68] sm:$0xff]
    %v74 = vld [vmem:[#allocation5 + $0x70] sm:$0xff]
    %v75 = vld [vmem:[#allocation5 + $0x78] sm:$0xff]
    %v76 = vld [vmem:[#allocation7] sm:$0xff]
    %v77 = vld [vmem:[#allocation7 + $0x8] sm:$0xff]
    %v78 = vld [vmem:[#allocation7 + $0x10] sm:$0xff]
    %v79 = vld [vmem:[#allocation7 + $0x18] sm:$0xff]
    %v80 = vld [vmem:[#allocation7 + $0x20] sm:$0xff]
    %v81 = vld [vmem:[#allocation7 + $0x28] sm:$0xff]
    %v82 = vld [vmem:[#allocation7 + $0x30] sm:$0xff]
    %v83 = vld [vmem:[#allocation7 + $0x38] sm:$0xff]
    %v84 = vld [vmem:[#allocation7 + $0x40] sm:$0xff]
    %v85 = vld [vmem:[#allocation7 + $0x48] sm:$0xff]
    %v86 = vld [vmem:[#allocation7 + $0x50] sm:$0xff]
    %v87 = vld [vmem:[#allocation7 + $0x58] sm:$0xff]
    %v88 = vld [vmem:[#allocation7 + $0x60] sm:$0xff]
    %v89 = vld [vmem:[#allocation7 + $0x68] sm:$0xff]
    %v90 = vld [vmem:[#allocation7 + $0x70] sm:$0xff]
    %v91 = vld [vmem:[#allocation7 + $0x78] sm:$0xff]
    %v92 = vld [vmem:[%s2] sm:$0x1]
    %v94 = vlaneseq
    %v95 = vshrl.u32 %v94, 7
    %v96 = vsub.s32 0, %v95
    %v97 = vrot.slane %v92, %v96
    %v99 = vld [vmem:[%s4] sm:$0x1]
    %v101 = vlaneseq
    %v102 = vshrl.u32 %v101, 7
    %v103 = vsub.s32 0, %v102
    %v104 = vrot.slane %v99, %v103
    %v106 = vld [vmem:[#allocation2] sm:$0xff]
    %107 = vmatprep.subr.mxu0 0.0
    %108 = vmatpush1.msra.mxu0 %v75
    %109 = vmatprep.subr.mxu0 0.0
    %110 = vmatpush1.msra.mxu0 %v74
    %111 = vmatprep.subr.mxu0 0.0
    %112 = vmatpush1.msra.mxu0 %v73
    %113 = vmatprep.subr.mxu0 0.0
    %114 = vmatpush1.msra.mxu0 %v72
    %115 = vmatprep.subr.mxu0 0.0
    %116 = vmatpush1.msra.mxu0 %v71
    %117 = vmatprep.subr.mxu0 0.0
    %118 = vmatpush1.msra.mxu0 %v70
    %119 = vmatprep.subr.mxu0 0.0
    %120 = vmatpush1.msra.mxu0 %v69
    %121 = vmatprep.subr.mxu0 0.0
    %122 = vmatpush1.msra.mxu0 %v68
    %123 = vmatprep.subr.mxu0 0.0
    %124 = vmatpush1.msra.mxu0 %v67
    %125 = vmatprep.subr.mxu0 0.0
    %126 = vmatpush1.msra.mxu0 %v66
    %127 = vmatprep.subr.mxu0 0.0
    %128 = vmatpush1.msra.mxu0 %v65
    %129 = vmatprep.subr.mxu0 0.0
    %130 = vmatpush1.msra.mxu0 %v64
    %131 = vmatprep.subr.mxu0 0.0
    %132 = vmatpush1.msra.mxu0 %v63
    %133 = vmatprep.subr.mxu0 0.0
    %134 = vmatpush1.msra.mxu0 %v62
    %135 = vmatprep.subr.mxu0 0.0
    %136 = vmatpush1.msra.mxu0 %v61
    %137 = vmatprep.subr.mxu0 0.0
    %138 = vmatpush1.msra.mxu0 %v60
    %139 = vmatprep.subr.mxu0 0.0
    %140 = vmatpush2.msra.mxu0 0.0
    %141 = vmatprep.subr.mxu0 0.0
    %142 = vmatpush2.msra.mxu0 0.0
    %143 = vmatprep.subr.mxu0 0.0
    %144 = vmatpush2.msra.mxu0 0.0
    %145 = vmatprep.subr.mxu0 0.0
    %146 = vmatpush2.msra.mxu0 0.0
    %147 = vmatprep.subr.mxu0 0.0
    %148 = vmatpush2.msra.mxu0 0.0
    %149 = vmatprep.subr.mxu0 0.0
    %150 = vmatpush2.msra.mxu0 0.0
    %151 = vmatprep.subr.mxu0 0.0
    %152 = vmatpush2.msra.mxu0 0.0
    %153 = vmatprep.subr.mxu0 0.0
    %154 = vmatpush2.msra.mxu0 0.0
    %155 = vmatprep.subr.mxu0 0.0
    %156 = vmatpush2.msra.mxu0 0.0
    %157 = vmatprep.subr.mxu0 0.0
    %158 = vmatpush2.msra.mxu0 0.0
    %159 = vmatprep.subr.mxu0 0.0
    %160 = vmatpush2.msra.mxu0 0.0
    %161 = vmatprep.subr.mxu0 0.0
    %162 = vmatpush2.msra.mxu0 0.0
    %163 = vmatprep.subr.mxu0 0.0
    %164 = vmatpush2.msra.mxu0 0.0
    %165 = vmatprep.subr.mxu0 0.0
    %166 = vmatpush2.msra.mxu0 0.0
    %167 = vmatprep.subr.mxu0 0.0
    %168 = vmatpush2.msra.mxu0 0.0
    %169 = vmatprep.subr.mxu0 0.0
    %170 = vmatpush2.msra.mxu0 0.0
    %171 = vmatprep.mubr.f32.mxu0 0.0
    %172 = vmatmul.mubr.f32.gmra.mxu0 %v106
    %v173 = vpop.f32.mrf.mxu0
    %v174 = vadd.f32 %v97, %v173
    %v175 = vpop.f32.mrf.mxu0
    %176 = vdwg.mxu0
    %v177 = vtanh.pop %v174
    %178 = vmatprep.subr.mxu0 0.0
    %179 = vmatpush1.msra.mxu0 %v91
    %180 = vmatprep.subr.mxu0 0.0
    %181 = vmatpush1.msra.mxu0 %v90
    %182 = vmatprep.subr.mxu0 0.0
    %183 = vmatpush1.msra.mxu0 %v89
    %184 = vmatprep.subr.mxu0 0.0
    %185 = vmatpush1.msra.mxu0 %v88
    %186 = vmatprep.subr.mxu0 0.0
    %187 = vmatpush1.msra.mxu0 %v87
    %188 = vmatprep.subr.mxu0 0.0
    %189 = vmatpush1.msra.mxu0 %v86
    %190 = vmatprep.subr.mxu0 0.0
    %191 = vmatpush1.msra.mxu0 %v85
    %192 = vmatprep.subr.mxu0 0.0
    %193 = vmatpush1.msra.mxu0 %v84
    %194 = vmatprep.subr.mxu0 0.0
    %195 = vmatpush1.msra.mxu0 %v83
    %196 = vmatprep.subr.mxu0 0.0
    %197 = vmatpush1.msra.mxu0 %v82
    %198 = vmatprep.subr.mxu0 0.0
    %199 = vmatpush1.msra.mxu0 %v81
    %200 = vmatprep.subr.mxu0 0.0
    %201 = vmatpush1.msra.mxu0 %v80
    %202 = vmatprep.subr.mxu0 0.0
    %203 = vmatpush1.msra.mxu0 %v79
    %204 = vmatprep.subr.mxu0 0.0
    %205 = vmatpush1.msra.mxu0 %v78
    %206 = vmatprep.subr.mxu0 0.0
    %207 = vmatpush1.msra.mxu0 %v77
    %208 = vmatprep.subr.mxu0 0.0
    %209 = vmatpush1.msra.mxu0 %v76
    %210 = vmatprep.subr.mxu0 0.0
    %211 = vmatpush2.msra.mxu0 0.0
    %212 = vmatprep.subr.mxu0 0.0
    %213 = vmatpush2.msra.mxu0 0.0
    %214 = vmatprep.subr.mxu0 0.0
    %215 = vmatpush2.msra.mxu0 0.0
    %216 = vmatprep.subr.mxu0 0.0
    %217 = vmatpush2.msra.mxu0 0.0
    %218 = vmatprep.subr.mxu0 0.0
    %219 = vmatpush2.msra.mxu0 0.0
    %220 = vmatprep.subr.mxu0 0.0
    %221 = vmatpush2.msra.mxu0 0.0
    %222 = vmatprep.subr.mxu0 0.0
    %223 = vmatpush2.msra.mxu0 0.0
    %224 = vmatprep.subr.mxu0 0.0
    %225 = vmatpush2.msra.mxu0 0.0
    %226 = vmatprep.subr.mxu0 0.0
    %227 = vmatpush2.msra.mxu0 0.0
    %228 = vmatprep.subr.mxu0 0.0
    %229 = vmatpush2.msra.mxu0 0.0
    %230 = vmatprep.subr.mxu0 0.0
    %231 = vmatpush2.msra.mxu0 0.0
    %232 = vmatprep.subr.mxu0 0.0
    %233 = vmatpush2.msra.mxu0 0.0
    %234 = vmatprep.subr.mxu0 0.0
    %235 = vmatpush2.msra.mxu0 0.0
    %236 = vmatprep.subr.mxu0 0.0
    %237 = vmatpush2.msra.mxu0 0.0
    %238 = vmatprep.subr.mxu0 0.0
    %239 = vmatpush2.msra.mxu0 0.0
    %240 = vmatprep.subr.mxu0 0.0
    %241 = vmatpush2.msra.mxu0 0.0
    %242 = vmatprep.mubr.f32.mxu0 0.0
    %243 = vmatmul.mubr.f32.gmra.mxu0 %v177
    %v244 = vpop.f32.mrf.mxu0
    %v245 = vadd.f32 %v104, %v244
    %v246 = vpop.f32.mrf.mxu0
    %247 = vdwg.mxu0
    %v248 = vmul.f32 %v245, 0.1
    %v249 = vadd.f32 %v106, %v248
    %250 = vmatprep.subr.mxu0 0.0
    %251 = vmatpush1.msra.mxu0 %v75
    %252 = vmatprep.subr.mxu0 0.0
    %253 = vmatpush1.msra.mxu0 %v74
    %254 = vmatprep.subr.mxu0 0.0
    %255 = vmatpush1.msra.mxu0 %v73
    %256 = vmatprep.subr.mxu0 0.0
    %257 = vmatpush1.msra.mxu0 %v72
    %258 = vmatprep.subr.mxu0 0.0
    %259 = vmatpush1.msra.mxu0 %v71
    %260 = vmatprep.subr.mxu0 0.0
    %261 = vmatpush1.msra.mxu0 %v70
    %262 = vmatprep.subr.mxu0 0.0
    %263 = vmatpush1.msra.mxu0 %v69
    %264 = vmatprep.subr.mxu0 0.0
    %265 = vmatpush1.msra.mxu0 %v68
    %266 = vmatprep.subr.mxu0 0.0
    %267 = vmatpush1.msra.mxu0 %v67
    %268 = vmatprep.subr.mxu0 0.0
    %269 = vmatpush1.msra.mxu0 %v66
    %270 = vmatprep.subr.mxu0 0.0
    %271 = vmatpush1.msra.mxu0 %v65
    %272 = vmatprep.subr.mxu0 0.0
    %273 = vmatpush1.msra.mxu0 %v64
    %274 = vmatprep.subr.mxu0 0.0
    %275 = vmatpush1.msra.mxu0 %v63
    %276 = vmatprep.subr.mxu0 0.0
    %277 = vmatpush1.msra.mxu0 %v62
    %278 = vmatprep.subr.mxu0 0.0
    %279 = vmatpush1.msra.mxu0 %v61
    %280 = vmatprep.subr.mxu0 0.0
    %281 = vmatpush1.msra.mxu0 %v60
    %282 = vmatprep.subr.mxu0 0.0
    %283 = vmatpush2.msra.mxu0 0.0
    %284 = vmatprep.subr.mxu0 0.0
    %285 = vmatpush2.msra.mxu0 0.0
    %286 = vmatprep.subr.mxu0 0.0
    %287 = vmatpush2.msra.mxu0 0.0
    %288 = vmatprep.subr.mxu0 0.0
    %289 = vmatpush2.msra.mxu0 0.0
    %290 = vmatprep.subr.mxu0 0.0
    %291 = vmatpush2.msra.mxu0 0.0
    %292 = vmatprep.subr.mxu0 0.0
    %293 = vmatpush2.msra.mxu0 0.0
    %294 = vmatprep.subr.mxu0 0.0
    %295 = vmatpush2.msra.mxu0 0.0
    %296 = vmatprep.subr.mxu0 0.0
    %297 = vmatpush2.msra.mxu0 0.0
    %298 = vmatprep.subr.mxu0 0.0
    %299 = vmatpush2.msra.mxu0 0.0
    %300 = vmatprep.subr.mxu0 0.0
    %301 = vmatpush2.msra.mxu0 0.0
    %302 = vmatprep.subr.mxu0 0.0
    %303 = vmatpush2.msra.mxu0 0.0
    %304 = vmatprep.subr.mxu0 0.0
    %305 = vmatpush2.msra.mxu0 0.0
    %306 = vmatprep.subr.mxu0 0.0
    %307 = vmatpush2.msra.mxu0 0.0
    %308 = vmatprep.subr.mxu0 0.0
    %309 = vmatpush2.msra.mxu0 0.0
    %310 = vmatprep.subr.mxu0 0.0
    %311 = vmatpush2.msra.mxu0 0.0
    %312 = vmatprep.subr.mxu0 0.0
    %313 = vmatpush2.msra.mxu0 0.0
    %314 = vmatprep.mubr.f32.mxu0 0.0
    %315 = vmatmul.mubr.f32.gmra.mxu0 %v249
    %v316 = vpop.f32.mrf.mxu0
    %v317 = vadd.f32 %v97, %v316
    %v318 = vpop.f32.mrf.mxu0
    %319 = vdwg.mxu0
    %v320 = vtanh.pop %v317
    %321 = vmatprep.subr.mxu0 0.0
    %322 = vmatpush1.msra.mxu0 %v91
    %323 = vmatprep.subr.mxu0 0.0
    %324 = vmatpush1.msra.mxu0 %v90
    %325 = vmatprep.subr.mxu0 0.0
    %326 = vmatpush1.msra.mxu0 %v89
    %327 = vmatprep.subr.mxu0 0.0
    %328 = vmatpush1.msra.mxu0 %v88
    %329 = vmatprep.subr.mxu0 0.0
    %330 = vmatpush1.msra.mxu0 %v87
    %331 = vmatprep.subr.mxu0 0.0
    %332 = vmatpush1.msra.mxu0 %v86
    %333 = vmatprep.subr.mxu0 0.0
    %334 = vmatpush1.msra.mxu0 %v85
    %335 = vmatprep.subr.mxu0 0.0
    %336 = vmatpush1.msra.mxu0 %v84
    %337 = vmatprep.subr.mxu0 0.0
    %338 = vmatpush1.msra.mxu0 %v83
    %339 = vmatprep.subr.mxu0 0.0
    %340 = vmatpush1.msra.mxu0 %v82
    %341 = vmatprep.subr.mxu0 0.0
    %342 = vmatpush1.msra.mxu0 %v81
    %343 = vmatprep.subr.mxu0 0.0
    %344 = vmatpush1.msra.mxu0 %v80
    %345 = vmatprep.subr.mxu0 0.0
    %346 = vmatpush1.msra.mxu0 %v79
    %347 = vmatprep.subr.mxu0 0.0
    %348 = vmatpush1.msra.mxu0 %v78
    %349 = vmatprep.subr.mxu0 0.0
    %350 = vmatpush1.msra.mxu0 %v77
    %351 = vmatprep.subr.mxu0 0.0
    %352 = vmatpush1.msra.mxu0 %v76
    %353 = vmatprep.subr.mxu0 0.0
    %354 = vmatpush2.msra.mxu0 0.0
    %355 = vmatprep.subr.mxu0 0.0
    %356 = vmatpush2.msra.mxu0 0.0
    %357 = vmatprep.subr.mxu0 0.0
    %358 = vmatpush2.msra.mxu0 0.0
    %359 = vmatprep.subr.mxu0 0.0
    %360 = vmatpush2.msra.mxu0 0.0
    %361 = vmatprep.subr.mxu0 0.0
    %362 = vmatpush2.msra.mxu0 0.0
    %363 = vmatprep.subr.mxu0 0.0
    %364 = vmatpush2.msra.mxu0 0.0
    %365 = vmatprep.subr.mxu0 0.0
    %366 = vmatpush2.msra.mxu0 0.0
    %367 = vmatprep.subr.mxu0 0.0
    %368 = vmatpush2.msra.mxu0 0.0
    %369 = vmatprep.subr.mxu0 0.0
    %370 = vmatpush2.msra.mxu0 0.0
    %371 = vmatprep.subr.mxu0 0.0
    %372 = vmatpush2.msra.mxu0 0.0
    %373 = vmatprep.subr.mxu0 0.0
    %374 = vmatpush2.msra.mxu0 0.0
    %375 = vmatprep.subr.mxu0 0.0
    %376 = vmatpush2.msra.mxu0 0.0
    %377 = vmatprep.subr.mxu0 0.0
    %378 = vmatpush2.msra.mxu0 0.0
    %379 = vmatprep.subr.mxu0 0.0
    %380 = vmatpush2.msra.mxu0 0.0
    %381 = vmatprep.subr.mxu0 0.0
    %382 = vmatpush2.msra.mxu0 0.0
    %383 = vmatprep.subr.mxu0 0.0
    %384 = vmatpush2.msra.mxu0 0.0
    %385 = vmatprep.mubr.f32.mxu0 0.0
    %386 = vmatmul.mubr.f32.gmra.mxu0 %v320
    %v387 = vpop.f32.mrf.mxu0
    %v388 = vadd.f32 %v104, %v387
    %v389 = vpop.f32.mrf.mxu0
    %390 = vdwg.mxu0
    %v391 = vmul.f32 %v388, 0.1
    %v392 = vadd.f32 %v249, %v391
    %393 = vmatprep.subr.mxu0 0.0
    %394 = vmatpush1.msra.mxu0 %v75
    %395 = vmatprep.subr.mxu0 0.0
    %396 = vmatpush1.msra.mxu0 %v74
    %397 = vmatprep.subr.mxu0 0.0
    %398 = vmatpush1.msra.mxu0 %v73
    %399 = vmatprep.subr.mxu0 0.0
    %400 = vmatpush1.msra.mxu0 %v72
    %401 = vmatprep.subr.mxu0 0.0
    %402 = vmatpush1.msra.mxu0 %v71
    %403 = vmatprep.subr.mxu0 0.0
    %404 = vmatpush1.msra.mxu0 %v70
    %405 = vmatprep.subr.mxu0 0.0
    %406 = vmatpush1.msra.mxu0 %v69
    %407 = vmatprep.subr.mxu0 0.0
    %408 = vmatpush1.msra.mxu0 %v68
    %409 = vmatprep.subr.mxu0 0.0
    %410 = vmatpush1.msra.mxu0 %v67
    %411 = vmatprep.subr.mxu0 0.0
    %412 = vmatpush1.msra.mxu0 %v66
    %413 = vmatprep.subr.mxu0 0.0
    %414 = vmatpush1.msra.mxu0 %v65
    %415 = vmatprep.subr.mxu0 0.0
    %416 = vmatpush1.msra.mxu0 %v64
    %417 = vmatprep.subr.mxu0 0.0
    %418 = vmatpush1.msra.mxu0 %v63
    %419 = vmatprep.subr.mxu0 0.0
    %420 = vmatpush1.msra.mxu0 %v62
    %421 = vmatprep.subr.mxu0 0.0
    %422 = vmatpush1.msra.mxu0 %v61
    %423 = vmatprep.subr.mxu0 0.0
    %424 = vmatpush1.msra.mxu0 %v60
    %425 = vmatprep.subr.mxu0 0.0
    %426 = vmatpush2.msra.mxu0 0.0
    %427 = vmatprep.subr.mxu0 0.0
    %428 = vmatpush2.msra.mxu0 0.0
    %429 = vmatprep.subr.mxu0 0.0
    %430 = vmatpush2.msra.mxu0 0.0
    %431 = vmatprep.subr.mxu0 0.0
    %432 = vmatpush2.msra.mxu0 0.0
    %433 = vmatprep.subr.mxu0 0.0
    %434 = vmatpush2.msra.mxu0 0.0
    %435 = vmatprep.subr.mxu0 0.0
    %436 = vmatpush2.msra.mxu0 0.0
    %437 = vmatprep.subr.mxu0 0.0
    %438 = vmatpush2.msra.mxu0 0.0
    %439 = vmatprep.subr.mxu0 0.0
    %440 = vmatpush2.msra.mxu0 0.0
    %441 = vmatprep.subr.mxu0 0.0
    %442 = vmatpush2.msra.mxu0 0.0
    %443 = vmatprep.subr.mxu0 0.0
    %444 = vmatpush2.msra.mxu0 0.0
    %445 = vmatprep.subr.mxu0 0.0
    %446 = vmatpush2.msra.mxu0 0.0
    %447 = vmatprep.subr.mxu0 0.0
    %448 = vmatpush2.msra.mxu0 0.0
    %449 = vmatprep.subr.mxu0 0.0
    %450 = vmatpush2.msra.mxu0 0.0
    %451 = vmatprep.subr.mxu0 0.0
    %452 = vmatpush2.msra.mxu0 0.0
    %453 = vmatprep.subr.mxu0 0.0
    %454 = vmatpush2.msra.mxu0 0.0
    %455 = vmatprep.subr.mxu0 0.0
    %456 = vmatpush2.msra.mxu0 0.0
    %457 = vmatprep.mubr.f32.mxu0 0.0
    %458 = vmatmul.mubr.f32.gmra.mxu0 %v392
    %v459 = vpop.f32.mrf.mxu0
    %v460 = vadd.f32 %v97, %v459
    %v461 = vpop.f32.mrf.mxu0
    %462 = vdwg.mxu0
    %v463 = vtanh.pop %v460
    %464 = vmatprep.subr.mxu0 0.0
    %465 = vmatpush1.msra.mxu0 %v91
    %466 = vmatprep.subr.mxu0 0.0
    %467 = vmatpush1.msra.mxu0 %v90
    %468 = vmatprep.subr.mxu0 0.0
    %469 = vmatpush1.msra.mxu0 %v89
    %470 = vmatprep.subr.mxu0 0.0
    %471 = vmatpush1.msra.mxu0 %v88
    %472 = vmatprep.subr.mxu0 0.0
    %473 = vmatpush1.msra.mxu0 %v87
    %474 = vmatprep.subr.mxu0 0.0
    %475 = vmatpush1.msra.mxu0 %v86
    %476 = vmatprep.subr.mxu0 0.0
    %477 = vmatpush1.msra.mxu0 %v85
    %478 = vmatprep.subr.mxu0 0.0
    %479 = vmatpush1.msra.mxu0 %v84
    %480 = vmatprep.subr.mxu0 0.0
    %481 = vmatpush1.msra.mxu0 %v83
    %482 = vmatprep.subr.mxu0 0.0
    %483 = vmatpush1.msra.mxu0 %v82
    %484 = vmatprep.subr.mxu0 0.0
    %485 = vmatpush1.msra.mxu0 %v81
    %486 = vmatprep.subr.mxu0 0.0
    %487 = vmatpush1.msra.mxu0 %v80
    %488 = vmatprep.subr.mxu0 0.0
    %489 = vmatpush1.msra.mxu0 %v79
    %490 = vmatprep.subr.mxu0 0.0
    %491 = vmatpush1.msra.mxu0 %v78
    %492 = vmatprep.subr.mxu0 0.0
    %493 = vmatpush1.msra.mxu0 %v77
    %494 = vmatprep.subr.mxu0 0.0
    %495 = vmatpush1.msra.mxu0 %v76
    %496 = vmatprep.subr.mxu0 0.0
    %497 = vmatpush2.msra.mxu0 0.0
    %498 = vmatprep.subr.mxu0 0.0
    %499 = vmatpush2.msra.mxu0 0.0
    %500 = vmatprep.subr.mxu0 0.0
    %501 = vmatpush2.msra.mxu0 0.0
    %502 = vmatprep.subr.mxu0 0.0
    %503 = vmatpush2.msra.mxu0 0.0
    %504 = vmatprep.subr.mxu0 0.0
    %505 = vmatpush2.msra.mxu0 0.0
    %506 = vmatprep.subr.mxu0 0.0
    %507 = vmatpush2.msra.mxu0 0.0
    %508 = vmatprep.subr.mxu0 0.0
    %509 = vmatpush2.msra.mxu0 0.0
    %510 = vmatprep.subr.mxu0 0.0
    %511 = vmatpush2.msra.mxu0 0.0
    %512 = vmatprep.subr.mxu0 0.0
    %513 = vmatpush2.msra.mxu0 0.0
    %514 = vmatprep.subr.mxu0 0.0
    %515 = vmatpush2.msra.mxu0 0.0
    %516 = vmatprep.subr.mxu0 0.0
    %517 = vmatpush2.msra.mxu0 0.0
    %518 = vmatprep.subr.mxu0 0.0
    %519 = vmatpush2.msra.mxu0 0.0
    %520 = vmatprep.subr.mxu0 0.0
    %521 = vmatpush2.msra.mxu0 0.0
    %522 = vmatprep.subr.mxu0 0.0
    %523 = vmatpush2.msra.mxu0 0.0
    %524 = vmatprep.subr.mxu0 0.0
    %525 = vmatpush2.msra.mxu0 0.0
    %526 = vmatprep.subr.mxu0 0.0
    %527 = vmatpush2.msra.mxu0 0.0
    %528 = vmatprep.mubr.f32.mxu0 0.0
    %529 = vmatmul.mubr.f32.gmra.mxu0 %v463
    %v530 = vpop.f32.mrf.mxu0
    %v531 = vadd.f32 %v104, %v530
    %v532 = vpop.f32.mrf.mxu0
    %533 = vdwg.mxu0
    %v534 = vmul.f32 %v531, 0.1
    %v535 = vadd.f32 %v392, %v534
    %536 = vmatprep.subr.mxu0 0.0
    %537 = vmatpush1.msra.mxu0 %v75
    %538 = vmatprep.subr.mxu0 0.0
    %539 = vmatpush1.msra.mxu0 %v74
    %540 = vmatprep.subr.mxu0 0.0
    %541 = vmatpush1.msra.mxu0 %v73
    %542 = vmatprep.subr.mxu0 0.0
    %543 = vmatpush1.msra.mxu0 %v72
    %544 = vmatprep.subr.mxu0 0.0
    %545 = vmatpush1.msra.mxu0 %v71
    %546 = vmatprep.subr.mxu0 0.0
    %547 = vmatpush1.msra.mxu0 %v70
    %548 = vmatprep.subr.mxu0 0.0
    %549 = vmatpush1.msra.mxu0 %v69
    %550 = vmatprep.subr.mxu0 0.0
    %551 = vmatpush1.msra.mxu0 %v68
    %552 = vmatprep.subr.mxu0 0.0
    %553 = vmatpush1.msra.mxu0 %v67
    %554 = vmatprep.subr.mxu0 0.0
    %555 = vmatpush1.msra.mxu0 %v66
    %556 = vmatprep.subr.mxu0 0.0
    %557 = vmatpush1.msra.mxu0 %v65
    %558 = vmatprep.subr.mxu0 0.0
    %559 = vmatpush1.msra.mxu0 %v64
    %560 = vmatprep.subr.mxu0 0.0
    %561 = vmatpush1.msra.mxu0 %v63
    %562 = vmatprep.subr.mxu0 0.0
    %563 = vmatpush1.msra.mxu0 %v62
    %564 = vmatprep.subr.mxu0 0.0
    %565 = vmatpush1.msra.mxu0 %v61
    %566 = vmatprep.subr.mxu0 0.0
    %567 = vmatpush1.msra.mxu0 %v60
    %568 = vmatprep.subr.mxu0 0.0
    %569 = vmatpush2.msra.mxu0 0.0
    %570 = vmatprep.subr.mxu0 0.0
    %571 = vmatpush2.msra.mxu0 0.0
    %572 = vmatprep.subr.mxu0 0.0
    %573 = vmatpush2.msra.mxu0 0.0
    %574 = vmatprep.subr.mxu0 0.0
    %575 = vmatpush2.msra.mxu0 0.0
    %576 = vmatprep.subr.mxu0 0.0
    %577 = vmatpush2.msra.mxu0 0.0
    %578 = vmatprep.subr.mxu0 0.0
    %579 = vmatpush2.msra.mxu0 0.0
    %580 = vmatprep.subr.mxu0 0.0
    %581 = vmatpush2.msra.mxu0 0.0
    %582 = vmatprep.subr.mxu0 0.0
    %583 = vmatpush2.msra.mxu0 0.0
    %584 = vmatprep.subr.mxu0 0.0
    %585 = vmatpush2.msra.mxu0 0.0
    %586 = vmatprep.subr.mxu0 0.0
    %587 = vmatpush2.msra.mxu0 0.0
    %588 = vmatprep.subr.mxu0 0.0
    %589 = vmatpush2.msra.mxu0 0.0
    %590 = vmatprep.subr.mxu0 0.0
    %591 = vmatpush2.msra.mxu0 0.0
    %592 = vmatprep.subr.mxu0 0.0
    %593 = vmatpush2.msra.mxu0 0.0
    %594 = vmatprep.subr.mxu0 0.0
    %595 = vmatpush2.msra.mxu0 0.0
    %596 = vmatprep.subr.mxu0 0.0
    %597 = vmatpush2.msra.mxu0 0.0
    %598 = vmatprep.subr.mxu0 0.0
    %599 = vmatpush2.msra.mxu0 0.0
    %600 = vmatprep.mubr.f32.mxu0 0.0
    %601 = vmatmul.mubr.f32.gmra.mxu0 %v535
    %v602 = vpop.f32.mrf.mxu0
    %v603 = vadd.f32 %v97, %v602
    %v604 = vpop.f32.mrf.mxu0
    %605 = vdwg.mxu0
    %v606 = vtanh.pop %v603
    %607 = vmatprep.subr.mxu0 0.0
    %608 = vmatpush1.msra.mxu0 %v91
    %609 = vmatprep.subr.mxu0 0.0
    %610 = vmatpush1.msra.mxu0 %v90
    %611 = vmatprep.subr.mxu0 0.0
    %612 = vmatpush1.msra.mxu0 %v89
    %613 = vmatprep.subr.mxu0 0.0
    %614 = vmatpush1.msra.mxu0 %v88
    %615 = vmatprep.subr.mxu0 0.0
    %616 = vmatpush1.msra.mxu0 %v87
    %617 = vmatprep.subr.mxu0 0.0
    %618 = vmatpush1.msra.mxu0 %v86
    %619 = vmatprep.subr.mxu0 0.0
    %620 = vmatpush1.msra.mxu0 %v85
    %621 = vmatprep.subr.mxu0 0.0
    %622 = vmatpush1.msra.mxu0 %v84
    %623 = vmatprep.subr.mxu0 0.0
    %624 = vmatpush1.msra.mxu0 %v83
    %625 = vmatprep.subr.mxu0 0.0
    %626 = vmatpush1.msra.mxu0 %v82
    %627 = vmatprep.subr.mxu0 0.0
    %628 = vmatpush1.msra.mxu0 %v81
    %629 = vmatprep.subr.mxu0 0.0
    %630 = vmatpush1.msra.mxu0 %v80
    %631 = vmatprep.subr.mxu0 0.0
    %632 = vmatpush1.msra.mxu0 %v79
    %633 = vmatprep.subr.mxu0 0.0
    %634 = vmatpush1.msra.mxu0 %v78
    %635 = vmatprep.subr.mxu0 0.0
    %636 = vmatpush1.msra.mxu0 %v77
    %637 = vmatprep.subr.mxu0 0.0
    %638 = vmatpush1.msra.mxu0 %v76
    %639 = vmatprep.subr.mxu0 0.0
    %640 = vmatpush2.msra.mxu0 0.0
    %641 = vmatprep.subr.mxu0 0.0
    %642 = vmatpush2.msra.mxu0 0.0
    %643 = vmatprep.subr.mxu0 0.0
    %644 = vmatpush2.msra.mxu0 0.0
    %645 = vmatprep.subr.mxu0 0.0
    %646 = vmatpush2.msra.mxu0 0.0
    %647 = vmatprep.subr.mxu0 0.0
    %648 = vmatpush2.msra.mxu0 0.0
    %649 = vmatprep.subr.mxu0 0.0
    %650 = vmatpush2.msra.mxu0 0.0
    %651 = vmatprep.subr.mxu0 0.0
    %652 = vmatpush2.msra.mxu0 0.0
    %653 = vmatprep.subr.mxu0 0.0
    %654 = vmatpush2.msra.mxu0 0.0
    %655 = vmatprep.subr.mxu0 0.0
    %656 = vmatpush2.msra.mxu0 0.0
    %657 = vmatprep.subr.mxu0 0.0
    %658 = vmatpush2.msra.mxu0 0.0
    %659 = vmatprep.subr.mxu0 0.0
    %660 = vmatpush2.msra.mxu0 0.0
    %661 = vmatprep.subr.mxu0 0.0
    %662 = vmatpush2.msra.mxu0 0.0
    %663 = vmatprep.subr.mxu0 0.0
    %664 = vmatpush2.msra.mxu0 0.0
    %665 = vmatprep.subr.mxu0 0.0
    %666 = vmatpush2.msra.mxu0 0.0
    %667 = vmatprep.subr.mxu0 0.0
    %668 = vmatpush2.msra.mxu0 0.0
    %669 = vmatprep.subr.mxu0 0.0
    %670 = vmatpush2.msra.mxu0 0.0
    %671 = vmatprep.mubr.f32.mxu0 0.0
    %672 = vmatmul.mubr.f32.gmra.mxu0 %v606
    %v673 = vpop.f32.mrf.mxu0
    %v674 = vadd.f32 %v104, %v673
    %v675 = vpop.f32.mrf.mxu0
    %676 = vdwg.mxu0
    %v677 = vmul.f32 %v674, 0.1
    %v678 = vadd.f32 %v535, %v677
    %679 = vmatprep.subr.mxu0 0.0
    %680 = vmatpush1.msra.mxu0 %v75
    %681 = vmatprep.subr.mxu0 0.0
    %682 = vmatpush1.msra.mxu0 %v74
    %683 = vmatprep.subr.mxu0 0.0
    %684 = vmatpush1.msra.mxu0 %v73
    %685 = vmatprep.subr.mxu0 0.0
    %686 = vmatpush1.msra.mxu0 %v72
    %687 = vmatprep.subr.mxu0 0.0
    %688 = vmatpush1.msra.mxu0 %v71
    %689 = vmatprep.subr.mxu0 0.0
    %690 = vmatpush1.msra.mxu0 %v70
    %691 = vmatprep.subr.mxu0 0.0
    %692 = vmatpush1.msra.mxu0 %v69
    %693 = vmatprep.subr.mxu0 0.0
    %694 = vmatpush1.msra.mxu0 %v68
    %695 = vmatprep.subr.mxu0 0.0
    %696 = vmatpush1.msra.mxu0 %v67
    %697 = vmatprep.subr.mxu0 0.0
    %698 = vmatpush1.msra.mxu0 %v66
    %699 = vmatprep.subr.mxu0 0.0
    %700 = vmatpush1.msra.mxu0 %v65
    %701 = vmatprep.subr.mxu0 0.0
    %702 = vmatpush1.msra.mxu0 %v64
    %703 = vmatprep.subr.mxu0 0.0
    %704 = vmatpush1.msra.mxu0 %v63
    %705 = vmatprep.subr.mxu0 0.0
    %706 = vmatpush1.msra.mxu0 %v62
    %707 = vmatprep.subr.mxu0 0.0
    %708 = vmatpush1.msra.mxu0 %v61
    %709 = vmatprep.subr.mxu0 0.0
    %710 = vmatpush1.msra.mxu0 %v60
    %711 = vmatprep.subr.mxu0 0.0
    %712 = vmatpush2.msra.mxu0 0.0
    %713 = vmatprep.subr.mxu0 0.0
    %714 = vmatpush2.msra.mxu0 0.0
    %715 = vmatprep.subr.mxu0 0.0
    %716 = vmatpush2.msra.mxu0 0.0
    %717 = vmatprep.subr.mxu0 0.0
    %718 = vmatpush2.msra.mxu0 0.0
    %719 = vmatprep.subr.mxu0 0.0
    %720 = vmatpush2.msra.mxu0 0.0
    %721 = vmatprep.subr.mxu0 0.0
    %722 = vmatpush2.msra.mxu0 0.0
    %723 = vmatprep.subr.mxu0 0.0
    %724 = vmatpush2.msra.mxu0 0.0
    %725 = vmatprep.subr.mxu0 0.0
    %726 = vmatpush2.msra.mxu0 0.0
    %727 = vmatprep.subr.mxu0 0.0
    %728 = vmatpush2.msra.mxu0 0.0
    %729 = vmatprep.subr.mxu0 0.0
    %730 = vmatpush2.msra.mxu0 0.0
    %731 = vmatprep.subr.mxu0 0.0
    %732 = vmatpush2.msra.mxu0 0.0
    %733 = vmatprep.subr.mxu0 0.0
    %734 = vmatpush2.msra.mxu0 0.0
    %735 = vmatprep.subr.mxu0 0.0
    %736 = vmatpush2.msra.mxu0 0.0
    %737 = vmatprep.subr.mxu0 0.0
    %738 = vmatpush2.msra.mxu0 0.0
    %739 = vmatprep.subr.mxu0 0.0
    %740 = vmatpush2.msra.mxu0 0.0
    %741 = vmatprep.subr.mxu0 0.0
    %742 = vmatpush2.msra.mxu0 0.0
    %743 = vmatprep.mubr.f32.mxu0 0.0
    %744 = vmatmul.mubr.f32.gmra.mxu0 %v678
    %v745 = vpop.f32.mrf.mxu0
    %v746 = vadd.f32 %v97, %v745
    %v747 = vpop.f32.mrf.mxu0
    %748 = vdwg.mxu0
    %v749 = vtanh.pop %v746
    %750 = vmatprep.subr.mxu0 0.0
    %751 = vmatpush1.msra.mxu0 %v91
    %752 = vmatprep.subr.mxu0 0.0
    %753 = vmatpush1.msra.mxu0 %v90
    %754 = vmatprep.subr.mxu0 0.0
    %755 = vmatpush1.msra.mxu0 %v89
    %756 = vmatprep.subr.mxu0 0.0
    %757 = vmatpush1.msra.mxu0 %v88
    %758 = vmatprep.subr.mxu0 0.0
    %759 = vmatpush1.msra.mxu0 %v87
    %760 = vmatprep.subr.mxu0 0.0
    %761 = vmatpush1.msra.mxu0 %v86
    %762 = vmatprep.subr.mxu0 0.0
    %763 = vmatpush1.msra.mxu0 %v85
    %764 = vmatprep.subr.mxu0 0.0
    %765 = vmatpush1.msra.mxu0 %v84
    %766 = vmatprep.subr.mxu0 0.0
    %767 = vmatpush1.msra.mxu0 %v83
    %768 = vmatprep.subr.mxu0 0.0
    %769 = vmatpush1.msra.mxu0 %v82
    %770 = vmatprep.subr.mxu0 0.0
    %771 = vmatpush1.msra.mxu0 %v81
    %772 = vmatprep.subr.mxu0 0.0
    %773 = vmatpush1.msra.mxu0 %v80
    %774 = vmatprep.subr.mxu0 0.0
    %775 = vmatpush1.msra.mxu0 %v79
    %776 = vmatprep.subr.mxu0 0.0
    %777 = vmatpush1.msra.mxu0 %v78
    %778 = vmatprep.subr.mxu0 0.0
    %779 = vmatpush1.msra.mxu0 %v77
    %780 = vmatprep.subr.mxu0 0.0
    %781 = vmatpush1.msra.mxu0 %v76
    %782 = vmatprep.subr.mxu0 0.0
    %783 = vmatpush2.msra.mxu0 0.0
    %784 = vmatprep.subr.mxu0 0.0
    %785 = vmatpush2.msra.mxu0 0.0
    %786 = vmatprep.subr.mxu0 0.0
    %787 = vmatpush2.msra.mxu0 0.0
    %788 = vmatprep.subr.mxu0 0.0
    %789 = vmatpush2.msra.mxu0 0.0
    %790 = vmatprep.subr.mxu0 0.0
    %791 = vmatpush2.msra.mxu0 0.0
    %792 = vmatprep.subr.mxu0 0.0
    %793 = vmatpush2.msra.mxu0 0.0
    %794 = vmatprep.subr.mxu0 0.0
    %795 = vmatpush2.msra.mxu0 0.0
    %796 = vmatprep.subr.mxu0 0.0
    %797 = vmatpush2.msra.mxu0 0.0
    %798 = vmatprep.subr.mxu0 0.0
    %799 = vmatpush2.msra.mxu0 0.0
    %800 = vmatprep.subr.mxu0 0.0
    %801 = vmatpush2.msra.mxu0 0.0
    %802 = vmatprep.subr.mxu0 0.0
    %803 = vmatpush2.msra.mxu0 0.0
    %804 = vmatprep.subr.mxu0 0.0
    %805 = vmatpush2.msra.mxu0 0.0
    %806 = vmatprep.subr.mxu0 0.0
    %807 = vmatpush2.msra.mxu0 0.0
    %808 = vmatprep.subr.mxu0 0.0
    %809 = vmatpush2.msra.mxu0 0.0
    %810 = vmatprep.subr.mxu0 0.0
    %811 = vmatpush2.msra.mxu0 0.0
    %812 = vmatprep.subr.mxu0 0.0
    %813 = vmatpush2.msra.mxu0 0.0
    %814 = vmatprep.mubr.f32.mxu0 0.0
    %815 = vmatmul.mubr.f32.gmra.mxu0 %v749
    %v816 = vpop.f32.mrf.mxu0
    %v817 = vadd.f32 %v104, %v816
    %v818 = vpop.f32.mrf.mxu0
    %819 = vdwg.mxu0
    %v820 = vmul.f32 %v817, 0.1
    %v821 = vadd.f32 %v678, %v820
    %822 = vmatprep.subr.mxu0 0.0
    %823 = vmatpush1.msra.mxu0 %v75
    %824 = vmatprep.subr.mxu0 0.0
    %825 = vmatpush1.msra.mxu0 %v74
    %826 = vmatprep.subr.mxu0 0.0
    %827 = vmatpush1.msra.mxu0 %v73
    %828 = vmatprep.subr.mxu0 0.0
    %829 = vmatpush1.msra.mxu0 %v72
    %830 = vmatprep.subr.mxu0 0.0
    %831 = vmatpush1.msra.mxu0 %v71
    %832 = vmatprep.subr.mxu0 0.0
    %833 = vmatpush1.msra.mxu0 %v70
    %834 = vmatprep.subr.mxu0 0.0
    %835 = vmatpush1.msra.mxu0 %v69
    %836 = vmatprep.subr.mxu0 0.0
    %837 = vmatpush1.msra.mxu0 %v68
    %838 = vmatprep.subr.mxu0 0.0
    %839 = vmatpush1.msra.mxu0 %v67
    %840 = vmatprep.subr.mxu0 0.0
    %841 = vmatpush1.msra.mxu0 %v66
    %842 = vmatprep.subr.mxu0 0.0
    %843 = vmatpush1.msra.mxu0 %v65
    %844 = vmatprep.subr.mxu0 0.0
    %845 = vmatpush1.msra.mxu0 %v64
    %846 = vmatprep.subr.mxu0 0.0
    %847 = vmatpush1.msra.mxu0 %v63
    %848 = vmatprep.subr.mxu0 0.0
    %849 = vmatpush1.msra.mxu0 %v62
    %850 = vmatprep.subr.mxu0 0.0
    %851 = vmatpush1.msra.mxu0 %v61
    %852 = vmatprep.subr.mxu0 0.0
    %853 = vmatpush1.msra.mxu0 %v60
    %854 = vmatprep.subr.mxu0 0.0
    %855 = vmatpush2.msra.mxu0 0.0
    %856 = vmatprep.subr.mxu0 0.0
    %857 = vmatpush2.msra.mxu0 0.0
    %858 = vmatprep.subr.mxu0 0.0
    %859 = vmatpush2.msra.mxu0 0.0
    %860 = vmatprep.subr.mxu0 0.0
    %861 = vmatpush2.msra.mxu0 0.0
    %862 = vmatprep.subr.mxu0 0.0
    %863 = vmatpush2.msra.mxu0 0.0
    %864 = vmatprep.subr.mxu0 0.0
    %865 = vmatpush2.msra.mxu0 0.0
    %866 = vmatprep.subr.mxu0 0.0
    %867 = vmatpush2.msra.mxu0 0.0
    %868 = vmatprep.subr.mxu0 0.0
    %869 = vmatpush2.msra.mxu0 0.0
    %870 = vmatprep.subr.mxu0 0.0
    %871 = vmatpush2.msra.mxu0 0.0
    %872 = vmatprep.subr.mxu0 0.0
    %873 = vmatpush2.msra.mxu0 0.0
    %874 = vmatprep.subr.mxu0 0.0
    %875 = vmatpush2.msra.mxu0 0.0
    %876 = vmatprep.subr.mxu0 0.0
    %877 = vmatpush2.msra.mxu0 0.0
    %878 = vmatprep.subr.mxu0 0.0
    %879 = vmatpush2.msra.mxu0 0.0
    %880 = vmatprep.subr.mxu0 0.0
    %881 = vmatpush2.msra.mxu0 0.0
    %882 = vmatprep.subr.mxu0 0.0
    %883 = vmatpush2.msra.mxu0 0.0
    %884 = vmatprep.subr.mxu0 0.0
    %885 = vmatpush2.msra.mxu0 0.0
    %886 = vmatprep.mubr.f32.mxu0 0.0
    %887 = vmatmul.mubr.f32.gmra.mxu0 %v821
    %v888 = vpop.f32.mrf.mxu0
    %v889 = vadd.f32 %v97, %v888
    %v890 = vpop.f32.mrf.mxu0
    %891 = vdwg.mxu0
    %v892 = vtanh.pop %v889
    %893 = vmatprep.subr.mxu0 0.0
    %894 = vmatpush1.msra.mxu0 %v91
    %895 = vmatprep.subr.mxu0 0.0
    %896 = vmatpush1.msra.mxu0 %v90
    %897 = vmatprep.subr.mxu0 0.0
    %898 = vmatpush1.msra.mxu0 %v89
    %899 = vmatprep.subr.mxu0 0.0
    %900 = vmatpush1.msra.mxu0 %v88
    %901 = vmatprep.subr.mxu0 0.0
    %902 = vmatpush1.msra.mxu0 %v87
    %903 = vmatprep.subr.mxu0 0.0
    %904 = vmatpush1.msra.mxu0 %v86
    %905 = vmatprep.subr.mxu0 0.0
    %906 = vmatpush1.msra.mxu0 %v85
    %907 = vmatprep.subr.mxu0 0.0
    %908 = vmatpush1.msra.mxu0 %v84
    %909 = vmatprep.subr.mxu0 0.0
    %910 = vmatpush1.msra.mxu0 %v83
    %911 = vmatprep.subr.mxu0 0.0
    %912 = vmatpush1.msra.mxu0 %v82
    %913 = vmatprep.subr.mxu0 0.0
    %914 = vmatpush1.msra.mxu0 %v81
    %915 = vmatprep.subr.mxu0 0.0
    %916 = vmatpush1.msra.mxu0 %v80
    %917 = vmatprep.subr.mxu0 0.0
    %918 = vmatpush1.msra.mxu0 %v79
    %919 = vmatprep.subr.mxu0 0.0
    %920 = vmatpush1.msra.mxu0 %v78
    %921 = vmatprep.subr.mxu0 0.0
    %922 = vmatpush1.msra.mxu0 %v77
    %923 = vmatprep.subr.mxu0 0.0
    %924 = vmatpush1.msra.mxu0 %v76
    %925 = vmatprep.subr.mxu0 0.0
    %926 = vmatpush2.msra.mxu0 0.0
    %927 = vmatprep.subr.mxu0 0.0
    %928 = vmatpush2.msra.mxu0 0.0
    %929 = vmatprep.subr.mxu0 0.0
    %930 = vmatpush2.msra.mxu0 0.0
    %931 = vmatprep.subr.mxu0 0.0
    %932 = vmatpush2.msra.mxu0 0.0
    %933 = vmatprep.subr.mxu0 0.0
    %934 = vmatpush2.msra.mxu0 0.0
    %935 = vmatprep.subr.mxu0 0.0
    %936 = vmatpush2.msra.mxu0 0.0
    %937 = vmatprep.subr.mxu0 0.0
    %938 = vmatpush2.msra.mxu0 0.0
    %939 = vmatprep.subr.mxu0 0.0
    %940 = vmatpush2.msra.mxu0 0.0
    %941 = vmatprep.subr.mxu0 0.0
    %942 = vmatpush2.msra.mxu0 0.0
    %943 = vmatprep.subr.mxu0 0.0
    %944 = vmatpush2.msra.mxu0 0.0
    %945 = vmatprep.subr.mxu0 0.0
    %946 = vmatpush2.msra.mxu0 0.0
    %947 = vmatprep.subr.mxu0 0.0
    %948 = vmatpush2.msra.mxu0 0.0
    %949 = vmatprep.subr.mxu0 0.0
    %950 = vmatpush2.msra.mxu0 0.0
    %951 = vmatprep.subr.mxu0 0.0
    %952 = vmatpush2.msra.mxu0 0.0
    %953 = vmatprep.subr.mxu0 0.0
    %954 = vmatpush2.msra.mxu0 0.0
    %955 = vmatprep.subr.mxu0 0.0
    %956 = vmatpush2.msra.mxu0 0.0
    %957 = vmatprep.mubr.f32.mxu0 0.0
    %958 = vmatmul.mubr.f32.gmra.mxu0 %v892
    %v959 = vpop.f32.mrf.mxu0
    %v960 = vadd.f32 %v104, %v959
    %v961 = vpop.f32.mrf.mxu0
    %962 = vdwg.mxu0
    %v963 = vmul.f32 %v960, 0.1
    %v964 = vadd.f32 %v821, %v963
    %965 = vmatprep.subr.mxu0 0.0
    %966 = vmatpush1.msra.mxu0 %v75
    %967 = vmatprep.subr.mxu0 0.0
    %968 = vmatpush1.msra.mxu0 %v74
    %969 = vmatprep.subr.mxu0 0.0
    %970 = vmatpush1.msra.mxu0 %v73
    %971 = vmatprep.subr.mxu0 0.0
    %972 = vmatpush1.msra.mxu0 %v72
    %973 = vmatprep.subr.mxu0 0.0
    %974 = vmatpush1.msra.mxu0 %v71
    %975 = vmatprep.subr.mxu0 0.0
    %976 = vmatpush1.msra.mxu0 %v70
    %977 = vmatprep.subr.mxu0 0.0
    %978 = vmatpush1.msra.mxu0 %v69
    %979 = vmatprep.subr.mxu0 0.0
    %980 = vmatpush1.msra.mxu0 %v68
    %981 = vmatprep.subr.mxu0 0.0
    %982 = vmatpush1.msra.mxu0 %v67
    %983 = vmatprep.subr.mxu0 0.0
    %984 = vmatpush1.msra.mxu0 %v66
    %985 = vmatprep.subr.mxu0 0.0
    %986 = vmatpush1.msra.mxu0 %v65
    %987 = vmatprep.subr.mxu0 0.0
    %988 = vmatpush1.msra.mxu0 %v64
    %989 = vmatprep.subr.mxu0 0.0
    %990 = vmatpush1.msra.mxu0 %v63
    %991 = vmatprep.subr.mxu0 0.0
    %992 = vmatpush1.msra.mxu0 %v62
    %993 = vmatprep.subr.mxu0 0.0
    %994 = vmatpush1.msra.mxu0 %v61
    %995 = vmatprep.subr.mxu0 0.0
    %996 = vmatpush1.msra.mxu0 %v60
    %997 = vmatprep.subr.mxu0 0.0
    %998 = vmatpush2.msra.mxu0 0.0
    %999 = vmatprep.subr.mxu0 0.0
    %1000 = vmatpush2.msra.mxu0 0.0
    %1001 = vmatprep.subr.mxu0 0.0
    %1002 = vmatpush2.msra.mxu0 0.0
    %1003 = vmatprep.subr.mxu0 0.0
    %1004 = vmatpush2.msra.mxu0 0.0
    %1005 = vmatprep.subr.mxu0 0.0
    %1006 = vmatpush2.msra.mxu0 0.0
    %1007 = vmatprep.subr.mxu0 0.0
    %1008 = vmatpush2.msra.mxu0 0.0
    %1009 = vmatprep.subr.mxu0 0.0
    %1010 = vmatpush2.msra.mxu0 0.0
    %1011 = vmatprep.subr.mxu0 0.0
    %1012 = vmatpush2.msra.mxu0 0.0
    %1013 = vmatprep.subr.mxu0 0.0
    %1014 = vmatpush2.msra.mxu0 0.0
    %1015 = vmatprep.subr.mxu0 0.0
    %1016 = vmatpush2.msra.mxu0 0.0
    %1017 = vmatprep.subr.mxu0 0.0
    %1018 = vmatpush2.msra.mxu0 0.0
    %1019 = vmatprep.subr.mxu0 0.0
    %1020 = vmatpush2.msra.mxu0 0.0
    %1021 = vmatprep.subr.mxu0 0.0
    %1022 = vmatpush2.msra.mxu0 0.0
    %1023 = vmatprep.subr.mxu0 0.0
    %1024 = vmatpush2.msra.mxu0 0.0
    %1025 = vmatprep.subr.mxu0 0.0
    %1026 = vmatpush2.msra.mxu0 0.0
    %1027 = vmatprep.subr.mxu0 0.0
    %1028 = vmatpush2.msra.mxu0 0.0
    %1029 = vmatprep.mubr.f32.mxu0 0.0
    %1030 = vmatmul.mubr.f32.gmra.mxu0 %v964
    %v1031 = vpop.f32.mrf.mxu0
    %v1032 = vadd.f32 %v97, %v1031
    %v1033 = vpop.f32.mrf.mxu0
    %1034 = vdwg.mxu0
    %v1035 = vtanh.pop %v1032
    %1036 = vmatprep.subr.mxu0 0.0
    %1037 = vmatpush1.msra.mxu0 %v91
    %1038 = vmatprep.subr.mxu0 0.0
    %1039 = vmatpush1.msra.mxu0 %v90
    %1040 = vmatprep.subr.mxu0 0.0
    %1041 = vmatpush1.msra.mxu0 %v89
    %1042 = vmatprep.subr.mxu0 0.0
    %1043 = vmatpush1.msra.mxu0 %v88
    %1044 = vmatprep.subr.mxu0 0.0
    %1045 = vmatpush1.msra.mxu0 %v87
    %1046 = vmatprep.subr.mxu0 0.0
    %1047 = vmatpush1.msra.mxu0 %v86
    %1048 = vmatprep.subr.mxu0 0.0
    %1049 = vmatpush1.msra.mxu0 %v85
    %1050 = vmatprep.subr.mxu0 0.0
    %1051 = vmatpush1.msra.mxu0 %v84
    %1052 = vmatprep.subr.mxu0 0.0
    %1053 = vmatpush1.msra.mxu0 %v83
    %1054 = vmatprep.subr.mxu0 0.0
    %1055 = vmatpush1.msra.mxu0 %v82
    %1056 = vmatprep.subr.mxu0 0.0
    %1057 = vmatpush1.msra.mxu0 %v81
    %1058 = vmatprep.subr.mxu0 0.0
    %1059 = vmatpush1.msra.mxu0 %v80
    %1060 = vmatprep.subr.mxu0 0.0
    %1061 = vmatpush1.msra.mxu0 %v79
    %1062 = vmatprep.subr.mxu0 0.0
    %1063 = vmatpush1.msra.mxu0 %v78
    %1064 = vmatprep.subr.mxu0 0.0
    %1065 = vmatpush1.msra.mxu0 %v77
    %1066 = vmatprep.subr.mxu0 0.0
    %1067 = vmatpush1.msra.mxu0 %v76
    %1068 = vmatprep.subr.mxu0 0.0
    %1069 = vmatpush2.msra.mxu0 0.0
    %1070 = vmatprep.subr.mxu0 0.0
    %1071 = vmatpush2.msra.mxu0 0.0
    %1072 = vmatprep.subr.mxu0 0.0
    %1073 = vmatpush2.msra.mxu0 0.0
    %1074 = vmatprep.subr.mxu0 0.0
    %1075 = vmatpush2.msra.mxu0 0.0
    %1076 = vmatprep.subr.mxu0 0.0
    %1077 = vmatpush2.msra.mxu0 0.0
    %1078 = vmatprep.subr.mxu0 0.0
    %1079 = vmatpush2.msra.mxu0 0.0
    %1080 = vmatprep.subr.mxu0 0.0
    %1081 = vmatpush2.msra.mxu0 0.0
    %1082 = vmatprep.subr.mxu0 0.0
    %1083 = vmatpush2.msra.mxu0 0.0
    %1084 = vmatprep.subr.mxu0 0.0
    %1085 = vmatpush2.msra.mxu0 0.0
    %1086 = vmatprep.subr.mxu0 0.0
    %1087 = vmatpush2.msra.mxu0 0.0
    %1088 = vmatprep.subr.mxu0 0.0
    %1089 = vmatpush2.msra.mxu0 0.0
    %1090 = vmatprep.subr.mxu0 0.0
    %1091 = vmatpush2.msra.mxu0 0.0
    %1092 = vmatprep.subr.mxu0 0.0
    %1093 = vmatpush2.msra.mxu0 0.0
    %1094 = vmatprep.subr.mxu0 0.0
    %1095 = vmatpush2.msra.mxu0 0.0
    %1096 = vmatprep.subr.mxu0 0.0
    %1097 = vmatpush2.msra.mxu0 0.0
    %1098 = vmatprep.subr.mxu0 0.0
    %1099 = vmatpush2.msra.mxu0 0.0
    %1100 = vmatprep.mubr.f32.mxu0 0.0
    %1101 = vmatmul.mubr.f32.gmra.mxu0 %v1035
    %v1102 = vpop.f32.mrf.mxu0
    %v1103 = vadd.f32 %v104, %v1102
    %v1104 = vpop.f32.mrf.mxu0
    %1105 = vdwg.mxu0
    %v1106 = vmul.f32 %v1103, 0.1
    %v1107 = vadd.f32 %v964, %v1106
    %1108 = vmatprep.subr.mxu0 0.0
    %1109 = vmatpush1.msra.mxu0 %v75
    %1110 = vmatprep.subr.mxu0 0.0
    %1111 = vmatpush1.msra.mxu0 %v74
    %1112 = vmatprep.subr.mxu0 0.0
    %1113 = vmatpush1.msra.mxu0 %v73
    %1114 = vmatprep.subr.mxu0 0.0
    %1115 = vmatpush1.msra.mxu0 %v72
    %1116 = vmatprep.subr.mxu0 0.0
    %1117 = vmatpush1.msra.mxu0 %v71
    %1118 = vmatprep.subr.mxu0 0.0
    %1119 = vmatpush1.msra.mxu0 %v70
    %1120 = vmatprep.subr.mxu0 0.0
    %1121 = vmatpush1.msra.mxu0 %v69
    %1122 = vmatprep.subr.mxu0 0.0
    %1123 = vmatpush1.msra.mxu0 %v68
    %1124 = vmatprep.subr.mxu0 0.0
    %1125 = vmatpush1.msra.mxu0 %v67
    %1126 = vmatprep.subr.mxu0 0.0
    %1127 = vmatpush1.msra.mxu0 %v66
    %1128 = vmatprep.subr.mxu0 0.0
    %1129 = vmatpush1.msra.mxu0 %v65
    %1130 = vmatprep.subr.mxu0 0.0
    %1131 = vmatpush1.msra.mxu0 %v64
    %1132 = vmatprep.subr.mxu0 0.0
    %1133 = vmatpush1.msra.mxu0 %v63
    %1134 = vmatprep.subr.mxu0 0.0
    %1135 = vmatpush1.msra.mxu0 %v62
    %1136 = vmatprep.subr.mxu0 0.0
    %1137 = vmatpush1.msra.mxu0 %v61
    %1138 = vmatprep.subr.mxu0 0.0
    %1139 = vmatpush1.msra.mxu0 %v60
    %1140 = vmatprep.subr.mxu0 0.0
    %1141 = vmatpush2.msra.mxu0 0.0
    %1142 = vmatprep.subr.mxu0 0.0
    %1143 = vmatpush2.msra.mxu0 0.0
    %1144 = vmatprep.subr.mxu0 0.0
    %1145 = vmatpush2.msra.mxu0 0.0
    %1146 = vmatprep.subr.mxu0 0.0
    %1147 = vmatpush2.msra.mxu0 0.0
    %1148 = vmatprep.subr.mxu0 0.0
    %1149 = vmatpush2.msra.mxu0 0.0
    %1150 = vmatprep.subr.mxu0 0.0
    %1151 = vmatpush2.msra.mxu0 0.0
    %1152 = vmatprep.subr.mxu0 0.0
    %1153 = vmatpush2.msra.mxu0 0.0
    %1154 = vmatprep.subr.mxu0 0.0
    %1155 = vmatpush2.msra.mxu0 0.0
    %1156 = vmatprep.subr.mxu0 0.0
    %1157 = vmatpush2.msra.mxu0 0.0
    %1158 = vmatprep.subr.mxu0 0.0
    %1159 = vmatpush2.msra.mxu0 0.0
    %1160 = vmatprep.subr.mxu0 0.0
    %1161 = vmatpush2.msra.mxu0 0.0
    %1162 = vmatprep.subr.mxu0 0.0
    %1163 = vmatpush2.msra.mxu0 0.0
    %1164 = vmatprep.subr.mxu0 0.0
    %1165 = vmatpush2.msra.mxu0 0.0
    %1166 = vmatprep.subr.mxu0 0.0
    %1167 = vmatpush2.msra.mxu0 0.0
    %1168 = vmatprep.subr.mxu0 0.0
    %1169 = vmatpush2.msra.mxu0 0.0
    %1170 = vmatprep.subr.mxu0 0.0
    %1171 = vmatpush2.msra.mxu0 0.0
    %1172 = vmatprep.mubr.f32.mxu0 0.0
    %1173 = vmatmul.mubr.f32.gmra.mxu0 %v1107
    %v1174 = vpop.f32.mrf.mxu0
    %v1175 = vadd.f32 %v97, %v1174
    %v1176 = vpop.f32.mrf.mxu0
    %1177 = vdwg.mxu0
    %v1178 = vtanh.pop %v1175
    %1179 = vmatprep.subr.mxu0 0.0
    %1180 = vmatpush1.msra.mxu0 %v91
    %1181 = vmatprep.subr.mxu0 0.0
    %1182 = vmatpush1.msra.mxu0 %v90
    %1183 = vmatprep.subr.mxu0 0.0
    %1184 = vmatpush1.msra.mxu0 %v89
    %1185 = vmatprep.subr.mxu0 0.0
    %1186 = vmatpush1.msra.mxu0 %v88
    %1187 = vmatprep.subr.mxu0 0.0
    %1188 = vmatpush1.msra.mxu0 %v87
    %1189 = vmatprep.subr.mxu0 0.0
    %1190 = vmatpush1.msra.mxu0 %v86
    %1191 = vmatprep.subr.mxu0 0.0
    %1192 = vmatpush1.msra.mxu0 %v85
    %1193 = vmatprep.subr.mxu0 0.0
    %1194 = vmatpush1.msra.mxu0 %v84
    %1195 = vmatprep.subr.mxu0 0.0
    %1196 = vmatpush1.msra.mxu0 %v83
    %1197 = vmatprep.subr.mxu0 0.0
    %1198 = vmatpush1.msra.mxu0 %v82
    %1199 = vmatprep.subr.mxu0 0.0
    %1200 = vmatpush1.msra.mxu0 %v81
    %1201 = vmatprep.subr.mxu0 0.0
    %1202 = vmatpush1.msra.mxu0 %v80
    %1203 = vmatprep.subr.mxu0 0.0
    %1204 = vmatpush1.msra.mxu0 %v79
    %1205 = vmatprep.subr.mxu0 0.0
    %1206 = vmatpush1.msra.mxu0 %v78
    %1207 = vmatprep.subr.mxu0 0.0
    %1208 = vmatpush1.msra.mxu0 %v77
    %1209 = vmatprep.subr.mxu0 0.0
    %1210 = vmatpush1.msra.mxu0 %v76
    %1211 = vmatprep.subr.mxu0 0.0
    %1212 = vmatpush2.msra.mxu0 0.0
    %1213 = vmatprep.subr.mxu0 0.0
    %1214 = vmatpush2.msra.mxu0 0.0
    %1215 = vmatprep.subr.mxu0 0.0
    %1216 = vmatpush2.msra.mxu0 0.0
    %1217 = vmatprep.subr.mxu0 0.0
    %1218 = vmatpush2.msra.mxu0 0.0
    %1219 = vmatprep.subr.mxu0 0.0
    %1220 = vmatpush2.msra.mxu0 0.0
    %1221 = vmatprep.subr.mxu0 0.0
    %1222 = vmatpush2.msra.mxu0 0.0
    %1223 = vmatprep.subr.mxu0 0.0
    %1224 = vmatpush2.msra.mxu0 0.0
    %1225 = vmatprep.subr.mxu0 0.0
    %1226 = vmatpush2.msra.mxu0 0.0
    %1227 = vmatprep.subr.mxu0 0.0
    %1228 = vmatpush2.msra.mxu0 0.0
    %1229 = vmatprep.subr.mxu0 0.0
    %1230 = vmatpush2.msra.mxu0 0.0
    %1231 = vmatprep.subr.mxu0 0.0
    %1232 = vmatpush2.msra.mxu0 0.0
    %1233 = vmatprep.subr.mxu0 0.0
    %1234 = vmatpush2.msra.mxu0 0.0
    %1235 = vmatprep.subr.mxu0 0.0
    %1236 = vmatpush2.msra.mxu0 0.0
    %1237 = vmatprep.subr.mxu0 0.0
    %1238 = vmatpush2.msra.mxu0 0.0
    %1239 = vmatprep.subr.mxu0 0.0
    %1240 = vmatpush2.msra.mxu0 0.0
    %1241 = vmatprep.subr.mxu0 0.0
    %1242 = vmatpush2.msra.mxu0 0.0
    %1243 = vmatprep.mubr.f32.mxu0 0.0
    %1244 = vmatmul.mubr.f32.gmra.mxu0 %v1178
    %v1245 = vpop.f32.mrf.mxu0
    %v1246 = vadd.f32 %v104, %v1245
    %v1247 = vpop.f32.mrf.mxu0
    %1248 = vdwg.mxu0
    %v1249 = vmul.f32 %v1246, 0.1
    %v1250 = vadd.f32 %v1107, %v1249
    %1251 = vmatprep.subr.mxu0 0.0
    %1252 = vmatpush1.msra.mxu0 %v75
    %1253 = vmatprep.subr.mxu0 0.0
    %1254 = vmatpush1.msra.mxu0 %v74
    %1255 = vmatprep.subr.mxu0 0.0
    %1256 = vmatpush1.msra.mxu0 %v73
    %1257 = vmatprep.subr.mxu0 0.0
    %1258 = vmatpush1.msra.mxu0 %v72
    %1259 = vmatprep.subr.mxu0 0.0
    %1260 = vmatpush1.msra.mxu0 %v71
    %1261 = vmatprep.subr.mxu0 0.0
    %1262 = vmatpush1.msra.mxu0 %v70
    %1263 = vmatprep.subr.mxu0 0.0
    %1264 = vmatpush1.msra.mxu0 %v69
    %1265 = vmatprep.subr.mxu0 0.0
    %1266 = vmatpush1.msra.mxu0 %v68
    %1267 = vmatprep.subr.mxu0 0.0
    %1268 = vmatpush1.msra.mxu0 %v67
    %1269 = vmatprep.subr.mxu0 0.0
    %1270 = vmatpush1.msra.mxu0 %v66
    %1271 = vmatprep.subr.mxu0 0.0
    %1272 = vmatpush1.msra.mxu0 %v65
    %1273 = vmatprep.subr.mxu0 0.0
    %1274 = vmatpush1.msra.mxu0 %v64
    %1275 = vmatprep.subr.mxu0 0.0
    %1276 = vmatpush1.msra.mxu0 %v63
    %1277 = vmatprep.subr.mxu0 0.0
    %1278 = vmatpush1.msra.mxu0 %v62
    %1279 = vmatprep.subr.mxu0 0.0
    %1280 = vmatpush1.msra.mxu0 %v61
    %1281 = vmatprep.subr.mxu0 0.0
    %1282 = vmatpush1.msra.mxu0 %v60
    %1283 = vmatprep.subr.mxu0 0.0
    %1284 = vmatpush2.msra.mxu0 0.0
    %1285 = vmatprep.subr.mxu0 0.0
    %1286 = vmatpush2.msra.mxu0 0.0
    %1287 = vmatprep.subr.mxu0 0.0
    %1288 = vmatpush2.msra.mxu0 0.0
    %1289 = vmatprep.subr.mxu0 0.0
    %1290 = vmatpush2.msra.mxu0 0.0
    %1291 = vmatprep.subr.mxu0 0.0
    %1292 = vmatpush2.msra.mxu0 0.0
    %1293 = vmatprep.subr.mxu0 0.0
    %1294 = vmatpush2.msra.mxu0 0.0
    %1295 = vmatprep.subr.mxu0 0.0
    %1296 = vmatpush2.msra.mxu0 0.0
    %1297 = vmatprep.subr.mxu0 0.0
    %1298 = vmatpush2.msra.mxu0 0.0
    %1299 = vmatprep.subr.mxu0 0.0
    %1300 = vmatpush2.msra.mxu0 0.0
    %1301 = vmatprep.subr.mxu0 0.0
    %1302 = vmatpush2.msra.mxu0 0.0
    %1303 = vmatprep.subr.mxu0 0.0
    %1304 = vmatpush2.msra.mxu0 0.0
    %1305 = vmatprep.subr.mxu0 0.0
    %1306 = vmatpush2.msra.mxu0 0.0
    %1307 = vmatprep.subr.mxu0 0.0
    %1308 = vmatpush2.msra.mxu0 0.0
    %1309 = vmatprep.subr.mxu0 0.0
    %1310 = vmatpush2.msra.mxu0 0.0
    %1311 = vmatprep.subr.mxu0 0.0
    %1312 = vmatpush2.msra.mxu0 0.0
    %1313 = vmatprep.subr.mxu0 0.0
    %1314 = vmatpush2.msra.mxu0 0.0
    %1315 = vmatprep.mubr.f32.mxu0 0.0
    %1316 = vmatmul.mubr.f32.gmra.mxu0 %v1250
    %v1317 = vpop.f32.mrf.mxu0
    %v1318 = vadd.f32 %v97, %v1317
    %v1319 = vpop.f32.mrf.mxu0
    %1320 = vdwg.mxu0
    %v1321 = vtanh.pop %v1318
    %1322 = vmatprep.subr.mxu0 0.0
    %1323 = vmatpush1.msra.mxu0 %v91
    %1324 = vmatprep.subr.mxu0 0.0
    %1325 = vmatpush1.msra.mxu0 %v90
    %1326 = vmatprep.subr.mxu0 0.0
    %1327 = vmatpush1.msra.mxu0 %v89
    %1328 = vmatprep.subr.mxu0 0.0
    %1329 = vmatpush1.msra.mxu0 %v88
    %1330 = vmatprep.subr.mxu0 0.0
    %1331 = vmatpush1.msra.mxu0 %v87
    %1332 = vmatprep.subr.mxu0 0.0
    %1333 = vmatpush1.msra.mxu0 %v86
    %1334 = vmatprep.subr.mxu0 0.0
    %1335 = vmatpush1.msra.mxu0 %v85
    %1336 = vmatprep.subr.mxu0 0.0
    %1337 = vmatpush1.msra.mxu0 %v84
    %1338 = vmatprep.subr.mxu0 0.0
    %1339 = vmatpush1.msra.mxu0 %v83
    %1340 = vmatprep.subr.mxu0 0.0
    %1341 = vmatpush1.msra.mxu0 %v82
    %1342 = vmatprep.subr.mxu0 0.0
    %1343 = vmatpush1.msra.mxu0 %v81
    %1344 = vmatprep.subr.mxu0 0.0
    %1345 = vmatpush1.msra.mxu0 %v80
    %1346 = vmatprep.subr.mxu0 0.0
    %1347 = vmatpush1.msra.mxu0 %v79
    %1348 = vmatprep.subr.mxu0 0.0
    %1349 = vmatpush1.msra.mxu0 %v78
    %1350 = vmatprep.subr.mxu0 0.0
    %1351 = vmatpush1.msra.mxu0 %v77
    %1352 = vmatprep.subr.mxu0 0.0
    %1353 = vmatpush1.msra.mxu0 %v76
    %1354 = vmatprep.subr.mxu0 0.0
    %1355 = vmatpush2.msra.mxu0 0.0
    %1356 = vmatprep.subr.mxu0 0.0
    %1357 = vmatpush2.msra.mxu0 0.0
    %1358 = vmatprep.subr.mxu0 0.0
    %1359 = vmatpush2.msra.mxu0 0.0
    %1360 = vmatprep.subr.mxu0 0.0
    %1361 = vmatpush2.msra.mxu0 0.0
    %1362 = vmatprep.subr.mxu0 0.0
    %1363 = vmatpush2.msra.mxu0 0.0
    %1364 = vmatprep.subr.mxu0 0.0
    %1365 = vmatpush2.msra.mxu0 0.0
    %1366 = vmatprep.subr.mxu0 0.0
    %1367 = vmatpush2.msra.mxu0 0.0
    %1368 = vmatprep.subr.mxu0 0.0
    %1369 = vmatpush2.msra.mxu0 0.0
    %1370 = vmatprep.subr.mxu0 0.0
    %1371 = vmatpush2.msra.mxu0 0.0
    %1372 = vmatprep.subr.mxu0 0.0
    %1373 = vmatpush2.msra.mxu0 0.0
    %1374 = vmatprep.subr.mxu0 0.0
    %1375 = vmatpush2.msra.mxu0 0.0
    %1376 = vmatprep.subr.mxu0 0.0
    %1377 = vmatpush2.msra.mxu0 0.0
    %1378 = vmatprep.subr.mxu0 0.0
    %1379 = vmatpush2.msra.mxu0 0.0
    %1380 = vmatprep.subr.mxu0 0.0
    %1381 = vmatpush2.msra.mxu0 0.0
    %1382 = vmatprep.subr.mxu0 0.0
    %1383 = vmatpush2.msra.mxu0 0.0
    %1384 = vmatprep.subr.mxu0 0.0
    %1385 = vmatpush2.msra.mxu0 0.0
    %1386 = vmatprep.mubr.f32.mxu0 0.0
    %1387 = vmatmul.mubr.f32.gmra.mxu0 %v1321
    %v1388 = vpop.f32.mrf.mxu0
    %v1389 = vadd.f32 %v104, %v1388
    %v1390 = vpop.f32.mrf.mxu0
    %1391 = vdwg.mxu0
    %v1392 = vmul.f32 %v1389, 0.1
    %v1393 = vadd.f32 %v1250, %v1392
    %1394 = vmatprep.subr.mxu0 0.0
    %1395 = vmatpush1.msra.mxu0 %v75
    %1396 = vmatprep.subr.mxu0 0.0
    %1397 = vmatpush1.msra.mxu0 %v74
    %1398 = vmatprep.subr.mxu0 0.0
    %1399 = vmatpush1.msra.mxu0 %v73
    %1400 = vmatprep.subr.mxu0 0.0
    %1401 = vmatpush1.msra.mxu0 %v72
    %1402 = vmatprep.subr.mxu0 0.0
    %1403 = vmatpush1.msra.mxu0 %v71
    %1404 = vmatprep.subr.mxu0 0.0
    %1405 = vmatpush1.msra.mxu0 %v70
    %1406 = vmatprep.subr.mxu0 0.0
    %1407 = vmatpush1.msra.mxu0 %v69
    %1408 = vmatprep.subr.mxu0 0.0
    %1409 = vmatpush1.msra.mxu0 %v68
    %1410 = vmatprep.subr.mxu0 0.0
    %1411 = vmatpush1.msra.mxu0 %v67
    %1412 = vmatprep.subr.mxu0 0.0
    %1413 = vmatpush1.msra.mxu0 %v66
    %1414 = vmatprep.subr.mxu0 0.0
    %1415 = vmatpush1.msra.mxu0 %v65
    %1416 = vmatprep.subr.mxu0 0.0
    %1417 = vmatpush1.msra.mxu0 %v64
    %1418 = vmatprep.subr.mxu0 0.0
    %1419 = vmatpush1.msra.mxu0 %v63
    %1420 = vmatprep.subr.mxu0 0.0
    %1421 = vmatpush1.msra.mxu0 %v62
    %1422 = vmatprep.subr.mxu0 0.0
    %1423 = vmatpush1.msra.mxu0 %v61
    %1424 = vmatprep.subr.mxu0 0.0
    %1425 = vmatpush1.msra.mxu0 %v60
    %1426 = vmatprep.subr.mxu0 0.0
    %1427 = vmatpush2.msra.mxu0 0.0
    %1428 = vmatprep.subr.mxu0 0.0
    %1429 = vmatpush2.msra.mxu0 0.0
    %1430 = vmatprep.subr.mxu0 0.0
    %1431 = vmatpush2.msra.mxu0 0.0
    %1432 = vmatprep.subr.mxu0 0.0
    %1433 = vmatpush2.msra.mxu0 0.0
    %1434 = vmatprep.subr.mxu0 0.0
    %1435 = vmatpush2.msra.mxu0 0.0
    %1436 = vmatprep.subr.mxu0 0.0
    %1437 = vmatpush2.msra.mxu0 0.0
    %1438 = vmatprep.subr.mxu0 0.0
    %1439 = vmatpush2.msra.mxu0 0.0
    %1440 = vmatprep.subr.mxu0 0.0
    %1441 = vmatpush2.msra.mxu0 0.0
    %1442 = vmatprep.subr.mxu0 0.0
    %1443 = vmatpush2.msra.mxu0 0.0
    %1444 = vmatprep.subr.mxu0 0.0
    %1445 = vmatpush2.msra.mxu0 0.0
    %1446 = vmatprep.subr.mxu0 0.0
    %1447 = vmatpush2.msra.mxu0 0.0
    %1448 = vmatprep.subr.mxu0 0.0
    %1449 = vmatpush2.msra.mxu0 0.0
    %1450 = vmatprep.subr.mxu0 0.0
    %1451 = vmatpush2.msra.mxu0 0.0
    %1452 = vmatprep.subr.mxu0 0.0
    %1453 = vmatpush2.msra.mxu0 0.0
    %1454 = vmatprep.subr.mxu0 0.0
    %1455 = vmatpush2.msra.mxu0 0.0
    %1456 = vmatprep.subr.mxu0 0.0
    %1457 = vmatpush2.msra.mxu0 0.0
    %1458 = vmatprep.mubr.f32.mxu0 0.0
    %1459 = vmatmul.mubr.f32.gmra.mxu0 %v1393
    %v1460 = vpop.f32.mrf.mxu0
    %v1461 = vadd.f32 %v97, %v1460
    %v1462 = vpop.f32.mrf.mxu0
    %1463 = vdwg.mxu0
    %v1464 = vtanh.pop %v1461
    %1465 = vmatprep.subr.mxu0 0.0
    %1466 = vmatpush1.msra.mxu0 %v91
    %1467 = vmatprep.subr.mxu0 0.0
    %1468 = vmatpush1.msra.mxu0 %v90
    %1469 = vmatprep.subr.mxu0 0.0
    %1470 = vmatpush1.msra.mxu0 %v89
    %1471 = vmatprep.subr.mxu0 0.0
    %1472 = vmatpush1.msra.mxu0 %v88
    %1473 = vmatprep.subr.mxu0 0.0
    %1474 = vmatpush1.msra.mxu0 %v87
    %1475 = vmatprep.subr.mxu0 0.0
    %1476 = vmatpush1.msra.mxu0 %v86
    %1477 = vmatprep.subr.mxu0 0.0
    %1478 = vmatpush1.msra.mxu0 %v85
    %1479 = vmatprep.subr.mxu0 0.0
    %1480 = vmatpush1.msra.mxu0 %v84
    %1481 = vmatprep.subr.mxu0 0.0
    %1482 = vmatpush1.msra.mxu0 %v83
    %1483 = vmatprep.subr.mxu0 0.0
    %1484 = vmatpush1.msra.mxu0 %v82
    %1485 = vmatprep.subr.mxu0 0.0
    %1486 = vmatpush1.msra.mxu0 %v81
    %1487 = vmatprep.subr.mxu0 0.0
    %1488 = vmatpush1.msra.mxu0 %v80
    %1489 = vmatprep.subr.mxu0 0.0
    %1490 = vmatpush1.msra.mxu0 %v79
    %1491 = vmatprep.subr.mxu0 0.0
    %1492 = vmatpush1.msra.mxu0 %v78
    %1493 = vmatprep.subr.mxu0 0.0
    %1494 = vmatpush1.msra.mxu0 %v77
    %1495 = vmatprep.subr.mxu0 0.0
    %1496 = vmatpush1.msra.mxu0 %v76
    %1497 = vmatprep.subr.mxu0 0.0
    %1498 = vmatpush2.msra.mxu0 0.0
    %1499 = vmatprep.subr.mxu0 0.0
    %1500 = vmatpush2.msra.mxu0 0.0
    %1501 = vmatprep.subr.mxu0 0.0
    %1502 = vmatpush2.msra.mxu0 0.0
    %1503 = vmatprep.subr.mxu0 0.0
    %1504 = vmatpush2.msra.mxu0 0.0
    %1505 = vmatprep.subr.mxu0 0.0
    %1506 = vmatpush2.msra.mxu0 0.0
    %1507 = vmatprep.subr.mxu0 0.0
    %1508 = vmatpush2.msra.mxu0 0.0
    %1509 = vmatprep.subr.mxu0 0.0
    %1510 = vmatpush2.msra.mxu0 0.0
    %1511 = vmatprep.subr.mxu0 0.0
    %1512 = vmatpush2.msra.mxu0 0.0
    %1513 = vmatprep.subr.mxu0 0.0
    %1514 = vmatpush2.msra.mxu0 0.0
    %1515 = vmatprep.subr.mxu0 0.0
    %1516 = vmatpush2.msra.mxu0 0.0
    %1517 = vmatprep.subr.mxu0 0.0
    %1518 = vmatpush2.msra.mxu0 0.0
    %1519 = vmatprep.subr.mxu0 0.0
    %1520 = vmatpush2.msra.mxu0 0.0
    %1521 = vmatprep.subr.mxu0 0.0
    %1522 = vmatpush2.msra.mxu0 0.0
    %1523 = vmatprep.subr.mxu0 0.0
    %1524 = vmatpush2.msra.mxu0 0.0
    %1525 = vmatprep.subr.mxu0 0.0
    %1526 = vmatpush2.msra.mxu0 0.0
    %1527 = vmatprep.subr.mxu0 0.0
    %1528 = vmatpush2.msra.mxu0 0.0
    %1529 = vmatprep.mubr.f32.mxu0 0.0
    %1530 = vmatmul.mubr.f32.gmra.mxu0 %v1464
    %v1531 = vpop.f32.mrf.mxu0
    %v1532 = vadd.f32 %v104, %v1531
    %v1533 = vpop.f32.mrf.mxu0
    %1534 = vdwg.mxu0
    %v1535 = vmul.f32 %v1532, 0.1
    %v1536 = vadd.f32 %v1393, %v1535
    %1537 = vmatprep.subr.mxu0 0.0
    %1538 = vmatpush1.msra.mxu0 %v75
    %1539 = vmatprep.subr.mxu0 0.0
    %1540 = vmatpush1.msra.mxu0 %v74
    %1541 = vmatprep.subr.mxu0 0.0
    %1542 = vmatpush1.msra.mxu0 %v73
    %1543 = vmatprep.subr.mxu0 0.0
    %1544 = vmatpush1.msra.mxu0 %v72
    %1545 = vmatprep.subr.mxu0 0.0
    %1546 = vmatpush1.msra.mxu0 %v71
    %1547 = vmatprep.subr.mxu0 0.0
    %1548 = vmatpush1.msra.mxu0 %v70
    %1549 = vmatprep.subr.mxu0 0.0
    %1550 = vmatpush1.msra.mxu0 %v69
    %1551 = vmatprep.subr.mxu0 0.0
    %1552 = vmatpush1.msra.mxu0 %v68
    %1553 = vmatprep.subr.mxu0 0.0
    %1554 = vmatpush1.msra.mxu0 %v67
    %1555 = vmatprep.subr.mxu0 0.0
    %1556 = vmatpush1.msra.mxu0 %v66
    %1557 = vmatprep.subr.mxu0 0.0
    %1558 = vmatpush1.msra.mxu0 %v65
    %1559 = vmatprep.subr.mxu0 0.0
    %1560 = vmatpush1.msra.mxu0 %v64
    %1561 = vmatprep.subr.mxu0 0.0
    %1562 = vmatpush1.msra.mxu0 %v63
    %1563 = vmatprep.subr.mxu0 0.0
    %1564 = vmatpush1.msra.mxu0 %v62
    %1565 = vmatprep.subr.mxu0 0.0
    %1566 = vmatpush1.msra.mxu0 %v61
    %1567 = vmatprep.subr.mxu0 0.0
    %1568 = vmatpush1.msra.mxu0 %v60
    %1569 = vmatprep.subr.mxu0 0.0
    %1570 = vmatpush2.msra.mxu0 0.0
    %1571 = vmatprep.subr.mxu0 0.0
    %1572 = vmatpush2.msra.mxu0 0.0
    %1573 = vmatprep.subr.mxu0 0.0
    %1574 = vmatpush2.msra.mxu0 0.0
    %1575 = vmatprep.subr.mxu0 0.0
    %1576 = vmatpush2.msra.mxu0 0.0
    %1577 = vmatprep.subr.mxu0 0.0
    %1578 = vmatpush2.msra.mxu0 0.0
    %1579 = vmatprep.subr.mxu0 0.0
    %1580 = vmatpush2.msra.mxu0 0.0
    %1581 = vmatprep.subr.mxu0 0.0
    %1582 = vmatpush2.msra.mxu0 0.0
    %1583 = vmatprep.subr.mxu0 0.0
    %1584 = vmatpush2.msra.mxu0 0.0
    %1585 = vmatprep.subr.mxu0 0.0
    %1586 = vmatpush2.msra.mxu0 0.0
    %1587 = vmatprep.subr.mxu0 0.0
    %1588 = vmatpush2.msra.mxu0 0.0
    %1589 = vmatprep.subr.mxu0 0.0
    %1590 = vmatpush2.msra.mxu0 0.0
    %1591 = vmatprep.subr.mxu0 0.0
    %1592 = vmatpush2.msra.mxu0 0.0
    %1593 = vmatprep.subr.mxu0 0.0
    %1594 = vmatpush2.msra.mxu0 0.0
    %1595 = vmatprep.subr.mxu0 0.0
    %1596 = vmatpush2.msra.mxu0 0.0
    %1597 = vmatprep.subr.mxu0 0.0
    %1598 = vmatpush2.msra.mxu0 0.0
    %1599 = vmatprep.subr.mxu0 0.0
    %1600 = vmatpush2.msra.mxu0 0.0
    %1601 = vmatprep.mubr.f32.mxu0 0.0
    %1602 = vmatmul.mubr.f32.gmra.mxu0 %v1536
    %v1603 = vpop.f32.mrf.mxu0
    %v1604 = vadd.f32 %v97, %v1603
    %v1605 = vpop.f32.mrf.mxu0
    %1606 = vdwg.mxu0
    %v1607 = vtanh.pop %v1604
    %1608 = vmatprep.subr.mxu0 0.0
    %1609 = vmatpush1.msra.mxu0 %v91
    %1610 = vmatprep.subr.mxu0 0.0
    %1611 = vmatpush1.msra.mxu0 %v90
    %1612 = vmatprep.subr.mxu0 0.0
    %1613 = vmatpush1.msra.mxu0 %v89
    %1614 = vmatprep.subr.mxu0 0.0
    %1615 = vmatpush1.msra.mxu0 %v88
    %1616 = vmatprep.subr.mxu0 0.0
    %1617 = vmatpush1.msra.mxu0 %v87
    %1618 = vmatprep.subr.mxu0 0.0
    %1619 = vmatpush1.msra.mxu0 %v86
    %1620 = vmatprep.subr.mxu0 0.0
    %1621 = vmatpush1.msra.mxu0 %v85
    %1622 = vmatprep.subr.mxu0 0.0
    %1623 = vmatpush1.msra.mxu0 %v84
    %1624 = vmatprep.subr.mxu0 0.0
    %1625 = vmatpush1.msra.mxu0 %v83
    %1626 = vmatprep.subr.mxu0 0.0
    %1627 = vmatpush1.msra.mxu0 %v82
    %1628 = vmatprep.subr.mxu0 0.0
    %1629 = vmatpush1.msra.mxu0 %v81
    %1630 = vmatprep.subr.mxu0 0.0
    %1631 = vmatpush1.msra.mxu0 %v80
    %1632 = vmatprep.subr.mxu0 0.0
    %1633 = vmatpush1.msra.mxu0 %v79
    %1634 = vmatprep.subr.mxu0 0.0
    %1635 = vmatpush1.msra.mxu0 %v78
    %1636 = vmatprep.subr.mxu0 0.0
    %1637 = vmatpush1.msra.mxu0 %v77
    %1638 = vmatprep.subr.mxu0 0.0
    %1639 = vmatpush1.msra.mxu0 %v76
    %1640 = vmatprep.subr.mxu0 0.0
    %1641 = vmatpush2.msra.mxu0 0.0
    %1642 = vmatprep.subr.mxu0 0.0
    %1643 = vmatpush2.msra.mxu0 0.0
    %1644 = vmatprep.subr.mxu0 0.0
    %1645 = vmatpush2.msra.mxu0 0.0
    %1646 = vmatprep.subr.mxu0 0.0
    %1647 = vmatpush2.msra.mxu0 0.0
    %1648 = vmatprep.subr.mxu0 0.0
    %1649 = vmatpush2.msra.mxu0 0.0
    %1650 = vmatprep.subr.mxu0 0.0
    %1651 = vmatpush2.msra.mxu0 0.0
    %1652 = vmatprep.subr.mxu0 0.0
    %1653 = vmatpush2.msra.mxu0 0.0
    %1654 = vmatprep.subr.mxu0 0.0
    %1655 = vmatpush2.msra.mxu0 0.0
    %1656 = vmatprep.subr.mxu0 0.0
    %1657 = vmatpush2.msra.mxu0 0.0
    %1658 = vmatprep.subr.mxu0 0.0
    %1659 = vmatpush2.msra.mxu0 0.0
    %1660 = vmatprep.subr.mxu0 0.0
    %1661 = vmatpush2.msra.mxu0 0.0
    %1662 = vmatprep.subr.mxu0 0.0
    %1663 = vmatpush2.msra.mxu0 0.0
    %1664 = vmatprep.subr.mxu0 0.0
    %1665 = vmatpush2.msra.mxu0 0.0
    %1666 = vmatprep.subr.mxu0 0.0
    %1667 = vmatpush2.msra.mxu0 0.0
    %1668 = vmatprep.subr.mxu0 0.0
    %1669 = vmatpush2.msra.mxu0 0.0
    %1670 = vmatprep.subr.mxu0 0.0
    %1671 = vmatpush2.msra.mxu0 0.0
    %1672 = vmatprep.mubr.f32.mxu0 0.0
    %1673 = vmatmul.mubr.f32.gmra.mxu0 %v1607
    %v1674 = vpop.f32.mrf.mxu0
    %v1675 = vadd.f32 %v104, %v1674
    %v1676 = vpop.f32.mrf.mxu0
    %1677 = vdwg.mxu0
    %v1678 = vmul.f32 %v1675, 0.1
    %v1679 = vadd.f32 %v1536, %v1678
    %1680 = vmatprep.subr.mxu0 0.0
    %1681 = vmatpush1.msra.mxu0 %v75
    %1682 = vmatprep.subr.mxu0 0.0
    %1683 = vmatpush1.msra.mxu0 %v74
    %1684 = vmatprep.subr.mxu0 0.0
    %1685 = vmatpush1.msra.mxu0 %v73
    %1686 = vmatprep.subr.mxu0 0.0
    %1687 = vmatpush1.msra.mxu0 %v72
    %1688 = vmatprep.subr.mxu0 0.0
    %1689 = vmatpush1.msra.mxu0 %v71
    %1690 = vmatprep.subr.mxu0 0.0
    %1691 = vmatpush1.msra.mxu0 %v70
    %1692 = vmatprep.subr.mxu0 0.0
    %1693 = vmatpush1.msra.mxu0 %v69
    %1694 = vmatprep.subr.mxu0 0.0
    %1695 = vmatpush1.msra.mxu0 %v68
    %1696 = vmatprep.subr.mxu0 0.0
    %1697 = vmatpush1.msra.mxu0 %v67
    %1698 = vmatprep.subr.mxu0 0.0
    %1699 = vmatpush1.msra.mxu0 %v66
    %1700 = vmatprep.subr.mxu0 0.0
    %1701 = vmatpush1.msra.mxu0 %v65
    %1702 = vmatprep.subr.mxu0 0.0
    %1703 = vmatpush1.msra.mxu0 %v64
    %1704 = vmatprep.subr.mxu0 0.0
    %1705 = vmatpush1.msra.mxu0 %v63
    %1706 = vmatprep.subr.mxu0 0.0
    %1707 = vmatpush1.msra.mxu0 %v62
    %1708 = vmatprep.subr.mxu0 0.0
    %1709 = vmatpush1.msra.mxu0 %v61
    %1710 = vmatprep.subr.mxu0 0.0
    %1711 = vmatpush1.msra.mxu0 %v60
    %1712 = vmatprep.subr.mxu0 0.0
    %1713 = vmatpush2.msra.mxu0 0.0
    %1714 = vmatprep.subr.mxu0 0.0
    %1715 = vmatpush2.msra.mxu0 0.0
    %1716 = vmatprep.subr.mxu0 0.0
    %1717 = vmatpush2.msra.mxu0 0.0
    %1718 = vmatprep.subr.mxu0 0.0
    %1719 = vmatpush2.msra.mxu0 0.0
    %1720 = vmatprep.subr.mxu0 0.0
    %1721 = vmatpush2.msra.mxu0 0.0
    %1722 = vmatprep.subr.mxu0 0.0
    %1723 = vmatpush2.msra.mxu0 0.0
    %1724 = vmatprep.subr.mxu0 0.0
    %1725 = vmatpush2.msra.mxu0 0.0
    %1726 = vmatprep.subr.mxu0 0.0
    %1727 = vmatpush2.msra.mxu0 0.0
    %1728 = vmatprep.subr.mxu0 0.0
    %1729 = vmatpush2.msra.mxu0 0.0
    %1730 = vmatprep.subr.mxu0 0.0
    %1731 = vmatpush2.msra.mxu0 0.0
    %1732 = vmatprep.subr.mxu0 0.0
    %1733 = vmatpush2.msra.mxu0 0.0
    %1734 = vmatprep.subr.mxu0 0.0
    %1735 = vmatpush2.msra.mxu0 0.0
    %1736 = vmatprep.subr.mxu0 0.0
    %1737 = vmatpush2.msra.mxu0 0.0
    %1738 = vmatprep.subr.mxu0 0.0
    %1739 = vmatpush2.msra.mxu0 0.0
    %1740 = vmatprep.subr.mxu0 0.0
    %1741 = vmatpush2.msra.mxu0 0.0
    %1742 = vmatprep.subr.mxu0 0.0
    %1743 = vmatpush2.msra.mxu0 0.0
    %1744 = vmatprep.mubr.f32.mxu0 0.0
    %1745 = vmatmul.mubr.f32.gmra.mxu0 %v1679
    %v1746 = vpop.f32.mrf.mxu0
    %v1747 = vadd.f32 %v97, %v1746
    %v1748 = vpop.f32.mrf.mxu0
    %1749 = vdwg.mxu0
    %v1750 = vtanh.pop %v1747
    %1751 = vmatprep.subr.mxu0 0.0
    %1752 = vmatpush1.msra.mxu0 %v91
    %1753 = vmatprep.subr.mxu0 0.0
    %1754 = vmatpush1.msra.mxu0 %v90
    %1755 = vmatprep.subr.mxu0 0.0
    %1756 = vmatpush1.msra.mxu0 %v89
    %1757 = vmatprep.subr.mxu0 0.0
    %1758 = vmatpush1.msra.mxu0 %v88
    %1759 = vmatprep.subr.mxu0 0.0
    %1760 = vmatpush1.msra.mxu0 %v87
    %1761 = vmatprep.subr.mxu0 0.0
    %1762 = vmatpush1.msra.mxu0 %v86
    %1763 = vmatprep.subr.mxu0 0.0
    %1764 = vmatpush1.msra.mxu0 %v85
    %1765 = vmatprep.subr.mxu0 0.0
    %1766 = vmatpush1.msra.mxu0 %v84
    %1767 = vmatprep.subr.mxu0 0.0
    %1768 = vmatpush1.msra.mxu0 %v83
    %1769 = vmatprep.subr.mxu0 0.0
    %1770 = vmatpush1.msra.mxu0 %v82
    %1771 = vmatprep.subr.mxu0 0.0
    %1772 = vmatpush1.msra.mxu0 %v81
    %1773 = vmatprep.subr.mxu0 0.0
    %1774 = vmatpush1.msra.mxu0 %v80
    %1775 = vmatprep.subr.mxu0 0.0
    %1776 = vmatpush1.msra.mxu0 %v79
    %1777 = vmatprep.subr.mxu0 0.0
    %1778 = vmatpush1.msra.mxu0 %v78
    %1779 = vmatprep.subr.mxu0 0.0
    %1780 = vmatpush1.msra.mxu0 %v77
    %1781 = vmatprep.subr.mxu0 0.0
    %1782 = vmatpush1.msra.mxu0 %v76
    %1783 = vmatprep.subr.mxu0 0.0
    %1784 = vmatpush2.msra.mxu0 0.0
    %1785 = vmatprep.subr.mxu0 0.0
    %1786 = vmatpush2.msra.mxu0 0.0
    %1787 = vmatprep.subr.mxu0 0.0
    %1788 = vmatpush2.msra.mxu0 0.0
    %1789 = vmatprep.subr.mxu0 0.0
    %1790 = vmatpush2.msra.mxu0 0.0
    %1791 = vmatprep.subr.mxu0 0.0
    %1792 = vmatpush2.msra.mxu0 0.0
    %1793 = vmatprep.subr.mxu0 0.0
    %1794 = vmatpush2.msra.mxu0 0.0
    %1795 = vmatprep.subr.mxu0 0.0
    %1796 = vmatpush2.msra.mxu0 0.0
    %1797 = vmatprep.subr.mxu0 0.0
    %1798 = vmatpush2.msra.mxu0 0.0
    %1799 = vmatprep.subr.mxu0 0.0
    %1800 = vmatpush2.msra.mxu0 0.0
    %1801 = vmatprep.subr.mxu0 0.0
    %1802 = vmatpush2.msra.mxu0 0.0
    %1803 = vmatprep.subr.mxu0 0.0
    %1804 = vmatpush2.msra.mxu0 0.0
    %1805 = vmatprep.subr.mxu0 0.0
    %1806 = vmatpush2.msra.mxu0 0.0
    %1807 = vmatprep.subr.mxu0 0.0
    %1808 = vmatpush2.msra.mxu0 0.0
    %1809 = vmatprep.subr.mxu0 0.0
    %1810 = vmatpush2.msra.mxu0 0.0
    %1811 = vmatprep.subr.mxu0 0.0
    %1812 = vmatpush2.msra.mxu0 0.0
    %1813 = vmatprep.subr.mxu0 0.0
    %1814 = vmatpush2.msra.mxu0 0.0
    %1815 = vmatprep.mubr.f32.mxu0 0.0
    %1816 = vmatmul.mubr.f32.gmra.mxu0 %v1750
    %v1817 = vpop.f32.mrf.mxu0
    %v1818 = vadd.f32 %v104, %v1817
    %v1819 = vpop.f32.mrf.mxu0
    %1820 = vdwg.mxu0
    %v1821 = vmul.f32 %v1818, 0.1
    %v1822 = vadd.f32 %v1679, %v1821
    %1823 = vmatprep.subr.mxu0 0.0
    %1824 = vmatpush1.msra.mxu0 %v75
    %1825 = vmatprep.subr.mxu0 0.0
    %1826 = vmatpush1.msra.mxu0 %v74
    %1827 = vmatprep.subr.mxu0 0.0
    %1828 = vmatpush1.msra.mxu0 %v73
    %1829 = vmatprep.subr.mxu0 0.0
    %1830 = vmatpush1.msra.mxu0 %v72
    %1831 = vmatprep.subr.mxu0 0.0
    %1832 = vmatpush1.msra.mxu0 %v71
    %1833 = vmatprep.subr.mxu0 0.0
    %1834 = vmatpush1.msra.mxu0 %v70
    %1835 = vmatprep.subr.mxu0 0.0
    %1836 = vmatpush1.msra.mxu0 %v69
    %1837 = vmatprep.subr.mxu0 0.0
    %1838 = vmatpush1.msra.mxu0 %v68
    %1839 = vmatprep.subr.mxu0 0.0
    %1840 = vmatpush1.msra.mxu0 %v67
    %1841 = vmatprep.subr.mxu0 0.0
    %1842 = vmatpush1.msra.mxu0 %v66
    %1843 = vmatprep.subr.mxu0 0.0
    %1844 = vmatpush1.msra.mxu0 %v65
    %1845 = vmatprep.subr.mxu0 0.0
    %1846 = vmatpush1.msra.mxu0 %v64
    %1847 = vmatprep.subr.mxu0 0.0
    %1848 = vmatpush1.msra.mxu0 %v63
    %1849 = vmatprep.subr.mxu0 0.0
    %1850 = vmatpush1.msra.mxu0 %v62
    %1851 = vmatprep.subr.mxu0 0.0
    %1852 = vmatpush1.msra.mxu0 %v61
    %1853 = vmatprep.subr.mxu0 0.0
    %1854 = vmatpush1.msra.mxu0 %v60
    %1855 = vmatprep.subr.mxu0 0.0
    %1856 = vmatpush2.msra.mxu0 0.0
    %1857 = vmatprep.subr.mxu0 0.0
    %1858 = vmatpush2.msra.mxu0 0.0
    %1859 = vmatprep.subr.mxu0 0.0
    %1860 = vmatpush2.msra.mxu0 0.0
    %1861 = vmatprep.subr.mxu0 0.0
    %1862 = vmatpush2.msra.mxu0 0.0
    %1863 = vmatprep.subr.mxu0 0.0
    %1864 = vmatpush2.msra.mxu0 0.0
    %1865 = vmatprep.subr.mxu0 0.0
    %1866 = vmatpush2.msra.mxu0 0.0
    %1867 = vmatprep.subr.mxu0 0.0
    %1868 = vmatpush2.msra.mxu0 0.0
    %1869 = vmatprep.subr.mxu0 0.0
    %1870 = vmatpush2.msra.mxu0 0.0
    %1871 = vmatprep.subr.mxu0 0.0
    %1872 = vmatpush2.msra.mxu0 0.0
    %1873 = vmatprep.subr.mxu0 0.0
    %1874 = vmatpush2.msra.mxu0 0.0
    %1875 = vmatprep.subr.mxu0 0.0
    %1876 = vmatpush2.msra.mxu0 0.0
    %1877 = vmatprep.subr.mxu0 0.0
    %1878 = vmatpush2.msra.mxu0 0.0
    %1879 = vmatprep.subr.mxu0 0.0
    %1880 = vmatpush2.msra.mxu0 0.0
    %1881 = vmatprep.subr.mxu0 0.0
    %1882 = vmatpush2.msra.mxu0 0.0
    %1883 = vmatprep.subr.mxu0 0.0
    %1884 = vmatpush2.msra.mxu0 0.0
    %1885 = vmatprep.subr.mxu0 0.0
    %1886 = vmatpush2.msra.mxu0 0.0
    %1887 = vmatprep.mubr.f32.mxu0 0.0
    %1888 = vmatmul.mubr.f32.gmra.mxu0 %v1822
    %v1889 = vpop.f32.mrf.mxu0
    %v1890 = vadd.f32 %v97, %v1889
    %v1891 = vpop.f32.mrf.mxu0
    %1892 = vdwg.mxu0
    %v1893 = vtanh.pop %v1890
    %1894 = vmatprep.subr.mxu0 0.0
    %1895 = vmatpush1.msra.mxu0 %v91
    %1896 = vmatprep.subr.mxu0 0.0
    %1897 = vmatpush1.msra.mxu0 %v90
    %1898 = vmatprep.subr.mxu0 0.0
    %1899 = vmatpush1.msra.mxu0 %v89
    %1900 = vmatprep.subr.mxu0 0.0
    %1901 = vmatpush1.msra.mxu0 %v88
    %1902 = vmatprep.subr.mxu0 0.0
    %1903 = vmatpush1.msra.mxu0 %v87
    %1904 = vmatprep.subr.mxu0 0.0
    %1905 = vmatpush1.msra.mxu0 %v86
    %1906 = vmatprep.subr.mxu0 0.0
    %1907 = vmatpush1.msra.mxu0 %v85
    %1908 = vmatprep.subr.mxu0 0.0
    %1909 = vmatpush1.msra.mxu0 %v84
    %1910 = vmatprep.subr.mxu0 0.0
    %1911 = vmatpush1.msra.mxu0 %v83
    %1912 = vmatprep.subr.mxu0 0.0
    %1913 = vmatpush1.msra.mxu0 %v82
    %1914 = vmatprep.subr.mxu0 0.0
    %1915 = vmatpush1.msra.mxu0 %v81
    %1916 = vmatprep.subr.mxu0 0.0
    %1917 = vmatpush1.msra.mxu0 %v80
    %1918 = vmatprep.subr.mxu0 0.0
    %1919 = vmatpush1.msra.mxu0 %v79
    %1920 = vmatprep.subr.mxu0 0.0
    %1921 = vmatpush1.msra.mxu0 %v78
    %1922 = vmatprep.subr.mxu0 0.0
    %1923 = vmatpush1.msra.mxu0 %v77
    %1924 = vmatprep.subr.mxu0 0.0
    %1925 = vmatpush1.msra.mxu0 %v76
    %1926 = vmatprep.subr.mxu0 0.0
    %1927 = vmatpush2.msra.mxu0 0.0
    %1928 = vmatprep.subr.mxu0 0.0
    %1929 = vmatpush2.msra.mxu0 0.0
    %1930 = vmatprep.subr.mxu0 0.0
    %1931 = vmatpush2.msra.mxu0 0.0
    %1932 = vmatprep.subr.mxu0 0.0
    %1933 = vmatpush2.msra.mxu0 0.0
    %1934 = vmatprep.subr.mxu0 0.0
    %1935 = vmatpush2.msra.mxu0 0.0
    %1936 = vmatprep.subr.mxu0 0.0
    %1937 = vmatpush2.msra.mxu0 0.0
    %1938 = vmatprep.subr.mxu0 0.0
    %1939 = vmatpush2.msra.mxu0 0.0
    %1940 = vmatprep.subr.mxu0 0.0
    %1941 = vmatpush2.msra.mxu0 0.0
    %1942 = vmatprep.subr.mxu0 0.0
    %1943 = vmatpush2.msra.mxu0 0.0
    %1944 = vmatprep.subr.mxu0 0.0
    %1945 = vmatpush2.msra.mxu0 0.0
    %1946 = vmatprep.subr.mxu0 0.0
    %1947 = vmatpush2.msra.mxu0 0.0
    %1948 = vmatprep.subr.mxu0 0.0
    %1949 = vmatpush2.msra.mxu0 0.0
    %1950 = vmatprep.subr.mxu0 0.0
    %1951 = vmatpush2.msra.mxu0 0.0
    %1952 = vmatprep.subr.mxu0 0.0
    %1953 = vmatpush2.msra.mxu0 0.0
    %1954 = vmatprep.subr.mxu0 0.0
    %1955 = vmatpush2.msra.mxu0 0.0
    %1956 = vmatprep.subr.mxu0 0.0
    %1957 = vmatpush2.msra.mxu0 0.0
    %1958 = vmatprep.mubr.f32.mxu0 0.0
    %1959 = vmatmul.mubr.f32.gmra.mxu0 %v1893
    %v1960 = vpop.f32.mrf.mxu0
    %v1961 = vadd.f32 %v104, %v1960
    %v1962 = vpop.f32.mrf.mxu0
    %1963 = vdwg.mxu0
    %v1964 = vmul.f32 %v1961, 0.1
    %v1965 = vadd.f32 %v1822, %v1964
    %1966 = vmatprep.subr.mxu0 0.0
    %1967 = vmatpush1.msra.mxu0 %v75
    %1968 = vmatprep.subr.mxu0 0.0
    %1969 = vmatpush1.msra.mxu0 %v74
    %1970 = vmatprep.subr.mxu0 0.0
    %1971 = vmatpush1.msra.mxu0 %v73
    %1972 = vmatprep.subr.mxu0 0.0
    %1973 = vmatpush1.msra.mxu0 %v72
    %1974 = vmatprep.subr.mxu0 0.0
    %1975 = vmatpush1.msra.mxu0 %v71
    %1976 = vmatprep.subr.mxu0 0.0
    %1977 = vmatpush1.msra.mxu0 %v70
    %1978 = vmatprep.subr.mxu0 0.0
    %1979 = vmatpush1.msra.mxu0 %v69
    %1980 = vmatprep.subr.mxu0 0.0
    %1981 = vmatpush1.msra.mxu0 %v68
    %1982 = vmatprep.subr.mxu0 0.0
    %1983 = vmatpush1.msra.mxu0 %v67
    %1984 = vmatprep.subr.mxu0 0.0
    %1985 = vmatpush1.msra.mxu0 %v66
    %1986 = vmatprep.subr.mxu0 0.0
    %1987 = vmatpush1.msra.mxu0 %v65
    %1988 = vmatprep.subr.mxu0 0.0
    %1989 = vmatpush1.msra.mxu0 %v64
    %1990 = vmatprep.subr.mxu0 0.0
    %1991 = vmatpush1.msra.mxu0 %v63
    %1992 = vmatprep.subr.mxu0 0.0
    %1993 = vmatpush1.msra.mxu0 %v62
    %1994 = vmatprep.subr.mxu0 0.0
    %1995 = vmatpush1.msra.mxu0 %v61
    %1996 = vmatprep.subr.mxu0 0.0
    %1997 = vmatpush1.msra.mxu0 %v60
    %1998 = vmatprep.subr.mxu0 0.0
    %1999 = vmatpush2.msra.mxu0 0.0
    %2000 = vmatprep.subr.mxu0 0.0
    %2001 = vmatpush2.msra.mxu0 0.0
    %2002 = vmatprep.subr.mxu0 0.0
    %2003 = vmatpush2.msra.mxu0 0.0
    %2004 = vmatprep.subr.mxu0 0.0
    %2005 = vmatpush2.msra.mxu0 0.0
    %2006 = vmatprep.subr.mxu0 0.0
    %2007 = vmatpush2.msra.mxu0 0.0
    %2008 = vmatprep.subr.mxu0 0.0
    %2009 = vmatpush2.msra.mxu0 0.0
    %2010 = vmatprep.subr.mxu0 0.0
    %2011 = vmatpush2.msra.mxu0 0.0
    %2012 = vmatprep.subr.mxu0 0.0
    %2013 = vmatpush2.msra.mxu0 0.0
    %2014 = vmatprep.subr.mxu0 0.0
    %2015 = vmatpush2.msra.mxu0 0.0
    %2016 = vmatprep.subr.mxu0 0.0
    %2017 = vmatpush2.msra.mxu0 0.0
    %2018 = vmatprep.subr.mxu0 0.0
    %2019 = vmatpush2.msra.mxu0 0.0
    %2020 = vmatprep.subr.mxu0 0.0
    %2021 = vmatpush2.msra.mxu0 0.0
    %2022 = vmatprep.subr.mxu0 0.0
    %2023 = vmatpush2.msra.mxu0 0.0
    %2024 = vmatprep.subr.mxu0 0.0
    %2025 = vmatpush2.msra.mxu0 0.0
    %2026 = vmatprep.subr.mxu0 0.0
    %2027 = vmatpush2.msra.mxu0 0.0
    %2028 = vmatprep.subr.mxu0 0.0
    %2029 = vmatpush2.msra.mxu0 0.0
    %2030 = vmatprep.mubr.f32.mxu0 0.0
    %2031 = vmatmul.mubr.f32.gmra.mxu0 %v1965
    %v2032 = vpop.f32.mrf.mxu0
    %v2033 = vadd.f32 %v97, %v2032
    %v2034 = vpop.f32.mrf.mxu0
    %2035 = vdwg.mxu0
    %v2036 = vtanh.pop %v2033
    %2037 = vmatprep.subr.mxu0 0.0
    %2038 = vmatpush1.msra.mxu0 %v91
    %2039 = vmatprep.subr.mxu0 0.0
    %2040 = vmatpush1.msra.mxu0 %v90
    %2041 = vmatprep.subr.mxu0 0.0
    %2042 = vmatpush1.msra.mxu0 %v89
    %2043 = vmatprep.subr.mxu0 0.0
    %2044 = vmatpush1.msra.mxu0 %v88
    %2045 = vmatprep.subr.mxu0 0.0
    %2046 = vmatpush1.msra.mxu0 %v87
    %2047 = vmatprep.subr.mxu0 0.0
    %2048 = vmatpush1.msra.mxu0 %v86
    %2049 = vmatprep.subr.mxu0 0.0
    %2050 = vmatpush1.msra.mxu0 %v85
    %2051 = vmatprep.subr.mxu0 0.0
    %2052 = vmatpush1.msra.mxu0 %v84
    %2053 = vmatprep.subr.mxu0 0.0
    %2054 = vmatpush1.msra.mxu0 %v83
    %2055 = vmatprep.subr.mxu0 0.0
    %2056 = vmatpush1.msra.mxu0 %v82
    %2057 = vmatprep.subr.mxu0 0.0
    %2058 = vmatpush1.msra.mxu0 %v81
    %2059 = vmatprep.subr.mxu0 0.0
    %2060 = vmatpush1.msra.mxu0 %v80
    %2061 = vmatprep.subr.mxu0 0.0
    %2062 = vmatpush1.msra.mxu0 %v79
    %2063 = vmatprep.subr.mxu0 0.0
    %2064 = vmatpush1.msra.mxu0 %v78
    %2065 = vmatprep.subr.mxu0 0.0
    %2066 = vmatpush1.msra.mxu0 %v77
    %2067 = vmatprep.subr.mxu0 0.0
    %2068 = vmatpush1.msra.mxu0 %v76
    %2069 = vmatprep.subr.mxu0 0.0
    %2070 = vmatpush2.msra.mxu0 0.0
    %2071 = vmatprep.subr.mxu0 0.0
    %2072 = vmatpush2.msra.mxu0 0.0
    %2073 = vmatprep.subr.mxu0 0.0
    %2074 = vmatpush2.msra.mxu0 0.0
    %2075 = vmatprep.subr.mxu0 0.0
    %2076 = vmatpush2.msra.mxu0 0.0
    %2077 = vmatprep.subr.mxu0 0.0
    %2078 = vmatpush2.msra.mxu0 0.0
    %2079 = vmatprep.subr.mxu0 0.0
    %2080 = vmatpush2.msra.mxu0 0.0
    %2081 = vmatprep.subr.mxu0 0.0
    %2082 = vmatpush2.msra.mxu0 0.0
    %2083 = vmatprep.subr.mxu0 0.0
    %2084 = vmatpush2.msra.mxu0 0.0
    %2085 = vmatprep.subr.mxu0 0.0
    %2086 = vmatpush2.msra.mxu0 0.0
    %2087 = vmatprep.subr.mxu0 0.0
    %2088 = vmatpush2.msra.mxu0 0.0
    %2089 = vmatprep.subr.mxu0 0.0
    %2090 = vmatpush2.msra.mxu0 0.0
    %2091 = vmatprep.subr.mxu0 0.0
    %2092 = vmatpush2.msra.mxu0 0.0
    %2093 = vmatprep.subr.mxu0 0.0
    %2094 = vmatpush2.msra.mxu0 0.0
    %2095 = vmatprep.subr.mxu0 0.0
    %2096 = vmatpush2.msra.mxu0 0.0
    %2097 = vmatprep.subr.mxu0 0.0
    %2098 = vmatpush2.msra.mxu0 0.0
    %2099 = vmatprep.subr.mxu0 0.0
    %2100 = vmatpush2.msra.mxu0 0.0
    %2101 = vmatprep.mubr.f32.mxu0 0.0
    %2102 = vmatmul.mubr.f32.gmra.mxu0 %v2036
    %v2103 = vpop.f32.mrf.mxu0
    %v2104 = vadd.f32 %v104, %v2103
    %v2105 = vpop.f32.mrf.mxu0
    %2106 = vdwg.mxu0
    %v2107 = vmul.f32 %v2104, 0.1
    %v2108 = vadd.f32 %v1965, %v2107
    %2109 = vmatprep.subr.mxu0 0.0
    %2110 = vmatpush1.msra.mxu0 %v75
    %2111 = vmatprep.subr.mxu0 0.0
    %2112 = vmatpush1.msra.mxu0 %v74
    %2113 = vmatprep.subr.mxu0 0.0
    %2114 = vmatpush1.msra.mxu0 %v73
    %2115 = vmatprep.subr.mxu0 0.0
    %2116 = vmatpush1.msra.mxu0 %v72
    %2117 = vmatprep.subr.mxu0 0.0
    %2118 = vmatpush1.msra.mxu0 %v71
    %2119 = vmatprep.subr.mxu0 0.0
    %2120 = vmatpush1.msra.mxu0 %v70
    %2121 = vmatprep.subr.mxu0 0.0
    %2122 = vmatpush1.msra.mxu0 %v69
    %2123 = vmatprep.subr.mxu0 0.0
    %2124 = vmatpush1.msra.mxu0 %v68
    %2125 = vmatprep.subr.mxu0 0.0
    %2126 = vmatpush1.msra.mxu0 %v67
    %2127 = vmatprep.subr.mxu0 0.0
    %2128 = vmatpush1.msra.mxu0 %v66
    %2129 = vmatprep.subr.mxu0 0.0
    %2130 = vmatpush1.msra.mxu0 %v65
    %2131 = vmatprep.subr.mxu0 0.0
    %2132 = vmatpush1.msra.mxu0 %v64
    %2133 = vmatprep.subr.mxu0 0.0
    %2134 = vmatpush1.msra.mxu0 %v63
    %2135 = vmatprep.subr.mxu0 0.0
    %2136 = vmatpush1.msra.mxu0 %v62
    %2137 = vmatprep.subr.mxu0 0.0
    %2138 = vmatpush1.msra.mxu0 %v61
    %2139 = vmatprep.subr.mxu0 0.0
    %2140 = vmatpush1.msra.mxu0 %v60
    %2141 = vmatprep.subr.mxu0 0.0
    %2142 = vmatpush2.msra.mxu0 0.0
    %2143 = vmatprep.subr.mxu0 0.0
    %2144 = vmatpush2.msra.mxu0 0.0
    %2145 = vmatprep.subr.mxu0 0.0
    %2146 = vmatpush2.msra.mxu0 0.0
    %2147 = vmatprep.subr.mxu0 0.0
    %2148 = vmatpush2.msra.mxu0 0.0
    %2149 = vmatprep.subr.mxu0 0.0
    %2150 = vmatpush2.msra.mxu0 0.0
    %2151 = vmatprep.subr.mxu0 0.0
    %2152 = vmatpush2.msra.mxu0 0.0
    %2153 = vmatprep.subr.mxu0 0.0
    %2154 = vmatpush2.msra.mxu0 0.0
    %2155 = vmatprep.subr.mxu0 0.0
    %2156 = vmatpush2.msra.mxu0 0.0
    %2157 = vmatprep.subr.mxu0 0.0
    %2158 = vmatpush2.msra.mxu0 0.0
    %2159 = vmatprep.subr.mxu0 0.0
    %2160 = vmatpush2.msra.mxu0 0.0
    %2161 = vmatprep.subr.mxu0 0.0
    %2162 = vmatpush2.msra.mxu0 0.0
    %2163 = vmatprep.subr.mxu0 0.0
    %2164 = vmatpush2.msra.mxu0 0.0
    %2165 = vmatprep.subr.mxu0 0.0
    %2166 = vmatpush2.msra.mxu0 0.0
    %2167 = vmatprep.subr.mxu0 0.0
    %2168 = vmatpush2.msra.mxu0 0.0
    %2169 = vmatprep.subr.mxu0 0.0
    %2170 = vmatpush2.msra.mxu0 0.0
    %2171 = vmatprep.subr.mxu0 0.0
    %2172 = vmatpush2.msra.mxu0 0.0
    %2173 = vmatprep.mubr.f32.mxu0 0.0
    %2174 = vmatmul.mubr.f32.gmra.mxu0 %v2108
    %v2175 = vpop.f32.mrf.mxu0
    %v2176 = vadd.f32 %v97, %v2175
    %v2177 = vpop.f32.mrf.mxu0
    %2178 = vdwg.mxu0
    %v2179 = vtanh.pop %v2176
    %2180 = vmatprep.subr.mxu0 0.0
    %2181 = vmatpush1.msra.mxu0 %v91
    %2182 = vmatprep.subr.mxu0 0.0
    %2183 = vmatpush1.msra.mxu0 %v90
    %2184 = vmatprep.subr.mxu0 0.0
    %2185 = vmatpush1.msra.mxu0 %v89
    %2186 = vmatprep.subr.mxu0 0.0
    %2187 = vmatpush1.msra.mxu0 %v88
    %2188 = vmatprep.subr.mxu0 0.0
    %2189 = vmatpush1.msra.mxu0 %v87
    %2190 = vmatprep.subr.mxu0 0.0
    %2191 = vmatpush1.msra.mxu0 %v86
    %2192 = vmatprep.subr.mxu0 0.0
    %2193 = vmatpush1.msra.mxu0 %v85
    %2194 = vmatprep.subr.mxu0 0.0
    %2195 = vmatpush1.msra.mxu0 %v84
    %2196 = vmatprep.subr.mxu0 0.0
    %2197 = vmatpush1.msra.mxu0 %v83
    %2198 = vmatprep.subr.mxu0 0.0
    %2199 = vmatpush1.msra.mxu0 %v82
    %2200 = vmatprep.subr.mxu0 0.0
    %2201 = vmatpush1.msra.mxu0 %v81
    %2202 = vmatprep.subr.mxu0 0.0
    %2203 = vmatpush1.msra.mxu0 %v80
    %2204 = vmatprep.subr.mxu0 0.0
    %2205 = vmatpush1.msra.mxu0 %v79
    %2206 = vmatprep.subr.mxu0 0.0
    %2207 = vmatpush1.msra.mxu0 %v78
    %2208 = vmatprep.subr.mxu0 0.0
    %2209 = vmatpush1.msra.mxu0 %v77
    %2210 = vmatprep.subr.mxu0 0.0
    %2211 = vmatpush1.msra.mxu0 %v76
    %2212 = vmatprep.subr.mxu0 0.0
    %2213 = vmatpush2.msra.mxu0 0.0
    %2214 = vmatprep.subr.mxu0 0.0
    %2215 = vmatpush2.msra.mxu0 0.0
    %2216 = vmatprep.subr.mxu0 0.0
    %2217 = vmatpush2.msra.mxu0 0.0
    %2218 = vmatprep.subr.mxu0 0.0
    %2219 = vmatpush2.msra.mxu0 0.0
    %2220 = vmatprep.subr.mxu0 0.0
    %2221 = vmatpush2.msra.mxu0 0.0
    %2222 = vmatprep.subr.mxu0 0.0
    %2223 = vmatpush2.msra.mxu0 0.0
    %2224 = vmatprep.subr.mxu0 0.0
    %2225 = vmatpush2.msra.mxu0 0.0
    %2226 = vmatprep.subr.mxu0 0.0
    %2227 = vmatpush2.msra.mxu0 0.0
    %2228 = vmatprep.subr.mxu0 0.0
    %2229 = vmatpush2.msra.mxu0 0.0
    %2230 = vmatprep.subr.mxu0 0.0
    %2231 = vmatpush2.msra.mxu0 0.0
    %2232 = vmatprep.subr.mxu0 0.0
    %2233 = vmatpush2.msra.mxu0 0.0
    %2234 = vmatprep.subr.mxu0 0.0
    %2235 = vmatpush2.msra.mxu0 0.0
    %2236 = vmatprep.subr.mxu0 0.0
    %2237 = vmatpush2.msra.mxu0 0.0
    %2238 = vmatprep.subr.mxu0 0.0
    %2239 = vmatpush2.msra.mxu0 0.0
    %2240 = vmatprep.subr.mxu0 0.0
    %2241 = vmatpush2.msra.mxu0 0.0
    %2242 = vmatprep.subr.mxu0 0.0
    %2243 = vmatpush2.msra.mxu0 0.0
    %2244 = vmatprep.mubr.f32.mxu0 0.0
    %2245 = vmatmul.mubr.f32.gmra.mxu0 %v2179
    %v2246 = vpop.f32.mrf.mxu0
    %v2247 = vadd.f32 %v104, %v2246
    %v2248 = vpop.f32.mrf.mxu0
    %2249 = vdwg.mxu0
    %v2250 = vmul.f32 %v2247, 0.1
    %v2251 = vadd.f32 %v2108, %v2250
    %2252 = vmatprep.subr.mxu0 0.0
    %2253 = vmatpush1.msra.mxu0 %v75
    %2254 = vmatprep.subr.mxu0 0.0
    %2255 = vmatpush1.msra.mxu0 %v74
    %2256 = vmatprep.subr.mxu0 0.0
    %2257 = vmatpush1.msra.mxu0 %v73
    %2258 = vmatprep.subr.mxu0 0.0
    %2259 = vmatpush1.msra.mxu0 %v72
    %2260 = vmatprep.subr.mxu0 0.0
    %2261 = vmatpush1.msra.mxu0 %v71
    %2262 = vmatprep.subr.mxu0 0.0
    %2263 = vmatpush1.msra.mxu0 %v70
    %2264 = vmatprep.subr.mxu0 0.0
    %2265 = vmatpush1.msra.mxu0 %v69
    %2266 = vmatprep.subr.mxu0 0.0
    %2267 = vmatpush1.msra.mxu0 %v68
    %2268 = vmatprep.subr.mxu0 0.0
    %2269 = vmatpush1.msra.mxu0 %v67
    %2270 = vmatprep.subr.mxu0 0.0
    %2271 = vmatpush1.msra.mxu0 %v66
    %2272 = vmatprep.subr.mxu0 0.0
    %2273 = vmatpush1.msra.mxu0 %v65
    %2274 = vmatprep.subr.mxu0 0.0
    %2275 = vmatpush1.msra.mxu0 %v64
    %2276 = vmatprep.subr.mxu0 0.0
    %2277 = vmatpush1.msra.mxu0 %v63
    %2278 = vmatprep.subr.mxu0 0.0
    %2279 = vmatpush1.msra.mxu0 %v62
    %2280 = vmatprep.subr.mxu0 0.0
    %2281 = vmatpush1.msra.mxu0 %v61
    %2282 = vmatprep.subr.mxu0 0.0
    %2283 = vmatpush1.msra.mxu0 %v60
    %2284 = vmatprep.subr.mxu0 0.0
    %2285 = vmatpush2.msra.mxu0 0.0
    %2286 = vmatprep.subr.mxu0 0.0
    %2287 = vmatpush2.msra.mxu0 0.0
    %2288 = vmatprep.subr.mxu0 0.0
    %2289 = vmatpush2.msra.mxu0 0.0
    %2290 = vmatprep.subr.mxu0 0.0
    %2291 = vmatpush2.msra.mxu0 0.0
    %2292 = vmatprep.subr.mxu0 0.0
    %2293 = vmatpush2.msra.mxu0 0.0
    %2294 = vmatprep.subr.mxu0 0.0
    %2295 = vmatpush2.msra.mxu0 0.0
    %2296 = vmatprep.subr.mxu0 0.0
    %2297 = vmatpush2.msra.mxu0 0.0
    %2298 = vmatprep.subr.mxu0 0.0
    %2299 = vmatpush2.msra.mxu0 0.0
    %2300 = vmatprep.subr.mxu0 0.0
    %2301 = vmatpush2.msra.mxu0 0.0
    %2302 = vmatprep.subr.mxu0 0.0
    %2303 = vmatpush2.msra.mxu0 0.0
    %2304 = vmatprep.subr.mxu0 0.0
    %2305 = vmatpush2.msra.mxu0 0.0
    %2306 = vmatprep.subr.mxu0 0.0
    %2307 = vmatpush2.msra.mxu0 0.0
    %2308 = vmatprep.subr.mxu0 0.0
    %2309 = vmatpush2.msra.mxu0 0.0
    %2310 = vmatprep.subr.mxu0 0.0
    %2311 = vmatpush2.msra.mxu0 0.0
    %2312 = vmatprep.subr.mxu0 0.0
    %2313 = vmatpush2.msra.mxu0 0.0
    %2314 = vmatprep.subr.mxu0 0.0
    %2315 = vmatpush2.msra.mxu0 0.0
    %2316 = vmatprep.mubr.f32.mxu0 0.0
    %2317 = vmatmul.mubr.f32.gmra.mxu0 %v2251
    %v2318 = vpop.f32.mrf.mxu0
    %v2319 = vadd.f32 %v97, %v2318
    %v2320 = vpop.f32.mrf.mxu0
    %2321 = vdwg.mxu0
    %v2322 = vtanh.pop %v2319
    %2323 = vmatprep.subr.mxu0 0.0
    %2324 = vmatpush1.msra.mxu0 %v91
    %2325 = vmatprep.subr.mxu0 0.0
    %2326 = vmatpush1.msra.mxu0 %v90
    %2327 = vmatprep.subr.mxu0 0.0
    %2328 = vmatpush1.msra.mxu0 %v89
    %2329 = vmatprep.subr.mxu0 0.0
    %2330 = vmatpush1.msra.mxu0 %v88
    %2331 = vmatprep.subr.mxu0 0.0
    %2332 = vmatpush1.msra.mxu0 %v87
    %2333 = vmatprep.subr.mxu0 0.0
    %2334 = vmatpush1.msra.mxu0 %v86
    %2335 = vmatprep.subr.mxu0 0.0
    %2336 = vmatpush1.msra.mxu0 %v85
    %2337 = vmatprep.subr.mxu0 0.0
    %2338 = vmatpush1.msra.mxu0 %v84
    %2339 = vmatprep.subr.mxu0 0.0
    %2340 = vmatpush1.msra.mxu0 %v83
    %2341 = vmatprep.subr.mxu0 0.0
    %2342 = vmatpush1.msra.mxu0 %v82
    %2343 = vmatprep.subr.mxu0 0.0
    %2344 = vmatpush1.msra.mxu0 %v81
    %2345 = vmatprep.subr.mxu0 0.0
    %2346 = vmatpush1.msra.mxu0 %v80
    %2347 = vmatprep.subr.mxu0 0.0
    %2348 = vmatpush1.msra.mxu0 %v79
    %2349 = vmatprep.subr.mxu0 0.0
    %2350 = vmatpush1.msra.mxu0 %v78
    %2351 = vmatprep.subr.mxu0 0.0
    %2352 = vmatpush1.msra.mxu0 %v77
    %2353 = vmatprep.subr.mxu0 0.0
    %2354 = vmatpush1.msra.mxu0 %v76
    %2355 = vmatprep.subr.mxu0 0.0
    %2356 = vmatpush2.msra.mxu0 0.0
    %2357 = vmatprep.subr.mxu0 0.0
    %2358 = vmatpush2.msra.mxu0 0.0
    %2359 = vmatprep.subr.mxu0 0.0
    %2360 = vmatpush2.msra.mxu0 0.0
    %2361 = vmatprep.subr.mxu0 0.0
    %2362 = vmatpush2.msra.mxu0 0.0
    %2363 = vmatprep.subr.mxu0 0.0
    %2364 = vmatpush2.msra.mxu0 0.0
    %2365 = vmatprep.subr.mxu0 0.0
    %2366 = vmatpush2.msra.mxu0 0.0
    %2367 = vmatprep.subr.mxu0 0.0
    %2368 = vmatpush2.msra.mxu0 0.0
    %2369 = vmatprep.subr.mxu0 0.0
    %2370 = vmatpush2.msra.mxu0 0.0
    %2371 = vmatprep.subr.mxu0 0.0
    %2372 = vmatpush2.msra.mxu0 0.0
    %2373 = vmatprep.subr.mxu0 0.0
    %2374 = vmatpush2.msra.mxu0 0.0
    %2375 = vmatprep.subr.mxu0 0.0
    %2376 = vmatpush2.msra.mxu0 0.0
    %2377 = vmatprep.subr.mxu0 0.0
    %2378 = vmatpush2.msra.mxu0 0.0
    %2379 = vmatprep.subr.mxu0 0.0
    %2380 = vmatpush2.msra.mxu0 0.0
    %2381 = vmatprep.subr.mxu0 0.0
    %2382 = vmatpush2.msra.mxu0 0.0
    %2383 = vmatprep.subr.mxu0 0.0
    %2384 = vmatpush2.msra.mxu0 0.0
    %2385 = vmatprep.subr.mxu0 0.0
    %2386 = vmatpush2.msra.mxu0 0.0
    %2387 = vmatprep.mubr.f32.mxu0 0.0
    %2388 = vmatmul.mubr.f32.gmra.mxu0 %v2322
    %v2389 = vpop.f32.mrf.mxu0
    %v2390 = vadd.f32 %v104, %v2389
    %v2391 = vpop.f32.mrf.mxu0
    %2392 = vdwg.mxu0
    %v2393 = vmul.f32 %v2390, 0.1
    %v2394 = vadd.f32 %v2251, %v2393
    %2395 = vmatprep.subr.mxu0 0.0
    %2396 = vmatpush1.msra.mxu0 %v75
    %2397 = vmatprep.subr.mxu0 0.0
    %2398 = vmatpush1.msra.mxu0 %v74
    %2399 = vmatprep.subr.mxu0 0.0
    %2400 = vmatpush1.msra.mxu0 %v73
    %2401 = vmatprep.subr.mxu0 0.0
    %2402 = vmatpush1.msra.mxu0 %v72
    %2403 = vmatprep.subr.mxu0 0.0
    %2404 = vmatpush1.msra.mxu0 %v71
    %2405 = vmatprep.subr.mxu0 0.0
    %2406 = vmatpush1.msra.mxu0 %v70
    %2407 = vmatprep.subr.mxu0 0.0
    %2408 = vmatpush1.msra.mxu0 %v69
    %2409 = vmatprep.subr.mxu0 0.0
    %2410 = vmatpush1.msra.mxu0 %v68
    %2411 = vmatprep.subr.mxu0 0.0
    %2412 = vmatpush1.msra.mxu0 %v67
    %2413 = vmatprep.subr.mxu0 0.0
    %2414 = vmatpush1.msra.mxu0 %v66
    %2415 = vmatprep.subr.mxu0 0.0
    %2416 = vmatpush1.msra.mxu0 %v65
    %2417 = vmatprep.subr.mxu0 0.0
    %2418 = vmatpush1.msra.mxu0 %v64
    %2419 = vmatprep.subr.mxu0 0.0
    %2420 = vmatpush1.msra.mxu0 %v63
    %2421 = vmatprep.subr.mxu0 0.0
    %2422 = vmatpush1.msra.mxu0 %v62
    %2423 = vmatprep.subr.mxu0 0.0
    %2424 = vmatpush1.msra.mxu0 %v61
    %2425 = vmatprep.subr.mxu0 0.0
    %2426 = vmatpush1.msra.mxu0 %v60
    %2427 = vmatprep.subr.mxu0 0.0
    %2428 = vmatpush2.msra.mxu0 0.0
    %2429 = vmatprep.subr.mxu0 0.0
    %2430 = vmatpush2.msra.mxu0 0.0
    %2431 = vmatprep.subr.mxu0 0.0
    %2432 = vmatpush2.msra.mxu0 0.0
    %2433 = vmatprep.subr.mxu0 0.0
    %2434 = vmatpush2.msra.mxu0 0.0
    %2435 = vmatprep.subr.mxu0 0.0
    %2436 = vmatpush2.msra.mxu0 0.0
    %2437 = vmatprep.subr.mxu0 0.0
    %2438 = vmatpush2.msra.mxu0 0.0
    %2439 = vmatprep.subr.mxu0 0.0
    %2440 = vmatpush2.msra.mxu0 0.0
    %2441 = vmatprep.subr.mxu0 0.0
    %2442 = vmatpush2.msra.mxu0 0.0
    %2443 = vmatprep.subr.mxu0 0.0
    %2444 = vmatpush2.msra.mxu0 0.0
    %2445 = vmatprep.subr.mxu0 0.0
    %2446 = vmatpush2.msra.mxu0 0.0
    %2447 = vmatprep.subr.mxu0 0.0
    %2448 = vmatpush2.msra.mxu0 0.0
    %2449 = vmatprep.subr.mxu0 0.0
    %2450 = vmatpush2.msra.mxu0 0.0
    %2451 = vmatprep.subr.mxu0 0.0
    %2452 = vmatpush2.msra.mxu0 0.0
    %2453 = vmatprep.subr.mxu0 0.0
    %2454 = vmatpush2.msra.mxu0 0.0
    %2455 = vmatprep.subr.mxu0 0.0
    %2456 = vmatpush2.msra.mxu0 0.0
    %2457 = vmatprep.subr.mxu0 0.0
    %2458 = vmatpush2.msra.mxu0 0.0
    %2459 = vmatprep.mubr.f32.mxu0 0.0
    %2460 = vmatmul.mubr.f32.gmra.mxu0 %v2394
    %v2461 = vpop.f32.mrf.mxu0
    %v2462 = vadd.f32 %v97, %v2461
    %v2463 = vpop.f32.mrf.mxu0
    %2464 = vdwg.mxu0
    %v2465 = vtanh.pop %v2462
    %2466 = vmatprep.subr.mxu0 0.0
    %2467 = vmatpush1.msra.mxu0 %v91
    %2468 = vmatprep.subr.mxu0 0.0
    %2469 = vmatpush1.msra.mxu0 %v90
    %2470 = vmatprep.subr.mxu0 0.0
    %2471 = vmatpush1.msra.mxu0 %v89
    %2472 = vmatprep.subr.mxu0 0.0
    %2473 = vmatpush1.msra.mxu0 %v88
    %2474 = vmatprep.subr.mxu0 0.0
    %2475 = vmatpush1.msra.mxu0 %v87
    %2476 = vmatprep.subr.mxu0 0.0
    %2477 = vmatpush1.msra.mxu0 %v86
    %2478 = vmatprep.subr.mxu0 0.0
    %2479 = vmatpush1.msra.mxu0 %v85
    %2480 = vmatprep.subr.mxu0 0.0
    %2481 = vmatpush1.msra.mxu0 %v84
    %2482 = vmatprep.subr.mxu0 0.0
    %2483 = vmatpush1.msra.mxu0 %v83
    %2484 = vmatprep.subr.mxu0 0.0
    %2485 = vmatpush1.msra.mxu0 %v82
    %2486 = vmatprep.subr.mxu0 0.0
    %2487 = vmatpush1.msra.mxu0 %v81
    %2488 = vmatprep.subr.mxu0 0.0
    %2489 = vmatpush1.msra.mxu0 %v80
    %2490 = vmatprep.subr.mxu0 0.0
    %2491 = vmatpush1.msra.mxu0 %v79
    %2492 = vmatprep.subr.mxu0 0.0
    %2493 = vmatpush1.msra.mxu0 %v78
    %2494 = vmatprep.subr.mxu0 0.0
    %2495 = vmatpush1.msra.mxu0 %v77
    %2496 = vmatprep.subr.mxu0 0.0
    %2497 = vmatpush1.msra.mxu0 %v76
    %2498 = vmatprep.subr.mxu0 0.0
    %2499 = vmatpush2.msra.mxu0 0.0
    %2500 = vmatprep.subr.mxu0 0.0
    %2501 = vmatpush2.msra.mxu0 0.0
    %2502 = vmatprep.subr.mxu0 0.0
    %2503 = vmatpush2.msra.mxu0 0.0
    %2504 = vmatprep.subr.mxu0 0.0
    %2505 = vmatpush2.msra.mxu0 0.0
    %2506 = vmatprep.subr.mxu0 0.0
    %2507 = vmatpush2.msra.mxu0 0.0
    %2508 = vmatprep.subr.mxu0 0.0
    %2509 = vmatpush2.msra.mxu0 0.0
    %2510 = vmatprep.subr.mxu0 0.0
    %2511 = vmatpush2.msra.mxu0 0.0
    %2512 = vmatprep.subr.mxu0 0.0
    %2513 = vmatpush2.msra.mxu0 0.0
    %2514 = vmatprep.subr.mxu0 0.0
    %2515 = vmatpush2.msra.mxu0 0.0
    %2516 = vmatprep.subr.mxu0 0.0
    %2517 = vmatpush2.msra.mxu0 0.0
    %2518 = vmatprep.subr.mxu0 0.0
    %2519 = vmatpush2.msra.mxu0 0.0
    %2520 = vmatprep.subr.mxu0 0.0
    %2521 = vmatpush2.msra.mxu0 0.0
    %2522 = vmatprep.subr.mxu0 0.0
    %2523 = vmatpush2.msra.mxu0 0.0
    %2524 = vmatprep.subr.mxu0 0.0
    %2525 = vmatpush2.msra.mxu0 0.0
    %2526 = vmatprep.subr.mxu0 0.0
    %2527 = vmatpush2.msra.mxu0 0.0
    %2528 = vmatprep.subr.mxu0 0.0
    %2529 = vmatpush2.msra.mxu0 0.0
    %2530 = vmatprep.mubr.f32.mxu0 0.0
    %2531 = vmatmul.mubr.f32.gmra.mxu0 %v2465
    %v2532 = vpop.f32.mrf.mxu0
    %v2533 = vadd.f32 %v104, %v2532
    %v2534 = vpop.f32.mrf.mxu0
    %2535 = vdwg.mxu0
    %v2536 = vmul.f32 %v2533, 0.1
    %v2537 = vadd.f32 %v2394, %v2536
    %2538 = vmatprep.subr.mxu0 0.0
    %2539 = vmatpush1.msra.mxu0 %v75
    %2540 = vmatprep.subr.mxu0 0.0
    %2541 = vmatpush1.msra.mxu0 %v74
    %2542 = vmatprep.subr.mxu0 0.0
    %2543 = vmatpush1.msra.mxu0 %v73
    %2544 = vmatprep.subr.mxu0 0.0
    %2545 = vmatpush1.msra.mxu0 %v72
    %2546 = vmatprep.subr.mxu0 0.0
    %2547 = vmatpush1.msra.mxu0 %v71
    %2548 = vmatprep.subr.mxu0 0.0
    %2549 = vmatpush1.msra.mxu0 %v70
    %2550 = vmatprep.subr.mxu0 0.0
    %2551 = vmatpush1.msra.mxu0 %v69
    %2552 = vmatprep.subr.mxu0 0.0
    %2553 = vmatpush1.msra.mxu0 %v68
    %2554 = vmatprep.subr.mxu0 0.0
    %2555 = vmatpush1.msra.mxu0 %v67
    %2556 = vmatprep.subr.mxu0 0.0
    %2557 = vmatpush1.msra.mxu0 %v66
    %2558 = vmatprep.subr.mxu0 0.0
    %2559 = vmatpush1.msra.mxu0 %v65
    %2560 = vmatprep.subr.mxu0 0.0
    %2561 = vmatpush1.msra.mxu0 %v64
    %2562 = vmatprep.subr.mxu0 0.0
    %2563 = vmatpush1.msra.mxu0 %v63
    %2564 = vmatprep.subr.mxu0 0.0
    %2565 = vmatpush1.msra.mxu0 %v62
    %2566 = vmatprep.subr.mxu0 0.0
    %2567 = vmatpush1.msra.mxu0 %v61
    %2568 = vmatprep.subr.mxu0 0.0
    %2569 = vmatpush1.msra.mxu0 %v60
    %2570 = vmatprep.subr.mxu0 0.0
    %2571 = vmatpush2.msra.mxu0 0.0
    %2572 = vmatprep.subr.mxu0 0.0
    %2573 = vmatpush2.msra.mxu0 0.0
    %2574 = vmatprep.subr.mxu0 0.0
    %2575 = vmatpush2.msra.mxu0 0.0
    %2576 = vmatprep.subr.mxu0 0.0
    %2577 = vmatpush2.msra.mxu0 0.0
    %2578 = vmatprep.subr.mxu0 0.0
    %2579 = vmatpush2.msra.mxu0 0.0
    %2580 = vmatprep.subr.mxu0 0.0
    %2581 = vmatpush2.msra.mxu0 0.0
    %2582 = vmatprep.subr.mxu0 0.0
    %2583 = vmatpush2.msra.mxu0 0.0
    %2584 = vmatprep.subr.mxu0 0.0
    %2585 = vmatpush2.msra.mxu0 0.0
    %2586 = vmatprep.subr.mxu0 0.0
    %2587 = vmatpush2.msra.mxu0 0.0
    %2588 = vmatprep.subr.mxu0 0.0
    %2589 = vmatpush2.msra.mxu0 0.0
    %2590 = vmatprep.subr.mxu0 0.0
    %2591 = vmatpush2.msra.mxu0 0.0
    %2592 = vmatprep.subr.mxu0 0.0
    %2593 = vmatpush2.msra.mxu0 0.0
    %2594 = vmatprep.subr.mxu0 0.0
    %2595 = vmatpush2.msra.mxu0 0.0
    %2596 = vmatprep.subr.mxu0 0.0
    %2597 = vmatpush2.msra.mxu0 0.0
    %2598 = vmatprep.subr.mxu0 0.0
    %2599 = vmatpush2.msra.mxu0 0.0
    %2600 = vmatprep.subr.mxu0 0.0
    %2601 = vmatpush2.msra.mxu0 0.0
    %2602 = vmatprep.mubr.f32.mxu0 0.0
    %2603 = vmatmul.mubr.f32.gmra.mxu0 %v2537
    %v2604 = vpop.f32.mrf.mxu0
    %v2605 = vadd.f32 %v97, %v2604
    %v2606 = vpop.f32.mrf.mxu0
    %2607 = vdwg.mxu0
    %v2608 = vtanh.pop %v2605
    %2609 = vmatprep.subr.mxu0 0.0
    %2610 = vmatpush1.msra.mxu0 %v91
    %2611 = vmatprep.subr.mxu0 0.0
    %2612 = vmatpush1.msra.mxu0 %v90
    %2613 = vmatprep.subr.mxu0 0.0
    %2614 = vmatpush1.msra.mxu0 %v89
    %2615 = vmatprep.subr.mxu0 0.0
    %2616 = vmatpush1.msra.mxu0 %v88
    %2617 = vmatprep.subr.mxu0 0.0
    %2618 = vmatpush1.msra.mxu0 %v87
    %2619 = vmatprep.subr.mxu0 0.0
    %2620 = vmatpush1.msra.mxu0 %v86
    %2621 = vmatprep.subr.mxu0 0.0
    %2622 = vmatpush1.msra.mxu0 %v85
    %2623 = vmatprep.subr.mxu0 0.0
    %2624 = vmatpush1.msra.mxu0 %v84
    %2625 = vmatprep.subr.mxu0 0.0
    %2626 = vmatpush1.msra.mxu0 %v83
    %2627 = vmatprep.subr.mxu0 0.0
    %2628 = vmatpush1.msra.mxu0 %v82
    %2629 = vmatprep.subr.mxu0 0.0
    %2630 = vmatpush1.msra.mxu0 %v81
    %2631 = vmatprep.subr.mxu0 0.0
    %2632 = vmatpush1.msra.mxu0 %v80
    %2633 = vmatprep.subr.mxu0 0.0
    %2634 = vmatpush1.msra.mxu0 %v79
    %2635 = vmatprep.subr.mxu0 0.0
    %2636 = vmatpush1.msra.mxu0 %v78
    %2637 = vmatprep.subr.mxu0 0.0
    %2638 = vmatpush1.msra.mxu0 %v77
    %2639 = vmatprep.subr.mxu0 0.0
    %2640 = vmatpush1.msra.mxu0 %v76
    %2641 = vmatprep.subr.mxu0 0.0
    %2642 = vmatpush2.msra.mxu0 0.0
    %2643 = vmatprep.subr.mxu0 0.0
    %2644 = vmatpush2.msra.mxu0 0.0
    %2645 = vmatprep.subr.mxu0 0.0
    %2646 = vmatpush2.msra.mxu0 0.0
    %2647 = vmatprep.subr.mxu0 0.0
    %2648 = vmatpush2.msra.mxu0 0.0
    %2649 = vmatprep.subr.mxu0 0.0
    %2650 = vmatpush2.msra.mxu0 0.0
    %2651 = vmatprep.subr.mxu0 0.0
    %2652 = vmatpush2.msra.mxu0 0.0
    %2653 = vmatprep.subr.mxu0 0.0
    %2654 = vmatpush2.msra.mxu0 0.0
    %2655 = vmatprep.subr.mxu0 0.0
    %2656 = vmatpush2.msra.mxu0 0.0
    %2657 = vmatprep.subr.mxu0 0.0
    %2658 = vmatpush2.msra.mxu0 0.0
    %2659 = vmatprep.subr.mxu0 0.0
    %2660 = vmatpush2.msra.mxu0 0.0
    %2661 = vmatprep.subr.mxu0 0.0
    %2662 = vmatpush2.msra.mxu0 0.0
    %2663 = vmatprep.subr.mxu0 0.0
    %2664 = vmatpush2.msra.mxu0 0.0
    %2665 = vmatprep.subr.mxu0 0.0
    %2666 = vmatpush2.msra.mxu0 0.0
    %2667 = vmatprep.subr.mxu0 0.0
    %2668 = vmatpush2.msra.mxu0 0.0
    %2669 = vmatprep.subr.mxu0 0.0
    %2670 = vmatpush2.msra.mxu0 0.0
    %2671 = vmatprep.subr.mxu0 0.0
    %2672 = vmatpush2.msra.mxu0 0.0
    %2673 = vmatprep.mubr.f32.mxu0 0.0
    %2674 = vmatmul.mubr.f32.gmra.mxu0 %v2608
    %v2675 = vpop.f32.mrf.mxu0
    %v2676 = vadd.f32 %v104, %v2675
    %v2677 = vpop.f32.mrf.mxu0
    %2678 = vdwg.mxu0
    %v2679 = vmul.f32 %v2676, 0.1
    %v2680 = vadd.f32 %v2537, %v2679
    %2681 = vmatprep.subr.mxu0 0.0
    %2682 = vmatpush1.msra.mxu0 %v75
    %2683 = vmatprep.subr.mxu0 0.0
    %2684 = vmatpush1.msra.mxu0 %v74
    %2685 = vmatprep.subr.mxu0 0.0
    %2686 = vmatpush1.msra.mxu0 %v73
    %2687 = vmatprep.subr.mxu0 0.0
    %2688 = vmatpush1.msra.mxu0 %v72
    %2689 = vmatprep.subr.mxu0 0.0
    %2690 = vmatpush1.msra.mxu0 %v71
    %2691 = vmatprep.subr.mxu0 0.0
    %2692 = vmatpush1.msra.mxu0 %v70
    %2693 = vmatprep.subr.mxu0 0.0
    %2694 = vmatpush1.msra.mxu0 %v69
    %2695 = vmatprep.subr.mxu0 0.0
    %2696 = vmatpush1.msra.mxu0 %v68
    %2697 = vmatprep.subr.mxu0 0.0
    %2698 = vmatpush1.msra.mxu0 %v67
    %2699 = vmatprep.subr.mxu0 0.0
    %2700 = vmatpush1.msra.mxu0 %v66
    %2701 = vmatprep.subr.mxu0 0.0
    %2702 = vmatpush1.msra.mxu0 %v65
    %2703 = vmatprep.subr.mxu0 0.0
    %2704 = vmatpush1.msra.mxu0 %v64
    %2705 = vmatprep.subr.mxu0 0.0
    %2706 = vmatpush1.msra.mxu0 %v63
    %2707 = vmatprep.subr.mxu0 0.0
    %2708 = vmatpush1.msra.mxu0 %v62
    %2709 = vmatprep.subr.mxu0 0.0
    %2710 = vmatpush1.msra.mxu0 %v61
    %2711 = vmatprep.subr.mxu0 0.0
    %2712 = vmatpush1.msra.mxu0 %v60
    %2713 = vmatprep.subr.mxu0 0.0
    %2714 = vmatpush2.msra.mxu0 0.0
    %2715 = vmatprep.subr.mxu0 0.0
    %2716 = vmatpush2.msra.mxu0 0.0
    %2717 = vmatprep.subr.mxu0 0.0
    %2718 = vmatpush2.msra.mxu0 0.0
    %2719 = vmatprep.subr.mxu0 0.0
    %2720 = vmatpush2.msra.mxu0 0.0
    %2721 = vmatprep.subr.mxu0 0.0
    %2722 = vmatpush2.msra.mxu0 0.0
    %2723 = vmatprep.subr.mxu0 0.0
    %2724 = vmatpush2.msra.mxu0 0.0
    %2725 = vmatprep.subr.mxu0 0.0
    %2726 = vmatpush2.msra.mxu0 0.0
    %2727 = vmatprep.subr.mxu0 0.0
    %2728 = vmatpush2.msra.mxu0 0.0
    %2729 = vmatprep.subr.mxu0 0.0
    %2730 = vmatpush2.msra.mxu0 0.0
    %2731 = vmatprep.subr.mxu0 0.0
    %2732 = vmatpush2.msra.mxu0 0.0
    %2733 = vmatprep.subr.mxu0 0.0
    %2734 = vmatpush2.msra.mxu0 0.0
    %2735 = vmatprep.subr.mxu0 0.0
    %2736 = vmatpush2.msra.mxu0 0.0
    %2737 = vmatprep.subr.mxu0 0.0
    %2738 = vmatpush2.msra.mxu0 0.0
    %2739 = vmatprep.subr.mxu0 0.0
    %2740 = vmatpush2.msra.mxu0 0.0
    %2741 = vmatprep.subr.mxu0 0.0
    %2742 = vmatpush2.msra.mxu0 0.0
    %2743 = vmatprep.subr.mxu0 0.0
    %2744 = vmatpush2.msra.mxu0 0.0
    %2745 = vmatprep.mubr.f32.mxu0 0.0
    %2746 = vmatmul.mubr.f32.gmra.mxu0 %v2680
    %v2747 = vpop.f32.mrf.mxu0
    %v2748 = vadd.f32 %v97, %v2747
    %v2749 = vpop.f32.mrf.mxu0
    %2750 = vdwg.mxu0
    %v2751 = vtanh.pop %v2748
    %2752 = vmatprep.subr.mxu0 0.0
    %2753 = vmatpush1.msra.mxu0 %v91
    %2754 = vmatprep.subr.mxu0 0.0
    %2755 = vmatpush1.msra.mxu0 %v90
    %2756 = vmatprep.subr.mxu0 0.0
    %2757 = vmatpush1.msra.mxu0 %v89
    %2758 = vmatprep.subr.mxu0 0.0
    %2759 = vmatpush1.msra.mxu0 %v88
    %2760 = vmatprep.subr.mxu0 0.0
    %2761 = vmatpush1.msra.mxu0 %v87
    %2762 = vmatprep.subr.mxu0 0.0
    %2763 = vmatpush1.msra.mxu0 %v86
    %2764 = vmatprep.subr.mxu0 0.0
    %2765 = vmatpush1.msra.mxu0 %v85
    %2766 = vmatprep.subr.mxu0 0.0
    %2767 = vmatpush1.msra.mxu0 %v84
    %2768 = vmatprep.subr.mxu0 0.0
    %2769 = vmatpush1.msra.mxu0 %v83
    %2770 = vmatprep.subr.mxu0 0.0
    %2771 = vmatpush1.msra.mxu0 %v82
    %2772 = vmatprep.subr.mxu0 0.0
    %2773 = vmatpush1.msra.mxu0 %v81
    %2774 = vmatprep.subr.mxu0 0.0
    %2775 = vmatpush1.msra.mxu0 %v80
    %2776 = vmatprep.subr.mxu0 0.0
    %2777 = vmatpush1.msra.mxu0 %v79
    %2778 = vmatprep.subr.mxu0 0.0
    %2779 = vmatpush1.msra.mxu0 %v78
    %2780 = vmatprep.subr.mxu0 0.0
    %2781 = vmatpush1.msra.mxu0 %v77
    %2782 = vmatprep.subr.mxu0 0.0
    %2783 = vmatpush1.msra.mxu0 %v76
    %2784 = vmatprep.subr.mxu0 0.0
    %2785 = vmatpush2.msra.mxu0 0.0
    %2786 = vmatprep.subr.mxu0 0.0
    %2787 = vmatpush2.msra.mxu0 0.0
    %2788 = vmatprep.subr.mxu0 0.0
    %2789 = vmatpush2.msra.mxu0 0.0
    %2790 = vmatprep.subr.mxu0 0.0
    %2791 = vmatpush2.msra.mxu0 0.0
    %2792 = vmatprep.subr.mxu0 0.0
    %2793 = vmatpush2.msra.mxu0 0.0
    %2794 = vmatprep.subr.mxu0 0.0
    %2795 = vmatpush2.msra.mxu0 0.0
    %2796 = vmatprep.subr.mxu0 0.0
    %2797 = vmatpush2.msra.mxu0 0.0
    %2798 = vmatprep.subr.mxu0 0.0
    %2799 = vmatpush2.msra.mxu0 0.0
    %2800 = vmatprep.subr.mxu0 0.0
    %2801 = vmatpush2.msra.mxu0 0.0
    %2802 = vmatprep.subr.mxu0 0.0
    %2803 = vmatpush2.msra.mxu0 0.0
    %2804 = vmatprep.subr.mxu0 0.0
    %2805 = vmatpush2.msra.mxu0 0.0
    %2806 = vmatprep.subr.mxu0 0.0
    %2807 = vmatpush2.msra.mxu0 0.0
    %2808 = vmatprep.subr.mxu0 0.0
    %2809 = vmatpush2.msra.mxu0 0.0
    %2810 = vmatprep.subr.mxu0 0.0
    %2811 = vmatpush2.msra.mxu0 0.0
    %2812 = vmatprep.subr.mxu0 0.0
    %2813 = vmatpush2.msra.mxu0 0.0
    %2814 = vmatprep.subr.mxu0 0.0
    %2815 = vmatpush2.msra.mxu0 0.0
    %2816 = vmatprep.mubr.f32.mxu0 0.0
    %2817 = vmatmul.mubr.f32.gmra.mxu0 %v2751
    %v2818 = vpop.f32.mrf.mxu0
    %v2819 = vadd.f32 %v104, %v2818
    %v2820 = vpop.f32.mrf.mxu0
    %2821 = vdwg.mxu0
    %v2822 = vmul.f32 %v2819, 0.1
    %v2823 = vadd.f32 %v2680, %v2822
    %2824 = vmatprep.subr.mxu0 0.0
    %2825 = vmatpush1.msra.mxu0 %v75
    %2826 = vmatprep.subr.mxu0 0.0
    %2827 = vmatpush1.msra.mxu0 %v74
    %2828 = vmatprep.subr.mxu0 0.0
    %2829 = vmatpush1.msra.mxu0 %v73
    %2830 = vmatprep.subr.mxu0 0.0
    %2831 = vmatpush1.msra.mxu0 %v72
    %2832 = vmatprep.subr.mxu0 0.0
    %2833 = vmatpush1.msra.mxu0 %v71
    %2834 = vmatprep.subr.mxu0 0.0
    %2835 = vmatpush1.msra.mxu0 %v70
    %2836 = vmatprep.subr.mxu0 0.0
    %2837 = vmatpush1.msra.mxu0 %v69
    %2838 = vmatprep.subr.mxu0 0.0
    %2839 = vmatpush1.msra.mxu0 %v68
    %2840 = vmatprep.subr.mxu0 0.0
    %2841 = vmatpush1.msra.mxu0 %v67
    %2842 = vmatprep.subr.mxu0 0.0
    %2843 = vmatpush1.msra.mxu0 %v66
    %2844 = vmatprep.subr.mxu0 0.0
    %2845 = vmatpush1.msra.mxu0 %v65
    %2846 = vmatprep.subr.mxu0 0.0
    %2847 = vmatpush1.msra.mxu0 %v64
    %2848 = vmatprep.subr.mxu0 0.0
    %2849 = vmatpush1.msra.mxu0 %v63
    %2850 = vmatprep.subr.mxu0 0.0
    %2851 = vmatpush1.msra.mxu0 %v62
    %2852 = vmatprep.subr.mxu0 0.0
    %2853 = vmatpush1.msra.mxu0 %v61
    %2854 = vmatprep.subr.mxu0 0.0
    %2855 = vmatpush1.msra.mxu0 %v60
    %2856 = vmatprep.subr.mxu0 0.0
    %2857 = vmatpush2.msra.mxu0 0.0
    %2858 = vmatprep.subr.mxu0 0.0
    %2859 = vmatpush2.msra.mxu0 0.0
    %2860 = vmatprep.subr.mxu0 0.0
    %2861 = vmatpush2.msra.mxu0 0.0
    %2862 = vmatprep.subr.mxu0 0.0
    %2863 = vmatpush2.msra.mxu0 0.0
    %2864 = vmatprep.subr.mxu0 0.0
    %2865 = vmatpush2.msra.mxu0 0.0
    %2866 = vmatprep.subr.mxu0 0.0
    %2867 = vmatpush2.msra.mxu0 0.0
    %2868 = vmatprep.subr.mxu0 0.0
    %2869 = vmatpush2.msra.mxu0 0.0
    %2870 = vmatprep.subr.mxu0 0.0
    %2871 = vmatpush2.msra.mxu0 0.0
    %2872 = vmatprep.subr.mxu0 0.0
    %2873 = vmatpush2.msra.mxu0 0.0
    %2874 = vmatprep.subr.mxu0 0.0
    %2875 = vmatpush2.msra.mxu0 0.0
    %2876 = vmatprep.subr.mxu0 0.0
    %2877 = vmatpush2.msra.mxu0 0.0
    %2878 = vmatprep.subr.mxu0 0.0
    %2879 = vmatpush2.msra.mxu0 0.0
    %2880 = vmatprep.subr.mxu0 0.0
    %2881 = vmatpush2.msra.mxu0 0.0
    %2882 = vmatprep.subr.mxu0 0.0
    %2883 = vmatpush2.msra.mxu0 0.0
    %2884 = vmatprep.subr.mxu0 0.0
    %2885 = vmatpush2.msra.mxu0 0.0
    %2886 = vmatprep.subr.mxu0 0.0
    %2887 = vmatpush2.msra.mxu0 0.0
    %2888 = vmatprep.mubr.f32.mxu0 0.0
    %2889 = vmatmul.mubr.f32.gmra.mxu0 %v2823
    %v2890 = vpop.f32.mrf.mxu0
    %v2891 = vadd.f32 %v97, %v2890
    %v2892 = vpop.f32.mrf.mxu0
    %2893 = vdwg.mxu0
    %v2894 = vtanh.pop %v2891
    %2895 = vmatprep.subr.mxu0 0.0
    %2896 = vmatpush1.msra.mxu0 %v91
    %2897 = vmatprep.subr.mxu0 0.0
    %2898 = vmatpush1.msra.mxu0 %v90
    %2899 = vmatprep.subr.mxu0 0.0
    %2900 = vmatpush1.msra.mxu0 %v89
    %2901 = vmatprep.subr.mxu0 0.0
    %2902 = vmatpush1.msra.mxu0 %v88
    %2903 = vmatprep.subr.mxu0 0.0
    %2904 = vmatpush1.msra.mxu0 %v87
    %2905 = vmatprep.subr.mxu0 0.0
    %2906 = vmatpush1.msra.mxu0 %v86
    %2907 = vmatprep.subr.mxu0 0.0
    %2908 = vmatpush1.msra.mxu0 %v85
    %2909 = vmatprep.subr.mxu0 0.0
    %2910 = vmatpush1.msra.mxu0 %v84
    %2911 = vmatprep.subr.mxu0 0.0
    %2912 = vmatpush1.msra.mxu0 %v83
    %2913 = vmatprep.subr.mxu0 0.0
    %2914 = vmatpush1.msra.mxu0 %v82
    %2915 = vmatprep.subr.mxu0 0.0
    %2916 = vmatpush1.msra.mxu0 %v81
    %2917 = vmatprep.subr.mxu0 0.0
    %2918 = vmatpush1.msra.mxu0 %v80
    %2919 = vmatprep.subr.mxu0 0.0
    %2920 = vmatpush1.msra.mxu0 %v79
    %2921 = vmatprep.subr.mxu0 0.0
    %2922 = vmatpush1.msra.mxu0 %v78
    %2923 = vmatprep.subr.mxu0 0.0
    %2924 = vmatpush1.msra.mxu0 %v77
    %2925 = vmatprep.subr.mxu0 0.0
    %2926 = vmatpush1.msra.mxu0 %v76
    %2927 = vmatprep.subr.mxu0 0.0
    %2928 = vmatpush2.msra.mxu0 0.0
    %2929 = vmatprep.subr.mxu0 0.0
    %2930 = vmatpush2.msra.mxu0 0.0
    %2931 = vmatprep.subr.mxu0 0.0
    %2932 = vmatpush2.msra.mxu0 0.0
    %2933 = vmatprep.subr.mxu0 0.0
    %2934 = vmatpush2.msra.mxu0 0.0
    %2935 = vmatprep.subr.mxu0 0.0
    %2936 = vmatpush2.msra.mxu0 0.0
    %2937 = vmatprep.subr.mxu0 0.0
    %2938 = vmatpush2.msra.mxu0 0.0
    %2939 = vmatprep.subr.mxu0 0.0
    %2940 = vmatpush2.msra.mxu0 0.0
    %2941 = vmatprep.subr.mxu0 0.0
    %2942 = vmatpush2.msra.mxu0 0.0
    %2943 = vmatprep.subr.mxu0 0.0
    %2944 = vmatpush2.msra.mxu0 0.0
    %2945 = vmatprep.subr.mxu0 0.0
    %2946 = vmatpush2.msra.mxu0 0.0
    %2947 = vmatprep.subr.mxu0 0.0
    %2948 = vmatpush2.msra.mxu0 0.0
    %2949 = vmatprep.subr.mxu0 0.0
    %2950 = vmatpush2.msra.mxu0 0.0
    %2951 = vmatprep.subr.mxu0 0.0
    %2952 = vmatpush2.msra.mxu0 0.0
    %2953 = vmatprep.subr.mxu0 0.0
    %2954 = vmatpush2.msra.mxu0 0.0
    %2955 = vmatprep.subr.mxu0 0.0
    %2956 = vmatpush2.msra.mxu0 0.0
    %2957 = vmatprep.subr.mxu0 0.0
    %2958 = vmatpush2.msra.mxu0 0.0
    %2959 = vmatprep.mubr.f32.mxu0 0.0
    %2960 = vmatmul.mubr.f32.gmra.mxu0 %v2894
    %v2961 = vpop.f32.mrf.mxu0
    %v2962 = vadd.f32 %v104, %v2961
    %v2963 = vpop.f32.mrf.mxu0
    %2964 = vdwg.mxu0
    %v2965 = vmul.f32 %v2962, 0.1
    %v2966 = vadd.f32 %v2823, %v2965
    %2967 = vmatprep.subr.mxu0 0.0
    %2968 = vmatpush1.msra.mxu0 %v75
    %2969 = vmatprep.subr.mxu0 0.0
    %2970 = vmatpush1.msra.mxu0 %v74
    %2971 = vmatprep.subr.mxu0 0.0
    %2972 = vmatpush1.msra.mxu0 %v73
    %2973 = vmatprep.subr.mxu0 0.0
    %2974 = vmatpush1.msra.mxu0 %v72
    %2975 = vmatprep.subr.mxu0 0.0
    %2976 = vmatpush1.msra.mxu0 %v71
    %2977 = vmatprep.subr.mxu0 0.0
    %2978 = vmatpush1.msra.mxu0 %v70
    %2979 = vmatprep.subr.mxu0 0.0
    %2980 = vmatpush1.msra.mxu0 %v69
    %2981 = vmatprep.subr.mxu0 0.0
    %2982 = vmatpush1.msra.mxu0 %v68
    %2983 = vmatprep.subr.mxu0 0.0
    %2984 = vmatpush1.msra.mxu0 %v67
    %2985 = vmatprep.subr.mxu0 0.0
    %2986 = vmatpush1.msra.mxu0 %v66
    %2987 = vmatprep.subr.mxu0 0.0
    %2988 = vmatpush1.msra.mxu0 %v65
    %2989 = vmatprep.subr.mxu0 0.0
    %2990 = vmatpush1.msra.mxu0 %v64
    %2991 = vmatprep.subr.mxu0 0.0
    %2992 = vmatpush1.msra.mxu0 %v63
    %2993 = vmatprep.subr.mxu0 0.0
    %2994 = vmatpush1.msra.mxu0 %v62
    %2995 = vmatprep.subr.mxu0 0.0
    %2996 = vmatpush1.msra.mxu0 %v61
    %2997 = vmatprep.subr.mxu0 0.0
    %2998 = vmatpush1.msra.mxu0 %v60
    %2999 = vmatprep.subr.mxu0 0.0
    %3000 = vmatpush2.msra.mxu0 0.0
    %3001 = vmatprep.subr.mxu0 0.0
    %3002 = vmatpush2.msra.mxu0 0.0
    %3003 = vmatprep.subr.mxu0 0.0
    %3004 = vmatpush2.msra.mxu0 0.0
    %3005 = vmatprep.subr.mxu0 0.0
    %3006 = vmatpush2.msra.mxu0 0.0
    %3007 = vmatprep.subr.mxu0 0.0
    %3008 = vmatpush2.msra.mxu0 0.0
    %3009 = vmatprep.subr.mxu0 0.0
    %3010 = vmatpush2.msra.mxu0 0.0
    %3011 = vmatprep.subr.mxu0 0.0
    %3012 = vmatpush2.msra.mxu0 0.0
    %3013 = vmatprep.subr.mxu0 0.0
    %3014 = vmatpush2.msra.mxu0 0.0
    %3015 = vmatprep.subr.mxu0 0.0
    %3016 = vmatpush2.msra.mxu0 0.0
    %3017 = vmatprep.subr.mxu0 0.0
    %3018 = vmatpush2.msra.mxu0 0.0
    %3019 = vmatprep.subr.mxu0 0.0
    %3020 = vmatpush2.msra.mxu0 0.0
    %3021 = vmatprep.subr.mxu0 0.0
    %3022 = vmatpush2.msra.mxu0 0.0
    %3023 = vmatprep.subr.mxu0 0.0
    %3024 = vmatpush2.msra.mxu0 0.0
    %3025 = vmatprep.subr.mxu0 0.0
    %3026 = vmatpush2.msra.mxu0 0.0
    %3027 = vmatprep.subr.mxu0 0.0
    %3028 = vmatpush2.msra.mxu0 0.0
    %3029 = vmatprep.subr.mxu0 0.0
    %3030 = vmatpush2.msra.mxu0 0.0
    %3031 = vmatprep.mubr.f32.mxu0 0.0
    %3032 = vmatmul.mubr.f32.gmra.mxu0 %v2966
    %v3033 = vpop.f32.mrf.mxu0
    %v3034 = vadd.f32 %v97, %v3033
    %v3035 = vpop.f32.mrf.mxu0
    %3036 = vdwg.mxu0
    %v3037 = vtanh.pop %v3034
    %3038 = vmatprep.subr.mxu0 0.0
    %3039 = vmatpush1.msra.mxu0 %v91
    %3040 = vmatprep.subr.mxu0 0.0
    %3041 = vmatpush1.msra.mxu0 %v90
    %3042 = vmatprep.subr.mxu0 0.0
    %3043 = vmatpush1.msra.mxu0 %v89
    %3044 = vmatprep.subr.mxu0 0.0
    %3045 = vmatpush1.msra.mxu0 %v88
    %3046 = vmatprep.subr.mxu0 0.0
    %3047 = vmatpush1.msra.mxu0 %v87
    %3048 = vmatprep.subr.mxu0 0.0
    %3049 = vmatpush1.msra.mxu0 %v86
    %3050 = vmatprep.subr.mxu0 0.0
    %3051 = vmatpush1.msra.mxu0 %v85
    %3052 = vmatprep.subr.mxu0 0.0
    %3053 = vmatpush1.msra.mxu0 %v84
    %3054 = vmatprep.subr.mxu0 0.0
    %3055 = vmatpush1.msra.mxu0 %v83
    %3056 = vmatprep.subr.mxu0 0.0
    %3057 = vmatpush1.msra.mxu0 %v82
    %3058 = vmatprep.subr.mxu0 0.0
    %3059 = vmatpush1.msra.mxu0 %v81
    %3060 = vmatprep.subr.mxu0 0.0
    %3061 = vmatpush1.msra.mxu0 %v80
    %3062 = vmatprep.subr.mxu0 0.0
    %3063 = vmatpush1.msra.mxu0 %v79
    %3064 = vmatprep.subr.mxu0 0.0
    %3065 = vmatpush1.msra.mxu0 %v78
    %3066 = vmatprep.subr.mxu0 0.0
    %3067 = vmatpush1.msra.mxu0 %v77
    %3068 = vmatprep.subr.mxu0 0.0
    %3069 = vmatpush1.msra.mxu0 %v76
    %3070 = vmatprep.subr.mxu0 0.0
    %3071 = vmatpush2.msra.mxu0 0.0
    %3072 = vmatprep.subr.mxu0 0.0
    %3073 = vmatpush2.msra.mxu0 0.0
    %3074 = vmatprep.subr.mxu0 0.0
    %3075 = vmatpush2.msra.mxu0 0.0
    %3076 = vmatprep.subr.mxu0 0.0
    %3077 = vmatpush2.msra.mxu0 0.0
    %3078 = vmatprep.subr.mxu0 0.0
    %3079 = vmatpush2.msra.mxu0 0.0
    %3080 = vmatprep.subr.mxu0 0.0
    %3081 = vmatpush2.msra.mxu0 0.0
    %3082 = vmatprep.subr.mxu0 0.0
    %3083 = vmatpush2.msra.mxu0 0.0
    %3084 = vmatprep.subr.mxu0 0.0
    %3085 = vmatpush2.msra.mxu0 0.0
    %3086 = vmatprep.subr.mxu0 0.0
    %3087 = vmatpush2.msra.mxu0 0.0
    %3088 = vmatprep.subr.mxu0 0.0
    %3089 = vmatpush2.msra.mxu0 0.0
    %3090 = vmatprep.subr.mxu0 0.0
    %3091 = vmatpush2.msra.mxu0 0.0
    %3092 = vmatprep.subr.mxu0 0.0
    %3093 = vmatpush2.msra.mxu0 0.0
    %3094 = vmatprep.subr.mxu0 0.0
    %3095 = vmatpush2.msra.mxu0 0.0
    %3096 = vmatprep.subr.mxu0 0.0
    %3097 = vmatpush2.msra.mxu0 0.0
    %3098 = vmatprep.subr.mxu0 0.0
    %3099 = vmatpush2.msra.mxu0 0.0
    %3100 = vmatprep.subr.mxu0 0.0
    %3101 = vmatpush2.msra.mxu0 0.0
    %3102 = vmatprep.mubr.f32.mxu0 0.0
    %3103 = vmatmul.mubr.f32.gmra.mxu0 %v3037
    %v3104 = vpop.f32.mrf.mxu0
    %v3105 = vadd.f32 %v104, %v3104
    %v3106 = vpop.f32.mrf.mxu0
    %3107 = vdwg.mxu0
    %v3108 = vmul.f32 %v3105, 0.1
    %v3109 = vadd.f32 %v2966, %v3108
    %3110 = vmatprep.subr.mxu0 0.0
    %3111 = vmatpush1.msra.mxu0 %v75
    %3112 = vmatprep.subr.mxu0 0.0
    %3113 = vmatpush1.msra.mxu0 %v74
    %3114 = vmatprep.subr.mxu0 0.0
    %3115 = vmatpush1.msra.mxu0 %v73
    %3116 = vmatprep.subr.mxu0 0.0
    %3117 = vmatpush1.msra.mxu0 %v72
    %3118 = vmatprep.subr.mxu0 0.0
    %3119 = vmatpush1.msra.mxu0 %v71
    %3120 = vmatprep.subr.mxu0 0.0
    %3121 = vmatpush1.msra.mxu0 %v70
    %3122 = vmatprep.subr.mxu0 0.0
    %3123 = vmatpush1.msra.mxu0 %v69
    %3124 = vmatprep.subr.mxu0 0.0
    %3125 = vmatpush1.msra.mxu0 %v68
    %3126 = vmatprep.subr.mxu0 0.0
    %3127 = vmatpush1.msra.mxu0 %v67
    %3128 = vmatprep.subr.mxu0 0.0
    %3129 = vmatpush1.msra.mxu0 %v66
    %3130 = vmatprep.subr.mxu0 0.0
    %3131 = vmatpush1.msra.mxu0 %v65
    %3132 = vmatprep.subr.mxu0 0.0
    %3133 = vmatpush1.msra.mxu0 %v64
    %3134 = vmatprep.subr.mxu0 0.0
    %3135 = vmatpush1.msra.mxu0 %v63
    %3136 = vmatprep.subr.mxu0 0.0
    %3137 = vmatpush1.msra.mxu0 %v62
    %3138 = vmatprep.subr.mxu0 0.0
    %3139 = vmatpush1.msra.mxu0 %v61
    %3140 = vmatprep.subr.mxu0 0.0
    %3141 = vmatpush1.msra.mxu0 %v60
    %3142 = vmatprep.subr.mxu0 0.0
    %3143 = vmatpush2.msra.mxu0 0.0
    %3144 = vmatprep.subr.mxu0 0.0
    %3145 = vmatpush2.msra.mxu0 0.0
    %3146 = vmatprep.subr.mxu0 0.0
    %3147 = vmatpush2.msra.mxu0 0.0
    %3148 = vmatprep.subr.mxu0 0.0
    %3149 = vmatpush2.msra.mxu0 0.0
    %3150 = vmatprep.subr.mxu0 0.0
    %3151 = vmatpush2.msra.mxu0 0.0
    %3152 = vmatprep.subr.mxu0 0.0
    %3153 = vmatpush2.msra.mxu0 0.0
    %3154 = vmatprep.subr.mxu0 0.0
    %3155 = vmatpush2.msra.mxu0 0.0
    %3156 = vmatprep.subr.mxu0 0.0
    %3157 = vmatpush2.msra.mxu0 0.0
    %3158 = vmatprep.subr.mxu0 0.0
    %3159 = vmatpush2.msra.mxu0 0.0
    %3160 = vmatprep.subr.mxu0 0.0
    %3161 = vmatpush2.msra.mxu0 0.0
    %3162 = vmatprep.subr.mxu0 0.0
    %3163 = vmatpush2.msra.mxu0 0.0
    %3164 = vmatprep.subr.mxu0 0.0
    %3165 = vmatpush2.msra.mxu0 0.0
    %3166 = vmatprep.subr.mxu0 0.0
    %3167 = vmatpush2.msra.mxu0 0.0
    %3168 = vmatprep.subr.mxu0 0.0
    %3169 = vmatpush2.msra.mxu0 0.0
    %3170 = vmatprep.subr.mxu0 0.0
    %3171 = vmatpush2.msra.mxu0 0.0
    %3172 = vmatprep.subr.mxu0 0.0
    %3173 = vmatpush2.msra.mxu0 0.0
    %3174 = vmatprep.mubr.f32.mxu0 0.0
    %3175 = vmatmul.mubr.f32.gmra.mxu0 %v3109
    %v3176 = vpop.f32.mrf.mxu0
    %v3177 = vadd.f32 %v97, %v3176
    %v3178 = vpop.f32.mrf.mxu0
    %3179 = vdwg.mxu0
    %v3180 = vtanh.pop %v3177
    %3181 = vmatprep.subr.mxu0 0.0
    %3182 = vmatpush1.msra.mxu0 %v91
    %3183 = vmatprep.subr.mxu0 0.0
    %3184 = vmatpush1.msra.mxu0 %v90
    %3185 = vmatprep.subr.mxu0 0.0
    %3186 = vmatpush1.msra.mxu0 %v89
    %3187 = vmatprep.subr.mxu0 0.0
    %3188 = vmatpush1.msra.mxu0 %v88
    %3189 = vmatprep.subr.mxu0 0.0
    %3190 = vmatpush1.msra.mxu0 %v87
    %3191 = vmatprep.subr.mxu0 0.0
    %3192 = vmatpush1.msra.mxu0 %v86
    %3193 = vmatprep.subr.mxu0 0.0
    %3194 = vmatpush1.msra.mxu0 %v85
    %3195 = vmatprep.subr.mxu0 0.0
    %3196 = vmatpush1.msra.mxu0 %v84
    %3197 = vmatprep.subr.mxu0 0.0
    %3198 = vmatpush1.msra.mxu0 %v83
    %3199 = vmatprep.subr.mxu0 0.0
    %3200 = vmatpush1.msra.mxu0 %v82
    %3201 = vmatprep.subr.mxu0 0.0
    %3202 = vmatpush1.msra.mxu0 %v81
    %3203 = vmatprep.subr.mxu0 0.0
    %3204 = vmatpush1.msra.mxu0 %v80
    %3205 = vmatprep.subr.mxu0 0.0
    %3206 = vmatpush1.msra.mxu0 %v79
    %3207 = vmatprep.subr.mxu0 0.0
    %3208 = vmatpush1.msra.mxu0 %v78
    %3209 = vmatprep.subr.mxu0 0.0
    %3210 = vmatpush1.msra.mxu0 %v77
    %3211 = vmatprep.subr.mxu0 0.0
    %3212 = vmatpush1.msra.mxu0 %v76
    %3213 = vmatprep.subr.mxu0 0.0
    %3214 = vmatpush2.msra.mxu0 0.0
    %3215 = vmatprep.subr.mxu0 0.0
    %3216 = vmatpush2.msra.mxu0 0.0
    %3217 = vmatprep.subr.mxu0 0.0
    %3218 = vmatpush2.msra.mxu0 0.0
    %3219 = vmatprep.subr.mxu0 0.0
    %3220 = vmatpush2.msra.mxu0 0.0
    %3221 = vmatprep.subr.mxu0 0.0
    %3222 = vmatpush2.msra.mxu0 0.0
    %3223 = vmatprep.subr.mxu0 0.0
    %3224 = vmatpush2.msra.mxu0 0.0
    %3225 = vmatprep.subr.mxu0 0.0
    %3226 = vmatpush2.msra.mxu0 0.0
    %3227 = vmatprep.subr.mxu0 0.0
    %3228 = vmatpush2.msra.mxu0 0.0
    %3229 = vmatprep.subr.mxu0 0.0
    %3230 = vmatpush2.msra.mxu0 0.0
    %3231 = vmatprep.subr.mxu0 0.0
    %3232 = vmatpush2.msra.mxu0 0.0
    %3233 = vmatprep.subr.mxu0 0.0
    %3234 = vmatpush2.msra.mxu0 0.0
    %3235 = vmatprep.subr.mxu0 0.0
    %3236 = vmatpush2.msra.mxu0 0.0
    %3237 = vmatprep.subr.mxu0 0.0
    %3238 = vmatpush2.msra.mxu0 0.0
    %3239 = vmatprep.subr.mxu0 0.0
    %3240 = vmatpush2.msra.mxu0 0.0
    %3241 = vmatprep.subr.mxu0 0.0
    %3242 = vmatpush2.msra.mxu0 0.0
    %3243 = vmatprep.subr.mxu0 0.0
    %3244 = vmatpush2.msra.mxu0 0.0
    %3245 = vmatprep.mubr.f32.mxu0 0.0
    %3246 = vmatmul.mubr.f32.gmra.mxu0 %v3180
    %v3247 = vpop.f32.mrf.mxu0
    %v3248 = vadd.f32 %v104, %v3247
    %v3249 = vpop.f32.mrf.mxu0
    %3250 = vdwg.mxu0
    %v3251 = vmul.f32 %v3248, 0.1
    %v3252 = vadd.f32 %v3109, %v3251
    %3253 = vmatprep.subr.mxu0 0.0
    %3254 = vmatpush1.msra.mxu0 %v75
    %3255 = vmatprep.subr.mxu0 0.0
    %3256 = vmatpush1.msra.mxu0 %v74
    %3257 = vmatprep.subr.mxu0 0.0
    %3258 = vmatpush1.msra.mxu0 %v73
    %3259 = vmatprep.subr.mxu0 0.0
    %3260 = vmatpush1.msra.mxu0 %v72
    %3261 = vmatprep.subr.mxu0 0.0
    %3262 = vmatpush1.msra.mxu0 %v71
    %3263 = vmatprep.subr.mxu0 0.0
    %3264 = vmatpush1.msra.mxu0 %v70
    %3265 = vmatprep.subr.mxu0 0.0
    %3266 = vmatpush1.msra.mxu0 %v69
    %3267 = vmatprep.subr.mxu0 0.0
    %3268 = vmatpush1.msra.mxu0 %v68
    %3269 = vmatprep.subr.mxu0 0.0
    %3270 = vmatpush1.msra.mxu0 %v67
    %3271 = vmatprep.subr.mxu0 0.0
    %3272 = vmatpush1.msra.mxu0 %v66
    %3273 = vmatprep.subr.mxu0 0.0
    %3274 = vmatpush1.msra.mxu0 %v65
    %3275 = vmatprep.subr.mxu0 0.0
    %3276 = vmatpush1.msra.mxu0 %v64
    %3277 = vmatprep.subr.mxu0 0.0
    %3278 = vmatpush1.msra.mxu0 %v63
    %3279 = vmatprep.subr.mxu0 0.0
    %3280 = vmatpush1.msra.mxu0 %v62
    %3281 = vmatprep.subr.mxu0 0.0
    %3282 = vmatpush1.msra.mxu0 %v61
    %3283 = vmatprep.subr.mxu0 0.0
    %3284 = vmatpush1.msra.mxu0 %v60
    %3285 = vmatprep.subr.mxu0 0.0
    %3286 = vmatpush2.msra.mxu0 0.0
    %3287 = vmatprep.subr.mxu0 0.0
    %3288 = vmatpush2.msra.mxu0 0.0
    %3289 = vmatprep.subr.mxu0 0.0
    %3290 = vmatpush2.msra.mxu0 0.0
    %3291 = vmatprep.subr.mxu0 0.0
    %3292 = vmatpush2.msra.mxu0 0.0
    %3293 = vmatprep.subr.mxu0 0.0
    %3294 = vmatpush2.msra.mxu0 0.0
    %3295 = vmatprep.subr.mxu0 0.0
    %3296 = vmatpush2.msra.mxu0 0.0
    %3297 = vmatprep.subr.mxu0 0.0
    %3298 = vmatpush2.msra.mxu0 0.0
    %3299 = vmatprep.subr.mxu0 0.0
    %3300 = vmatpush2.msra.mxu0 0.0
    %3301 = vmatprep.subr.mxu0 0.0
    %3302 = vmatpush2.msra.mxu0 0.0
    %3303 = vmatprep.subr.mxu0 0.0
    %3304 = vmatpush2.msra.mxu0 0.0
    %3305 = vmatprep.subr.mxu0 0.0
    %3306 = vmatpush2.msra.mxu0 0.0
    %3307 = vmatprep.subr.mxu0 0.0
    %3308 = vmatpush2.msra.mxu0 0.0
    %3309 = vmatprep.subr.mxu0 0.0
    %3310 = vmatpush2.msra.mxu0 0.0
    %3311 = vmatprep.subr.mxu0 0.0
    %3312 = vmatpush2.msra.mxu0 0.0
    %3313 = vmatprep.subr.mxu0 0.0
    %3314 = vmatpush2.msra.mxu0 0.0
    %3315 = vmatprep.subr.mxu0 0.0
    %3316 = vmatpush2.msra.mxu0 0.0
    %3317 = vmatprep.mubr.f32.mxu0 0.0
    %3318 = vmatmul.mubr.f32.gmra.mxu0 %v3252
    %v3319 = vpop.f32.mrf.mxu0
    %v3320 = vadd.f32 %v97, %v3319
    %v3321 = vpop.f32.mrf.mxu0
    %3322 = vdwg.mxu0
    %v3323 = vtanh.pop %v3320
    %3324 = vmatprep.subr.mxu0 0.0
    %3325 = vmatpush1.msra.mxu0 %v91
    %3326 = vmatprep.subr.mxu0 0.0
    %3327 = vmatpush1.msra.mxu0 %v90
    %3328 = vmatprep.subr.mxu0 0.0
    %3329 = vmatpush1.msra.mxu0 %v89
    %3330 = vmatprep.subr.mxu0 0.0
    %3331 = vmatpush1.msra.mxu0 %v88
    %3332 = vmatprep.subr.mxu0 0.0
    %3333 = vmatpush1.msra.mxu0 %v87
    %3334 = vmatprep.subr.mxu0 0.0
    %3335 = vmatpush1.msra.mxu0 %v86
    %3336 = vmatprep.subr.mxu0 0.0
    %3337 = vmatpush1.msra.mxu0 %v85
    %3338 = vmatprep.subr.mxu0 0.0
    %3339 = vmatpush1.msra.mxu0 %v84
    %3340 = vmatprep.subr.mxu0 0.0
    %3341 = vmatpush1.msra.mxu0 %v83
    %3342 = vmatprep.subr.mxu0 0.0
    %3343 = vmatpush1.msra.mxu0 %v82
    %3344 = vmatprep.subr.mxu0 0.0
    %3345 = vmatpush1.msra.mxu0 %v81
    %3346 = vmatprep.subr.mxu0 0.0
    %3347 = vmatpush1.msra.mxu0 %v80
    %3348 = vmatprep.subr.mxu0 0.0
    %3349 = vmatpush1.msra.mxu0 %v79
    %3350 = vmatprep.subr.mxu0 0.0
    %3351 = vmatpush1.msra.mxu0 %v78
    %3352 = vmatprep.subr.mxu0 0.0
    %3353 = vmatpush1.msra.mxu0 %v77
    %3354 = vmatprep.subr.mxu0 0.0
    %3355 = vmatpush1.msra.mxu0 %v76
    %3356 = vmatprep.subr.mxu0 0.0
    %3357 = vmatpush2.msra.mxu0 0.0
    %3358 = vmatprep.subr.mxu0 0.0
    %3359 = vmatpush2.msra.mxu0 0.0
    %3360 = vmatprep.subr.mxu0 0.0
    %3361 = vmatpush2.msra.mxu0 0.0
    %3362 = vmatprep.subr.mxu0 0.0
    %3363 = vmatpush2.msra.mxu0 0.0
    %3364 = vmatprep.subr.mxu0 0.0
    %3365 = vmatpush2.msra.mxu0 0.0
    %3366 = vmatprep.subr.mxu0 0.0
    %3367 = vmatpush2.msra.mxu0 0.0
    %3368 = vmatprep.subr.mxu0 0.0
    %3369 = vmatpush2.msra.mxu0 0.0
    %3370 = vmatprep.subr.mxu0 0.0
    %3371 = vmatpush2.msra.mxu0 0.0
    %3372 = vmatprep.subr.mxu0 0.0
    %3373 = vmatpush2.msra.mxu0 0.0
    %3374 = vmatprep.subr.mxu0 0.0
    %3375 = vmatpush2.msra.mxu0 0.0
    %3376 = vmatprep.subr.mxu0 0.0
    %3377 = vmatpush2.msra.mxu0 0.0
    %3378 = vmatprep.subr.mxu0 0.0
    %3379 = vmatpush2.msra.mxu0 0.0
    %3380 = vmatprep.subr.mxu0 0.0
    %3381 = vmatpush2.msra.mxu0 0.0
    %3382 = vmatprep.subr.mxu0 0.0
    %3383 = vmatpush2.msra.mxu0 0.0
    %3384 = vmatprep.subr.mxu0 0.0
    %3385 = vmatpush2.msra.mxu0 0.0
    %3386 = vmatprep.subr.mxu0 0.0
    %3387 = vmatpush2.msra.mxu0 0.0
    %3388 = vmatprep.mubr.f32.mxu0 0.0
    %3389 = vmatmul.mubr.f32.gmra.mxu0 %v3323
    %v3390 = vpop.f32.mrf.mxu0
    %v3391 = vadd.f32 %v104, %v3390
    %v3392 = vpop.f32.mrf.mxu0
    %3393 = vdwg.mxu0
    %v3394 = vmul.f32 %v3391, 0.1
    %v3395 = vadd.f32 %v3252, %v3394
    %3396 = vmatprep.subr.mxu0 0.0
    %3397 = vmatpush1.msra.mxu0 %v75
    %3398 = vmatprep.subr.mxu0 0.0
    %3399 = vmatpush1.msra.mxu0 %v74
    %3400 = vmatprep.subr.mxu0 0.0
    %3401 = vmatpush1.msra.mxu0 %v73
    %3402 = vmatprep.subr.mxu0 0.0
    %3403 = vmatpush1.msra.mxu0 %v72
    %3404 = vmatprep.subr.mxu0 0.0
    %3405 = vmatpush1.msra.mxu0 %v71
    %3406 = vmatprep.subr.mxu0 0.0
    %3407 = vmatpush1.msra.mxu0 %v70
    %3408 = vmatprep.subr.mxu0 0.0
    %3409 = vmatpush1.msra.mxu0 %v69
    %3410 = vmatprep.subr.mxu0 0.0
    %3411 = vmatpush1.msra.mxu0 %v68
    %3412 = vmatprep.subr.mxu0 0.0
    %3413 = vmatpush1.msra.mxu0 %v67
    %3414 = vmatprep.subr.mxu0 0.0
    %3415 = vmatpush1.msra.mxu0 %v66
    %3416 = vmatprep.subr.mxu0 0.0
    %3417 = vmatpush1.msra.mxu0 %v65
    %3418 = vmatprep.subr.mxu0 0.0
    %3419 = vmatpush1.msra.mxu0 %v64
    %3420 = vmatprep.subr.mxu0 0.0
    %3421 = vmatpush1.msra.mxu0 %v63
    %3422 = vmatprep.subr.mxu0 0.0
    %3423 = vmatpush1.msra.mxu0 %v62
    %3424 = vmatprep.subr.mxu0 0.0
    %3425 = vmatpush1.msra.mxu0 %v61
    %3426 = vmatprep.subr.mxu0 0.0
    %3427 = vmatpush1.msra.mxu0 %v60
    %3428 = vmatprep.subr.mxu0 0.0
    %3429 = vmatpush2.msra.mxu0 0.0
    %3430 = vmatprep.subr.mxu0 0.0
    %3431 = vmatpush2.msra.mxu0 0.0
    %3432 = vmatprep.subr.mxu0 0.0
    %3433 = vmatpush2.msra.mxu0 0.0
    %3434 = vmatprep.subr.mxu0 0.0
    %3435 = vmatpush2.msra.mxu0 0.0
    %3436 = vmatprep.subr.mxu0 0.0
    %3437 = vmatpush2.msra.mxu0 0.0
    %3438 = vmatprep.subr.mxu0 0.0
    %3439 = vmatpush2.msra.mxu0 0.0
    %3440 = vmatprep.subr.mxu0 0.0
    %3441 = vmatpush2.msra.mxu0 0.0
    %3442 = vmatprep.subr.mxu0 0.0
    %3443 = vmatpush2.msra.mxu0 0.0
    %3444 = vmatprep.subr.mxu0 0.0
    %3445 = vmatpush2.msra.mxu0 0.0
    %3446 = vmatprep.subr.mxu0 0.0
    %3447 = vmatpush2.msra.mxu0 0.0
    %3448 = vmatprep.subr.mxu0 0.0
    %3449 = vmatpush2.msra.mxu0 0.0
    %3450 = vmatprep.subr.mxu0 0.0
    %3451 = vmatpush2.msra.mxu0 0.0
    %3452 = vmatprep.subr.mxu0 0.0
    %3453 = vmatpush2.msra.mxu0 0.0
    %3454 = vmatprep.subr.mxu0 0.0
    %3455 = vmatpush2.msra.mxu0 0.0
    %3456 = vmatprep.subr.mxu0 0.0
    %3457 = vmatpush2.msra.mxu0 0.0
    %3458 = vmatprep.subr.mxu0 0.0
    %3459 = vmatpush2.msra.mxu0 0.0
    %3460 = vmatprep.mubr.f32.mxu0 0.0
    %3461 = vmatmul.mubr.f32.gmra.mxu0 %v3395
    %v3462 = vpop.f32.mrf.mxu0
    %v3463 = vadd.f32 %v97, %v3462
    %v3464 = vpop.f32.mrf.mxu0
    %3465 = vdwg.mxu0
    %v3466 = vtanh.pop %v3463
    %3467 = vmatprep.subr.mxu0 0.0
    %3468 = vmatpush1.msra.mxu0 %v91
    %3469 = vmatprep.subr.mxu0 0.0
    %3470 = vmatpush1.msra.mxu0 %v90
    %3471 = vmatprep.subr.mxu0 0.0
    %3472 = vmatpush1.msra.mxu0 %v89
    %3473 = vmatprep.subr.mxu0 0.0
    %3474 = vmatpush1.msra.mxu0 %v88
    %3475 = vmatprep.subr.mxu0 0.0
    %3476 = vmatpush1.msra.mxu0 %v87
    %3477 = vmatprep.subr.mxu0 0.0
    %3478 = vmatpush1.msra.mxu0 %v86
    %3479 = vmatprep.subr.mxu0 0.0
    %3480 = vmatpush1.msra.mxu0 %v85
    %3481 = vmatprep.subr.mxu0 0.0
    %3482 = vmatpush1.msra.mxu0 %v84
    %3483 = vmatprep.subr.mxu0 0.0
    %3484 = vmatpush1.msra.mxu0 %v83
    %3485 = vmatprep.subr.mxu0 0.0
    %3486 = vmatpush1.msra.mxu0 %v82
    %3487 = vmatprep.subr.mxu0 0.0
    %3488 = vmatpush1.msra.mxu0 %v81
    %3489 = vmatprep.subr.mxu0 0.0
    %3490 = vmatpush1.msra.mxu0 %v80
    %3491 = vmatprep.subr.mxu0 0.0
    %3492 = vmatpush1.msra.mxu0 %v79
    %3493 = vmatprep.subr.mxu0 0.0
    %3494 = vmatpush1.msra.mxu0 %v78
    %3495 = vmatprep.subr.mxu0 0.0
    %3496 = vmatpush1.msra.mxu0 %v77
    %3497 = vmatprep.subr.mxu0 0.0
    %3498 = vmatpush1.msra.mxu0 %v76
    %3499 = vmatprep.subr.mxu0 0.0
    %3500 = vmatpush2.msra.mxu0 0.0
    %3501 = vmatprep.subr.mxu0 0.0
    %3502 = vmatpush2.msra.mxu0 0.0
    %3503 = vmatprep.subr.mxu0 0.0
    %3504 = vmatpush2.msra.mxu0 0.0
    %3505 = vmatprep.subr.mxu0 0.0
    %3506 = vmatpush2.msra.mxu0 0.0
    %3507 = vmatprep.subr.mxu0 0.0
    %3508 = vmatpush2.msra.mxu0 0.0
    %3509 = vmatprep.subr.mxu0 0.0
    %3510 = vmatpush2.msra.mxu0 0.0
    %3511 = vmatprep.subr.mxu0 0.0
    %3512 = vmatpush2.msra.mxu0 0.0
    %3513 = vmatprep.subr.mxu0 0.0
    %3514 = vmatpush2.msra.mxu0 0.0
    %3515 = vmatprep.subr.mxu0 0.0
    %3516 = vmatpush2.msra.mxu0 0.0
    %3517 = vmatprep.subr.mxu0 0.0
    %3518 = vmatpush2.msra.mxu0 0.0
    %3519 = vmatprep.subr.mxu0 0.0
    %3520 = vmatpush2.msra.mxu0 0.0
    %3521 = vmatprep.subr.mxu0 0.0
    %3522 = vmatpush2.msra.mxu0 0.0
    %3523 = vmatprep.subr.mxu0 0.0
    %3524 = vmatpush2.msra.mxu0 0.0
    %3525 = vmatprep.subr.mxu0 0.0
    %3526 = vmatpush2.msra.mxu0 0.0
    %3527 = vmatprep.subr.mxu0 0.0
    %3528 = vmatpush2.msra.mxu0 0.0
    %3529 = vmatprep.subr.mxu0 0.0
    %3530 = vmatpush2.msra.mxu0 0.0
    %3531 = vmatprep.mubr.f32.mxu0 0.0
    %3532 = vmatmul.mubr.f32.gmra.mxu0 %v3466
    %v3533 = vpop.f32.mrf.mxu0
    %v3534 = vadd.f32 %v104, %v3533
    %v3535 = vpop.f32.mrf.mxu0
    %3536 = vdwg.mxu0
    %v3537 = vmul.f32 %v3534, 0.1
    %v3538 = vadd.f32 %v3395, %v3537
    %3539 = vmatprep.subr.mxu0 0.0
    %3540 = vmatpush1.msra.mxu0 %v75
    %3541 = vmatprep.subr.mxu0 0.0
    %3542 = vmatpush1.msra.mxu0 %v74
    %3543 = vmatprep.subr.mxu0 0.0
    %3544 = vmatpush1.msra.mxu0 %v73
    %3545 = vmatprep.subr.mxu0 0.0
    %3546 = vmatpush1.msra.mxu0 %v72
    %3547 = vmatprep.subr.mxu0 0.0
    %3548 = vmatpush1.msra.mxu0 %v71
    %3549 = vmatprep.subr.mxu0 0.0
    %3550 = vmatpush1.msra.mxu0 %v70
    %3551 = vmatprep.subr.mxu0 0.0
    %3552 = vmatpush1.msra.mxu0 %v69
    %3553 = vmatprep.subr.mxu0 0.0
    %3554 = vmatpush1.msra.mxu0 %v68
    %3555 = vmatprep.subr.mxu0 0.0
    %3556 = vmatpush1.msra.mxu0 %v67
    %3557 = vmatprep.subr.mxu0 0.0
    %3558 = vmatpush1.msra.mxu0 %v66
    %3559 = vmatprep.subr.mxu0 0.0
    %3560 = vmatpush1.msra.mxu0 %v65
    %3561 = vmatprep.subr.mxu0 0.0
    %3562 = vmatpush1.msra.mxu0 %v64
    %3563 = vmatprep.subr.mxu0 0.0
    %3564 = vmatpush1.msra.mxu0 %v63
    %3565 = vmatprep.subr.mxu0 0.0
    %3566 = vmatpush1.msra.mxu0 %v62
    %3567 = vmatprep.subr.mxu0 0.0
    %3568 = vmatpush1.msra.mxu0 %v61
    %3569 = vmatprep.subr.mxu0 0.0
    %3570 = vmatpush1.msra.mxu0 %v60
    %3571 = vmatprep.subr.mxu0 0.0
    %3572 = vmatpush2.msra.mxu0 0.0
    %3573 = vmatprep.subr.mxu0 0.0
    %3574 = vmatpush2.msra.mxu0 0.0
    %3575 = vmatprep.subr.mxu0 0.0
    %3576 = vmatpush2.msra.mxu0 0.0
    %3577 = vmatprep.subr.mxu0 0.0
    %3578 = vmatpush2.msra.mxu0 0.0
    %3579 = vmatprep.subr.mxu0 0.0
    %3580 = vmatpush2.msra.mxu0 0.0
    %3581 = vmatprep.subr.mxu0 0.0
    %3582 = vmatpush2.msra.mxu0 0.0
    %3583 = vmatprep.subr.mxu0 0.0
    %3584 = vmatpush2.msra.mxu0 0.0
    %3585 = vmatprep.subr.mxu0 0.0
    %3586 = vmatpush2.msra.mxu0 0.0
    %3587 = vmatprep.subr.mxu0 0.0
    %3588 = vmatpush2.msra.mxu0 0.0
    %3589 = vmatprep.subr.mxu0 0.0
    %3590 = vmatpush2.msra.mxu0 0.0
    %3591 = vmatprep.subr.mxu0 0.0
    %3592 = vmatpush2.msra.mxu0 0.0
    %3593 = vmatprep.subr.mxu0 0.0
    %3594 = vmatpush2.msra.mxu0 0.0
    %3595 = vmatprep.subr.mxu0 0.0
    %3596 = vmatpush2.msra.mxu0 0.0
    %3597 = vmatprep.subr.mxu0 0.0
    %3598 = vmatpush2.msra.mxu0 0.0
    %3599 = vmatprep.subr.mxu0 0.0
    %3600 = vmatpush2.msra.mxu0 0.0
    %3601 = vmatprep.subr.mxu0 0.0
    %3602 = vmatpush2.msra.mxu0 0.0
    %3603 = vmatprep.mubr.f32.mxu0 0.0
    %3604 = vmatmul.mubr.f32.gmra.mxu0 %v3538
    %v3605 = vpop.f32.mrf.mxu0
    %v3606 = vadd.f32 %v97, %v3605
    %v3607 = vpop.f32.mrf.mxu0
    %3608 = vdwg.mxu0
    %v3609 = vtanh.pop %v3606
    %3610 = vmatprep.subr.mxu0 0.0
    %3611 = vmatpush1.msra.mxu0 %v91
    %3612 = vmatprep.subr.mxu0 0.0
    %3613 = vmatpush1.msra.mxu0 %v90
    %3614 = vmatprep.subr.mxu0 0.0
    %3615 = vmatpush1.msra.mxu0 %v89
    %3616 = vmatprep.subr.mxu0 0.0
    %3617 = vmatpush1.msra.mxu0 %v88
    %3618 = vmatprep.subr.mxu0 0.0
    %3619 = vmatpush1.msra.mxu0 %v87
    %3620 = vmatprep.subr.mxu0 0.0
    %3621 = vmatpush1.msra.mxu0 %v86
    %3622 = vmatprep.subr.mxu0 0.0
    %3623 = vmatpush1.msra.mxu0 %v85
    %3624 = vmatprep.subr.mxu0 0.0
    %3625 = vmatpush1.msra.mxu0 %v84
    %3626 = vmatprep.subr.mxu0 0.0
    %3627 = vmatpush1.msra.mxu0 %v83
    %3628 = vmatprep.subr.mxu0 0.0
    %3629 = vmatpush1.msra.mxu0 %v82
    %3630 = vmatprep.subr.mxu0 0.0
    %3631 = vmatpush1.msra.mxu0 %v81
    %3632 = vmatprep.subr.mxu0 0.0
    %3633 = vmatpush1.msra.mxu0 %v80
    %3634 = vmatprep.subr.mxu0 0.0
    %3635 = vmatpush1.msra.mxu0 %v79
    %3636 = vmatprep.subr.mxu0 0.0
    %3637 = vmatpush1.msra.mxu0 %v78
    %3638 = vmatprep.subr.mxu0 0.0
    %3639 = vmatpush1.msra.mxu0 %v77
    %3640 = vmatprep.subr.mxu0 0.0
    %3641 = vmatpush1.msra.mxu0 %v76
    %3642 = vmatprep.subr.mxu0 0.0
    %3643 = vmatpush2.msra.mxu0 0.0
    %3644 = vmatprep.subr.mxu0 0.0
    %3645 = vmatpush2.msra.mxu0 0.0
    %3646 = vmatprep.subr.mxu0 0.0
    %3647 = vmatpush2.msra.mxu0 0.0
    %3648 = vmatprep.subr.mxu0 0.0
    %3649 = vmatpush2.msra.mxu0 0.0
    %3650 = vmatprep.subr.mxu0 0.0
    %3651 = vmatpush2.msra.mxu0 0.0
    %3652 = vmatprep.subr.mxu0 0.0
    %3653 = vmatpush2.msra.mxu0 0.0
    %3654 = vmatprep.subr.mxu0 0.0
    %3655 = vmatpush2.msra.mxu0 0.0
    %3656 = vmatprep.subr.mxu0 0.0
    %3657 = vmatpush2.msra.mxu0 0.0
    %3658 = vmatprep.subr.mxu0 0.0
    %3659 = vmatpush2.msra.mxu0 0.0
    %3660 = vmatprep.subr.mxu0 0.0
    %3661 = vmatpush2.msra.mxu0 0.0
    %3662 = vmatprep.subr.mxu0 0.0
    %3663 = vmatpush2.msra.mxu0 0.0
    %3664 = vmatprep.subr.mxu0 0.0
    %3665 = vmatpush2.msra.mxu0 0.0
    %3666 = vmatprep.subr.mxu0 0.0
    %3667 = vmatpush2.msra.mxu0 0.0
    %3668 = vmatprep.subr.mxu0 0.0
    %3669 = vmatpush2.msra.mxu0 0.0
    %3670 = vmatprep.subr.mxu0 0.0
    %3671 = vmatpush2.msra.mxu0 0.0
    %3672 = vmatprep.subr.mxu0 0.0
    %3673 = vmatpush2.msra.mxu0 0.0
    %3674 = vmatprep.mubr.f32.mxu0 0.0
    %3675 = vmatmul.mubr.f32.gmra.mxu0 %v3609
    %v3676 = vpop.f32.mrf.mxu0
    %v3677 = vadd.f32 %v104, %v3676
    %v3678 = vpop.f32.mrf.mxu0
    %3679 = vdwg.mxu0
    %v3680 = vmul.f32 %v3677, 0.1
    %v3681 = vadd.f32 %v3538, %v3680
    %3682 = vmatprep.subr.mxu0 0.0
    %3683 = vmatpush1.msra.mxu0 %v75
    %3684 = vmatprep.subr.mxu0 0.0
    %3685 = vmatpush1.msra.mxu0 %v74
    %3686 = vmatprep.subr.mxu0 0.0
    %3687 = vmatpush1.msra.mxu0 %v73
    %3688 = vmatprep.subr.mxu0 0.0
    %3689 = vmatpush1.msra.mxu0 %v72
    %3690 = vmatprep.subr.mxu0 0.0
    %3691 = vmatpush1.msra.mxu0 %v71
    %3692 = vmatprep.subr.mxu0 0.0
    %3693 = vmatpush1.msra.mxu0 %v70
    %3694 = vmatprep.subr.mxu0 0.0
    %3695 = vmatpush1.msra.mxu0 %v69
    %3696 = vmatprep.subr.mxu0 0.0
    %3697 = vmatpush1.msra.mxu0 %v68
    %3698 = vmatprep.subr.mxu0 0.0
    %3699 = vmatpush1.msra.mxu0 %v67
    %3700 = vmatprep.subr.mxu0 0.0
    %3701 = vmatpush1.msra.mxu0 %v66
    %3702 = vmatprep.subr.mxu0 0.0
    %3703 = vmatpush1.msra.mxu0 %v65
    %3704 = vmatprep.subr.mxu0 0.0
    %3705 = vmatpush1.msra.mxu0 %v64
    %3706 = vmatprep.subr.mxu0 0.0
    %3707 = vmatpush1.msra.mxu0 %v63
    %3708 = vmatprep.subr.mxu0 0.0
    %3709 = vmatpush1.msra.mxu0 %v62
    %3710 = vmatprep.subr.mxu0 0.0
    %3711 = vmatpush1.msra.mxu0 %v61
    %3712 = vmatprep.subr.mxu0 0.0
    %3713 = vmatpush1.msra.mxu0 %v60
    %3714 = vmatprep.subr.mxu0 0.0
    %3715 = vmatpush2.msra.mxu0 0.0
    %3716 = vmatprep.subr.mxu0 0.0
    %3717 = vmatpush2.msra.mxu0 0.0
    %3718 = vmatprep.subr.mxu0 0.0
    %3719 = vmatpush2.msra.mxu0 0.0
    %3720 = vmatprep.subr.mxu0 0.0
    %3721 = vmatpush2.msra.mxu0 0.0
    %3722 = vmatprep.subr.mxu0 0.0
    %3723 = vmatpush2.msra.mxu0 0.0
    %3724 = vmatprep.subr.mxu0 0.0
    %3725 = vmatpush2.msra.mxu0 0.0
    %3726 = vmatprep.subr.mxu0 0.0
    %3727 = vmatpush2.msra.mxu0 0.0
    %3728 = vmatprep.subr.mxu0 0.0
    %3729 = vmatpush2.msra.mxu0 0.0
    %3730 = vmatprep.subr.mxu0 0.0
    %3731 = vmatpush2.msra.mxu0 0.0
    %3732 = vmatprep.subr.mxu0 0.0
    %3733 = vmatpush2.msra.mxu0 0.0
    %3734 = vmatprep.subr.mxu0 0.0
    %3735 = vmatpush2.msra.mxu0 0.0
    %3736 = vmatprep.subr.mxu0 0.0
    %3737 = vmatpush2.msra.mxu0 0.0
    %3738 = vmatprep.subr.mxu0 0.0
    %3739 = vmatpush2.msra.mxu0 0.0
    %3740 = vmatprep.subr.mxu0 0.0
    %3741 = vmatpush2.msra.mxu0 0.0
    %3742 = vmatprep.subr.mxu0 0.0
    %3743 = vmatpush2.msra.mxu0 0.0
    %3744 = vmatprep.subr.mxu0 0.0
    %3745 = vmatpush2.msra.mxu0 0.0
    %3746 = vmatprep.mubr.f32.mxu0 0.0
    %3747 = vmatmul.mubr.f32.gmra.mxu0 %v3681
    %v3748 = vpop.f32.mrf.mxu0
    %v3749 = vadd.f32 %v97, %v3748
    %v3750 = vpop.f32.mrf.mxu0
    %3751 = vdwg.mxu0
    %v3752 = vtanh.pop %v3749
    %3753 = vmatprep.subr.mxu0 0.0
    %3754 = vmatpush1.msra.mxu0 %v91
    %3755 = vmatprep.subr.mxu0 0.0
    %3756 = vmatpush1.msra.mxu0 %v90
    %3757 = vmatprep.subr.mxu0 0.0
    %3758 = vmatpush1.msra.mxu0 %v89
    %3759 = vmatprep.subr.mxu0 0.0
    %3760 = vmatpush1.msra.mxu0 %v88
    %3761 = vmatprep.subr.mxu0 0.0
    %3762 = vmatpush1.msra.mxu0 %v87
    %3763 = vmatprep.subr.mxu0 0.0
    %3764 = vmatpush1.msra.mxu0 %v86
    %3765 = vmatprep.subr.mxu0 0.0
    %3766 = vmatpush1.msra.mxu0 %v85
    %3767 = vmatprep.subr.mxu0 0.0
    %3768 = vmatpush1.msra.mxu0 %v84
    %3769 = vmatprep.subr.mxu0 0.0
    %3770 = vmatpush1.msra.mxu0 %v83
    %3771 = vmatprep.subr.mxu0 0.0
    %3772 = vmatpush1.msra.mxu0 %v82
    %3773 = vmatprep.subr.mxu0 0.0
    %3774 = vmatpush1.msra.mxu0 %v81
    %3775 = vmatprep.subr.mxu0 0.0
    %3776 = vmatpush1.msra.mxu0 %v80
    %3777 = vmatprep.subr.mxu0 0.0
    %3778 = vmatpush1.msra.mxu0 %v79
    %3779 = vmatprep.subr.mxu0 0.0
    %3780 = vmatpush1.msra.mxu0 %v78
    %3781 = vmatprep.subr.mxu0 0.0
    %3782 = vmatpush1.msra.mxu0 %v77
    %3783 = vmatprep.subr.mxu0 0.0
    %3784 = vmatpush1.msra.mxu0 %v76
    %3785 = vmatprep.subr.mxu0 0.0
    %3786 = vmatpush2.msra.mxu0 0.0
    %3787 = vmatprep.subr.mxu0 0.0
    %3788 = vmatpush2.msra.mxu0 0.0
    %3789 = vmatprep.subr.mxu0 0.0
    %3790 = vmatpush2.msra.mxu0 0.0
    %3791 = vmatprep.subr.mxu0 0.0
    %3792 = vmatpush2.msra.mxu0 0.0
    %3793 = vmatprep.subr.mxu0 0.0
    %3794 = vmatpush2.msra.mxu0 0.0
    %3795 = vmatprep.subr.mxu0 0.0
    %3796 = vmatpush2.msra.mxu0 0.0
    %3797 = vmatprep.subr.mxu0 0.0
    %3798 = vmatpush2.msra.mxu0 0.0
    %3799 = vmatprep.subr.mxu0 0.0
    %3800 = vmatpush2.msra.mxu0 0.0
    %3801 = vmatprep.subr.mxu0 0.0
    %3802 = vmatpush2.msra.mxu0 0.0
    %3803 = vmatprep.subr.mxu0 0.0
    %3804 = vmatpush2.msra.mxu0 0.0
    %3805 = vmatprep.subr.mxu0 0.0
    %3806 = vmatpush2.msra.mxu0 0.0
    %3807 = vmatprep.subr.mxu0 0.0
    %3808 = vmatpush2.msra.mxu0 0.0
    %3809 = vmatprep.subr.mxu0 0.0
    %3810 = vmatpush2.msra.mxu0 0.0
    %3811 = vmatprep.subr.mxu0 0.0
    %3812 = vmatpush2.msra.mxu0 0.0
    %3813 = vmatprep.subr.mxu0 0.0
    %3814 = vmatpush2.msra.mxu0 0.0
    %3815 = vmatprep.subr.mxu0 0.0
    %3816 = vmatpush2.msra.mxu0 0.0
    %3817 = vmatprep.mubr.f32.mxu0 0.0
    %3818 = vmatmul.mubr.f32.gmra.mxu0 %v3752
    %v3819 = vpop.f32.mrf.mxu0
    %v3820 = vadd.f32 %v104, %v3819
    %v3821 = vpop.f32.mrf.mxu0
    %3822 = vdwg.mxu0
    %v3823 = vmul.f32 %v3820, 0.1
    %v3824 = vadd.f32 %v3681, %v3823
    %3825 = vmatprep.subr.mxu0 0.0
    %3826 = vmatpush1.msra.mxu0 %v75
    %3827 = vmatprep.subr.mxu0 0.0
    %3828 = vmatpush1.msra.mxu0 %v74
    %3829 = vmatprep.subr.mxu0 0.0
    %3830 = vmatpush1.msra.mxu0 %v73
    %3831 = vmatprep.subr.mxu0 0.0
    %3832 = vmatpush1.msra.mxu0 %v72
    %3833 = vmatprep.subr.mxu0 0.0
    %3834 = vmatpush1.msra.mxu0 %v71
    %3835 = vmatprep.subr.mxu0 0.0
    %3836 = vmatpush1.msra.mxu0 %v70
    %3837 = vmatprep.subr.mxu0 0.0
    %3838 = vmatpush1.msra.mxu0 %v69
    %3839 = vmatprep.subr.mxu0 0.0
    %3840 = vmatpush1.msra.mxu0 %v68
    %3841 = vmatprep.subr.mxu0 0.0
    %3842 = vmatpush1.msra.mxu0 %v67
    %3843 = vmatprep.subr.mxu0 0.0
    %3844 = vmatpush1.msra.mxu0 %v66
    %3845 = vmatprep.subr.mxu0 0.0
    %3846 = vmatpush1.msra.mxu0 %v65
    %3847 = vmatprep.subr.mxu0 0.0
    %3848 = vmatpush1.msra.mxu0 %v64
    %3849 = vmatprep.subr.mxu0 0.0
    %3850 = vmatpush1.msra.mxu0 %v63
    %3851 = vmatprep.subr.mxu0 0.0
    %3852 = vmatpush1.msra.mxu0 %v62
    %3853 = vmatprep.subr.mxu0 0.0
    %3854 = vmatpush1.msra.mxu0 %v61
    %3855 = vmatprep.subr.mxu0 0.0
    %3856 = vmatpush1.msra.mxu0 %v60
    %3857 = vmatprep.subr.mxu0 0.0
    %3858 = vmatpush2.msra.mxu0 0.0
    %3859 = vmatprep.subr.mxu0 0.0
    %3860 = vmatpush2.msra.mxu0 0.0
    %3861 = vmatprep.subr.mxu0 0.0
    %3862 = vmatpush2.msra.mxu0 0.0
    %3863 = vmatprep.subr.mxu0 0.0
    %3864 = vmatpush2.msra.mxu0 0.0
    %3865 = vmatprep.subr.mxu0 0.0
    %3866 = vmatpush2.msra.mxu0 0.0
    %3867 = vmatprep.subr.mxu0 0.0
    %3868 = vmatpush2.msra.mxu0 0.0
    %3869 = vmatprep.subr.mxu0 0.0
    %3870 = vmatpush2.msra.mxu0 0.0
    %3871 = vmatprep.subr.mxu0 0.0
    %3872 = vmatpush2.msra.mxu0 0.0
    %3873 = vmatprep.subr.mxu0 0.0
    %3874 = vmatpush2.msra.mxu0 0.0
    %3875 = vmatprep.subr.mxu0 0.0
    %3876 = vmatpush2.msra.mxu0 0.0
    %3877 = vmatprep.subr.mxu0 0.0
    %3878 = vmatpush2.msra.mxu0 0.0
    %3879 = vmatprep.subr.mxu0 0.0
    %3880 = vmatpush2.msra.mxu0 0.0
    %3881 = vmatprep.subr.mxu0 0.0
    %3882 = vmatpush2.msra.mxu0 0.0
    %3883 = vmatprep.subr.mxu0 0.0
    %3884 = vmatpush2.msra.mxu0 0.0
    %3885 = vmatprep.subr.mxu0 0.0
    %3886 = vmatpush2.msra.mxu0 0.0
    %3887 = vmatprep.subr.mxu0 0.0
    %3888 = vmatpush2.msra.mxu0 0.0
    %3889 = vmatprep.mubr.f32.mxu0 0.0
    %3890 = vmatmul.mubr.f32.gmra.mxu0 %v3824
    %v3891 = vpop.f32.mrf.mxu0
    %v3892 = vadd.f32 %v97, %v3891
    %v3893 = vpop.f32.mrf.mxu0
    %3894 = vdwg.mxu0
    %v3895 = vtanh.pop %v3892
    %3896 = vmatprep.subr.mxu0 0.0
    %3897 = vmatpush1.msra.mxu0 %v91
    %3898 = vmatprep.subr.mxu0 0.0
    %3899 = vmatpush1.msra.mxu0 %v90
    %3900 = vmatprep.subr.mxu0 0.0
    %3901 = vmatpush1.msra.mxu0 %v89
    %3902 = vmatprep.subr.mxu0 0.0
    %3903 = vmatpush1.msra.mxu0 %v88
    %3904 = vmatprep.subr.mxu0 0.0
    %3905 = vmatpush1.msra.mxu0 %v87
    %3906 = vmatprep.subr.mxu0 0.0
    %3907 = vmatpush1.msra.mxu0 %v86
    %3908 = vmatprep.subr.mxu0 0.0
    %3909 = vmatpush1.msra.mxu0 %v85
    %3910 = vmatprep.subr.mxu0 0.0
    %3911 = vmatpush1.msra.mxu0 %v84
    %3912 = vmatprep.subr.mxu0 0.0
    %3913 = vmatpush1.msra.mxu0 %v83
    %3914 = vmatprep.subr.mxu0 0.0
    %3915 = vmatpush1.msra.mxu0 %v82
    %3916 = vmatprep.subr.mxu0 0.0
    %3917 = vmatpush1.msra.mxu0 %v81
    %3918 = vmatprep.subr.mxu0 0.0
    %3919 = vmatpush1.msra.mxu0 %v80
    %3920 = vmatprep.subr.mxu0 0.0
    %3921 = vmatpush1.msra.mxu0 %v79
    %3922 = vmatprep.subr.mxu0 0.0
    %3923 = vmatpush1.msra.mxu0 %v78
    %3924 = vmatprep.subr.mxu0 0.0
    %3925 = vmatpush1.msra.mxu0 %v77
    %3926 = vmatprep.subr.mxu0 0.0
    %3927 = vmatpush1.msra.mxu0 %v76
    %3928 = vmatprep.subr.mxu0 0.0
    %3929 = vmatpush2.msra.mxu0 0.0
    %3930 = vmatprep.subr.mxu0 0.0
    %3931 = vmatpush2.msra.mxu0 0.0
    %3932 = vmatprep.subr.mxu0 0.0
    %3933 = vmatpush2.msra.mxu0 0.0
    %3934 = vmatprep.subr.mxu0 0.0
    %3935 = vmatpush2.msra.mxu0 0.0
    %3936 = vmatprep.subr.mxu0 0.0
    %3937 = vmatpush2.msra.mxu0 0.0
    %3938 = vmatprep.subr.mxu0 0.0
    %3939 = vmatpush2.msra.mxu0 0.0
    %3940 = vmatprep.subr.mxu0 0.0
    %3941 = vmatpush2.msra.mxu0 0.0
    %3942 = vmatprep.subr.mxu0 0.0
    %3943 = vmatpush2.msra.mxu0 0.0
    %3944 = vmatprep.subr.mxu0 0.0
    %3945 = vmatpush2.msra.mxu0 0.0
    %3946 = vmatprep.subr.mxu0 0.0
    %3947 = vmatpush2.msra.mxu0 0.0
    %3948 = vmatprep.subr.mxu0 0.0
    %3949 = vmatpush2.msra.mxu0 0.0
    %3950 = vmatprep.subr.mxu0 0.0
    %3951 = vmatpush2.msra.mxu0 0.0
    %3952 = vmatprep.subr.mxu0 0.0
    %3953 = vmatpush2.msra.mxu0 0.0
    %3954 = vmatprep.subr.mxu0 0.0
    %3955 = vmatpush2.msra.mxu0 0.0
    %3956 = vmatprep.subr.mxu0 0.0
    %3957 = vmatpush2.msra.mxu0 0.0
    %3958 = vmatprep.subr.mxu0 0.0
    %3959 = vmatpush2.msra.mxu0 0.0
    %3960 = vmatprep.mubr.f32.mxu0 0.0
    %3961 = vmatmul.mubr.f32.gmra.mxu0 %v3895
    %v3962 = vpop.f32.mrf.mxu0
    %v3963 = vadd.f32 %v104, %v3962
    %v3964 = vpop.f32.mrf.mxu0
    %3965 = vdwg.mxu0
    %v3966 = vmul.f32 %v3963, 0.1
    %v3967 = vadd.f32 %v3824, %v3966
    %3968 = vmatprep.subr.mxu0 0.0
    %3969 = vmatpush1.msra.mxu0 %v75
    %3970 = vmatprep.subr.mxu0 0.0
    %3971 = vmatpush1.msra.mxu0 %v74
    %3972 = vmatprep.subr.mxu0 0.0
    %3973 = vmatpush1.msra.mxu0 %v73
    %3974 = vmatprep.subr.mxu0 0.0
    %3975 = vmatpush1.msra.mxu0 %v72
    %3976 = vmatprep.subr.mxu0 0.0
    %3977 = vmatpush1.msra.mxu0 %v71
    %3978 = vmatprep.subr.mxu0 0.0
    %3979 = vmatpush1.msra.mxu0 %v70
    %3980 = vmatprep.subr.mxu0 0.0
    %3981 = vmatpush1.msra.mxu0 %v69
    %3982 = vmatprep.subr.mxu0 0.0
    %3983 = vmatpush1.msra.mxu0 %v68
    %3984 = vmatprep.subr.mxu0 0.0
    %3985 = vmatpush1.msra.mxu0 %v67
    %3986 = vmatprep.subr.mxu0 0.0
    %3987 = vmatpush1.msra.mxu0 %v66
    %3988 = vmatprep.subr.mxu0 0.0
    %3989 = vmatpush1.msra.mxu0 %v65
    %3990 = vmatprep.subr.mxu0 0.0
    %3991 = vmatpush1.msra.mxu0 %v64
    %3992 = vmatprep.subr.mxu0 0.0
    %3993 = vmatpush1.msra.mxu0 %v63
    %3994 = vmatprep.subr.mxu0 0.0
    %3995 = vmatpush1.msra.mxu0 %v62
    %3996 = vmatprep.subr.mxu0 0.0
    %3997 = vmatpush1.msra.mxu0 %v61
    %3998 = vmatprep.subr.mxu0 0.0
    %3999 = vmatpush1.msra.mxu0 %v60
    %4000 = vmatprep.subr.mxu0 0.0
    %4001 = vmatpush2.msra.mxu0 0.0
    %4002 = vmatprep.subr.mxu0 0.0
    %4003 = vmatpush2.msra.mxu0 0.0
    %4004 = vmatprep.subr.mxu0 0.0
    %4005 = vmatpush2.msra.mxu0 0.0
    %4006 = vmatprep.subr.mxu0 0.0
    %4007 = vmatpush2.msra.mxu0 0.0
    %4008 = vmatprep.subr.mxu0 0.0
    %4009 = vmatpush2.msra.mxu0 0.0
    %4010 = vmatprep.subr.mxu0 0.0
    %4011 = vmatpush2.msra.mxu0 0.0
    %4012 = vmatprep.subr.mxu0 0.0
    %4013 = vmatpush2.msra.mxu0 0.0
    %4014 = vmatprep.subr.mxu0 0.0
    %4015 = vmatpush2.msra.mxu0 0.0
    %4016 = vmatprep.subr.mxu0 0.0
    %4017 = vmatpush2.msra.mxu0 0.0
    %4018 = vmatprep.subr.mxu0 0.0
    %4019 = vmatpush2.msra.mxu0 0.0
    %4020 = vmatprep.subr.mxu0 0.0
    %4021 = vmatpush2.msra.mxu0 0.0
    %4022 = vmatprep.subr.mxu0 0.0
    %4023 = vmatpush2.msra.mxu0 0.0
    %4024 = vmatprep.subr.mxu0 0.0
    %4025 = vmatpush2.msra.mxu0 0.0
    %4026 = vmatprep.subr.mxu0 0.0
    %4027 = vmatpush2.msra.mxu0 0.0
    %4028 = vmatprep.subr.mxu0 0.0
    %4029 = vmatpush2.msra.mxu0 0.0
    %4030 = vmatprep.subr.mxu0 0.0
    %4031 = vmatpush2.msra.mxu0 0.0
    %4032 = vmatprep.mubr.f32.mxu0 0.0
    %4033 = vmatmul.mubr.f32.gmra.mxu0 %v3967
    %v4034 = vpop.f32.mrf.mxu0
    %v4035 = vadd.f32 %v97, %v4034
    %v4036 = vpop.f32.mrf.mxu0
    %4037 = vdwg.mxu0
    %v4038 = vtanh.pop %v4035
    %4039 = vmatprep.subr.mxu0 0.0
    %4040 = vmatpush1.msra.mxu0 %v91
    %4041 = vmatprep.subr.mxu0 0.0
    %4042 = vmatpush1.msra.mxu0 %v90
    %4043 = vmatprep.subr.mxu0 0.0
    %4044 = vmatpush1.msra.mxu0 %v89
    %4045 = vmatprep.subr.mxu0 0.0
    %4046 = vmatpush1.msra.mxu0 %v88
    %4047 = vmatprep.subr.mxu0 0.0
    %4048 = vmatpush1.msra.mxu0 %v87
    %4049 = vmatprep.subr.mxu0 0.0
    %4050 = vmatpush1.msra.mxu0 %v86
    %4051 = vmatprep.subr.mxu0 0.0
    %4052 = vmatpush1.msra.mxu0 %v85
    %4053 = vmatprep.subr.mxu0 0.0
    %4054 = vmatpush1.msra.mxu0 %v84
    %4055 = vmatprep.subr.mxu0 0.0
    %4056 = vmatpush1.msra.mxu0 %v83
    %4057 = vmatprep.subr.mxu0 0.0
    %4058 = vmatpush1.msra.mxu0 %v82
    %4059 = vmatprep.subr.mxu0 0.0
    %4060 = vmatpush1.msra.mxu0 %v81
    %4061 = vmatprep.subr.mxu0 0.0
    %4062 = vmatpush1.msra.mxu0 %v80
    %4063 = vmatprep.subr.mxu0 0.0
    %4064 = vmatpush1.msra.mxu0 %v79
    %4065 = vmatprep.subr.mxu0 0.0
    %4066 = vmatpush1.msra.mxu0 %v78
    %4067 = vmatprep.subr.mxu0 0.0
    %4068 = vmatpush1.msra.mxu0 %v77
    %4069 = vmatprep.subr.mxu0 0.0
    %4070 = vmatpush1.msra.mxu0 %v76
    %4071 = vmatprep.subr.mxu0 0.0
    %4072 = vmatpush2.msra.mxu0 0.0
    %4073 = vmatprep.subr.mxu0 0.0
    %4074 = vmatpush2.msra.mxu0 0.0
    %4075 = vmatprep.subr.mxu0 0.0
    %4076 = vmatpush2.msra.mxu0 0.0
    %4077 = vmatprep.subr.mxu0 0.0
    %4078 = vmatpush2.msra.mxu0 0.0
    %4079 = vmatprep.subr.mxu0 0.0
    %4080 = vmatpush2.msra.mxu0 0.0
    %4081 = vmatprep.subr.mxu0 0.0
    %4082 = vmatpush2.msra.mxu0 0.0
    %4083 = vmatprep.subr.mxu0 0.0
    %4084 = vmatpush2.msra.mxu0 0.0
    %4085 = vmatprep.subr.mxu0 0.0
    %4086 = vmatpush2.msra.mxu0 0.0
    %4087 = vmatprep.subr.mxu0 0.0
    %4088 = vmatpush2.msra.mxu0 0.0
    %4089 = vmatprep.subr.mxu0 0.0
    %4090 = vmatpush2.msra.mxu0 0.0
    %4091 = vmatprep.subr.mxu0 0.0
    %4092 = vmatpush2.msra.mxu0 0.0
    %4093 = vmatprep.subr.mxu0 0.0
    %4094 = vmatpush2.msra.mxu0 0.0
    %4095 = vmatprep.subr.mxu0 0.0
    %4096 = vmatpush2.msra.mxu0 0.0
    %4097 = vmatprep.subr.mxu0 0.0
    %4098 = vmatpush2.msra.mxu0 0.0
    %4099 = vmatprep.subr.mxu0 0.0
    %4100 = vmatpush2.msra.mxu0 0.0
    %4101 = vmatprep.subr.mxu0 0.0
    %4102 = vmatpush2.msra.mxu0 0.0
    %4103 = vmatprep.mubr.f32.mxu0 0.0
    %4104 = vmatmul.mubr.f32.gmra.mxu0 %v4038
    %v4105 = vpop.f32.mrf.mxu0
    %v4106 = vadd.f32 %v104, %v4105
    %v4107 = vpop.f32.mrf.mxu0
    %4108 = vdwg.mxu0
    %v4109 = vmul.f32 %v4106, 0.1
    %v4110 = vadd.f32 %v3967, %v4109
    %4111 = vmatprep.subr.mxu0 0.0
    %4112 = vmatpush1.msra.mxu0 %v75
    %4113 = vmatprep.subr.mxu0 0.0
    %4114 = vmatpush1.msra.mxu0 %v74
    %4115 = vmatprep.subr.mxu0 0.0
    %4116 = vmatpush1.msra.mxu0 %v73
    %4117 = vmatprep.subr.mxu0 0.0
    %4118 = vmatpush1.msra.mxu0 %v72
    %4119 = vmatprep.subr.mxu0 0.0
    %4120 = vmatpush1.msra.mxu0 %v71
    %4121 = vmatprep.subr.mxu0 0.0
    %4122 = vmatpush1.msra.mxu0 %v70
    %4123 = vmatprep.subr.mxu0 0.0
    %4124 = vmatpush1.msra.mxu0 %v69
    %4125 = vmatprep.subr.mxu0 0.0
    %4126 = vmatpush1.msra.mxu0 %v68
    %4127 = vmatprep.subr.mxu0 0.0
    %4128 = vmatpush1.msra.mxu0 %v67
    %4129 = vmatprep.subr.mxu0 0.0
    %4130 = vmatpush1.msra.mxu0 %v66
    %4131 = vmatprep.subr.mxu0 0.0
    %4132 = vmatpush1.msra.mxu0 %v65
    %4133 = vmatprep.subr.mxu0 0.0
    %4134 = vmatpush1.msra.mxu0 %v64
    %4135 = vmatprep.subr.mxu0 0.0
    %4136 = vmatpush1.msra.mxu0 %v63
    %4137 = vmatprep.subr.mxu0 0.0
    %4138 = vmatpush1.msra.mxu0 %v62
    %4139 = vmatprep.subr.mxu0 0.0
    %4140 = vmatpush1.msra.mxu0 %v61
    %4141 = vmatprep.subr.mxu0 0.0
    %4142 = vmatpush1.msra.mxu0 %v60
    %4143 = vmatprep.subr.mxu0 0.0
    %4144 = vmatpush2.msra.mxu0 0.0
    %4145 = vmatprep.subr.mxu0 0.0
    %4146 = vmatpush2.msra.mxu0 0.0
    %4147 = vmatprep.subr.mxu0 0.0
    %4148 = vmatpush2.msra.mxu0 0.0
    %4149 = vmatprep.subr.mxu0 0.0
    %4150 = vmatpush2.msra.mxu0 0.0
    %4151 = vmatprep.subr.mxu0 0.0
    %4152 = vmatpush2.msra.mxu0 0.0
    %4153 = vmatprep.subr.mxu0 0.0
    %4154 = vmatpush2.msra.mxu0 0.0
    %4155 = vmatprep.subr.mxu0 0.0
    %4156 = vmatpush2.msra.mxu0 0.0
    %4157 = vmatprep.subr.mxu0 0.0
    %4158 = vmatpush2.msra.mxu0 0.0
    %4159 = vmatprep.subr.mxu0 0.0
    %4160 = vmatpush2.msra.mxu0 0.0
    %4161 = vmatprep.subr.mxu0 0.0
    %4162 = vmatpush2.msra.mxu0 0.0
    %4163 = vmatprep.subr.mxu0 0.0
    %4164 = vmatpush2.msra.mxu0 0.0
    %4165 = vmatprep.subr.mxu0 0.0
    %4166 = vmatpush2.msra.mxu0 0.0
    %4167 = vmatprep.subr.mxu0 0.0
    %4168 = vmatpush2.msra.mxu0 0.0
    %4169 = vmatprep.subr.mxu0 0.0
    %4170 = vmatpush2.msra.mxu0 0.0
    %4171 = vmatprep.subr.mxu0 0.0
    %4172 = vmatpush2.msra.mxu0 0.0
    %4173 = vmatprep.subr.mxu0 0.0
    %4174 = vmatpush2.msra.mxu0 0.0
    %4175 = vmatprep.mubr.f32.mxu0 0.0
    %4176 = vmatmul.mubr.f32.gmra.mxu0 %v4110
    %v4177 = vpop.f32.mrf.mxu0
    %v4178 = vadd.f32 %v97, %v4177
    %v4179 = vpop.f32.mrf.mxu0
    %4180 = vdwg.mxu0
    %v4181 = vtanh.pop %v4178
    %4182 = vmatprep.subr.mxu0 0.0
    %4183 = vmatpush1.msra.mxu0 %v91
    %4184 = vmatprep.subr.mxu0 0.0
    %4185 = vmatpush1.msra.mxu0 %v90
    %4186 = vmatprep.subr.mxu0 0.0
    %4187 = vmatpush1.msra.mxu0 %v89
    %4188 = vmatprep.subr.mxu0 0.0
    %4189 = vmatpush1.msra.mxu0 %v88
    %4190 = vmatprep.subr.mxu0 0.0
    %4191 = vmatpush1.msra.mxu0 %v87
    %4192 = vmatprep.subr.mxu0 0.0
    %4193 = vmatpush1.msra.mxu0 %v86
    %4194 = vmatprep.subr.mxu0 0.0
    %4195 = vmatpush1.msra.mxu0 %v85
    %4196 = vmatprep.subr.mxu0 0.0
    %4197 = vmatpush1.msra.mxu0 %v84
    %4198 = vmatprep.subr.mxu0 0.0
    %4199 = vmatpush1.msra.mxu0 %v83
    %4200 = vmatprep.subr.mxu0 0.0
    %4201 = vmatpush1.msra.mxu0 %v82
    %4202 = vmatprep.subr.mxu0 0.0
    %4203 = vmatpush1.msra.mxu0 %v81
    %4204 = vmatprep.subr.mxu0 0.0
    %4205 = vmatpush1.msra.mxu0 %v80
    %4206 = vmatprep.subr.mxu0 0.0
    %4207 = vmatpush1.msra.mxu0 %v79
    %4208 = vmatprep.subr.mxu0 0.0
    %4209 = vmatpush1.msra.mxu0 %v78
    %4210 = vmatprep.subr.mxu0 0.0
    %4211 = vmatpush1.msra.mxu0 %v77
    %4212 = vmatprep.subr.mxu0 0.0
    %4213 = vmatpush1.msra.mxu0 %v76
    %4214 = vmatprep.subr.mxu0 0.0
    %4215 = vmatpush2.msra.mxu0 0.0
    %4216 = vmatprep.subr.mxu0 0.0
    %4217 = vmatpush2.msra.mxu0 0.0
    %4218 = vmatprep.subr.mxu0 0.0
    %4219 = vmatpush2.msra.mxu0 0.0
    %4220 = vmatprep.subr.mxu0 0.0
    %4221 = vmatpush2.msra.mxu0 0.0
    %4222 = vmatprep.subr.mxu0 0.0
    %4223 = vmatpush2.msra.mxu0 0.0
    %4224 = vmatprep.subr.mxu0 0.0
    %4225 = vmatpush2.msra.mxu0 0.0
    %4226 = vmatprep.subr.mxu0 0.0
    %4227 = vmatpush2.msra.mxu0 0.0
    %4228 = vmatprep.subr.mxu0 0.0
    %4229 = vmatpush2.msra.mxu0 0.0
    %4230 = vmatprep.subr.mxu0 0.0
    %4231 = vmatpush2.msra.mxu0 0.0
    %4232 = vmatprep.subr.mxu0 0.0
    %4233 = vmatpush2.msra.mxu0 0.0
    %4234 = vmatprep.subr.mxu0 0.0
    %4235 = vmatpush2.msra.mxu0 0.0
    %4236 = vmatprep.subr.mxu0 0.0
    %4237 = vmatpush2.msra.mxu0 0.0
    %4238 = vmatprep.subr.mxu0 0.0
    %4239 = vmatpush2.msra.mxu0 0.0
    %4240 = vmatprep.subr.mxu0 0.0
    %4241 = vmatpush2.msra.mxu0 0.0
    %4242 = vmatprep.subr.mxu0 0.0
    %4243 = vmatpush2.msra.mxu0 0.0
    %4244 = vmatprep.subr.mxu0 0.0
    %4245 = vmatpush2.msra.mxu0 0.0
    %4246 = vmatprep.mubr.f32.mxu0 0.0
    %4247 = vmatmul.mubr.f32.gmra.mxu0 %v4181
    %v4248 = vpop.f32.mrf.mxu0
    %v4249 = vadd.f32 %v104, %v4248
    %v4250 = vpop.f32.mrf.mxu0
    %4251 = vdwg.mxu0
    %v4252 = vmul.f32 %v4249, 0.1
    %v4253 = vadd.f32 %v4110, %v4252
    %4254 = vmatprep.subr.mxu0 0.0
    %4255 = vmatpush1.msra.mxu0 %v75
    %4256 = vmatprep.subr.mxu0 0.0
    %4257 = vmatpush1.msra.mxu0 %v74
    %4258 = vmatprep.subr.mxu0 0.0
    %4259 = vmatpush1.msra.mxu0 %v73
    %4260 = vmatprep.subr.mxu0 0.0
    %4261 = vmatpush1.msra.mxu0 %v72
    %4262 = vmatprep.subr.mxu0 0.0
    %4263 = vmatpush1.msra.mxu0 %v71
    %4264 = vmatprep.subr.mxu0 0.0
    %4265 = vmatpush1.msra.mxu0 %v70
    %4266 = vmatprep.subr.mxu0 0.0
    %4267 = vmatpush1.msra.mxu0 %v69
    %4268 = vmatprep.subr.mxu0 0.0
    %4269 = vmatpush1.msra.mxu0 %v68
    %4270 = vmatprep.subr.mxu0 0.0
    %4271 = vmatpush1.msra.mxu0 %v67
    %4272 = vmatprep.subr.mxu0 0.0
    %4273 = vmatpush1.msra.mxu0 %v66
    %4274 = vmatprep.subr.mxu0 0.0
    %4275 = vmatpush1.msra.mxu0 %v65
    %4276 = vmatprep.subr.mxu0 0.0
    %4277 = vmatpush1.msra.mxu0 %v64
    %4278 = vmatprep.subr.mxu0 0.0
    %4279 = vmatpush1.msra.mxu0 %v63
    %4280 = vmatprep.subr.mxu0 0.0
    %4281 = vmatpush1.msra.mxu0 %v62
    %4282 = vmatprep.subr.mxu0 0.0
    %4283 = vmatpush1.msra.mxu0 %v61
    %4284 = vmatprep.subr.mxu0 0.0
    %4285 = vmatpush1.msra.mxu0 %v60
    %4286 = vmatprep.subr.mxu0 0.0
    %4287 = vmatpush2.msra.mxu0 0.0
    %4288 = vmatprep.subr.mxu0 0.0
    %4289 = vmatpush2.msra.mxu0 0.0
    %4290 = vmatprep.subr.mxu0 0.0
    %4291 = vmatpush2.msra.mxu0 0.0
    %4292 = vmatprep.subr.mxu0 0.0
    %4293 = vmatpush2.msra.mxu0 0.0
    %4294 = vmatprep.subr.mxu0 0.0
    %4295 = vmatpush2.msra.mxu0 0.0
    %4296 = vmatprep.subr.mxu0 0.0
    %4297 = vmatpush2.msra.mxu0 0.0
    %4298 = vmatprep.subr.mxu0 0.0
    %4299 = vmatpush2.msra.mxu0 0.0
    %4300 = vmatprep.subr.mxu0 0.0
    %4301 = vmatpush2.msra.mxu0 0.0
    %4302 = vmatprep.subr.mxu0 0.0
    %4303 = vmatpush2.msra.mxu0 0.0
    %4304 = vmatprep.subr.mxu0 0.0
    %4305 = vmatpush2.msra.mxu0 0.0
    %4306 = vmatprep.subr.mxu0 0.0
    %4307 = vmatpush2.msra.mxu0 0.0
    %4308 = vmatprep.subr.mxu0 0.0
    %4309 = vmatpush2.msra.mxu0 0.0
    %4310 = vmatprep.subr.mxu0 0.0
    %4311 = vmatpush2.msra.mxu0 0.0
    %4312 = vmatprep.subr.mxu0 0.0
    %4313 = vmatpush2.msra.mxu0 0.0
    %4314 = vmatprep.subr.mxu0 0.0
    %4315 = vmatpush2.msra.mxu0 0.0
    %4316 = vmatprep.subr.mxu0 0.0
    %4317 = vmatpush2.msra.mxu0 0.0
    %4318 = vmatprep.mubr.f32.mxu0 0.0
    %4319 = vmatmul.mubr.f32.gmra.mxu0 %v4253
    %v4320 = vpop.f32.mrf.mxu0
    %v4321 = vadd.f32 %v97, %v4320
    %v4322 = vpop.f32.mrf.mxu0
    %4323 = vdwg.mxu0
    %v4324 = vtanh.pop %v4321
    %4325 = vmatprep.subr.mxu0 0.0
    %4326 = vmatpush1.msra.mxu0 %v91
    %4327 = vmatprep.subr.mxu0 0.0
    %4328 = vmatpush1.msra.mxu0 %v90
    %4329 = vmatprep.subr.mxu0 0.0
    %4330 = vmatpush1.msra.mxu0 %v89
    %4331 = vmatprep.subr.mxu0 0.0
    %4332 = vmatpush1.msra.mxu0 %v88
    %4333 = vmatprep.subr.mxu0 0.0
    %4334 = vmatpush1.msra.mxu0 %v87
    %4335 = vmatprep.subr.mxu0 0.0
    %4336 = vmatpush1.msra.mxu0 %v86
    %4337 = vmatprep.subr.mxu0 0.0
    %4338 = vmatpush1.msra.mxu0 %v85
    %4339 = vmatprep.subr.mxu0 0.0
    %4340 = vmatpush1.msra.mxu0 %v84
    %4341 = vmatprep.subr.mxu0 0.0
    %4342 = vmatpush1.msra.mxu0 %v83
    %4343 = vmatprep.subr.mxu0 0.0
    %4344 = vmatpush1.msra.mxu0 %v82
    %4345 = vmatprep.subr.mxu0 0.0
    %4346 = vmatpush1.msra.mxu0 %v81
    %4347 = vmatprep.subr.mxu0 0.0
    %4348 = vmatpush1.msra.mxu0 %v80
    %4349 = vmatprep.subr.mxu0 0.0
    %4350 = vmatpush1.msra.mxu0 %v79
    %4351 = vmatprep.subr.mxu0 0.0
    %4352 = vmatpush1.msra.mxu0 %v78
    %4353 = vmatprep.subr.mxu0 0.0
    %4354 = vmatpush1.msra.mxu0 %v77
    %4355 = vmatprep.subr.mxu0 0.0
    %4356 = vmatpush1.msra.mxu0 %v76
    %4357 = vmatprep.subr.mxu0 0.0
    %4358 = vmatpush2.msra.mxu0 0.0
    %4359 = vmatprep.subr.mxu0 0.0
    %4360 = vmatpush2.msra.mxu0 0.0
    %4361 = vmatprep.subr.mxu0 0.0
    %4362 = vmatpush2.msra.mxu0 0.0
    %4363 = vmatprep.subr.mxu0 0.0
    %4364 = vmatpush2.msra.mxu0 0.0
    %4365 = vmatprep.subr.mxu0 0.0
    %4366 = vmatpush2.msra.mxu0 0.0
    %4367 = vmatprep.subr.mxu0 0.0
    %4368 = vmatpush2.msra.mxu0 0.0
    %4369 = vmatprep.subr.mxu0 0.0
    %4370 = vmatpush2.msra.mxu0 0.0
    %4371 = vmatprep.subr.mxu0 0.0
    %4372 = vmatpush2.msra.mxu0 0.0
    %4373 = vmatprep.subr.mxu0 0.0
    %4374 = vmatpush2.msra.mxu0 0.0
    %4375 = vmatprep.subr.mxu0 0.0
    %4376 = vmatpush2.msra.mxu0 0.0
    %4377 = vmatprep.subr.mxu0 0.0
    %4378 = vmatpush2.msra.mxu0 0.0
    %4379 = vmatprep.subr.mxu0 0.0
    %4380 = vmatpush2.msra.mxu0 0.0
    %4381 = vmatprep.subr.mxu0 0.0
    %4382 = vmatpush2.msra.mxu0 0.0
    %4383 = vmatprep.subr.mxu0 0.0
    %4384 = vmatpush2.msra.mxu0 0.0
    %4385 = vmatprep.subr.mxu0 0.0
    %4386 = vmatpush2.msra.mxu0 0.0
    %4387 = vmatprep.subr.mxu0 0.0
    %4388 = vmatpush2.msra.mxu0 0.0
    %4389 = vmatprep.mubr.f32.mxu0 0.0
    %4390 = vmatmul.mubr.f32.gmra.mxu0 %v4324
    %v4391 = vpop.f32.mrf.mxu0
    %v4392 = vadd.f32 %v104, %v4391
    %v4393 = vpop.f32.mrf.mxu0
    %4394 = vdwg.mxu0
    %v4395 = vmul.f32 %v4392, 0.1
    %v4396 = vadd.f32 %v4253, %v4395
    %4397 = vmatprep.subr.mxu0 0.0
    %4398 = vmatpush1.msra.mxu0 %v75
    %4399 = vmatprep.subr.mxu0 0.0
    %4400 = vmatpush1.msra.mxu0 %v74
    %4401 = vmatprep.subr.mxu0 0.0
    %4402 = vmatpush1.msra.mxu0 %v73
    %4403 = vmatprep.subr.mxu0 0.0
    %4404 = vmatpush1.msra.mxu0 %v72
    %4405 = vmatprep.subr.mxu0 0.0
    %4406 = vmatpush1.msra.mxu0 %v71
    %4407 = vmatprep.subr.mxu0 0.0
    %4408 = vmatpush1.msra.mxu0 %v70
    %4409 = vmatprep.subr.mxu0 0.0
    %4410 = vmatpush1.msra.mxu0 %v69
    %4411 = vmatprep.subr.mxu0 0.0
    %4412 = vmatpush1.msra.mxu0 %v68
    %4413 = vmatprep.subr.mxu0 0.0
    %4414 = vmatpush1.msra.mxu0 %v67
    %4415 = vmatprep.subr.mxu0 0.0
    %4416 = vmatpush1.msra.mxu0 %v66
    %4417 = vmatprep.subr.mxu0 0.0
    %4418 = vmatpush1.msra.mxu0 %v65
    %4419 = vmatprep.subr.mxu0 0.0
    %4420 = vmatpush1.msra.mxu0 %v64
    %4421 = vmatprep.subr.mxu0 0.0
    %4422 = vmatpush1.msra.mxu0 %v63
    %4423 = vmatprep.subr.mxu0 0.0
    %4424 = vmatpush1.msra.mxu0 %v62
    %4425 = vmatprep.subr.mxu0 0.0
    %4426 = vmatpush1.msra.mxu0 %v61
    %4427 = vmatprep.subr.mxu0 0.0
    %4428 = vmatpush1.msra.mxu0 %v60
    %4429 = vmatprep.subr.mxu0 0.0
    %4430 = vmatpush2.msra.mxu0 0.0
    %4431 = vmatprep.subr.mxu0 0.0
    %4432 = vmatpush2.msra.mxu0 0.0
    %4433 = vmatprep.subr.mxu0 0.0
    %4434 = vmatpush2.msra.mxu0 0.0
    %4435 = vmatprep.subr.mxu0 0.0
    %4436 = vmatpush2.msra.mxu0 0.0
    %4437 = vmatprep.subr.mxu0 0.0
    %4438 = vmatpush2.msra.mxu0 0.0
    %4439 = vmatprep.subr.mxu0 0.0
    %4440 = vmatpush2.msra.mxu0 0.0
    %4441 = vmatprep.subr.mxu0 0.0
    %4442 = vmatpush2.msra.mxu0 0.0
    %4443 = vmatprep.subr.mxu0 0.0
    %4444 = vmatpush2.msra.mxu0 0.0
    %4445 = vmatprep.subr.mxu0 0.0
    %4446 = vmatpush2.msra.mxu0 0.0
    %4447 = vmatprep.subr.mxu0 0.0
    %4448 = vmatpush2.msra.mxu0 0.0
    %4449 = vmatprep.subr.mxu0 0.0
    %4450 = vmatpush2.msra.mxu0 0.0
    %4451 = vmatprep.subr.mxu0 0.0
    %4452 = vmatpush2.msra.mxu0 0.0
    %4453 = vmatprep.subr.mxu0 0.0
    %4454 = vmatpush2.msra.mxu0 0.0
    %4455 = vmatprep.subr.mxu0 0.0
    %4456 = vmatpush2.msra.mxu0 0.0
    %4457 = vmatprep.subr.mxu0 0.0
    %4458 = vmatpush2.msra.mxu0 0.0
    %4459 = vmatprep.subr.mxu0 0.0
    %4460 = vmatpush2.msra.mxu0 0.0
    %4461 = vmatprep.mubr.f32.mxu0 0.0
    %4462 = vmatmul.mubr.f32.gmra.mxu0 %v4396
    %v4463 = vpop.f32.mrf.mxu0
    %v4464 = vadd.f32 %v97, %v4463
    %v4465 = vpop.f32.mrf.mxu0
    %4466 = vdwg.mxu0
    %v4467 = vtanh.pop %v4464
    %4468 = vmatprep.subr.mxu0 0.0
    %4469 = vmatpush1.msra.mxu0 %v91
    %4470 = vmatprep.subr.mxu0 0.0
    %4471 = vmatpush1.msra.mxu0 %v90
    %4472 = vmatprep.subr.mxu0 0.0
    %4473 = vmatpush1.msra.mxu0 %v89
    %4474 = vmatprep.subr.mxu0 0.0
    %4475 = vmatpush1.msra.mxu0 %v88
    %4476 = vmatprep.subr.mxu0 0.0
    %4477 = vmatpush1.msra.mxu0 %v87
    %4478 = vmatprep.subr.mxu0 0.0
    %4479 = vmatpush1.msra.mxu0 %v86
    %4480 = vmatprep.subr.mxu0 0.0
    %4481 = vmatpush1.msra.mxu0 %v85
    %4482 = vmatprep.subr.mxu0 0.0
    %4483 = vmatpush1.msra.mxu0 %v84
    %4484 = vmatprep.subr.mxu0 0.0
    %4485 = vmatpush1.msra.mxu0 %v83
    %4486 = vmatprep.subr.mxu0 0.0
    %4487 = vmatpush1.msra.mxu0 %v82
    %4488 = vmatprep.subr.mxu0 0.0
    %4489 = vmatpush1.msra.mxu0 %v81
    %4490 = vmatprep.subr.mxu0 0.0
    %4491 = vmatpush1.msra.mxu0 %v80
    %4492 = vmatprep.subr.mxu0 0.0
    %4493 = vmatpush1.msra.mxu0 %v79
    %4494 = vmatprep.subr.mxu0 0.0
    %4495 = vmatpush1.msra.mxu0 %v78
    %4496 = vmatprep.subr.mxu0 0.0
    %4497 = vmatpush1.msra.mxu0 %v77
    %4498 = vmatprep.subr.mxu0 0.0
    %4499 = vmatpush1.msra.mxu0 %v76
    %4500 = vmatprep.subr.mxu0 0.0
    %4501 = vmatpush2.msra.mxu0 0.0
    %4502 = vmatprep.subr.mxu0 0.0
    %4503 = vmatpush2.msra.mxu0 0.0
    %4504 = vmatprep.subr.mxu0 0.0
    %4505 = vmatpush2.msra.mxu0 0.0
    %4506 = vmatprep.subr.mxu0 0.0
    %4507 = vmatpush2.msra.mxu0 0.0
    %4508 = vmatprep.subr.mxu0 0.0
    %4509 = vmatpush2.msra.mxu0 0.0
    %4510 = vmatprep.subr.mxu0 0.0
    %4511 = vmatpush2.msra.mxu0 0.0
    %4512 = vmatprep.subr.mxu0 0.0
    %4513 = vmatpush2.msra.mxu0 0.0
    %4514 = vmatprep.subr.mxu0 0.0
    %4515 = vmatpush2.msra.mxu0 0.0
    %4516 = vmatprep.subr.mxu0 0.0
    %4517 = vmatpush2.msra.mxu0 0.0
    %4518 = vmatprep.subr.mxu0 0.0
    %4519 = vmatpush2.msra.mxu0 0.0
    %4520 = vmatprep.subr.mxu0 0.0
    %4521 = vmatpush2.msra.mxu0 0.0
    %4522 = vmatprep.subr.mxu0 0.0
    %4523 = vmatpush2.msra.mxu0 0.0
    %4524 = vmatprep.subr.mxu0 0.0
    %4525 = vmatpush2.msra.mxu0 0.0
    %4526 = vmatprep.subr.mxu0 0.0
    %4527 = vmatpush2.msra.mxu0 0.0
    %4528 = vmatprep.subr.mxu0 0.0
    %4529 = vmatpush2.msra.mxu0 0.0
    %4530 = vmatprep.subr.mxu0 0.0
    %4531 = vmatpush2.msra.mxu0 0.0
    %4532 = vmatprep.mubr.f32.mxu0 0.0
    %4533 = vmatmul.mubr.f32.gmra.mxu0 %v4467
    %v4534 = vpop.f32.mrf.mxu0
    %v4535 = vadd.f32 %v104, %v4534
    %v4536 = vpop.f32.mrf.mxu0
    %4537 = vdwg.mxu0
    %v4538 = vmul.f32 %v4535, 0.1
    %v4539 = vadd.f32 %v4396, %v4538
    %4540 = vmatprep.subr.mxu0 0.0
    %4541 = vmatpush1.msra.mxu0 %v75
    %4542 = vmatprep.subr.mxu0 0.0
    %4543 = vmatpush1.msra.mxu0 %v74
    %4544 = vmatprep.subr.mxu0 0.0
    %4545 = vmatpush1.msra.mxu0 %v73
    %4546 = vmatprep.subr.mxu0 0.0
    %4547 = vmatpush1.msra.mxu0 %v72
    %4548 = vmatprep.subr.mxu0 0.0
    %4549 = vmatpush1.msra.mxu0 %v71
    %4550 = vmatprep.subr.mxu0 0.0
    %4551 = vmatpush1.msra.mxu0 %v70
    %4552 = vmatprep.subr.mxu0 0.0
    %4553 = vmatpush1.msra.mxu0 %v69
    %4554 = vmatprep.subr.mxu0 0.0
    %4555 = vmatpush1.msra.mxu0 %v68
    %4556 = vmatprep.subr.mxu0 0.0
    %4557 = vmatpush1.msra.mxu0 %v67
    %4558 = vmatprep.subr.mxu0 0.0
    %4559 = vmatpush1.msra.mxu0 %v66
    %4560 = vmatprep.subr.mxu0 0.0
    %4561 = vmatpush1.msra.mxu0 %v65
    %4562 = vmatprep.subr.mxu0 0.0
    %4563 = vmatpush1.msra.mxu0 %v64
    %4564 = vmatprep.subr.mxu0 0.0
    %4565 = vmatpush1.msra.mxu0 %v63
    %4566 = vmatprep.subr.mxu0 0.0
    %4567 = vmatpush1.msra.mxu0 %v62
    %4568 = vmatprep.subr.mxu0 0.0
    %4569 = vmatpush1.msra.mxu0 %v61
    %4570 = vmatprep.subr.mxu0 0.0
    %4571 = vmatpush1.msra.mxu0 %v60
    %4572 = vmatprep.subr.mxu0 0.0
    %4573 = vmatpush2.msra.mxu0 0.0
    %4574 = vmatprep.subr.mxu0 0.0
    %4575 = vmatpush2.msra.mxu0 0.0
    %4576 = vmatprep.subr.mxu0 0.0
    %4577 = vmatpush2.msra.mxu0 0.0
    %4578 = vmatprep.subr.mxu0 0.0
    %4579 = vmatpush2.msra.mxu0 0.0
    %4580 = vmatprep.subr.mxu0 0.0
    %4581 = vmatpush2.msra.mxu0 0.0
    %4582 = vmatprep.subr.mxu0 0.0
    %4583 = vmatpush2.msra.mxu0 0.0
    %4584 = vmatprep.subr.mxu0 0.0
    %4585 = vmatpush2.msra.mxu0 0.0
    %4586 = vmatprep.subr.mxu0 0.0
    %4587 = vmatpush2.msra.mxu0 0.0
    %4588 = vmatprep.subr.mxu0 0.0
    %4589 = vmatpush2.msra.mxu0 0.0
    %4590 = vmatprep.subr.mxu0 0.0
    %4591 = vmatpush2.msra.mxu0 0.0
    %4592 = vmatprep.subr.mxu0 0.0
    %4593 = vmatpush2.msra.mxu0 0.0
    %4594 = vmatprep.subr.mxu0 0.0
    %4595 = vmatpush2.msra.mxu0 0.0
    %4596 = vmatprep.subr.mxu0 0.0
    %4597 = vmatpush2.msra.mxu0 0.0
    %4598 = vmatprep.subr.mxu0 0.0
    %4599 = vmatpush2.msra.mxu0 0.0
    %4600 = vmatprep.subr.mxu0 0.0
    %4601 = vmatpush2.msra.mxu0 0.0
    %4602 = vmatprep.subr.mxu0 0.0
    %4603 = vmatpush2.msra.mxu0 0.0
    %4604 = vmatprep.mubr.f32.mxu0 0.0
    %4605 = vmatmul.mubr.f32.gmra.mxu0 %v4539
    %v4606 = vpop.f32.mrf.mxu0
    %v4607 = vadd.f32 %v97, %v4606
    %v4608 = vpop.f32.mrf.mxu0
    %4609 = vdwg.mxu0
    %v4610 = vtanh.pop %v4607
    %4611 = vmatprep.subr.mxu0 0.0
    %4612 = vmatpush1.msra.mxu0 %v91
    %4613 = vmatprep.subr.mxu0 0.0
    %4614 = vmatpush1.msra.mxu0 %v90
    %4615 = vmatprep.subr.mxu0 0.0
    %4616 = vmatpush1.msra.mxu0 %v89
    %4617 = vmatprep.subr.mxu0 0.0
    %4618 = vmatpush1.msra.mxu0 %v88
    %4619 = vmatprep.subr.mxu0 0.0
    %4620 = vmatpush1.msra.mxu0 %v87
    %4621 = vmatprep.subr.mxu0 0.0
    %4622 = vmatpush1.msra.mxu0 %v86
    %4623 = vmatprep.subr.mxu0 0.0
    %4624 = vmatpush1.msra.mxu0 %v85
    %4625 = vmatprep.subr.mxu0 0.0
    %4626 = vmatpush1.msra.mxu0 %v84
    %4627 = vmatprep.subr.mxu0 0.0
    %4628 = vmatpush1.msra.mxu0 %v83
    %4629 = vmatprep.subr.mxu0 0.0
    %4630 = vmatpush1.msra.mxu0 %v82
    %4631 = vmatprep.subr.mxu0 0.0
    %4632 = vmatpush1.msra.mxu0 %v81
    %4633 = vmatprep.subr.mxu0 0.0
    %4634 = vmatpush1.msra.mxu0 %v80
    %4635 = vmatprep.subr.mxu0 0.0
    %4636 = vmatpush1.msra.mxu0 %v79
    %4637 = vmatprep.subr.mxu0 0.0
    %4638 = vmatpush1.msra.mxu0 %v78
    %4639 = vmatprep.subr.mxu0 0.0
    %4640 = vmatpush1.msra.mxu0 %v77
    %4641 = vmatprep.subr.mxu0 0.0
    %4642 = vmatpush1.msra.mxu0 %v76
    %4643 = vmatprep.subr.mxu0 0.0
    %4644 = vmatpush2.msra.mxu0 0.0
    %4645 = vmatprep.subr.mxu0 0.0
    %4646 = vmatpush2.msra.mxu0 0.0
    %4647 = vmatprep.subr.mxu0 0.0
    %4648 = vmatpush2.msra.mxu0 0.0
    %4649 = vmatprep.subr.mxu0 0.0
    %4650 = vmatpush2.msra.mxu0 0.0
    %4651 = vmatprep.subr.mxu0 0.0
    %4652 = vmatpush2.msra.mxu0 0.0
    %4653 = vmatprep.subr.mxu0 0.0
    %4654 = vmatpush2.msra.mxu0 0.0
    %4655 = vmatprep.subr.mxu0 0.0
    %4656 = vmatpush2.msra.mxu0 0.0
    %4657 = vmatprep.subr.mxu0 0.0
    %4658 = vmatpush2.msra.mxu0 0.0
    %4659 = vmatprep.subr.mxu0 0.0
    %4660 = vmatpush2.msra.mxu0 0.0
    %4661 = vmatprep.subr.mxu0 0.0
    %4662 = vmatpush2.msra.mxu0 0.0
    %4663 = vmatprep.subr.mxu0 0.0
    %4664 = vmatpush2.msra.mxu0 0.0
    %4665 = vmatprep.subr.mxu0 0.0
    %4666 = vmatpush2.msra.mxu0 0.0
    %4667 = vmatprep.subr.mxu0 0.0
    %4668 = vmatpush2.msra.mxu0 0.0
    %4669 = vmatprep.subr.mxu0 0.0
    %4670 = vmatpush2.msra.mxu0 0.0
    %4671 = vmatprep.subr.mxu0 0.0
    %4672 = vmatpush2.msra.mxu0 0.0
    %4673 = vmatprep.subr.mxu0 0.0
    %4674 = vmatpush2.msra.mxu0 0.0
    %4675 = vmatprep.mubr.f32.mxu0 0.0
    %4676 = vmatmul.mubr.f32.gmra.mxu0 %v4610
    %v4677 = vpop.f32.mrf.mxu0
    %v4678 = vadd.f32 %v104, %v4677
    %v4679 = vpop.f32.mrf.mxu0
    %4680 = vdwg.mxu0
    %v4681 = vmul.f32 %v4678, 0.1
    %v4682 = vadd.f32 %v4539, %v4681
    %4683 = vmatprep.subr.mxu0 0.0
    %4684 = vmatpush1.msra.mxu0 %v75
    %4685 = vmatprep.subr.mxu0 0.0
    %4686 = vmatpush1.msra.mxu0 %v74
    %4687 = vmatprep.subr.mxu0 0.0
    %4688 = vmatpush1.msra.mxu0 %v73
    %4689 = vmatprep.subr.mxu0 0.0
    %4690 = vmatpush1.msra.mxu0 %v72
    %4691 = vmatprep.subr.mxu0 0.0
    %4692 = vmatpush1.msra.mxu0 %v71
    %4693 = vmatprep.subr.mxu0 0.0
    %4694 = vmatpush1.msra.mxu0 %v70
    %4695 = vmatprep.subr.mxu0 0.0
    %4696 = vmatpush1.msra.mxu0 %v69
    %4697 = vmatprep.subr.mxu0 0.0
    %4698 = vmatpush1.msra.mxu0 %v68
    %4699 = vmatprep.subr.mxu0 0.0
    %4700 = vmatpush1.msra.mxu0 %v67
    %4701 = vmatprep.subr.mxu0 0.0
    %4702 = vmatpush1.msra.mxu0 %v66
    %4703 = vmatprep.subr.mxu0 0.0
    %4704 = vmatpush1.msra.mxu0 %v65
    %4705 = vmatprep.subr.mxu0 0.0
    %4706 = vmatpush1.msra.mxu0 %v64
    %4707 = vmatprep.subr.mxu0 0.0
    %4708 = vmatpush1.msra.mxu0 %v63
    %4709 = vmatprep.subr.mxu0 0.0
    %4710 = vmatpush1.msra.mxu0 %v62
    %4711 = vmatprep.subr.mxu0 0.0
    %4712 = vmatpush1.msra.mxu0 %v61
    %4713 = vmatprep.subr.mxu0 0.0
    %4714 = vmatpush1.msra.mxu0 %v60
    %4715 = vmatprep.subr.mxu0 0.0
    %4716 = vmatpush2.msra.mxu0 0.0
    %4717 = vmatprep.subr.mxu0 0.0
    %4718 = vmatpush2.msra.mxu0 0.0
    %4719 = vmatprep.subr.mxu0 0.0
    %4720 = vmatpush2.msra.mxu0 0.0
    %4721 = vmatprep.subr.mxu0 0.0
    %4722 = vmatpush2.msra.mxu0 0.0
    %4723 = vmatprep.subr.mxu0 0.0
    %4724 = vmatpush2.msra.mxu0 0.0
    %4725 = vmatprep.subr.mxu0 0.0
    %4726 = vmatpush2.msra.mxu0 0.0
    %4727 = vmatprep.subr.mxu0 0.0
    %4728 = vmatpush2.msra.mxu0 0.0
    %4729 = vmatprep.subr.mxu0 0.0
    %4730 = vmatpush2.msra.mxu0 0.0
    %4731 = vmatprep.subr.mxu0 0.0
    %4732 = vmatpush2.msra.mxu0 0.0
    %4733 = vmatprep.subr.mxu0 0.0
    %4734 = vmatpush2.msra.mxu0 0.0
    %4735 = vmatprep.subr.mxu0 0.0
    %4736 = vmatpush2.msra.mxu0 0.0
    %4737 = vmatprep.subr.mxu0 0.0
    %4738 = vmatpush2.msra.mxu0 0.0
    %4739 = vmatprep.subr.mxu0 0.0
    %4740 = vmatpush2.msra.mxu0 0.0
    %4741 = vmatprep.subr.mxu0 0.0
    %4742 = vmatpush2.msra.mxu0 0.0
    %4743 = vmatprep.subr.mxu0 0.0
    %4744 = vmatpush2.msra.mxu0 0.0
    %4745 = vmatprep.subr.mxu0 0.0
    %4746 = vmatpush2.msra.mxu0 0.0
    %4747 = vmatprep.mubr.f32.mxu0 0.0
    %4748 = vmatmul.mubr.f32.gmra.mxu0 %v4682
    %v4749 = vpop.f32.mrf.mxu0
    %v4750 = vadd.f32 %v97, %v4749
    %v4751 = vpop.f32.mrf.mxu0
    %4752 = vdwg.mxu0
    %v4753 = vtanh.pop %v4750
    %4754 = vmatprep.subr.mxu0 0.0
    %4755 = vmatpush1.msra.mxu0 %v91
    %4756 = vmatprep.subr.mxu0 0.0
    %4757 = vmatpush1.msra.mxu0 %v90
    %4758 = vmatprep.subr.mxu0 0.0
    %4759 = vmatpush1.msra.mxu0 %v89
    %4760 = vmatprep.subr.mxu0 0.0
    %4761 = vmatpush1.msra.mxu0 %v88
    %4762 = vmatprep.subr.mxu0 0.0
    %4763 = vmatpush1.msra.mxu0 %v87
    %4764 = vmatprep.subr.mxu0 0.0
    %4765 = vmatpush1.msra.mxu0 %v86
    %4766 = vmatprep.subr.mxu0 0.0
    %4767 = vmatpush1.msra.mxu0 %v85
    %4768 = vmatprep.subr.mxu0 0.0
    %4769 = vmatpush1.msra.mxu0 %v84
    %4770 = vmatprep.subr.mxu0 0.0
    %4771 = vmatpush1.msra.mxu0 %v83
    %4772 = vmatprep.subr.mxu0 0.0
    %4773 = vmatpush1.msra.mxu0 %v82
    %4774 = vmatprep.subr.mxu0 0.0
    %4775 = vmatpush1.msra.mxu0 %v81
    %4776 = vmatprep.subr.mxu0 0.0
    %4777 = vmatpush1.msra.mxu0 %v80
    %4778 = vmatprep.subr.mxu0 0.0
    %4779 = vmatpush1.msra.mxu0 %v79
    %4780 = vmatprep.subr.mxu0 0.0
    %4781 = vmatpush1.msra.mxu0 %v78
    %4782 = vmatprep.subr.mxu0 0.0
    %4783 = vmatpush1.msra.mxu0 %v77
    %4784 = vmatprep.subr.mxu0 0.0
    %4785 = vmatpush1.msra.mxu0 %v76
    %4786 = vmatprep.subr.mxu0 0.0
    %4787 = vmatpush2.msra.mxu0 0.0
    %4788 = vmatprep.subr.mxu0 0.0
    %4789 = vmatpush2.msra.mxu0 0.0
    %4790 = vmatprep.subr.mxu0 0.0
    %4791 = vmatpush2.msra.mxu0 0.0
    %4792 = vmatprep.subr.mxu0 0.0
    %4793 = vmatpush2.msra.mxu0 0.0
    %4794 = vmatprep.subr.mxu0 0.0
    %4795 = vmatpush2.msra.mxu0 0.0
    %4796 = vmatprep.subr.mxu0 0.0
    %4797 = vmatpush2.msra.mxu0 0.0
    %4798 = vmatprep.subr.mxu0 0.0
    %4799 = vmatpush2.msra.mxu0 0.0
    %4800 = vmatprep.subr.mxu0 0.0
    %4801 = vmatpush2.msra.mxu0 0.0
    %4802 = vmatprep.subr.mxu0 0.0
    %4803 = vmatpush2.msra.mxu0 0.0
    %4804 = vmatprep.subr.mxu0 0.0
    %4805 = vmatpush2.msra.mxu0 0.0
    %4806 = vmatprep.subr.mxu0 0.0
    %4807 = vmatpush2.msra.mxu0 0.0
    %4808 = vmatprep.subr.mxu0 0.0
    %4809 = vmatpush2.msra.mxu0 0.0
    %4810 = vmatprep.subr.mxu0 0.0
    %4811 = vmatpush2.msra.mxu0 0.0
    %4812 = vmatprep.subr.mxu0 0.0
    %4813 = vmatpush2.msra.mxu0 0.0
    %4814 = vmatprep.subr.mxu0 0.0
    %4815 = vmatpush2.msra.mxu0 0.0
    %4816 = vmatprep.subr.mxu0 0.0
    %4817 = vmatpush2.msra.mxu0 0.0
    %4818 = vmatprep.mubr.f32.mxu0 0.0
    %4819 = vmatmul.mubr.f32.gmra.mxu0 %v4753
    %v4820 = vpop.f32.mrf.mxu0
    %v4821 = vadd.f32 %v104, %v4820
    %v4822 = vpop.f32.mrf.mxu0
    %4823 = vdwg.mxu0
    %v4824 = vmul.f32 %v4821, 0.1
    %v4825 = vadd.f32 %v4682, %v4824
    %4826 = vmatprep.subr.mxu0 0.0
    %4827 = vmatpush1.msra.mxu0 %v75
    %4828 = vmatprep.subr.mxu0 0.0
    %4829 = vmatpush1.msra.mxu0 %v74
    %4830 = vmatprep.subr.mxu0 0.0
    %4831 = vmatpush1.msra.mxu0 %v73
    %4832 = vmatprep.subr.mxu0 0.0
    %4833 = vmatpush1.msra.mxu0 %v72
    %4834 = vmatprep.subr.mxu0 0.0
    %4835 = vmatpush1.msra.mxu0 %v71
    %4836 = vmatprep.subr.mxu0 0.0
    %4837 = vmatpush1.msra.mxu0 %v70
    %4838 = vmatprep.subr.mxu0 0.0
    %4839 = vmatpush1.msra.mxu0 %v69
    %4840 = vmatprep.subr.mxu0 0.0
    %4841 = vmatpush1.msra.mxu0 %v68
    %4842 = vmatprep.subr.mxu0 0.0
    %4843 = vmatpush1.msra.mxu0 %v67
    %4844 = vmatprep.subr.mxu0 0.0
    %4845 = vmatpush1.msra.mxu0 %v66
    %4846 = vmatprep.subr.mxu0 0.0
    %4847 = vmatpush1.msra.mxu0 %v65
    %4848 = vmatprep.subr.mxu0 0.0
    %4849 = vmatpush1.msra.mxu0 %v64
    %4850 = vmatprep.subr.mxu0 0.0
    %4851 = vmatpush1.msra.mxu0 %v63
    %4852 = vmatprep.subr.mxu0 0.0
    %4853 = vmatpush1.msra.mxu0 %v62
    %4854 = vmatprep.subr.mxu0 0.0
    %4855 = vmatpush1.msra.mxu0 %v61
    %4856 = vmatprep.subr.mxu0 0.0
    %4857 = vmatpush1.msra.mxu0 %v60
    %4858 = vmatprep.subr.mxu0 0.0
    %4859 = vmatpush2.msra.mxu0 0.0
    %4860 = vmatprep.subr.mxu0 0.0
    %4861 = vmatpush2.msra.mxu0 0.0
    %4862 = vmatprep.subr.mxu0 0.0
    %4863 = vmatpush2.msra.mxu0 0.0
    %4864 = vmatprep.subr.mxu0 0.0
    %4865 = vmatpush2.msra.mxu0 0.0
    %4866 = vmatprep.subr.mxu0 0.0
    %4867 = vmatpush2.msra.mxu0 0.0
    %4868 = vmatprep.subr.mxu0 0.0
    %4869 = vmatpush2.msra.mxu0 0.0
    %4870 = vmatprep.subr.mxu0 0.0
    %4871 = vmatpush2.msra.mxu0 0.0
    %4872 = vmatprep.subr.mxu0 0.0
    %4873 = vmatpush2.msra.mxu0 0.0
    %4874 = vmatprep.subr.mxu0 0.0
    %4875 = vmatpush2.msra.mxu0 0.0
    %4876 = vmatprep.subr.mxu0 0.0
    %4877 = vmatpush2.msra.mxu0 0.0
    %4878 = vmatprep.subr.mxu0 0.0
    %4879 = vmatpush2.msra.mxu0 0.0
    %4880 = vmatprep.subr.mxu0 0.0
    %4881 = vmatpush2.msra.mxu0 0.0
    %4882 = vmatprep.subr.mxu0 0.0
    %4883 = vmatpush2.msra.mxu0 0.0
    %4884 = vmatprep.subr.mxu0 0.0
    %4885 = vmatpush2.msra.mxu0 0.0
    %4886 = vmatprep.subr.mxu0 0.0
    %4887 = vmatpush2.msra.mxu0 0.0
    %4888 = vmatprep.subr.mxu0 0.0
    %4889 = vmatpush2.msra.mxu0 0.0
    %4890 = vmatprep.mubr.f32.mxu0 0.0
    %4891 = vmatmul.mubr.f32.gmra.mxu0 %v4825
    %v4892 = vpop.f32.mrf.mxu0
    %v4893 = vadd.f32 %v97, %v4892
    %v4894 = vpop.f32.mrf.mxu0
    %4895 = vdwg.mxu0
    %v4896 = vtanh.pop %v4893
    %4897 = vmatprep.subr.mxu0 0.0
    %4898 = vmatpush1.msra.mxu0 %v91
    %4899 = vmatprep.subr.mxu0 0.0
    %4900 = vmatpush1.msra.mxu0 %v90
    %4901 = vmatprep.subr.mxu0 0.0
    %4902 = vmatpush1.msra.mxu0 %v89
    %4903 = vmatprep.subr.mxu0 0.0
    %4904 = vmatpush1.msra.mxu0 %v88
    %4905 = vmatprep.subr.mxu0 0.0
    %4906 = vmatpush1.msra.mxu0 %v87
    %4907 = vmatprep.subr.mxu0 0.0
    %4908 = vmatpush1.msra.mxu0 %v86
    %4909 = vmatprep.subr.mxu0 0.0
    %4910 = vmatpush1.msra.mxu0 %v85
    %4911 = vmatprep.subr.mxu0 0.0
    %4912 = vmatpush1.msra.mxu0 %v84
    %4913 = vmatprep.subr.mxu0 0.0
    %4914 = vmatpush1.msra.mxu0 %v83
    %4915 = vmatprep.subr.mxu0 0.0
    %4916 = vmatpush1.msra.mxu0 %v82
    %4917 = vmatprep.subr.mxu0 0.0
    %4918 = vmatpush1.msra.mxu0 %v81
    %4919 = vmatprep.subr.mxu0 0.0
    %4920 = vmatpush1.msra.mxu0 %v80
    %4921 = vmatprep.subr.mxu0 0.0
    %4922 = vmatpush1.msra.mxu0 %v79
    %4923 = vmatprep.subr.mxu0 0.0
    %4924 = vmatpush1.msra.mxu0 %v78
    %4925 = vmatprep.subr.mxu0 0.0
    %4926 = vmatpush1.msra.mxu0 %v77
    %4927 = vmatprep.subr.mxu0 0.0
    %4928 = vmatpush1.msra.mxu0 %v76
    %4929 = vmatprep.subr.mxu0 0.0
    %4930 = vmatpush2.msra.mxu0 0.0
    %4931 = vmatprep.subr.mxu0 0.0
    %4932 = vmatpush2.msra.mxu0 0.0
    %4933 = vmatprep.subr.mxu0 0.0
    %4934 = vmatpush2.msra.mxu0 0.0
    %4935 = vmatprep.subr.mxu0 0.0
    %4936 = vmatpush2.msra.mxu0 0.0
    %4937 = vmatprep.subr.mxu0 0.0
    %4938 = vmatpush2.msra.mxu0 0.0
    %4939 = vmatprep.subr.mxu0 0.0
    %4940 = vmatpush2.msra.mxu0 0.0
    %4941 = vmatprep.subr.mxu0 0.0
    %4942 = vmatpush2.msra.mxu0 0.0
    %4943 = vmatprep.subr.mxu0 0.0
    %4944 = vmatpush2.msra.mxu0 0.0
    %4945 = vmatprep.subr.mxu0 0.0
    %4946 = vmatpush2.msra.mxu0 0.0
    %4947 = vmatprep.subr.mxu0 0.0
    %4948 = vmatpush2.msra.mxu0 0.0
    %4949 = vmatprep.subr.mxu0 0.0
    %4950 = vmatpush2.msra.mxu0 0.0
    %4951 = vmatprep.subr.mxu0 0.0
    %4952 = vmatpush2.msra.mxu0 0.0
    %4953 = vmatprep.subr.mxu0 0.0
    %4954 = vmatpush2.msra.mxu0 0.0
    %4955 = vmatprep.subr.mxu0 0.0
    %4956 = vmatpush2.msra.mxu0 0.0
    %4957 = vmatprep.subr.mxu0 0.0
    %4958 = vmatpush2.msra.mxu0 0.0
    %4959 = vmatprep.subr.mxu0 0.0
    %4960 = vmatpush2.msra.mxu0 0.0
    %4961 = vmatprep.mubr.f32.mxu0 0.0
    %4962 = vmatmul.mubr.f32.gmra.mxu0 %v4896
    %v4963 = vpop.f32.mrf.mxu0
    %v4964 = vadd.f32 %v104, %v4963
    %v4965 = vpop.f32.mrf.mxu0
    %4966 = vdwg.mxu0
    %v4967 = vmul.f32 %v4964, 0.1
    %v4968 = vadd.f32 %v4825, %v4967
    %4969 = vmatprep.subr.mxu0 0.0
    %4970 = vmatpush1.msra.mxu0 %v75
    %4971 = vmatprep.subr.mxu0 0.0
    %4972 = vmatpush1.msra.mxu0 %v74
    %4973 = vmatprep.subr.mxu0 0.0
    %4974 = vmatpush1.msra.mxu0 %v73
    %4975 = vmatprep.subr.mxu0 0.0
    %4976 = vmatpush1.msra.mxu0 %v72
    %4977 = vmatprep.subr.mxu0 0.0
    %4978 = vmatpush1.msra.mxu0 %v71
    %4979 = vmatprep.subr.mxu0 0.0
    %4980 = vmatpush1.msra.mxu0 %v70
    %4981 = vmatprep.subr.mxu0 0.0
    %4982 = vmatpush1.msra.mxu0 %v69
    %4983 = vmatprep.subr.mxu0 0.0
    %4984 = vmatpush1.msra.mxu0 %v68
    %4985 = vmatprep.subr.mxu0 0.0
    %4986 = vmatpush1.msra.mxu0 %v67
    %4987 = vmatprep.subr.mxu0 0.0
    %4988 = vmatpush1.msra.mxu0 %v66
    %4989 = vmatprep.subr.mxu0 0.0
    %4990 = vmatpush1.msra.mxu0 %v65
    %4991 = vmatprep.subr.mxu0 0.0
    %4992 = vmatpush1.msra.mxu0 %v64
    %4993 = vmatprep.subr.mxu0 0.0
    %4994 = vmatpush1.msra.mxu0 %v63
    %4995 = vmatprep.subr.mxu0 0.0
    %4996 = vmatpush1.msra.mxu0 %v62
    %4997 = vmatprep.subr.mxu0 0.0
    %4998 = vmatpush1.msra.mxu0 %v61
    %4999 = vmatprep.subr.mxu0 0.0
    %5000 = vmatpush1.msra.mxu0 %v60
    %5001 = vmatprep.subr.mxu0 0.0
    %5002 = vmatpush2.msra.mxu0 0.0
    %5003 = vmatprep.subr.mxu0 0.0
    %5004 = vmatpush2.msra.mxu0 0.0
    %5005 = vmatprep.subr.mxu0 0.0
    %5006 = vmatpush2.msra.mxu0 0.0
    %5007 = vmatprep.subr.mxu0 0.0
    %5008 = vmatpush2.msra.mxu0 0.0
    %5009 = vmatprep.subr.mxu0 0.0
    %5010 = vmatpush2.msra.mxu0 0.0
    %5011 = vmatprep.subr.mxu0 0.0
    %5012 = vmatpush2.msra.mxu0 0.0
    %5013 = vmatprep.subr.mxu0 0.0
    %5014 = vmatpush2.msra.mxu0 0.0
    %5015 = vmatprep.subr.mxu0 0.0
    %5016 = vmatpush2.msra.mxu0 0.0
    %5017 = vmatprep.subr.mxu0 0.0
    %5018 = vmatpush2.msra.mxu0 0.0
    %5019 = vmatprep.subr.mxu0 0.0
    %5020 = vmatpush2.msra.mxu0 0.0
    %5021 = vmatprep.subr.mxu0 0.0
    %5022 = vmatpush2.msra.mxu0 0.0
    %5023 = vmatprep.subr.mxu0 0.0
    %5024 = vmatpush2.msra.mxu0 0.0
    %5025 = vmatprep.subr.mxu0 0.0
    %5026 = vmatpush2.msra.mxu0 0.0
    %5027 = vmatprep.subr.mxu0 0.0
    %5028 = vmatpush2.msra.mxu0 0.0
    %5029 = vmatprep.subr.mxu0 0.0
    %5030 = vmatpush2.msra.mxu0 0.0
    %5031 = vmatprep.subr.mxu0 0.0
    %5032 = vmatpush2.msra.mxu0 0.0
    %5033 = vmatprep.mubr.f32.mxu0 0.0
    %5034 = vmatmul.mubr.f32.gmra.mxu0 %v4968
    %v5035 = vpop.f32.mrf.mxu0
    %v5036 = vadd.f32 %v97, %v5035
    %v5037 = vpop.f32.mrf.mxu0
    %5038 = vdwg.mxu0
    %v5039 = vtanh.pop %v5036
    %5040 = vmatprep.subr.mxu0 0.0
    %5041 = vmatpush1.msra.mxu0 %v91
    %5042 = vmatprep.subr.mxu0 0.0
    %5043 = vmatpush1.msra.mxu0 %v90
    %5044 = vmatprep.subr.mxu0 0.0
    %5045 = vmatpush1.msra.mxu0 %v89
    %5046 = vmatprep.subr.mxu0 0.0
    %5047 = vmatpush1.msra.mxu0 %v88
    %5048 = vmatprep.subr.mxu0 0.0
    %5049 = vmatpush1.msra.mxu0 %v87
    %5050 = vmatprep.subr.mxu0 0.0
    %5051 = vmatpush1.msra.mxu0 %v86
    %5052 = vmatprep.subr.mxu0 0.0
    %5053 = vmatpush1.msra.mxu0 %v85
    %5054 = vmatprep.subr.mxu0 0.0
    %5055 = vmatpush1.msra.mxu0 %v84
    %5056 = vmatprep.subr.mxu0 0.0
    %5057 = vmatpush1.msra.mxu0 %v83
    %5058 = vmatprep.subr.mxu0 0.0
    %5059 = vmatpush1.msra.mxu0 %v82
    %5060 = vmatprep.subr.mxu0 0.0
    %5061 = vmatpush1.msra.mxu0 %v81
    %5062 = vmatprep.subr.mxu0 0.0
    %5063 = vmatpush1.msra.mxu0 %v80
    %5064 = vmatprep.subr.mxu0 0.0
    %5065 = vmatpush1.msra.mxu0 %v79
    %5066 = vmatprep.subr.mxu0 0.0
    %5067 = vmatpush1.msra.mxu0 %v78
    %5068 = vmatprep.subr.mxu0 0.0
    %5069 = vmatpush1.msra.mxu0 %v77
    %5070 = vmatprep.subr.mxu0 0.0
    %5071 = vmatpush1.msra.mxu0 %v76
    %5072 = vmatprep.subr.mxu0 0.0
    %5073 = vmatpush2.msra.mxu0 0.0
    %5074 = vmatprep.subr.mxu0 0.0
    %5075 = vmatpush2.msra.mxu0 0.0
    %5076 = vmatprep.subr.mxu0 0.0
    %5077 = vmatpush2.msra.mxu0 0.0
    %5078 = vmatprep.subr.mxu0 0.0
    %5079 = vmatpush2.msra.mxu0 0.0
    %5080 = vmatprep.subr.mxu0 0.0
    %5081 = vmatpush2.msra.mxu0 0.0
    %5082 = vmatprep.subr.mxu0 0.0
    %5083 = vmatpush2.msra.mxu0 0.0
    %5084 = vmatprep.subr.mxu0 0.0
    %5085 = vmatpush2.msra.mxu0 0.0
    %5086 = vmatprep.subr.mxu0 0.0
    %5087 = vmatpush2.msra.mxu0 0.0
    %5088 = vmatprep.subr.mxu0 0.0
    %5089 = vmatpush2.msra.mxu0 0.0
    %5090 = vmatprep.subr.mxu0 0.0
    %5091 = vmatpush2.msra.mxu0 0.0
    %5092 = vmatprep.subr.mxu0 0.0
    %5093 = vmatpush2.msra.mxu0 0.0
    %5094 = vmatprep.subr.mxu0 0.0
    %5095 = vmatpush2.msra.mxu0 0.0
    %5096 = vmatprep.subr.mxu0 0.0
    %5097 = vmatpush2.msra.mxu0 0.0
    %5098 = vmatprep.subr.mxu0 0.0
    %5099 = vmatpush2.msra.mxu0 0.0
    %5100 = vmatprep.subr.mxu0 0.0
    %5101 = vmatpush2.msra.mxu0 0.0
    %5102 = vmatprep.subr.mxu0 0.0
    %5103 = vmatpush2.msra.mxu0 0.0
    %5104 = vmatprep.mubr.f32.mxu0 0.0
    %5105 = vmatmul.mubr.f32.gmra.mxu0 %v5039
    %v5106 = vpop.f32.mrf.mxu0
    %v5107 = vadd.f32 %v104, %v5106
    %v5108 = vpop.f32.mrf.mxu0
    %5109 = vdwg.mxu0
    %v5110 = vmul.f32 %v5107, 0.1
    %v5111 = vadd.f32 %v4968, %v5110
    %5112 = vmatprep.subr.mxu0 0.0
    %5113 = vmatpush1.msra.mxu0 %v75
    %5114 = vmatprep.subr.mxu0 0.0
    %5115 = vmatpush1.msra.mxu0 %v74
    %5116 = vmatprep.subr.mxu0 0.0
    %5117 = vmatpush1.msra.mxu0 %v73
    %5118 = vmatprep.subr.mxu0 0.0
    %5119 = vmatpush1.msra.mxu0 %v72
    %5120 = vmatprep.subr.mxu0 0.0
    %5121 = vmatpush1.msra.mxu0 %v71
    %5122 = vmatprep.subr.mxu0 0.0
    %5123 = vmatpush1.msra.mxu0 %v70
    %5124 = vmatprep.subr.mxu0 0.0
    %5125 = vmatpush1.msra.mxu0 %v69
    %5126 = vmatprep.subr.mxu0 0.0
    %5127 = vmatpush1.msra.mxu0 %v68
    %5128 = vmatprep.subr.mxu0 0.0
    %5129 = vmatpush1.msra.mxu0 %v67
    %5130 = vmatprep.subr.mxu0 0.0
    %5131 = vmatpush1.msra.mxu0 %v66
    %5132 = vmatprep.subr.mxu0 0.0
    %5133 = vmatpush1.msra.mxu0 %v65
    %5134 = vmatprep.subr.mxu0 0.0
    %5135 = vmatpush1.msra.mxu0 %v64
    %5136 = vmatprep.subr.mxu0 0.0
    %5137 = vmatpush1.msra.mxu0 %v63
    %5138 = vmatprep.subr.mxu0 0.0
    %5139 = vmatpush1.msra.mxu0 %v62
    %5140 = vmatprep.subr.mxu0 0.0
    %5141 = vmatpush1.msra.mxu0 %v61
    %5142 = vmatprep.subr.mxu0 0.0
    %5143 = vmatpush1.msra.mxu0 %v60
    %5144 = vmatprep.subr.mxu0 0.0
    %5145 = vmatpush2.msra.mxu0 0.0
    %5146 = vmatprep.subr.mxu0 0.0
    %5147 = vmatpush2.msra.mxu0 0.0
    %5148 = vmatprep.subr.mxu0 0.0
    %5149 = vmatpush2.msra.mxu0 0.0
    %5150 = vmatprep.subr.mxu0 0.0
    %5151 = vmatpush2.msra.mxu0 0.0
    %5152 = vmatprep.subr.mxu0 0.0
    %5153 = vmatpush2.msra.mxu0 0.0
    %5154 = vmatprep.subr.mxu0 0.0
    %5155 = vmatpush2.msra.mxu0 0.0
    %5156 = vmatprep.subr.mxu0 0.0
    %5157 = vmatpush2.msra.mxu0 0.0
    %5158 = vmatprep.subr.mxu0 0.0
    %5159 = vmatpush2.msra.mxu0 0.0
    %5160 = vmatprep.subr.mxu0 0.0
    %5161 = vmatpush2.msra.mxu0 0.0
    %5162 = vmatprep.subr.mxu0 0.0
    %5163 = vmatpush2.msra.mxu0 0.0
    %5164 = vmatprep.subr.mxu0 0.0
    %5165 = vmatpush2.msra.mxu0 0.0
    %5166 = vmatprep.subr.mxu0 0.0
    %5167 = vmatpush2.msra.mxu0 0.0
    %5168 = vmatprep.subr.mxu0 0.0
    %5169 = vmatpush2.msra.mxu0 0.0
    %5170 = vmatprep.subr.mxu0 0.0
    %5171 = vmatpush2.msra.mxu0 0.0
    %5172 = vmatprep.subr.mxu0 0.0
    %5173 = vmatpush2.msra.mxu0 0.0
    %5174 = vmatprep.subr.mxu0 0.0
    %5175 = vmatpush2.msra.mxu0 0.0
    %5176 = vmatprep.mubr.f32.mxu0 0.0
    %5177 = vmatmul.mubr.f32.gmra.mxu0 %v5111
    %v5178 = vpop.f32.mrf.mxu0
    %v5179 = vadd.f32 %v97, %v5178
    %v5180 = vpop.f32.mrf.mxu0
    %5181 = vdwg.mxu0
    %v5182 = vtanh.pop %v5179
    %5183 = vmatprep.subr.mxu0 0.0
    %5184 = vmatpush1.msra.mxu0 %v91
    %5185 = vmatprep.subr.mxu0 0.0
    %5186 = vmatpush1.msra.mxu0 %v90
    %5187 = vmatprep.subr.mxu0 0.0
    %5188 = vmatpush1.msra.mxu0 %v89
    %5189 = vmatprep.subr.mxu0 0.0
    %5190 = vmatpush1.msra.mxu0 %v88
    %5191 = vmatprep.subr.mxu0 0.0
    %5192 = vmatpush1.msra.mxu0 %v87
    %5193 = vmatprep.subr.mxu0 0.0
    %5194 = vmatpush1.msra.mxu0 %v86
    %5195 = vmatprep.subr.mxu0 0.0
    %5196 = vmatpush1.msra.mxu0 %v85
    %5197 = vmatprep.subr.mxu0 0.0
    %5198 = vmatpush1.msra.mxu0 %v84
    %5199 = vmatprep.subr.mxu0 0.0
    %5200 = vmatpush1.msra.mxu0 %v83
    %5201 = vmatprep.subr.mxu0 0.0
    %5202 = vmatpush1.msra.mxu0 %v82
    %5203 = vmatprep.subr.mxu0 0.0
    %5204 = vmatpush1.msra.mxu0 %v81
    %5205 = vmatprep.subr.mxu0 0.0
    %5206 = vmatpush1.msra.mxu0 %v80
    %5207 = vmatprep.subr.mxu0 0.0
    %5208 = vmatpush1.msra.mxu0 %v79
    %5209 = vmatprep.subr.mxu0 0.0
    %5210 = vmatpush1.msra.mxu0 %v78
    %5211 = vmatprep.subr.mxu0 0.0
    %5212 = vmatpush1.msra.mxu0 %v77
    %5213 = vmatprep.subr.mxu0 0.0
    %5214 = vmatpush1.msra.mxu0 %v76
    %5215 = vmatprep.subr.mxu0 0.0
    %5216 = vmatpush2.msra.mxu0 0.0
    %5217 = vmatprep.subr.mxu0 0.0
    %5218 = vmatpush2.msra.mxu0 0.0
    %5219 = vmatprep.subr.mxu0 0.0
    %5220 = vmatpush2.msra.mxu0 0.0
    %5221 = vmatprep.subr.mxu0 0.0
    %5222 = vmatpush2.msra.mxu0 0.0
    %5223 = vmatprep.subr.mxu0 0.0
    %5224 = vmatpush2.msra.mxu0 0.0
    %5225 = vmatprep.subr.mxu0 0.0
    %5226 = vmatpush2.msra.mxu0 0.0
    %5227 = vmatprep.subr.mxu0 0.0
    %5228 = vmatpush2.msra.mxu0 0.0
    %5229 = vmatprep.subr.mxu0 0.0
    %5230 = vmatpush2.msra.mxu0 0.0
    %5231 = vmatprep.subr.mxu0 0.0
    %5232 = vmatpush2.msra.mxu0 0.0
    %5233 = vmatprep.subr.mxu0 0.0
    %5234 = vmatpush2.msra.mxu0 0.0
    %5235 = vmatprep.subr.mxu0 0.0
    %5236 = vmatpush2.msra.mxu0 0.0
    %5237 = vmatprep.subr.mxu0 0.0
    %5238 = vmatpush2.msra.mxu0 0.0
    %5239 = vmatprep.subr.mxu0 0.0
    %5240 = vmatpush2.msra.mxu0 0.0
    %5241 = vmatprep.subr.mxu0 0.0
    %5242 = vmatpush2.msra.mxu0 0.0
    %5243 = vmatprep.subr.mxu0 0.0
    %5244 = vmatpush2.msra.mxu0 0.0
    %5245 = vmatprep.subr.mxu0 0.0
    %5246 = vmatpush2.msra.mxu0 0.0
    %5247 = vmatprep.mubr.f32.mxu0 0.0
    %5248 = vmatmul.mubr.f32.gmra.mxu0 %v5182
    %v5249 = vpop.f32.mrf.mxu0
    %v5250 = vadd.f32 %v104, %v5249
    %v5251 = vpop.f32.mrf.mxu0
    %5252 = vdwg.mxu0
    %v5253 = vmul.f32 %v5250, 0.1
    %v5254 = vadd.f32 %v5111, %v5253
    %5255 = vmatprep.subr.mxu0 0.0
    %5256 = vmatpush1.msra.mxu0 %v75
    %5257 = vmatprep.subr.mxu0 0.0
    %5258 = vmatpush1.msra.mxu0 %v74
    %5259 = vmatprep.subr.mxu0 0.0
    %5260 = vmatpush1.msra.mxu0 %v73
    %5261 = vmatprep.subr.mxu0 0.0
    %5262 = vmatpush1.msra.mxu0 %v72
    %5263 = vmatprep.subr.mxu0 0.0
    %5264 = vmatpush1.msra.mxu0 %v71
    %5265 = vmatprep.subr.mxu0 0.0
    %5266 = vmatpush1.msra.mxu0 %v70
    %5267 = vmatprep.subr.mxu0 0.0
    %5268 = vmatpush1.msra.mxu0 %v69
    %5269 = vmatprep.subr.mxu0 0.0
    %5270 = vmatpush1.msra.mxu0 %v68
    %5271 = vmatprep.subr.mxu0 0.0
    %5272 = vmatpush1.msra.mxu0 %v67
    %5273 = vmatprep.subr.mxu0 0.0
    %5274 = vmatpush1.msra.mxu0 %v66
    %5275 = vmatprep.subr.mxu0 0.0
    %5276 = vmatpush1.msra.mxu0 %v65
    %5277 = vmatprep.subr.mxu0 0.0
    %5278 = vmatpush1.msra.mxu0 %v64
    %5279 = vmatprep.subr.mxu0 0.0
    %5280 = vmatpush1.msra.mxu0 %v63
    %5281 = vmatprep.subr.mxu0 0.0
    %5282 = vmatpush1.msra.mxu0 %v62
    %5283 = vmatprep.subr.mxu0 0.0
    %5284 = vmatpush1.msra.mxu0 %v61
    %5285 = vmatprep.subr.mxu0 0.0
    %5286 = vmatpush1.msra.mxu0 %v60
    %5287 = vmatprep.subr.mxu0 0.0
    %5288 = vmatpush2.msra.mxu0 0.0
    %5289 = vmatprep.subr.mxu0 0.0
    %5290 = vmatpush2.msra.mxu0 0.0
    %5291 = vmatprep.subr.mxu0 0.0
    %5292 = vmatpush2.msra.mxu0 0.0
    %5293 = vmatprep.subr.mxu0 0.0
    %5294 = vmatpush2.msra.mxu0 0.0
    %5295 = vmatprep.subr.mxu0 0.0
    %5296 = vmatpush2.msra.mxu0 0.0
    %5297 = vmatprep.subr.mxu0 0.0
    %5298 = vmatpush2.msra.mxu0 0.0
    %5299 = vmatprep.subr.mxu0 0.0
    %5300 = vmatpush2.msra.mxu0 0.0
    %5301 = vmatprep.subr.mxu0 0.0
    %5302 = vmatpush2.msra.mxu0 0.0
    %5303 = vmatprep.subr.mxu0 0.0
    %5304 = vmatpush2.msra.mxu0 0.0
    %5305 = vmatprep.subr.mxu0 0.0
    %5306 = vmatpush2.msra.mxu0 0.0
    %5307 = vmatprep.subr.mxu0 0.0
    %5308 = vmatpush2.msra.mxu0 0.0
    %5309 = vmatprep.subr.mxu0 0.0
    %5310 = vmatpush2.msra.mxu0 0.0
    %5311 = vmatprep.subr.mxu0 0.0
    %5312 = vmatpush2.msra.mxu0 0.0
    %5313 = vmatprep.subr.mxu0 0.0
    %5314 = vmatpush2.msra.mxu0 0.0
    %5315 = vmatprep.subr.mxu0 0.0
    %5316 = vmatpush2.msra.mxu0 0.0
    %5317 = vmatprep.subr.mxu0 0.0
    %5318 = vmatpush2.msra.mxu0 0.0
    %5319 = vmatprep.mubr.f32.mxu0 0.0
    %5320 = vmatmul.mubr.f32.gmra.mxu0 %v5254
    %v5321 = vpop.f32.mrf.mxu0
    %v5322 = vadd.f32 %v97, %v5321
    %v5323 = vpop.f32.mrf.mxu0
    %5324 = vdwg.mxu0
    %v5325 = vtanh.pop %v5322
    %5326 = vmatprep.subr.mxu0 0.0
    %5327 = vmatpush1.msra.mxu0 %v91
    %5328 = vmatprep.subr.mxu0 0.0
    %5329 = vmatpush1.msra.mxu0 %v90
    %5330 = vmatprep.subr.mxu0 0.0
    %5331 = vmatpush1.msra.mxu0 %v89
    %5332 = vmatprep.subr.mxu0 0.0
    %5333 = vmatpush1.msra.mxu0 %v88
    %5334 = vmatprep.subr.mxu0 0.0
    %5335 = vmatpush1.msra.mxu0 %v87
    %5336 = vmatprep.subr.mxu0 0.0
    %5337 = vmatpush1.msra.mxu0 %v86
    %5338 = vmatprep.subr.mxu0 0.0
    %5339 = vmatpush1.msra.mxu0 %v85
    %5340 = vmatprep.subr.mxu0 0.0
    %5341 = vmatpush1.msra.mxu0 %v84
    %5342 = vmatprep.subr.mxu0 0.0
    %5343 = vmatpush1.msra.mxu0 %v83
    %5344 = vmatprep.subr.mxu0 0.0
    %5345 = vmatpush1.msra.mxu0 %v82
    %5346 = vmatprep.subr.mxu0 0.0
    %5347 = vmatpush1.msra.mxu0 %v81
    %5348 = vmatprep.subr.mxu0 0.0
    %5349 = vmatpush1.msra.mxu0 %v80
    %5350 = vmatprep.subr.mxu0 0.0
    %5351 = vmatpush1.msra.mxu0 %v79
    %5352 = vmatprep.subr.mxu0 0.0
    %5353 = vmatpush1.msra.mxu0 %v78
    %5354 = vmatprep.subr.mxu0 0.0
    %5355 = vmatpush1.msra.mxu0 %v77
    %5356 = vmatprep.subr.mxu0 0.0
    %5357 = vmatpush1.msra.mxu0 %v76
    %5358 = vmatprep.subr.mxu0 0.0
    %5359 = vmatpush2.msra.mxu0 0.0
    %5360 = vmatprep.subr.mxu0 0.0
    %5361 = vmatpush2.msra.mxu0 0.0
    %5362 = vmatprep.subr.mxu0 0.0
    %5363 = vmatpush2.msra.mxu0 0.0
    %5364 = vmatprep.subr.mxu0 0.0
    %5365 = vmatpush2.msra.mxu0 0.0
    %5366 = vmatprep.subr.mxu0 0.0
    %5367 = vmatpush2.msra.mxu0 0.0
    %5368 = vmatprep.subr.mxu0 0.0
    %5369 = vmatpush2.msra.mxu0 0.0
    %5370 = vmatprep.subr.mxu0 0.0
    %5371 = vmatpush2.msra.mxu0 0.0
    %5372 = vmatprep.subr.mxu0 0.0
    %5373 = vmatpush2.msra.mxu0 0.0
    %5374 = vmatprep.subr.mxu0 0.0
    %5375 = vmatpush2.msra.mxu0 0.0
    %5376 = vmatprep.subr.mxu0 0.0
    %5377 = vmatpush2.msra.mxu0 0.0
    %5378 = vmatprep.subr.mxu0 0.0
    %5379 = vmatpush2.msra.mxu0 0.0
    %5380 = vmatprep.subr.mxu0 0.0
    %5381 = vmatpush2.msra.mxu0 0.0
    %5382 = vmatprep.subr.mxu0 0.0
    %5383 = vmatpush2.msra.mxu0 0.0
    %5384 = vmatprep.subr.mxu0 0.0
    %5385 = vmatpush2.msra.mxu0 0.0
    %5386 = vmatprep.subr.mxu0 0.0
    %5387 = vmatpush2.msra.mxu0 0.0
    %5388 = vmatprep.subr.mxu0 0.0
    %5389 = vmatpush2.msra.mxu0 0.0
    %5390 = vmatprep.mubr.f32.mxu0 0.0
    %5391 = vmatmul.mubr.f32.gmra.mxu0 %v5325
    %v5392 = vpop.f32.mrf.mxu0
    %v5393 = vadd.f32 %v104, %v5392
    %v5394 = vpop.f32.mrf.mxu0
    %5395 = vdwg.mxu0
    %v5396 = vmul.f32 %v5393, 0.1
    %v5397 = vadd.f32 %v5254, %v5396
    %5398 = vmatprep.subr.mxu0 0.0
    %5399 = vmatpush1.msra.mxu0 %v75
    %5400 = vmatprep.subr.mxu0 0.0
    %5401 = vmatpush1.msra.mxu0 %v74
    %5402 = vmatprep.subr.mxu0 0.0
    %5403 = vmatpush1.msra.mxu0 %v73
    %5404 = vmatprep.subr.mxu0 0.0
    %5405 = vmatpush1.msra.mxu0 %v72
    %5406 = vmatprep.subr.mxu0 0.0
    %5407 = vmatpush1.msra.mxu0 %v71
    %5408 = vmatprep.subr.mxu0 0.0
    %5409 = vmatpush1.msra.mxu0 %v70
    %5410 = vmatprep.subr.mxu0 0.0
    %5411 = vmatpush1.msra.mxu0 %v69
    %5412 = vmatprep.subr.mxu0 0.0
    %5413 = vmatpush1.msra.mxu0 %v68
    %5414 = vmatprep.subr.mxu0 0.0
    %5415 = vmatpush1.msra.mxu0 %v67
    %5416 = vmatprep.subr.mxu0 0.0
    %5417 = vmatpush1.msra.mxu0 %v66
    %5418 = vmatprep.subr.mxu0 0.0
    %5419 = vmatpush1.msra.mxu0 %v65
    %5420 = vmatprep.subr.mxu0 0.0
    %5421 = vmatpush1.msra.mxu0 %v64
    %5422 = vmatprep.subr.mxu0 0.0
    %5423 = vmatpush1.msra.mxu0 %v63
    %5424 = vmatprep.subr.mxu0 0.0
    %5425 = vmatpush1.msra.mxu0 %v62
    %5426 = vmatprep.subr.mxu0 0.0
    %5427 = vmatpush1.msra.mxu0 %v61
    %5428 = vmatprep.subr.mxu0 0.0
    %5429 = vmatpush1.msra.mxu0 %v60
    %5430 = vmatprep.subr.mxu0 0.0
    %5431 = vmatpush2.msra.mxu0 0.0
    %5432 = vmatprep.subr.mxu0 0.0
    %5433 = vmatpush2.msra.mxu0 0.0
    %5434 = vmatprep.subr.mxu0 0.0
    %5435 = vmatpush2.msra.mxu0 0.0
    %5436 = vmatprep.subr.mxu0 0.0
    %5437 = vmatpush2.msra.mxu0 0.0
    %5438 = vmatprep.subr.mxu0 0.0
    %5439 = vmatpush2.msra.mxu0 0.0
    %5440 = vmatprep.subr.mxu0 0.0
    %5441 = vmatpush2.msra.mxu0 0.0
    %5442 = vmatprep.subr.mxu0 0.0
    %5443 = vmatpush2.msra.mxu0 0.0
    %5444 = vmatprep.subr.mxu0 0.0
    %5445 = vmatpush2.msra.mxu0 0.0
    %5446 = vmatprep.subr.mxu0 0.0
    %5447 = vmatpush2.msra.mxu0 0.0
    %5448 = vmatprep.subr.mxu0 0.0
    %5449 = vmatpush2.msra.mxu0 0.0
    %5450 = vmatprep.subr.mxu0 0.0
    %5451 = vmatpush2.msra.mxu0 0.0
    %5452 = vmatprep.subr.mxu0 0.0
    %5453 = vmatpush2.msra.mxu0 0.0
    %5454 = vmatprep.subr.mxu0 0.0
    %5455 = vmatpush2.msra.mxu0 0.0
    %5456 = vmatprep.subr.mxu0 0.0
    %5457 = vmatpush2.msra.mxu0 0.0
    %5458 = vmatprep.subr.mxu0 0.0
    %5459 = vmatpush2.msra.mxu0 0.0
    %5460 = vmatprep.subr.mxu0 0.0
    %5461 = vmatpush2.msra.mxu0 0.0
    %5462 = vmatprep.mubr.f32.mxu0 0.0
    %5463 = vmatmul.mubr.f32.gmra.mxu0 %v5397
    %v5464 = vpop.f32.mrf.mxu0
    %v5465 = vadd.f32 %v97, %v5464
    %v5466 = vpop.f32.mrf.mxu0
    %5467 = vdwg.mxu0
    %v5468 = vtanh.pop %v5465
    %5469 = vmatprep.subr.mxu0 0.0
    %5470 = vmatpush1.msra.mxu0 %v91
    %5471 = vmatprep.subr.mxu0 0.0
    %5472 = vmatpush1.msra.mxu0 %v90
    %5473 = vmatprep.subr.mxu0 0.0
    %5474 = vmatpush1.msra.mxu0 %v89
    %5475 = vmatprep.subr.mxu0 0.0
    %5476 = vmatpush1.msra.mxu0 %v88
    %5477 = vmatprep.subr.mxu0 0.0
    %5478 = vmatpush1.msra.mxu0 %v87
    %5479 = vmatprep.subr.mxu0 0.0
    %5480 = vmatpush1.msra.mxu0 %v86
    %5481 = vmatprep.subr.mxu0 0.0
    %5482 = vmatpush1.msra.mxu0 %v85
    %5483 = vmatprep.subr.mxu0 0.0
    %5484 = vmatpush1.msra.mxu0 %v84
    %5485 = vmatprep.subr.mxu0 0.0
    %5486 = vmatpush1.msra.mxu0 %v83
    %5487 = vmatprep.subr.mxu0 0.0
    %5488 = vmatpush1.msra.mxu0 %v82
    %5489 = vmatprep.subr.mxu0 0.0
    %5490 = vmatpush1.msra.mxu0 %v81
    %5491 = vmatprep.subr.mxu0 0.0
    %5492 = vmatpush1.msra.mxu0 %v80
    %5493 = vmatprep.subr.mxu0 0.0
    %5494 = vmatpush1.msra.mxu0 %v79
    %5495 = vmatprep.subr.mxu0 0.0
    %5496 = vmatpush1.msra.mxu0 %v78
    %5497 = vmatprep.subr.mxu0 0.0
    %5498 = vmatpush1.msra.mxu0 %v77
    %5499 = vmatprep.subr.mxu0 0.0
    %5500 = vmatpush1.msra.mxu0 %v76
    %5501 = vmatprep.subr.mxu0 0.0
    %5502 = vmatpush2.msra.mxu0 0.0
    %5503 = vmatprep.subr.mxu0 0.0
    %5504 = vmatpush2.msra.mxu0 0.0
    %5505 = vmatprep.subr.mxu0 0.0
    %5506 = vmatpush2.msra.mxu0 0.0
    %5507 = vmatprep.subr.mxu0 0.0
    %5508 = vmatpush2.msra.mxu0 0.0
    %5509 = vmatprep.subr.mxu0 0.0
    %5510 = vmatpush2.msra.mxu0 0.0
    %5511 = vmatprep.subr.mxu0 0.0
    %5512 = vmatpush2.msra.mxu0 0.0
    %5513 = vmatprep.subr.mxu0 0.0
    %5514 = vmatpush2.msra.mxu0 0.0
    %5515 = vmatprep.subr.mxu0 0.0
    %5516 = vmatpush2.msra.mxu0 0.0
    %5517 = vmatprep.subr.mxu0 0.0
    %5518 = vmatpush2.msra.mxu0 0.0
    %5519 = vmatprep.subr.mxu0 0.0
    %5520 = vmatpush2.msra.mxu0 0.0
    %5521 = vmatprep.subr.mxu0 0.0
    %5522 = vmatpush2.msra.mxu0 0.0
    %5523 = vmatprep.subr.mxu0 0.0
    %5524 = vmatpush2.msra.mxu0 0.0
    %5525 = vmatprep.subr.mxu0 0.0
    %5526 = vmatpush2.msra.mxu0 0.0
    %5527 = vmatprep.subr.mxu0 0.0
    %5528 = vmatpush2.msra.mxu0 0.0
    %5529 = vmatprep.subr.mxu0 0.0
    %5530 = vmatpush2.msra.mxu0 0.0
    %5531 = vmatprep.subr.mxu0 0.0
    %5532 = vmatpush2.msra.mxu0 0.0
    %5533 = vmatprep.mubr.f32.mxu0 0.0
    %5534 = vmatmul.mubr.f32.gmra.mxu0 %v5468
    %v5535 = vpop.f32.mrf.mxu0
    %v5536 = vadd.f32 %v104, %v5535
    %v5537 = vpop.f32.mrf.mxu0
    %5538 = vdwg.mxu0
    %v5539 = vmul.f32 %v5536, 0.1
    %v5540 = vadd.f32 %v5397, %v5539
    %5541 = vmatprep.subr.mxu0 0.0
    %5542 = vmatpush1.msra.mxu0 %v75
    %5543 = vmatprep.subr.mxu0 0.0
    %5544 = vmatpush1.msra.mxu0 %v74
    %5545 = vmatprep.subr.mxu0 0.0
    %5546 = vmatpush1.msra.mxu0 %v73
    %5547 = vmatprep.subr.mxu0 0.0
    %5548 = vmatpush1.msra.mxu0 %v72
    %5549 = vmatprep.subr.mxu0 0.0
    %5550 = vmatpush1.msra.mxu0 %v71
    %5551 = vmatprep.subr.mxu0 0.0
    %5552 = vmatpush1.msra.mxu0 %v70
    %5553 = vmatprep.subr.mxu0 0.0
    %5554 = vmatpush1.msra.mxu0 %v69
    %5555 = vmatprep.subr.mxu0 0.0
    %5556 = vmatpush1.msra.mxu0 %v68
    %5557 = vmatprep.subr.mxu0 0.0
    %5558 = vmatpush1.msra.mxu0 %v67
    %5559 = vmatprep.subr.mxu0 0.0
    %5560 = vmatpush1.msra.mxu0 %v66
    %5561 = vmatprep.subr.mxu0 0.0
    %5562 = vmatpush1.msra.mxu0 %v65
    %5563 = vmatprep.subr.mxu0 0.0
    %5564 = vmatpush1.msra.mxu0 %v64
    %5565 = vmatprep.subr.mxu0 0.0
    %5566 = vmatpush1.msra.mxu0 %v63
    %5567 = vmatprep.subr.mxu0 0.0
    %5568 = vmatpush1.msra.mxu0 %v62
    %5569 = vmatprep.subr.mxu0 0.0
    %5570 = vmatpush1.msra.mxu0 %v61
    %5571 = vmatprep.subr.mxu0 0.0
    %5572 = vmatpush1.msra.mxu0 %v60
    %5573 = vmatprep.subr.mxu0 0.0
    %5574 = vmatpush2.msra.mxu0 0.0
    %5575 = vmatprep.subr.mxu0 0.0
    %5576 = vmatpush2.msra.mxu0 0.0
    %5577 = vmatprep.subr.mxu0 0.0
    %5578 = vmatpush2.msra.mxu0 0.0
    %5579 = vmatprep.subr.mxu0 0.0
    %5580 = vmatpush2.msra.mxu0 0.0
    %5581 = vmatprep.subr.mxu0 0.0
    %5582 = vmatpush2.msra.mxu0 0.0
    %5583 = vmatprep.subr.mxu0 0.0
    %5584 = vmatpush2.msra.mxu0 0.0
    %5585 = vmatprep.subr.mxu0 0.0
    %5586 = vmatpush2.msra.mxu0 0.0
    %5587 = vmatprep.subr.mxu0 0.0
    %5588 = vmatpush2.msra.mxu0 0.0
    %5589 = vmatprep.subr.mxu0 0.0
    %5590 = vmatpush2.msra.mxu0 0.0
    %5591 = vmatprep.subr.mxu0 0.0
    %5592 = vmatpush2.msra.mxu0 0.0
    %5593 = vmatprep.subr.mxu0 0.0
    %5594 = vmatpush2.msra.mxu0 0.0
    %5595 = vmatprep.subr.mxu0 0.0
    %5596 = vmatpush2.msra.mxu0 0.0
    %5597 = vmatprep.subr.mxu0 0.0
    %5598 = vmatpush2.msra.mxu0 0.0
    %5599 = vmatprep.subr.mxu0 0.0
    %5600 = vmatpush2.msra.mxu0 0.0
    %5601 = vmatprep.subr.mxu0 0.0
    %5602 = vmatpush2.msra.mxu0 0.0
    %5603 = vmatprep.subr.mxu0 0.0
    %5604 = vmatpush2.msra.mxu0 0.0
    %5605 = vmatprep.mubr.f32.mxu0 0.0
    %5606 = vmatmul.mubr.f32.gmra.mxu0 %v5540
    %v5607 = vpop.f32.mrf.mxu0
    %v5608 = vadd.f32 %v97, %v5607
    %v5609 = vpop.f32.mrf.mxu0
    %5610 = vdwg.mxu0
    %v5611 = vtanh.pop %v5608
    %5612 = vmatprep.subr.mxu0 0.0
    %5613 = vmatpush1.msra.mxu0 %v91
    %5614 = vmatprep.subr.mxu0 0.0
    %5615 = vmatpush1.msra.mxu0 %v90
    %5616 = vmatprep.subr.mxu0 0.0
    %5617 = vmatpush1.msra.mxu0 %v89
    %5618 = vmatprep.subr.mxu0 0.0
    %5619 = vmatpush1.msra.mxu0 %v88
    %5620 = vmatprep.subr.mxu0 0.0
    %5621 = vmatpush1.msra.mxu0 %v87
    %5622 = vmatprep.subr.mxu0 0.0
    %5623 = vmatpush1.msra.mxu0 %v86
    %5624 = vmatprep.subr.mxu0 0.0
    %5625 = vmatpush1.msra.mxu0 %v85
    %5626 = vmatprep.subr.mxu0 0.0
    %5627 = vmatpush1.msra.mxu0 %v84
    %5628 = vmatprep.subr.mxu0 0.0
    %5629 = vmatpush1.msra.mxu0 %v83
    %5630 = vmatprep.subr.mxu0 0.0
    %5631 = vmatpush1.msra.mxu0 %v82
    %5632 = vmatprep.subr.mxu0 0.0
    %5633 = vmatpush1.msra.mxu0 %v81
    %5634 = vmatprep.subr.mxu0 0.0
    %5635 = vmatpush1.msra.mxu0 %v80
    %5636 = vmatprep.subr.mxu0 0.0
    %5637 = vmatpush1.msra.mxu0 %v79
    %5638 = vmatprep.subr.mxu0 0.0
    %5639 = vmatpush1.msra.mxu0 %v78
    %5640 = vmatprep.subr.mxu0 0.0
    %5641 = vmatpush1.msra.mxu0 %v77
    %5642 = vmatprep.subr.mxu0 0.0
    %5643 = vmatpush1.msra.mxu0 %v76
    %5644 = vmatprep.subr.mxu0 0.0
    %5645 = vmatpush2.msra.mxu0 0.0
    %5646 = vmatprep.subr.mxu0 0.0
    %5647 = vmatpush2.msra.mxu0 0.0
    %5648 = vmatprep.subr.mxu0 0.0
    %5649 = vmatpush2.msra.mxu0 0.0
    %5650 = vmatprep.subr.mxu0 0.0
    %5651 = vmatpush2.msra.mxu0 0.0
    %5652 = vmatprep.subr.mxu0 0.0
    %5653 = vmatpush2.msra.mxu0 0.0
    %5654 = vmatprep.subr.mxu0 0.0
    %5655 = vmatpush2.msra.mxu0 0.0
    %5656 = vmatprep.subr.mxu0 0.0
    %5657 = vmatpush2.msra.mxu0 0.0
    %5658 = vmatprep.subr.mxu0 0.0
    %5659 = vmatpush2.msra.mxu0 0.0
    %5660 = vmatprep.subr.mxu0 0.0
    %5661 = vmatpush2.msra.mxu0 0.0
    %5662 = vmatprep.subr.mxu0 0.0
    %5663 = vmatpush2.msra.mxu0 0.0
    %5664 = vmatprep.subr.mxu0 0.0
    %5665 = vmatpush2.msra.mxu0 0.0
    %5666 = vmatprep.subr.mxu0 0.0
    %5667 = vmatpush2.msra.mxu0 0.0
    %5668 = vmatprep.subr.mxu0 0.0
    %5669 = vmatpush2.msra.mxu0 0.0
    %5670 = vmatprep.subr.mxu0 0.0
    %5671 = vmatpush2.msra.mxu0 0.0
    %5672 = vmatprep.subr.mxu0 0.0
    %5673 = vmatpush2.msra.mxu0 0.0
    %5674 = vmatprep.subr.mxu0 0.0
    %5675 = vmatpush2.msra.mxu0 0.0
    %5676 = vmatprep.mubr.f32.mxu0 0.0
    %5677 = vmatmul.mubr.f32.gmra.mxu0 %v5611
    %v5678 = vpop.f32.mrf.mxu0
    %v5679 = vadd.f32 %v104, %v5678
    %v5680 = vpop.f32.mrf.mxu0
    %5681 = vdwg.mxu0
    %v5682 = vmul.f32 %v5679, 0.1
    %v5683 = vadd.f32 %v5540, %v5682
    %5684 = vmatprep.subr.mxu0 0.0
    %5685 = vmatpush1.msra.mxu0 %v75
    %5686 = vmatprep.subr.mxu0 0.0
    %5687 = vmatpush1.msra.mxu0 %v74
    %5688 = vmatprep.subr.mxu0 0.0
    %5689 = vmatpush1.msra.mxu0 %v73
    %5690 = vmatprep.subr.mxu0 0.0
    %5691 = vmatpush1.msra.mxu0 %v72
    %5692 = vmatprep.subr.mxu0 0.0
    %5693 = vmatpush1.msra.mxu0 %v71
    %5694 = vmatprep.subr.mxu0 0.0
    %5695 = vmatpush1.msra.mxu0 %v70
    %5696 = vmatprep.subr.mxu0 0.0
    %5697 = vmatpush1.msra.mxu0 %v69
    %5698 = vmatprep.subr.mxu0 0.0
    %5699 = vmatpush1.msra.mxu0 %v68
    %5700 = vmatprep.subr.mxu0 0.0
    %5701 = vmatpush1.msra.mxu0 %v67
    %5702 = vmatprep.subr.mxu0 0.0
    %5703 = vmatpush1.msra.mxu0 %v66
    %5704 = vmatprep.subr.mxu0 0.0
    %5705 = vmatpush1.msra.mxu0 %v65
    %5706 = vmatprep.subr.mxu0 0.0
    %5707 = vmatpush1.msra.mxu0 %v64
    %5708 = vmatprep.subr.mxu0 0.0
    %5709 = vmatpush1.msra.mxu0 %v63
    %5710 = vmatprep.subr.mxu0 0.0
    %5711 = vmatpush1.msra.mxu0 %v62
    %5712 = vmatprep.subr.mxu0 0.0
    %5713 = vmatpush1.msra.mxu0 %v61
    %5714 = vmatprep.subr.mxu0 0.0
    %5715 = vmatpush1.msra.mxu0 %v60
    %5716 = vmatprep.subr.mxu0 0.0
    %5717 = vmatpush2.msra.mxu0 0.0
    %5718 = vmatprep.subr.mxu0 0.0
    %5719 = vmatpush2.msra.mxu0 0.0
    %5720 = vmatprep.subr.mxu0 0.0
    %5721 = vmatpush2.msra.mxu0 0.0
    %5722 = vmatprep.subr.mxu0 0.0
    %5723 = vmatpush2.msra.mxu0 0.0
    %5724 = vmatprep.subr.mxu0 0.0
    %5725 = vmatpush2.msra.mxu0 0.0
    %5726 = vmatprep.subr.mxu0 0.0
    %5727 = vmatpush2.msra.mxu0 0.0
    %5728 = vmatprep.subr.mxu0 0.0
    %5729 = vmatpush2.msra.mxu0 0.0
    %5730 = vmatprep.subr.mxu0 0.0
    %5731 = vmatpush2.msra.mxu0 0.0
    %5732 = vmatprep.subr.mxu0 0.0
    %5733 = vmatpush2.msra.mxu0 0.0
    %5734 = vmatprep.subr.mxu0 0.0
    %5735 = vmatpush2.msra.mxu0 0.0
    %5736 = vmatprep.subr.mxu0 0.0
    %5737 = vmatpush2.msra.mxu0 0.0
    %5738 = vmatprep.subr.mxu0 0.0
    %5739 = vmatpush2.msra.mxu0 0.0
    %5740 = vmatprep.subr.mxu0 0.0
    %5741 = vmatpush2.msra.mxu0 0.0
    %5742 = vmatprep.subr.mxu0 0.0
    %5743 = vmatpush2.msra.mxu0 0.0
    %5744 = vmatprep.subr.mxu0 0.0
    %5745 = vmatpush2.msra.mxu0 0.0
    %5746 = vmatprep.subr.mxu0 0.0
    %5747 = vmatpush2.msra.mxu0 0.0
    %5748 = vmatprep.mubr.f32.mxu0 0.0
    %5749 = vmatmul.mubr.f32.gmra.mxu0 %v5683
    %v5750 = vpop.f32.mrf.mxu0
    %v5751 = vadd.f32 %v97, %v5750
    %v5752 = vpop.f32.mrf.mxu0
    %5753 = vdwg.mxu0
    %v5754 = vtanh.pop %v5751
    %5755 = vmatprep.subr.mxu0 0.0
    %5756 = vmatpush1.msra.mxu0 %v91
    %5757 = vmatprep.subr.mxu0 0.0
    %5758 = vmatpush1.msra.mxu0 %v90
    %5759 = vmatprep.subr.mxu0 0.0
    %5760 = vmatpush1.msra.mxu0 %v89
    %5761 = vmatprep.subr.mxu0 0.0
    %5762 = vmatpush1.msra.mxu0 %v88
    %5763 = vmatprep.subr.mxu0 0.0
    %5764 = vmatpush1.msra.mxu0 %v87
    %5765 = vmatprep.subr.mxu0 0.0
    %5766 = vmatpush1.msra.mxu0 %v86
    %5767 = vmatprep.subr.mxu0 0.0
    %5768 = vmatpush1.msra.mxu0 %v85
    %5769 = vmatprep.subr.mxu0 0.0
    %5770 = vmatpush1.msra.mxu0 %v84
    %5771 = vmatprep.subr.mxu0 0.0
    %5772 = vmatpush1.msra.mxu0 %v83
    %5773 = vmatprep.subr.mxu0 0.0
    %5774 = vmatpush1.msra.mxu0 %v82
    %5775 = vmatprep.subr.mxu0 0.0
    %5776 = vmatpush1.msra.mxu0 %v81
    %5777 = vmatprep.subr.mxu0 0.0
    %5778 = vmatpush1.msra.mxu0 %v80
    %5779 = vmatprep.subr.mxu0 0.0
    %5780 = vmatpush1.msra.mxu0 %v79
    %5781 = vmatprep.subr.mxu0 0.0
    %5782 = vmatpush1.msra.mxu0 %v78
    %5783 = vmatprep.subr.mxu0 0.0
    %5784 = vmatpush1.msra.mxu0 %v77
    %5785 = vmatprep.subr.mxu0 0.0
    %5786 = vmatpush1.msra.mxu0 %v76
    %5787 = vmatprep.subr.mxu0 0.0
    %5788 = vmatpush2.msra.mxu0 0.0
    %5789 = vmatprep.subr.mxu0 0.0
    %5790 = vmatpush2.msra.mxu0 0.0
    %5791 = vmatprep.subr.mxu0 0.0
    %5792 = vmatpush2.msra.mxu0 0.0
    %5793 = vmatprep.subr.mxu0 0.0
    %5794 = vmatpush2.msra.mxu0 0.0
    %5795 = vmatprep.subr.mxu0 0.0
    %5796 = vmatpush2.msra.mxu0 0.0
    %5797 = vmatprep.subr.mxu0 0.0
    %5798 = vmatpush2.msra.mxu0 0.0
    %5799 = vmatprep.subr.mxu0 0.0
    %5800 = vmatpush2.msra.mxu0 0.0
    %5801 = vmatprep.subr.mxu0 0.0
    %5802 = vmatpush2.msra.mxu0 0.0
    %5803 = vmatprep.subr.mxu0 0.0
    %5804 = vmatpush2.msra.mxu0 0.0
    %5805 = vmatprep.subr.mxu0 0.0
    %5806 = vmatpush2.msra.mxu0 0.0
    %5807 = vmatprep.subr.mxu0 0.0
    %5808 = vmatpush2.msra.mxu0 0.0
    %5809 = vmatprep.subr.mxu0 0.0
    %5810 = vmatpush2.msra.mxu0 0.0
    %5811 = vmatprep.subr.mxu0 0.0
    %5812 = vmatpush2.msra.mxu0 0.0
    %5813 = vmatprep.subr.mxu0 0.0
    %5814 = vmatpush2.msra.mxu0 0.0
    %5815 = vmatprep.subr.mxu0 0.0
    %5816 = vmatpush2.msra.mxu0 0.0
    %5817 = vmatprep.subr.mxu0 0.0
    %5818 = vmatpush2.msra.mxu0 0.0
    %5819 = vmatprep.mubr.f32.mxu0 0.0
    %5820 = vmatmul.mubr.f32.gmra.mxu0 %v5754
    %v5821 = vpop.f32.mrf.mxu0
    %v5822 = vadd.f32 %v104, %v5821
    %v5823 = vpop.f32.mrf.mxu0
    %5824 = vdwg.mxu0
    %v5825 = vmul.f32 %v5822, 0.1
    %v5826 = vadd.f32 %v5683, %v5825
    %5827 = vst [vmem:[#allocation8] sm:$0xff] %v5826
    // Predicated region
    $region34: #{tpu_custom_call.1} parent=1 // pred_check
      _
    $region35: #{tpu_custom_call.1} parent=1 // pred_check_branch
      %5829 = sbr.rel (0) target = $region37
    $region36: #{tpu_custom_call.1} parent=1 // pred_region
      %s5831 = ssub.s32 128, 128
      %5832 = vsyncadd [#allocation4], %s5831
      %s5834 = sshll.u32 [#allocation8], 4
      %s5835 = int_to_ptr.vmem [resolvable:$true] %s5834
      %5837 = dma.vmem_to_hbm [thread:$0]  %s5835, 128, %s5, [#allocation4]
    $region37: #{tpu_custom_call.1} parent=1 // pred_fallthru
      _
    // Predicated region
    $region38: #{tpu_custom_call.1} parent=1 // pred_check
      _
    $region39: #{tpu_custom_call.1} parent=1 // pred_check_branch
      %5839 = sbr.rel (0) target = $region41
    $region40: #{tpu_custom_call.1} parent=1 // pred_region
      %5840 = dma.done [#allocation4], 128
    $region41: #{tpu_custom_call.1} parent=1 // pred_fallthru
      _
    %5841 = vsyncpa [#allocation3], 1
    %5842 = vsyncpa [#allocation6], 1
    %5843 = vsyncpa [#allocation4], 1

</llo_original>
